<compile_context>
chip_gen: v7x
topology: tpu7x:2x2x1
jax: 0.10.0
libtpu: 0.0.40
codegen_flags: <defaults>
</compile_context>

<pallas_src>
import math
import numpy as np
import jax
import jax.numpy as jnp
from jax.experimental import pallas as pl
from jax.experimental.pallas import tpu as pltpu

# ----------------------------- configuration --------------------------------
EMBED_DIM = 32
NUM_HEADS = 4
WINDOW_SIZE = 4
SHIFT_SIZE = 2
HEAD_DIM = EMBED_DIM // NUM_HEADS
SCALE = HEAD_DIM ** (-0.5)
N_TOK = WINDOW_SIZE * WINDOW_SIZE          # tokens per window
FUSED_OUT = 2 * EMBED_DIM + NUM_HEADS * EMBED_DIM   # [q | k | v'(per head C)]


# ------------------------------ Pallas kernel --------------------------------
def _swin_window_attn_kernel(x_ref, wqkv_ref, bqkv_ref, bproj_ref, bias_ref, o_ref):
    # x_ref:    (W_BLK*N, C)        bf16 window tokens
    # wqkv_ref: (C, 2C + H*C)       bf16 fused [Q(scaled) | K | V'(proj-folded)]
    # bqkv_ref: (1, 2C + H*C)       f32  fused bias
    # bproj_ref:(1, C)              f32  output-projection bias
    # bias_ref: (W_BLK, H, N, N)    f32  rel-pos bias + shift mask (pre-added)
    # o_ref:    (W_BLK*N, C)        bf16 output
    TN, C = x_ref.shape
    WB = TN // N_TOK
    Hh, hd, N = NUM_HEADS, HEAD_DIM, N_TOK

    # Fused Q / K / V' projection over the whole window block (bf16 MXU, f32 acc).
    qkv = jnp.dot(x_ref[...], wqkv_ref[...],
                  preferred_element_type=jnp.float32) + bqkv_ref[...]

    # One relayout per tensor: heads become part of the leading batch dim so all
    # later einsums are plain 3-D batched matmuls (no per-head lane slicing loop).
    q = jnp.transpose(qkv[:, :C].reshape(WB, N, Hh, hd), (0, 2, 1, 3))
    k = jnp.transpose(qkv[:, C:2 * C].reshape(WB, N, Hh, hd), (0, 2, 1, 3))
    v = jnp.transpose(qkv[:, 2 * C:].reshape(WB, N, Hh, C), (0, 2, 1, 3))
    q = q.reshape(WB * Hh, N, hd)
    k = k.reshape(WB * Hh, N, hd)
    v = v.reshape(WB * Hh, N, C)            # W_proj already folded into V'

    # Batched attention scores for all windows*heads (bf16 into the MXU).
    s = jnp.einsum("bnd,bmd->bnm",
                   q.astype(jnp.bfloat16), k.astype(jnp.bfloat16),
                   preferred_element_type=jnp.float32)
    s = s + bias_ref[...].reshape(WB * Hh, N, N)      # rel-pos bias + shift mask

    # Numerically-stable softmax in f32; reciprocal goes to the EUP slot.
    m = jnp.max(s, axis=-1, keepdims=True)
    e = jnp.exp(s - m)
    attn = e * pl.reciprocal(jnp.sum(e, axis=-1, keepdims=True), approx=True)

    # attn @ V' (output projection folded in), then sum over heads (4 cheap adds).
    o = jnp.einsum("bnm,bmd->bnd",
                   attn.astype(jnp.bfloat16), v.astype(jnp.bfloat16),
                   preferred_element_type=jnp.float32)
    o = jnp.sum(o.reshape(WB, Hh, N, C), axis=1) + bproj_ref[...]
    o_ref[...] = o.reshape(TN, C).astype(o_ref.dtype)


def window_msa_pallas(x_tok, w_fused, b_fused, b_proj, bias_big, w_blk):
    """x_tok: (BW*N, C) bf16; bias_big: (P, H, N, N) f32. Returns (BW*N, C) bf16."""
    TN, C = x_tok.shape
    BW = TN // N_TOK
    P = bias_big.shape[0]
    assert BW % w_blk == 0 and P % w_blk == 0
    n_blk = BW // w_blk
    mask_period = P // w_blk
    tn_blk = w_blk * N_TOK
    F = w_fused.shape[1]

    return pl.pallas_call(
        _swin_window_attn_kernel,
        out_shape=jax.ShapeDtypeStruct((TN, C), jnp.bfloat16),
        grid_spec=pltpu.PrefetchScalarGridSpec(
            num_scalar_prefetch=0,
            grid=(n_blk,),
            in_specs=[
                pl.BlockSpec((tn_blk, C), lambda w: (w, 0)),              # x tokens
                pl.BlockSpec((C, F), lambda w: (0, 0)),                   # fused W
                pl.BlockSpec((1, F), lambda w: (0, 0)),                   # fused b
                pl.BlockSpec((1, C), lambda w: (0, 0)),                   # proj b
                pl.BlockSpec((w_blk, NUM_HEADS, N_TOK, N_TOK),
                             lambda w: (w % mask_period, 0, 0, 0)),       # bias+mask
            ],
            out_specs=pl.BlockSpec((tn_blk, C), lambda w: (w, 0)),
        ),
        compiler_params=pltpu.CompilerParams(
            dimension_semantics=("parallel",)),
    )(x_tok, w_fused, b_fused, b_proj, bias_big)


# ------------------------------ host-side prep -------------------------------
def _window_partition(x, ws):
    B, H, W, C = x.shape
    x = x.reshape(B, H // ws, ws, W // ws, ws, C)
    x = jnp.transpose(x, (0, 1, 3, 2, 4, 5))
    return x.reshape(-1, ws, ws, C)


def _window_reverse(windows, H, W, ws):
    B = windows.shape[0] // ((H // ws) * (W // ws))
    x = windows.reshape(B, H // ws, W // ws, ws, ws, -1)
    x = jnp.transpose(x, (0, 1, 3, 2, 4, 5))
    return x.reshape(B, H, W, -1)


def _relative_position_index(ws):
    seq1 = np.arange(0, (2 * ws - 1) * ws, 2 * ws - 1)
    seq2 = np.arange(0, ws)
    rel = (seq1[:, None] + seq2[None, :]).reshape(1, -1)
    idx = rel + rel.T
    return idx[:, ::-1].copy()


def _build_shift_mask(H_pad, W_pad, ws, ss):
    img_mask = np.zeros((1, H_pad, W_pad, 1), np.float32)
    h_slices = (slice(0, -ws), slice(-ws, -ss), slice(-ss, None))
    w_slices = (slice(0, -ws), slice(-ws, -ss), slice(-ss, None))
    cnt = 0
    for h in h_slices:
        for w in w_slices:
            img_mask[:, h, w, :] = cnt
            cnt += 1
    m = img_mask.reshape(1, H_pad // ws, ws, W_pad // ws, ws, 1)
    m = m.transpose(0, 1, 3, 2, 4, 5).reshape(-1, ws * ws)
    attn_mask = m[:, None, :] - m[:, :, None]
    return np.where(attn_mask != 0, -100.0, 0.0).astype(np.float32)


def _prepare_fused_params(params):
    """Fold qk-scale into Q and W_proj into V'; return bf16 fused weight."""
    C, Hh, hd = EMBED_DIM, NUM_HEADS, HEAD_DIM
    hi = jax.lax.Precision.HIGHEST
    w_qkv, b_qkv = params["w_qkv"], params["b_qkv"]          # (C,3C), (1,3C)
    w_proj = params["w_proj"]                                # (C, C)
    w_q, b_q = w_qkv[:, :C] * SCALE, b_qkv[:, :C] * SCALE
    w_k, b_k = w_qkv[:, C:2 * C], b_qkv[:, C:2 * C]
    w_v_heads, b_v_heads = [], []
    for h in range(Hh):
        p_h = w_proj[h * hd:(h + 1) * hd, :]                 # (hd, C)
        wv_h = w_qkv[:, 2 * C + h * hd: 2 * C + (h + 1) * hd]
        bv_h = b_qkv[:, 2 * C + h * hd: 2 * C + (h + 1) * hd]
        w_v_heads.append(jnp.dot(wv_h, p_h, precision=hi))   # (C, C)
        b_v_heads.append(jnp.dot(bv_h, p_h, precision=hi))   # (1, C)
    w_fused = jnp.concatenate([w_q, w_k] + w_v_heads, axis=1)   # (C, 2C+H*C)
    b_fused = jnp.concatenate([b_q, b_k] + b_v_heads, axis=1)   # (1, 2C+H*C)
    return (w_fused.astype(jnp.bfloat16),
            b_fused.astype(jnp.float32),
            params["b_proj"].astype(jnp.float32))


def _combined_bias(rel_table, attn_mask_np):
    """Pre-add relative-position bias into the per-mask-window shift mask."""
    rel_idx = _relative_position_index(WINDOW_SIZE)
    rel_bias = rel_table[rel_idx.reshape(-1)].reshape(N_TOK, N_TOK, NUM_HEADS)
    rel_bias = jnp.transpose(rel_bias, (2, 0, 1)).astype(jnp.float32)  # (H,N,N)
    mask = jnp.asarray(attn_mask_np)                                   # (nW,N,N)
    return rel_bias[None, :, :, :] + mask[:, None, :, :]               # (nW,H,N,N)


def _choose_w_blk(BW, target=16):
    # Grid is a sequential loop per TensorCore: for small BW one block (grid=1)
    # is best on single-TC v5e/v6e and harmless on v7x; for large BW, blocks of
    # ~`target` windows bound live f32 temporaries (vreg spill) while leaving
    # many grid steps for v7x megacore sharding + double buffering.
    # Sweep target over {8, 16, 32} when tuning.
    if BW <= target:
        return BW
    for w in range(min(target, BW), 0, -1):
        if BW % w == 0:
            return w
    return BW


# -------------------- pure-JAX mirror of the kernel math ---------------------
def _window_attn_reference_math(x_tok, w_fused, b_fused, b_proj, bias_all):
    TN, C = x_tok.shape
    WB = TN // N_TOK
    Hh, hd, N = NUM_HEADS, HEAD_DIM, N_TOK
    qkv = jnp.dot(x_tok, w_fused, preferred_element_type=jnp.float32) + b_fused
    q = jnp.transpose(qkv[:, :C].reshape(WB, N, Hh, hd), (0, 2, 1, 3)).reshape(WB * Hh, N, hd)
    k = jnp.transpose(qkv[:, C:2 * C].reshape(WB, N, Hh, hd), (0, 2, 1, 3)).reshape(WB * Hh, N, hd)
    v = jnp.transpose(qkv[:, 2 * C:].reshape(WB, N, Hh, C), (0, 2, 1, 3)).reshape(WB * Hh, N, C)
    s = jnp.einsum("bnd,bmd->bnm", q.astype(jnp.bfloat16), k.astype(jnp.bfloat16),
                   preferred_element_type=jnp.float32)
    s = s + bias_all.reshape(WB * Hh, N, N)
    attn = jax.nn.softmax(s, axis=-1)
    o = jnp.einsum("bnm,bmd->bnd", attn.astype(jnp.bfloat16), v.astype(jnp.bfloat16),
                   preferred_element_type=jnp.float32)
    o = jnp.sum(o.reshape(WB, Hh, N, C), axis=1) + b_proj
    return o.reshape(TN, C).astype(jnp.bfloat16)


# --------------------------------- forward -----------------------------------
def shift_window_msa_forward(query, hw_shape, params, w_blk_target=16,
                             use_pallas=True):
    B, L, C = query.shape
    H, W = hw_shape
    assert L == H * W and C == EMBED_DIM
    ws, ss = WINDOW_SIZE, SHIFT_SIZE

    x = query.reshape(B, H, W, C)
    pad_r = (ws - W % ws) % ws
    pad_b = (ws - H % ws) % ws
    if pad_r or pad_b:
        x = jnp.pad(x, ((0, 0), (0, pad_b), (0, pad_r), (0, 0)))
    H_pad, W_pad = x.shape[1], x.shape[2]

    if ss > 0:
        x = jnp.roll(x, shift=(-ss, -ss), axis=(1, 2))
        attn_mask = _build_shift_mask(H_pad, W_pad, ws, ss)        # (nW, N, N)
    else:
        attn_mask = np.zeros((1, N_TOK, N_TOK), np.float32)

    q_windows = _window_partition(x, ws)                           # (BW, ws, ws, C)
    BW = q_windows.shape[0]
    nW = attn_mask.shape[0]
    # Window ordering must be batch-major with exactly nW windows per image,
    # otherwise the periodic bias/mask indexing below mis-aligns.
    assert BW % nW == 0

    w_blk = _choose_w_blk(BW, w_blk_target)
    assert BW % w_blk == 0
    P = (w_blk * nW) // math.gcd(w_blk, nW)                        # lcm(w_blk, nW)
    bias_nw = _combined_bias(params["rel_pos_table"], attn_mask)   # (nW, H, N, N)
    bias_big = jnp.tile(bias_nw, (P // nW, 1, 1, 1))               # (P, H, N, N)

    w_fused, b_fused, b_proj = _prepare_fused_params(params)
    x_tok = q_windows.reshape(BW * N_TOK, C).astype(jnp.bfloat16)

    if use_pallas:
        out_tok = window_msa_pallas(x_tok, w_fused, b_fused, b_proj, bias_big, w_blk)
    else:  # pure-JAX mirror of the kernel math (matched-precision reference)
        out_tok = _window_attn_reference_math(
            x_tok, w_fused, b_fused, b_proj, jnp.tile(bias_nw, (BW // nW, 1, 1, 1)))

    attn_windows = out_tok.astype(jnp.float32).reshape(-1, ws, ws, C)
    x = _window_reverse(attn_windows, H_pad, W_pad, ws)
    if ss > 0:
        x = jnp.roll(x, shift=(ss, ss), axis=(1, 2))
    if pad_r or pad_b:
        x = x[:, :H, :W, :]
    # attn_drop / proj_drop / DropPath are identity at the module default rate 0.
    return x.reshape(B, H * W, C).astype(query.dtype)


# ------------------------- fp32 module-semantics reference -------------------
def _reference_fp32(query, hw_shape, params):
    B, L, C = query.shape
    H, W = hw_shape
    ws, ss = WINDOW_SIZE, SHIFT_SIZE
    hi = jax.lax.Precision.HIGHEST

    x = query.reshape(B, H, W, C)
    pad_r = (ws - W % ws) % ws
    pad_b = (ws - H % ws) % ws
    if pad_r or pad_b:
        x = jnp.pad(x, ((0, 0), (0, pad_b), (0, pad_r), (0, 0)))
    H_pad, W_pad = x.shape[1], x.shape[2]
    if ss > 0:
        x = jnp.roll(x, shift=(-ss, -ss), axis=(1, 2))
        attn_mask = jnp.asarray(_build_shift_mask(H_pad, W_pad, ws, ss))
    else:
        attn_mask = None
    qw = _window_partition(x, ws).reshape(-1, N_TOK, C)
    BW, N, _ = qw.shape

    qkv = jnp.einsum("bnc,cf->bnf", qw, params["w_qkv"], precision=hi) + params["b_qkv"][0]
    qkv = jnp.transpose(qkv.reshape(BW, N, 3, NUM_HEADS, HEAD_DIM), (2, 0, 3, 1, 4))
    q, k, v = qkv[0] * SCALE, qkv[1], qkv[2]
    attn = jnp.einsum("bhnd,bhmd->bhnm", q, k, precision=hi)
    rel_idx = _relative_position_index(ws)
    rel_bias = params["rel_pos_table"][rel_idx.reshape(-1)]
    rel_bias = jnp.transpose(rel_bias.reshape(N, N, NUM_HEADS), (2, 0, 1))
    attn = attn + rel_bias[None]
    if attn_mask is not None:
        nW = attn_mask.shape[0]
        attn = attn.reshape(BW // nW, nW, NUM_HEADS, N, N) + attn_mask[None, :, None]
        attn = attn.reshape(BW, NUM_HEADS, N, N)
    attn = jax.nn.softmax(attn, axis=-1)
    o = jnp.einsum("bhnm,bhmd->bhnd", attn, v, precision=hi)
    o = jnp.transpose(o, (0, 2, 1, 3)).reshape(BW * N, C)
    o = jnp.dot(o, params["w_proj"], precision=hi) + params["b_proj"][0]
    o = o.reshape(-1, ws, ws, C)
    sx = _window_reverse(o, H_pad, W_pad, ws)
    if ss > 0:
        sx = jnp.roll(sx, shift=(ss, ss), axis=(1, 2))
    if pad_r or pad_b:
        sx = sx[:, :H, :W, :]
    return sx.reshape(B, H * W, C)


# ----------------------------------- main -------------------------------------
if __name__ == "__main__":
    key = jax.random.PRNGKey(0)
    k_x, k_t, k_wq, k_bq, k_wp, k_bp = jax.random.split(key, 6)

    B, H, W, C = 2, 8, 8, EMBED_DIM
    query = jax.random.normal(k_x, (B, H * W, C), jnp.float32)

    params = {
        "rel_pos_table": 0.02 * jax.random.normal(
            k_t, ((2 * WINDOW_SIZE - 1) ** 2, NUM_HEADS), jnp.float32),
        # stored input-major so y = x @ W + b  (== torch Linear with weight = W.T)
        "w_qkv": 0.1 * jax.random.normal(k_wq, (C, 3 * C), jnp.float32),
        "b_qkv": 0.1 * jax.random.normal(k_bq, (1, 3 * C), jnp.float32),
        "w_proj": 0.1 * jax.random.normal(k_wp, (C, C), jnp.float32),
        "b_proj": 0.1 * jax.random.normal(k_bp, (1, C), jnp.float32),
    }

    out = jax.block_until_ready(shift_window_msa_forward(query, (H, W), params))
    assert out.shape == (B, H * W, C)

    # Check 1: pure-JAX mirror of the kernel math (same folded bf16 weights,
    # same bf16 matmul inputs, exact softmax divide) -> tight tolerance.
    ref_matched = jax.block_until_ready(
        shift_window_msa_forward(query, (H, W), params, use_pallas=False))
    np.testing.assert_allclose(np.asarray(out), np.asarray(ref_matched),
                               atol=5e-3, rtol=5e-3)

    # Check 2: plain fp32 module semantics (absorbs bf16 / approx-recip drift).
    ref_f32 = jax.block_until_ready(_reference_fp32(query, (H, W), params))
    np.testing.assert_allclose(np.asarray(out), np.asarray(ref_f32),
                               atol=3e-2, rtol=3e-2)

    print("KERNEL_OK")
</pallas_src>

<mosaic_0001>
module attributes {stable_mosaic.version = 11 : i64} {
  func.func @_swin_window_attn_kernel(%arg0: i32, %arg1: memref<128x32xbf16, #tpu.memory_space<vmem>>, %arg2: memref<32x192xbf16, #tpu.memory_space<vmem>>, %arg3: memref<1x192xf32, #tpu.memory_space<vmem>>, %arg4: memref<1x32xf32, #tpu.memory_space<vmem>>, %arg5: memref<8x4x16x16xf32, #tpu.memory_space<vmem>>, %arg6: memref<128x32xbf16, #tpu.memory_space<vmem>>) attributes {dimension_semantics = [#tpu.dimension_semantics<parallel>], iteration_bounds = array<i64: 1>, scalar_prefetch = 0 : i64, scratch_operands = 0 : i64, tpu.core_type = #tpu.core_type<tc>, window_params = [{transform_indices = @transform_0, window_bounds = array<i64: 128, 32>}, {pipeline_mode = #tpu.pipeline_mode<synchronous>, transform_indices = @transform_1, window_bounds = array<i64: 32, 192>}, {pipeline_mode = #tpu.pipeline_mode<synchronous>, transform_indices = @transform_2, window_bounds = array<i64: 1, 192>}, {pipeline_mode = #tpu.pipeline_mode<synchronous>, transform_indices = @transform_3, window_bounds = array<i64: 1, 32>}, {transform_indices = @transform_4, window_bounds = array<i64: 8, 4, 16, 16>}, {transform_indices = @transform_5, window_bounds = array<i64: 128, 32>}]} {
    %c0 = arith.constant 0 : index
    %c0_0 = arith.constant 0 : index
    %0 = vector.load %arg1[%c0, %c0_0] : memref<128x32xbf16, #tpu.memory_space<vmem>>, vector<128x32xbf16>
    %c0_1 = arith.constant 0 : index
    %c0_2 = arith.constant 0 : index
    %1 = vector.load %arg2[%c0_1, %c0_2] : memref<32x192xbf16, #tpu.memory_space<vmem>>, vector<32x192xbf16>
    %cst = arith.constant dense<0.000000e+00> : vector<128x192xf32>
    %2 = tpu.matmul %0, %1, %cst {dimension_numbers = #tpu.dot_dimension_numbers<[1], [0], [0], [1], [0, 0, 1, 1], [], []>} : vector<128x32xbf16>, vector<32x192xbf16>, vector<128x192xf32> -> vector<128x192xf32>
    %c0_3 = arith.constant 0 : index
    %c0_4 = arith.constant 0 : index
    %3 = vector.load %arg3[%c0_3, %c0_4] : memref<1x192xf32, #tpu.memory_space<vmem>>, vector<1x192xf32>
    %4 = vector.broadcast %3 : vector<1x192xf32> to vector<128x192xf32>
    %5 = arith.addf %2, %4 : vector<128x192xf32>
    %6 = vector.extract_strided_slice %5 {offsets = [0, 0], sizes = [128, 32], strides = [1, 1]} : vector<128x192xf32> to vector<128x32xf32>
    %7 = vector.shape_cast %6 : vector<128x32xf32> to vector<8x16x4x8xf32>
    %8 = tpu.transpose %7, [0, 2, 1, 3] : vector<8x16x4x8xf32> -> vector<8x4x16x8xf32>
    %9 = vector.extract_strided_slice %5 {offsets = [0, 32], sizes = [128, 32], strides = [1, 1]} : vector<128x192xf32> to vector<128x32xf32>
    %10 = vector.shape_cast %9 : vector<128x32xf32> to vector<8x16x4x8xf32>
    %11 = tpu.transpose %10, [0, 2, 1, 3] : vector<8x16x4x8xf32> -> vector<8x4x16x8xf32>
    %12 = vector.extract_strided_slice %5 {offsets = [0, 64], sizes = [128, 128], strides = [1, 1]} : vector<128x192xf32> to vector<128x128xf32>
    %13 = vector.shape_cast %12 : vector<128x128xf32> to vector<8x16x4x32xf32>
    %14 = tpu.transpose %13, [0, 2, 1, 3] : vector<8x16x4x32xf32> -> vector<8x4x16x32xf32>
    %15 = vector.shape_cast %8 : vector<8x4x16x8xf32> to vector<32x16x8xf32>
    %16 = vector.shape_cast %11 : vector<8x4x16x8xf32> to vector<32x16x8xf32>
    %17 = vector.shape_cast %14 : vector<8x4x16x32xf32> to vector<32x16x32xf32>
    %18 = arith.truncf %15 : vector<32x16x8xf32> to vector<32x16x8xbf16>
    %19 = arith.truncf %16 : vector<32x16x8xf32> to vector<32x16x8xbf16>
    "tpu.trace_start"() <{level = 10 : i32, message = "bnd,bmd->bnm"}> : () -> ()
    %cst_5 = arith.constant dense<0.000000e+00> : vector<32x16x16xf32>
    %20 = tpu.matmul %18, %19, %cst_5 {dimension_numbers = #tpu.dot_dimension_numbers<[2], [2], [1], [1], [0, 0, 0, 1, 1, 1], [0], [0]>} : vector<32x16x8xbf16>, vector<32x16x8xbf16>, vector<32x16x16xf32> -> vector<32x16x16xf32>
    "tpu.trace_stop"() : () -> ()
    %c0_6 = arith.constant 0 : index
    %c0_7 = arith.constant 0 : index
    %c0_8 = arith.constant 0 : index
    %c0_9 = arith.constant 0 : index
    %21 = vector.load %arg5[%c0_6, %c0_7, %c0_8, %c0_9] : memref<8x4x16x16xf32, #tpu.memory_space<vmem>>, vector<8x4x16x16xf32>
    %22 = vector.shape_cast %21 : vector<8x4x16x16xf32> to vector<32x16x16xf32>
    %23 = arith.addf %20, %22 : vector<32x16x16xf32>
    %cst_10 = arith.constant dense<0xFF800000> : vector<32x16xf32>
    %24 = vector.multi_reduction <maximumf>, %23, %cst_10 [2] : vector<32x16x16xf32> to vector<32x16xf32>
    %25 = vector.shape_cast %24 : vector<32x16xf32> to vector<32x16x1xf32>
    %26 = vector.broadcast %25 : vector<32x16x1xf32> to vector<32x16x16xf32>
    %27 = arith.subf %23, %26 : vector<32x16x16xf32>
    %28 = math.exp %27 : vector<32x16x16xf32>
    %cst_11 = arith.constant dense<0.000000e+00> : vector<32x16xf32>
    %29 = vector.multi_reduction <add>, %28, %cst_11 [2] : vector<32x16x16xf32> to vector<32x16xf32>
    %30 = vector.shape_cast %29 : vector<32x16xf32> to vector<32x16x1xf32>
    %31 = tpu.reciprocal %30 {approx = true} : vector<32x16x1xf32> -> vector<32x16x1xf32>
    %32 = vector.broadcast %31 : vector<32x16x1xf32> to vector<32x16x16xf32>
    %33 = arith.mulf %28, %32 : vector<32x16x16xf32>
    %34 = arith.truncf %33 : vector<32x16x16xf32> to vector<32x16x16xbf16>
    %35 = arith.truncf %17 : vector<32x16x32xf32> to vector<32x16x32xbf16>
    "tpu.trace_start"() <{level = 10 : i32, message = "bnm,bmd->bnd"}> : () -> ()
    %cst_12 = arith.constant dense<0.000000e+00> : vector<32x16x32xf32>
    %36 = tpu.matmul %34, %35, %cst_12 {dimension_numbers = #tpu.dot_dimension_numbers<[2], [1], [1], [2], [0, 0, 0, 1, 1, 2], [0], [0]>} : vector<32x16x16xbf16>, vector<32x16x32xbf16>, vector<32x16x32xf32> -> vector<32x16x32xf32>
    "tpu.trace_stop"() : () -> ()
    %37 = vector.shape_cast %36 : vector<32x16x32xf32> to vector<8x4x16x32xf32>
    %cst_13 = arith.constant dense<0.000000e+00> : vector<8x16x32xf32>
    %38 = vector.multi_reduction <add>, %37, %cst_13 [1] : vector<8x4x16x32xf32> to vector<8x16x32xf32>
    %c0_14 = arith.constant 0 : index
    %c0_15 = arith.constant 0 : index
    %39 = vector.load %arg4[%c0_14, %c0_15] : memref<1x32xf32, #tpu.memory_space<vmem>>, vector<1x32xf32>
    %40 = vector.shape_cast %39 : vector<1x32xf32> to vector<1x1x32xf32>
    %41 = vector.broadcast %40 : vector<1x1x32xf32> to vector<8x16x32xf32>
    %42 = arith.addf %38, %41 : vector<8x16x32xf32>
    %43 = vector.shape_cast %42 : vector<8x16x32xf32> to vector<128x32xf32>
    %44 = arith.truncf %43 : vector<128x32xf32> to vector<128x32xbf16>
    %c0_16 = arith.constant 0 : index
    %c0_17 = arith.constant 0 : index
    %45 = vector.load %arg6[%c0_16, %c0_17] : memref<128x32xbf16, #tpu.memory_space<vmem>>, vector<128x32xbf16>
    tpu.vector_store %arg6[%c0_16, %c0_17], %44 {strides = array<i32>} : memref<128x32xbf16, #tpu.memory_space<vmem>>, vector<128x32xbf16>,
    return
  }
  func.func @transform_0(%arg0: i32) -> (i32, i32) {
    %c0_i32 = arith.constant 0 : i32
    %c0_i32_0 = arith.constant 0 : i32
    return %arg0, %c0_i32 : i32, i32
  }
  func.func @transform_1(%arg0: i32) -> (i32, i32) {
    %c0_i32 = arith.constant 0 : i32
    %c0_i32_0 = arith.constant 0 : i32
    %c0_i32_1 = arith.constant 0 : i32
    return %c0_i32, %c0_i32_0 : i32, i32
  }
  func.func @transform_2(%arg0: i32) -> (i32, i32) {
    %c0_i32 = arith.constant 0 : i32
    %c0_i32_0 = arith.constant 0 : i32
    %c0_i32_1 = arith.constant 0 : i32
    return %c0_i32, %c0_i32_0 : i32, i32
  }
  func.func @transform_3(%arg0: i32) -> (i32, i32) {
    %c0_i32 = arith.constant 0 : i32
    %c0_i32_0 = arith.constant 0 : i32
    %c0_i32_1 = arith.constant 0 : i32
    return %c0_i32, %c0_i32_0 : i32, i32
  }
  func.func @transform_4(%arg0: i32) -> (i32, i32, i32, i32) {
    %c1_i32 = arith.constant 1 : i32
    %c0_i32 = arith.constant 0 : i32
    %0 = arith.cmpi eq, %c1_i32, %c0_i32 : i32
    %c1_i32_0 = arith.constant 1 : i32
    %1 = arith.select %0, %c1_i32_0, %c1_i32 : i32
    %2 = arith.remsi %arg0, %1 : i32
    %c0_i32_1 = arith.constant 0 : i32
    %3 = arith.cmpi ne, %2, %c0_i32_1 : i32
    %c0_i32_2 = arith.constant 0 : i32
    %4 = arith.cmpi slt, %2, %c0_i32_2 : i32
    %c0_i32_3 = arith.constant 0 : i32
    %5 = arith.cmpi slt, %1, %c0_i32_3 : i32
    %6 = arith.xori %4, %5 : i1
    %7 = arith.andi %6, %3 : i1
    %8 = arith.addi %2, %1 : i32
    %9 = arith.select %7, %8, %2 : i32
    %c0_i32_4 = arith.constant 0 : i32
    %c0_i32_5 = arith.constant 0 : i32
    %c0_i32_6 = arith.constant 0 : i32
    %c0_i32_7 = arith.constant 0 : i32
    return %9, %c0_i32_4, %c0_i32_5, %c0_i32_6 : i32, i32, i32, i32
  }
  func.func @transform_5(%arg0: i32) -> (i32, i32) {
    %c0_i32 = arith.constant 0 : i32
    %c0_i32_0 = arith.constant 0 : i32
    return %arg0, %c0_i32 : i32, i32
  }
}

</mosaic_0001>

<llo_original>
// kernel: tpu_custom_call.1
$region0: #{tpu_custom_call.1}
  #allocation0 [shape = 'u32[]', space=smem, size = 0x4, offset = 0x4, fixed_abs, tag = 'smem constant byte address 0x4 - core index']
  #allocation1 [shape = 'u32[144,128]{1,0:T(1,128)}', space=vmem, size = 0x12000, scoped, tag = 'internal scratch']
  %s0 = inlined_call_operand.vmem [shape: bf16[128,32], index: 0, kind: input, shape index: {}]
  %s1 = inlined_call_operand.vmem [shape: bf16[32,192], index: 1, kind: input, shape index: {}]
  %s2 = inlined_call_operand.vmem [shape: f32[1,192], index: 2, kind: input, shape index: {}]
  %s3 = inlined_call_operand.vmem [shape: f32[1,32], index: 3, kind: input, shape index: {}]
  %s4 = inlined_call_operand.hbm [shape: f32[8,4,16,16], index: 4, kind: input, shape index: {}]
  %s5 = inlined_call_operand.vmem [shape: bf16[128,32], index: 5, kind: output, shape index: {}]
  %s6 = sld [smem:[#allocation0]]
  $region34: #{tpu_custom_call.1} parent=0
    _
  %s8 = ssub.s32 1, %s6
  %s9 = scalar_select 0, %s8, %s6
  $region1: #{tpu_custom_call.1} parent=0
    #allocation2 [shape = 'u8[262144]{0}', space=vmem, size = 0x40000, scoped, tag = 'input window, operand 4, single buffered']
    #allocation3 [shape = 's32[1]{0}', space=sflag, size = 0x4, scoped, tag = 'scoped memory for tpu_custom_call.1']
    %10 = vsyncpa [#allocation3], 0
    // Predicated region
    $region2: #{tpu_custom_call.1} parent=1 // pred_check
      _
    $region3: #{tpu_custom_call.1} parent=1 // pred_check_branch
      %12 = sbr.rel (0) target = $region5
    $region4: #{tpu_custom_call.1} parent=1 // pred_region
      _
    $region5: #{tpu_custom_call.1} parent=1 // pred_fallthru
      _
    // Predicated region
    $region6: #{tpu_custom_call.1} parent=1 // pred_check
      _
    $region7: #{tpu_custom_call.1} parent=1 // pred_check_branch
      %14 = sbr.rel (0) target = $region9
    $region8: #{tpu_custom_call.1} parent=1 // pred_region
      _
    $region9: #{tpu_custom_call.1} parent=1 // pred_fallthru
      _
    // Predicated region
    $region10: #{tpu_custom_call.1} parent=1 // pred_check
      _
    $region11: #{tpu_custom_call.1} parent=1 // pred_check_branch
      %16 = sbr.rel (0) target = $region13
    $region12: #{tpu_custom_call.1} parent=1 // pred_region
      _
    $region13: #{tpu_custom_call.1} parent=1 // pred_fallthru
      _
    // Predicated region
    $region14: #{tpu_custom_call.1} parent=1 // pred_check
      _
    $region15: #{tpu_custom_call.1} parent=1 // pred_check_branch
      %18 = sbr.rel (0) target = $region17
    $region16: #{tpu_custom_call.1} parent=1 // pred_region
      _
    $region17: #{tpu_custom_call.1} parent=1 // pred_fallthru
      _
    // Predicated region
    $region18: #{tpu_custom_call.1} parent=1 // pred_check
      _
    $region19: #{tpu_custom_call.1} parent=1 // pred_check_branch
      %20 = sbr.rel (0) target = $region21
    $region20: #{tpu_custom_call.1} parent=1 // pred_region
      %s22 = ssub.s32 8192, 8192
      %23 = vsyncadd [#allocation3], %s22
      %s24 = sshll.u32 [#allocation2], 4
      %s25 = int_to_ptr.vmem [resolvable:$true] %s24
      %30 = dma.hbm_to_vmem [thread:$0]  %s4, 8192, %s25, [#allocation3], 128, 128, 8
    $region21: #{tpu_custom_call.1} parent=1 // pred_fallthru
      _
    // Predicated region
    $region22: #{tpu_custom_call.1} parent=1 // pred_check
      _
    $region23: #{tpu_custom_call.1} parent=1 // pred_check_branch
      %32 = sbr.rel (0) target = $region25
    $region24: #{tpu_custom_call.1} parent=1 // pred_region
      %33 = dma.done [#allocation3], 8192
    $region25: #{tpu_custom_call.1} parent=1 // pred_fallthru
      _
    %v35 = vld [vmem:[%s0] sm:$0xf]
    %v36 = vld [vmem:[%s0 + $0x4] sm:$0xf]
    %v37 = vld [vmem:[%s0 + $0x8] sm:$0xf]
    %v38 = vld [vmem:[%s0 + $0xc] sm:$0xf]
    %v39 = vld [vmem:[%s0 + $0x10] sm:$0xf]
    %v40 = vld [vmem:[%s0 + $0x14] sm:$0xf]
    %v41 = vld [vmem:[%s0 + $0x18] sm:$0xf]
    %v42 = vld [vmem:[%s0 + $0x1c] sm:$0xf]
    %v43 = vld [vmem:[%s0 + $0x20] sm:$0xf]
    %v44 = vld [vmem:[%s0 + $0x24] sm:$0xf]
    %v45 = vld [vmem:[%s0 + $0x28] sm:$0xf]
    %v46 = vld [vmem:[%s0 + $0x2c] sm:$0xf]
    %v47 = vld [vmem:[%s0 + $0x30] sm:$0xf]
    %v48 = vld [vmem:[%s0 + $0x34] sm:$0xf]
    %v49 = vld [vmem:[%s0 + $0x38] sm:$0xf]
    %v50 = vld [vmem:[%s0 + $0x3c] sm:$0xf]
    %v51 = vld [vmem:[%s1] sm:$0xff]
    %v52 = vld [vmem:[%s1 + $0x8] sm:$0xff]
    %v53 = vld [vmem:[%s1 + $0x10] sm:$0xff]
    %v54 = vld [vmem:[%s1 + $0x18] sm:$0xff]
    %v55 = vld [vmem:[%s2] sm:$0x3]
    %v57 = vlaneseq
    %v58 = vshrl.u32 %v57, 7
    %v59 = vsub.s32 0, %v58
    %v60 = vrot.slane %v55, %v59
    %v61 = vlaneseq
    %v62 = vshrl.u32 %v61, 7
    %v63 = vsub.s32 1, %v62
    %v64 = vrot.slane %v55, %v63
    %v83 = vunpack.c.l.b16 %v35
    %v84 = vunpack.c.l.b16 %v36
    %v85 = vunpack.c.l.b16 %v37
    %v86 = vunpack.c.l.b16 %v38
    %v87 = vunpack.c.l.b16 %v39
    %v88 = vunpack.c.l.b16 %v40
    %v89 = vunpack.c.l.b16 %v41
    %v90 = vunpack.c.l.b16 %v42
    %v91 = vunpack.c.l.b16 %v43
    %v92 = vunpack.c.l.b16 %v44
    %v93 = vunpack.c.l.b16 %v45
    %v94 = vunpack.c.l.b16 %v46
    %v95 = vunpack.c.l.b16 %v47
    %v96 = vunpack.c.l.b16 %v48
    %v97 = vunpack.c.l.b16 %v49
    %v98 = vunpack.c.l.b16 %v50
    %v99 = vpack.c.b16 %v84, %v83
    %v100 = vpack.c.b16 %v86, %v85
    %v101 = vpack.c.b16 %v88, %v87
    %v102 = vpack.c.b16 %v90, %v89
    %v103 = vpack.c.b16 %v92, %v91
    %v104 = vpack.c.b16 %v94, %v93
    %v105 = vpack.c.b16 %v96, %v95
    %v106 = vpack.c.b16 %v98, %v97
    %v111 = vunpack.c.l.b16 %v51
    %v112 = vunpack.c.h.b16 %v51
    %v113 = vunpack.c.l.b16 %v52
    %v114 = vunpack.c.h.b16 %v52
    %v115 = vunpack.c.l.b16 %v53
    %v116 = vunpack.c.h.b16 %v53
    %v117 = vunpack.c.l.b16 %v54
    %v118 = vunpack.c.h.b16 %v54
    %v119 = vpack.c.b16 %v113, %v111
    %v120 = vpack.c.b16 %v114, %v112
    %v121 = vpack.c.b16 %v117, %v115
    %v122 = vpack.c.b16 %v118, %v116
    %vm127 = vcmask 261120
    %v129 = vsel %vm127, %v99, 0
    %v132 = vsel %vm127, %v100, 0
    %v135 = vsel %vm127, %v101, 0
    %v138 = vsel %vm127, %v102, 0
    %v141 = vsel %vm127, %v103, 0
    %v144 = vsel %vm127, %v104, 0
    %v147 = vsel %vm127, %v105, 0
    %v150 = vsel %vm127, %v106, 0
    %152 = vmatprep.subr.bf16.mxu0 %v120
    %153 = vmatpush1.bf16.msra.mxu0 %v119
    %154 = vmatprep.subr.bf16.mxu0 %v122
    %155 = vmatpush1.bf16.msra.mxu0 %v121
    %156 = vmatprep.subr.bf16.mxu0 0
    %157 = vmatpush1.bf16.msra.mxu0 0
    %158 = vmatprep.subr.bf16.mxu0 0
    %159 = vmatpush1.bf16.msra.mxu0 0
    %160 = vmatprep.subr.bf16.mxu0 0
    %161 = vmatpush1.bf16.msra.mxu0 0
    %162 = vmatprep.subr.bf16.mxu0 0
    %163 = vmatpush1.bf16.msra.mxu0 0
    %164 = vmatprep.subr.bf16.mxu0 0
    %165 = vmatpush1.bf16.msra.mxu0 0
    %166 = vmatprep.subr.bf16.mxu0 0
    %167 = vmatpush1.bf16.msra.mxu0 0
    %168 = vmatprep.subr.bf16.mxu0 0
    %169 = vmatpush1.bf16.msra.mxu0 0
    %170 = vmatprep.subr.bf16.mxu0 0
    %171 = vmatpush1.bf16.msra.mxu0 0
    %172 = vmatprep.subr.bf16.mxu0 0
    %173 = vmatpush1.bf16.msra.mxu0 0
    %174 = vmatprep.subr.bf16.mxu0 0
    %175 = vmatpush1.bf16.msra.mxu0 0
    %176 = vmatprep.subr.bf16.mxu0 0
    %177 = vmatpush1.bf16.msra.mxu0 0
    %178 = vmatprep.subr.bf16.mxu0 0
    %179 = vmatpush1.bf16.msra.mxu0 0
    %180 = vmatprep.subr.bf16.mxu0 0
    %181 = vmatpush1.bf16.msra.mxu0 0
    %182 = vmatprep.subr.bf16.mxu0 0
    %183 = vmatpush1.bf16.msra.mxu0 0
    %184 = vmatprep.mubr.bf16.mxu0 0
    %185 = vmatmul.mubr.bf16.gmra.mrb[0].mxu0 %v129
    %v186 = vpop.f32.mrb[0].mxu0
    %v187 = vadd.f32 %v60, %v186
    %v188 = vpop.f32.mrb[0].mxu0
    %v189 = vadd.f32 %v64, %v188
    %v190 = vpop.f32.mrb[0].mxu0
    %v191 = vadd.f32 %v60, %v190
    %v192 = vpop.f32.mrb[0].mxu0
    %v193 = vadd.f32 %v64, %v192
    %194 = vmatprep.mubr.bf16.mxu0 0
    %195 = vmatmul.mubr.bf16.gmra.mrb[0].mxu0 %v132
    %v196 = vpop.f32.mrb[0].mxu0
    %v197 = vadd.f32 %v60, %v196
    %v198 = vpop.f32.mrb[0].mxu0
    %v199 = vadd.f32 %v64, %v198
    %v200 = vpop.f32.mrb[0].mxu0
    %v201 = vadd.f32 %v60, %v200
    %v202 = vpop.f32.mrb[0].mxu0
    %v203 = vadd.f32 %v64, %v202
    %204 = vmatprep.mubr.bf16.mxu0 0
    %205 = vmatmul.mubr.bf16.gmra.mrb[0].mxu0 %v135
    %v206 = vpop.f32.mrb[0].mxu0
    %v207 = vadd.f32 %v60, %v206
    %v208 = vpop.f32.mrb[0].mxu0
    %v209 = vadd.f32 %v64, %v208
    %v210 = vpop.f32.mrb[0].mxu0
    %v211 = vadd.f32 %v60, %v210
    %v212 = vpop.f32.mrb[0].mxu0
    %v213 = vadd.f32 %v64, %v212
    %214 = vmatprep.mubr.bf16.mxu0 0
    %215 = vmatmul.mubr.bf16.gmra.mrb[0].mxu0 %v138
    %v216 = vpop.f32.mrb[0].mxu0
    %v217 = vadd.f32 %v60, %v216
    %v218 = vpop.f32.mrb[0].mxu0
    %v219 = vadd.f32 %v64, %v218
    %v220 = vpop.f32.mrb[0].mxu0
    %v221 = vadd.f32 %v60, %v220
    %v222 = vpop.f32.mrb[0].mxu0
    %v223 = vadd.f32 %v64, %v222
    %224 = vmatprep.mubr.bf16.mxu0 0
    %225 = vmatmul.mubr.bf16.gmra.mrb[0].mxu0 %v141
    %v226 = vpop.f32.mrb[0].mxu0
    %v227 = vadd.f32 %v60, %v226
    %v228 = vpop.f32.mrb[0].mxu0
    %v229 = vadd.f32 %v64, %v228
    %v230 = vpop.f32.mrb[0].mxu0
    %v231 = vadd.f32 %v60, %v230
    %v232 = vpop.f32.mrb[0].mxu0
    %v233 = vadd.f32 %v64, %v232
    %234 = vmatprep.mubr.bf16.mxu0 0
    %235 = vmatmul.mubr.bf16.gmra.mrb[0].mxu0 %v144
    %v236 = vpop.f32.mrb[0].mxu0
    %v237 = vadd.f32 %v60, %v236
    %v238 = vpop.f32.mrb[0].mxu0
    %v239 = vadd.f32 %v64, %v238
    %v240 = vpop.f32.mrb[0].mxu0
    %v241 = vadd.f32 %v60, %v240
    %v242 = vpop.f32.mrb[0].mxu0
    %v243 = vadd.f32 %v64, %v242
    %244 = vmatprep.mubr.bf16.mxu0 0
    %245 = vmatmul.mubr.bf16.gmra.mrb[0].mxu0 %v147
    %v246 = vpop.f32.mrb[0].mxu0
    %v247 = vadd.f32 %v60, %v246
    %v248 = vpop.f32.mrb[0].mxu0
    %v249 = vadd.f32 %v64, %v248
    %v250 = vpop.f32.mrb[0].mxu0
    %v251 = vadd.f32 %v60, %v250
    %v252 = vpop.f32.mrb[0].mxu0
    %v253 = vadd.f32 %v64, %v252
    %254 = vmatprep.mubr.bf16.mxu0 0
    %255 = vmatmul.mubr.bf16.gmra.mrb[0].mxu0 %v150
    %v256 = vpop.f32.mrb[0].mxu0
    %v257 = vadd.f32 %v60, %v256
    %v258 = vpop.f32.mrb[0].mxu0
    %v259 = vadd.f32 %v64, %v258
    %v260 = vpop.f32.mrb[0].mxu0
    %v261 = vadd.f32 %v60, %v260
    %v262 = vpop.f32.mrb[0].mxu0
    %v263 = vadd.f32 %v64, %v262
    %264 = vdwg.mxu0
    %281 = vrot.lane.b32.xlu0 %v187, 120
    %v282 = vpop.permute.xlu0 %281
    %283 = vrot.lane.b32.xlu0 %v191, 120
    %v284 = vpop.permute.xlu0 %283
    %285 = vrot.lane.b32.xlu0 %v197, 120
    %v286 = vpop.permute.xlu0 %285
    %287 = vrot.lane.b32.xlu0 %v201, 120
    %v288 = vpop.permute.xlu0 %287
    %289 = vrot.lane.b32.xlu0 %v207, 120
    %v290 = vpop.permute.xlu0 %289
    %291 = vrot.lane.b32.xlu0 %v211, 120
    %v292 = vpop.permute.xlu0 %291
    %293 = vrot.lane.b32.xlu0 %v217, 120
    %v294 = vpop.permute.xlu0 %293
    %295 = vrot.lane.b32.xlu0 %v221, 120
    %v296 = vpop.permute.xlu0 %295
    %297 = vrot.lane.b32.xlu0 %v227, 120
    %v298 = vpop.permute.xlu0 %297
    %299 = vrot.lane.b32.xlu0 %v231, 120
    %v300 = vpop.permute.xlu0 %299
    %301 = vrot.lane.b32.xlu0 %v237, 120
    %v302 = vpop.permute.xlu0 %301
    %303 = vrot.lane.b32.xlu0 %v241, 120
    %v304 = vpop.permute.xlu0 %303
    %305 = vrot.lane.b32.xlu0 %v247, 120
    %v306 = vpop.permute.xlu0 %305
    %307 = vrot.lane.b32.xlu0 %v251, 120
    %v308 = vpop.permute.xlu0 %307
    %309 = vrot.lane.b32.xlu0 %v257, 120
    %v310 = vpop.permute.xlu0 %309
    %311 = vrot.lane.b32.xlu0 %v261, 120
    %v312 = vpop.permute.xlu0 %311
    %329 = vrot.lane.b32.xlu0 %v187, 112
    %v330 = vpop.permute.xlu0 %329
    %331 = vrot.lane.b32.xlu0 %v191, 112
    %v332 = vpop.permute.xlu0 %331
    %333 = vrot.lane.b32.xlu0 %v197, 112
    %v334 = vpop.permute.xlu0 %333
    %335 = vrot.lane.b32.xlu0 %v201, 112
    %v336 = vpop.permute.xlu0 %335
    %337 = vrot.lane.b32.xlu0 %v207, 112
    %v338 = vpop.permute.xlu0 %337
    %339 = vrot.lane.b32.xlu0 %v211, 112
    %v340 = vpop.permute.xlu0 %339
    %341 = vrot.lane.b32.xlu0 %v217, 112
    %v342 = vpop.permute.xlu0 %341
    %343 = vrot.lane.b32.xlu0 %v221, 112
    %v344 = vpop.permute.xlu0 %343
    %345 = vrot.lane.b32.xlu0 %v227, 112
    %v346 = vpop.permute.xlu0 %345
    %347 = vrot.lane.b32.xlu0 %v231, 112
    %v348 = vpop.permute.xlu0 %347
    %349 = vrot.lane.b32.xlu0 %v237, 112
    %v350 = vpop.permute.xlu0 %349
    %351 = vrot.lane.b32.xlu0 %v241, 112
    %v352 = vpop.permute.xlu0 %351
    %353 = vrot.lane.b32.xlu0 %v247, 112
    %v354 = vpop.permute.xlu0 %353
    %355 = vrot.lane.b32.xlu0 %v251, 112
    %v356 = vpop.permute.xlu0 %355
    %357 = vrot.lane.b32.xlu0 %v257, 112
    %v358 = vpop.permute.xlu0 %357
    %359 = vrot.lane.b32.xlu0 %v261, 112
    %v360 = vpop.permute.xlu0 %359
    %377 = vrot.lane.b32.xlu0 %v187, 104
    %v378 = vpop.permute.xlu0 %377
    %379 = vrot.lane.b32.xlu0 %v191, 104
    %v380 = vpop.permute.xlu0 %379
    %381 = vrot.lane.b32.xlu0 %v197, 104
    %v382 = vpop.permute.xlu0 %381
    %383 = vrot.lane.b32.xlu0 %v201, 104
    %v384 = vpop.permute.xlu0 %383
    %385 = vrot.lane.b32.xlu0 %v207, 104
    %v386 = vpop.permute.xlu0 %385
    %387 = vrot.lane.b32.xlu0 %v211, 104
    %v388 = vpop.permute.xlu0 %387
    %389 = vrot.lane.b32.xlu0 %v217, 104
    %v390 = vpop.permute.xlu0 %389
    %391 = vrot.lane.b32.xlu0 %v221, 104
    %v392 = vpop.permute.xlu0 %391
    %393 = vrot.lane.b32.xlu0 %v227, 104
    %v394 = vpop.permute.xlu0 %393
    %395 = vrot.lane.b32.xlu0 %v231, 104
    %v396 = vpop.permute.xlu0 %395
    %397 = vrot.lane.b32.xlu0 %v237, 104
    %v398 = vpop.permute.xlu0 %397
    %399 = vrot.lane.b32.xlu0 %v241, 104
    %v400 = vpop.permute.xlu0 %399
    %401 = vrot.lane.b32.xlu0 %v247, 104
    %v402 = vpop.permute.xlu0 %401
    %403 = vrot.lane.b32.xlu0 %v251, 104
    %v404 = vpop.permute.xlu0 %403
    %405 = vrot.lane.b32.xlu0 %v257, 104
    %v406 = vpop.permute.xlu0 %405
    %407 = vrot.lane.b32.xlu0 %v261, 104
    %v408 = vpop.permute.xlu0 %407
    %v425 = vcombine.low %v187, %v330
    %v426 = vcombine.high %v187, %v330
    %v428 = vunpack.c.l.s4 1983009808
    %v429 = vunpack.c.0.s8 %v428
    %v430 = vlaneseq
    %v431 = vshrl.u32 %v430, 7
    %v432 = vsub.s32 %v429, %v431
    %v433 = vrot.slane %v425, %v432
    %v435 = vunpack.c.l.s4 1983009808
    %v436 = vunpack.c.0.s8 %v435
    %v437 = vlaneseq
    %v438 = vshrl.u32 %v437, 7
    %v439 = vsub.s32 %v436, %v438
    %v440 = vrot.slane %v426, %v439
    %v441 = vcombine.low %v282, %v378
    %v442 = vcombine.high %v282, %v378
    %v444 = vunpack.c.l.s4 1983009808
    %v445 = vunpack.c.0.s8 %v444
    %v446 = vlaneseq
    %v447 = vshrl.u32 %v446, 7
    %v448 = vsub.s32 %v445, %v447
    %v449 = vrot.slane %v441, %v448
    %v451 = vunpack.c.l.s4 1983009808
    %v452 = vunpack.c.0.s8 %v451
    %v453 = vlaneseq
    %v454 = vshrl.u32 %v453, 7
    %v455 = vsub.s32 %v452, %v454
    %v456 = vrot.slane %v442, %v455
    %v457 = vcombine.low %v433, %v449
    %v458 = vcombine.high %v433, %v449
    %v460 = vunpack.c.l.s4 1934713408
    %v461 = vunpack.c.0.s8 %v460
    %v462 = vlaneseq
    %v463 = vshrl.u32 %v462, 7
    %v464 = vsub.s32 %v461, %v463
    %v465 = vrot.slane %v457, %v464
    %v467 = vunpack.c.l.s4 1934713408
    %v468 = vunpack.c.0.s8 %v467
    %v469 = vlaneseq
    %v470 = vshrl.u32 %v469, 7
    %v471 = vsub.s32 %v468, %v470
    %v472 = vrot.slane %v458, %v471
    %v473 = vcombine.low %v440, %v456
    %v474 = vcombine.high %v440, %v456
    %v476 = vunpack.c.l.s4 1934713408
    %v477 = vunpack.c.0.s8 %v476
    %v478 = vlaneseq
    %v479 = vshrl.u32 %v478, 7
    %v480 = vsub.s32 %v477, %v479
    %v481 = vrot.slane %v473, %v480
    %v483 = vunpack.c.l.s4 1934713408
    %v484 = vunpack.c.0.s8 %v483
    %v485 = vlaneseq
    %v486 = vshrl.u32 %v485, 7
    %v487 = vsub.s32 %v484, %v486
    %v488 = vrot.slane %v474, %v487
    %v489 = vcombine.high %v465, 0.0
    %v490 = vcombine.high %v472, 0.0
    %v491 = vcombine.high %v481, 0.0
    %v492 = vcombine.high %v488, 0.0
    %v493 = vcombine.low %v191, %v332
    %v494 = vcombine.high %v191, %v332
    %v496 = vunpack.c.l.s4 1983009808
    %v497 = vunpack.c.0.s8 %v496
    %v498 = vlaneseq
    %v499 = vshrl.u32 %v498, 7
    %v500 = vsub.s32 %v497, %v499
    %v501 = vrot.slane %v493, %v500
    %v503 = vunpack.c.l.s4 1983009808
    %v504 = vunpack.c.0.s8 %v503
    %v505 = vlaneseq
    %v506 = vshrl.u32 %v505, 7
    %v507 = vsub.s32 %v504, %v506
    %v508 = vrot.slane %v494, %v507
    %v509 = vcombine.low %v284, %v380
    %v510 = vcombine.high %v284, %v380
    %v512 = vunpack.c.l.s4 1983009808
    %v513 = vunpack.c.0.s8 %v512
    %v514 = vlaneseq
    %v515 = vshrl.u32 %v514, 7
    %v516 = vsub.s32 %v513, %v515
    %v517 = vrot.slane %v509, %v516
    %v519 = vunpack.c.l.s4 1983009808
    %v520 = vunpack.c.0.s8 %v519
    %v521 = vlaneseq
    %v522 = vshrl.u32 %v521, 7
    %v523 = vsub.s32 %v520, %v522
    %v524 = vrot.slane %v510, %v523
    %v525 = vcombine.low %v501, %v517
    %v526 = vcombine.high %v501, %v517
    %v528 = vunpack.c.l.s4 1934713408
    %v529 = vunpack.c.0.s8 %v528
    %v530 = vlaneseq
    %v531 = vshrl.u32 %v530, 7
    %v532 = vsub.s32 %v529, %v531
    %v533 = vrot.slane %v525, %v532
    %v535 = vunpack.c.l.s4 1934713408
    %v536 = vunpack.c.0.s8 %v535
    %v537 = vlaneseq
    %v538 = vshrl.u32 %v537, 7
    %v539 = vsub.s32 %v536, %v538
    %v540 = vrot.slane %v526, %v539
    %v541 = vcombine.low %v508, %v524
    %v542 = vcombine.high %v508, %v524
    %v544 = vunpack.c.l.s4 1934713408
    %v545 = vunpack.c.0.s8 %v544
    %v546 = vlaneseq
    %v547 = vshrl.u32 %v546, 7
    %v548 = vsub.s32 %v545, %v547
    %v549 = vrot.slane %v541, %v548
    %v551 = vunpack.c.l.s4 1934713408
    %v552 = vunpack.c.0.s8 %v551
    %v553 = vlaneseq
    %v554 = vshrl.u32 %v553, 7
    %v555 = vsub.s32 %v552, %v554
    %v556 = vrot.slane %v542, %v555
    %v557 = vcombine.high %v533, 0.0
    %v558 = vcombine.high %v540, 0.0
    %v559 = vcombine.high %v549, 0.0
    %v560 = vcombine.high %v556, 0.0
    %v561 = vcombine.low %v197, %v334
    %v562 = vcombine.high %v197, %v334
    %v564 = vunpack.c.l.s4 1983009808
    %v565 = vunpack.c.0.s8 %v564
    %v566 = vlaneseq
    %v567 = vshrl.u32 %v566, 7
    %v568 = vsub.s32 %v565, %v567
    %v569 = vrot.slane %v561, %v568
    %v571 = vunpack.c.l.s4 1983009808
    %v572 = vunpack.c.0.s8 %v571
    %v573 = vlaneseq
    %v574 = vshrl.u32 %v573, 7
    %v575 = vsub.s32 %v572, %v574
    %v576 = vrot.slane %v562, %v575
    %v577 = vcombine.low %v286, %v382
    %v578 = vcombine.high %v286, %v382
    %v580 = vunpack.c.l.s4 1983009808
    %v581 = vunpack.c.0.s8 %v580
    %v582 = vlaneseq
    %v583 = vshrl.u32 %v582, 7
    %v584 = vsub.s32 %v581, %v583
    %v585 = vrot.slane %v577, %v584
    %v587 = vunpack.c.l.s4 1983009808
    %v588 = vunpack.c.0.s8 %v587
    %v589 = vlaneseq
    %v590 = vshrl.u32 %v589, 7
    %v591 = vsub.s32 %v588, %v590
    %v592 = vrot.slane %v578, %v591
    %v593 = vcombine.low %v569, %v585
    %v594 = vcombine.high %v569, %v585
    %v596 = vunpack.c.l.s4 1934713408
    %v597 = vunpack.c.0.s8 %v596
    %v598 = vlaneseq
    %v599 = vshrl.u32 %v598, 7
    %v600 = vsub.s32 %v597, %v599
    %v601 = vrot.slane %v593, %v600
    %v603 = vunpack.c.l.s4 1934713408
    %v604 = vunpack.c.0.s8 %v603
    %v605 = vlaneseq
    %v606 = vshrl.u32 %v605, 7
    %v607 = vsub.s32 %v604, %v606
    %v608 = vrot.slane %v594, %v607
    %v609 = vcombine.low %v576, %v592
    %v610 = vcombine.high %v576, %v592
    %v612 = vunpack.c.l.s4 1934713408
    %v613 = vunpack.c.0.s8 %v612
    %v614 = vlaneseq
    %v615 = vshrl.u32 %v614, 7
    %v616 = vsub.s32 %v613, %v615
    %v617 = vrot.slane %v609, %v616
    %v619 = vunpack.c.l.s4 1934713408
    %v620 = vunpack.c.0.s8 %v619
    %v621 = vlaneseq
    %v622 = vshrl.u32 %v621, 7
    %v623 = vsub.s32 %v620, %v622
    %v624 = vrot.slane %v610, %v623
    %v625 = vcombine.high %v601, 0.0
    %v626 = vcombine.high %v608, 0.0
    %v627 = vcombine.high %v617, 0.0
    %v628 = vcombine.high %v624, 0.0
    %v629 = vcombine.low %v201, %v336
    %v630 = vcombine.high %v201, %v336
    %v632 = vunpack.c.l.s4 1983009808
    %v633 = vunpack.c.0.s8 %v632
    %v634 = vlaneseq
    %v635 = vshrl.u32 %v634, 7
    %v636 = vsub.s32 %v633, %v635
    %v637 = vrot.slane %v629, %v636
    %v639 = vunpack.c.l.s4 1983009808
    %v640 = vunpack.c.0.s8 %v639
    %v641 = vlaneseq
    %v642 = vshrl.u32 %v641, 7
    %v643 = vsub.s32 %v640, %v642
    %v644 = vrot.slane %v630, %v643
    %v645 = vcombine.low %v288, %v384
    %v646 = vcombine.high %v288, %v384
    %v648 = vunpack.c.l.s4 1983009808
    %v649 = vunpack.c.0.s8 %v648
    %v650 = vlaneseq
    %v651 = vshrl.u32 %v650, 7
    %v652 = vsub.s32 %v649, %v651
    %v653 = vrot.slane %v645, %v652
    %v655 = vunpack.c.l.s4 1983009808
    %v656 = vunpack.c.0.s8 %v655
    %v657 = vlaneseq
    %v658 = vshrl.u32 %v657, 7
    %v659 = vsub.s32 %v656, %v658
    %v660 = vrot.slane %v646, %v659
    %v661 = vcombine.low %v637, %v653
    %v662 = vcombine.high %v637, %v653
    %v664 = vunpack.c.l.s4 1934713408
    %v665 = vunpack.c.0.s8 %v664
    %v666 = vlaneseq
    %v667 = vshrl.u32 %v666, 7
    %v668 = vsub.s32 %v665, %v667
    %v669 = vrot.slane %v661, %v668
    %v671 = vunpack.c.l.s4 1934713408
    %v672 = vunpack.c.0.s8 %v671
    %v673 = vlaneseq
    %v674 = vshrl.u32 %v673, 7
    %v675 = vsub.s32 %v672, %v674
    %v676 = vrot.slane %v662, %v675
    %v677 = vcombine.low %v644, %v660
    %v678 = vcombine.high %v644, %v660
    %v680 = vunpack.c.l.s4 1934713408
    %v681 = vunpack.c.0.s8 %v680
    %v682 = vlaneseq
    %v683 = vshrl.u32 %v682, 7
    %v684 = vsub.s32 %v681, %v683
    %v685 = vrot.slane %v677, %v684
    %v687 = vunpack.c.l.s4 1934713408
    %v688 = vunpack.c.0.s8 %v687
    %v689 = vlaneseq
    %v690 = vshrl.u32 %v689, 7
    %v691 = vsub.s32 %v688, %v690
    %v692 = vrot.slane %v678, %v691
    %v693 = vcombine.high %v669, 0.0
    %v694 = vcombine.high %v676, 0.0
    %v695 = vcombine.high %v685, 0.0
    %v696 = vcombine.high %v692, 0.0
    %v697 = vcombine.low %v207, %v338
    %v698 = vcombine.high %v207, %v338
    %v700 = vunpack.c.l.s4 1983009808
    %v701 = vunpack.c.0.s8 %v700
    %v702 = vlaneseq
    %v703 = vshrl.u32 %v702, 7
    %v704 = vsub.s32 %v701, %v703
    %v705 = vrot.slane %v697, %v704
    %v707 = vunpack.c.l.s4 1983009808
    %v708 = vunpack.c.0.s8 %v707
    %v709 = vlaneseq
    %v710 = vshrl.u32 %v709, 7
    %v711 = vsub.s32 %v708, %v710
    %v712 = vrot.slane %v698, %v711
    %v713 = vcombine.low %v290, %v386
    %v714 = vcombine.high %v290, %v386
    %v716 = vunpack.c.l.s4 1983009808
    %v717 = vunpack.c.0.s8 %v716
    %v718 = vlaneseq
    %v719 = vshrl.u32 %v718, 7
    %v720 = vsub.s32 %v717, %v719
    %v721 = vrot.slane %v713, %v720
    %v723 = vunpack.c.l.s4 1983009808
    %v724 = vunpack.c.0.s8 %v723
    %v725 = vlaneseq
    %v726 = vshrl.u32 %v725, 7
    %v727 = vsub.s32 %v724, %v726
    %v728 = vrot.slane %v714, %v727
    %v729 = vcombine.low %v705, %v721
    %v730 = vcombine.high %v705, %v721
    %v732 = vunpack.c.l.s4 1934713408
    %v733 = vunpack.c.0.s8 %v732
    %v734 = vlaneseq
    %v735 = vshrl.u32 %v734, 7
    %v736 = vsub.s32 %v733, %v735
    %v737 = vrot.slane %v729, %v736
    %v739 = vunpack.c.l.s4 1934713408
    %v740 = vunpack.c.0.s8 %v739
    %v741 = vlaneseq
    %v742 = vshrl.u32 %v741, 7
    %v743 = vsub.s32 %v740, %v742
    %v744 = vrot.slane %v730, %v743
    %v745 = vcombine.low %v712, %v728
    %v746 = vcombine.high %v712, %v728
    %v748 = vunpack.c.l.s4 1934713408
    %v749 = vunpack.c.0.s8 %v748
    %v750 = vlaneseq
    %v751 = vshrl.u32 %v750, 7
    %v752 = vsub.s32 %v749, %v751
    %v753 = vrot.slane %v745, %v752
    %v755 = vunpack.c.l.s4 1934713408
    %v756 = vunpack.c.0.s8 %v755
    %v757 = vlaneseq
    %v758 = vshrl.u32 %v757, 7
    %v759 = vsub.s32 %v756, %v758
    %v760 = vrot.slane %v746, %v759
    %v761 = vcombine.high %v737, 0.0
    %v762 = vcombine.high %v744, 0.0
    %v763 = vcombine.high %v753, 0.0
    %v764 = vcombine.high %v760, 0.0
    %v765 = vcombine.low %v211, %v340
    %v766 = vcombine.high %v211, %v340
    %v768 = vunpack.c.l.s4 1983009808
    %v769 = vunpack.c.0.s8 %v768
    %v770 = vlaneseq
    %v771 = vshrl.u32 %v770, 7
    %v772 = vsub.s32 %v769, %v771
    %v773 = vrot.slane %v765, %v772
    %v775 = vunpack.c.l.s4 1983009808
    %v776 = vunpack.c.0.s8 %v775
    %v777 = vlaneseq
    %v778 = vshrl.u32 %v777, 7
    %v779 = vsub.s32 %v776, %v778
    %v780 = vrot.slane %v766, %v779
    %v781 = vcombine.low %v292, %v388
    %v782 = vcombine.high %v292, %v388
    %v784 = vunpack.c.l.s4 1983009808
    %v785 = vunpack.c.0.s8 %v784
    %v786 = vlaneseq
    %v787 = vshrl.u32 %v786, 7
    %v788 = vsub.s32 %v785, %v787
    %v789 = vrot.slane %v781, %v788
    %v791 = vunpack.c.l.s4 1983009808
    %v792 = vunpack.c.0.s8 %v791
    %v793 = vlaneseq
    %v794 = vshrl.u32 %v793, 7
    %v795 = vsub.s32 %v792, %v794
    %v796 = vrot.slane %v782, %v795
    %v797 = vcombine.low %v773, %v789
    %v798 = vcombine.high %v773, %v789
    %v800 = vunpack.c.l.s4 1934713408
    %v801 = vunpack.c.0.s8 %v800
    %v802 = vlaneseq
    %v803 = vshrl.u32 %v802, 7
    %v804 = vsub.s32 %v801, %v803
    %v805 = vrot.slane %v797, %v804
    %v807 = vunpack.c.l.s4 1934713408
    %v808 = vunpack.c.0.s8 %v807
    %v809 = vlaneseq
    %v810 = vshrl.u32 %v809, 7
    %v811 = vsub.s32 %v808, %v810
    %v812 = vrot.slane %v798, %v811
    %v813 = vcombine.low %v780, %v796
    %v814 = vcombine.high %v780, %v796
    %v816 = vunpack.c.l.s4 1934713408
    %v817 = vunpack.c.0.s8 %v816
    %v818 = vlaneseq
    %v819 = vshrl.u32 %v818, 7
    %v820 = vsub.s32 %v817, %v819
    %v821 = vrot.slane %v813, %v820
    %v823 = vunpack.c.l.s4 1934713408
    %v824 = vunpack.c.0.s8 %v823
    %v825 = vlaneseq
    %v826 = vshrl.u32 %v825, 7
    %v827 = vsub.s32 %v824, %v826
    %v828 = vrot.slane %v814, %v827
    %v829 = vcombine.high %v805, 0.0
    %v830 = vcombine.high %v812, 0.0
    %v831 = vcombine.high %v821, 0.0
    %v832 = vcombine.high %v828, 0.0
    %v833 = vcombine.low %v217, %v342
    %v834 = vcombine.high %v217, %v342
    %v836 = vunpack.c.l.s4 1983009808
    %v837 = vunpack.c.0.s8 %v836
    %v838 = vlaneseq
    %v839 = vshrl.u32 %v838, 7
    %v840 = vsub.s32 %v837, %v839
    %v841 = vrot.slane %v833, %v840
    %v843 = vunpack.c.l.s4 1983009808
    %v844 = vunpack.c.0.s8 %v843
    %v845 = vlaneseq
    %v846 = vshrl.u32 %v845, 7
    %v847 = vsub.s32 %v844, %v846
    %v848 = vrot.slane %v834, %v847
    %v849 = vcombine.low %v294, %v390
    %v850 = vcombine.high %v294, %v390
    %v852 = vunpack.c.l.s4 1983009808
    %v853 = vunpack.c.0.s8 %v852
    %v854 = vlaneseq
    %v855 = vshrl.u32 %v854, 7
    %v856 = vsub.s32 %v853, %v855
    %v857 = vrot.slane %v849, %v856
    %v859 = vunpack.c.l.s4 1983009808
    %v860 = vunpack.c.0.s8 %v859
    %v861 = vlaneseq
    %v862 = vshrl.u32 %v861, 7
    %v863 = vsub.s32 %v860, %v862
    %v864 = vrot.slane %v850, %v863
    %v865 = vcombine.low %v841, %v857
    %v866 = vcombine.high %v841, %v857
    %v868 = vunpack.c.l.s4 1934713408
    %v869 = vunpack.c.0.s8 %v868
    %v870 = vlaneseq
    %v871 = vshrl.u32 %v870, 7
    %v872 = vsub.s32 %v869, %v871
    %v873 = vrot.slane %v865, %v872
    %v875 = vunpack.c.l.s4 1934713408
    %v876 = vunpack.c.0.s8 %v875
    %v877 = vlaneseq
    %v878 = vshrl.u32 %v877, 7
    %v879 = vsub.s32 %v876, %v878
    %v880 = vrot.slane %v866, %v879
    %v881 = vcombine.low %v848, %v864
    %v882 = vcombine.high %v848, %v864
    %v884 = vunpack.c.l.s4 1934713408
    %v885 = vunpack.c.0.s8 %v884
    %v886 = vlaneseq
    %v887 = vshrl.u32 %v886, 7
    %v888 = vsub.s32 %v885, %v887
    %v889 = vrot.slane %v881, %v888
    %v891 = vunpack.c.l.s4 1934713408
    %v892 = vunpack.c.0.s8 %v891
    %v893 = vlaneseq
    %v894 = vshrl.u32 %v893, 7
    %v895 = vsub.s32 %v892, %v894
    %v896 = vrot.slane %v882, %v895
    %v897 = vcombine.high %v873, 0.0
    %v898 = vcombine.high %v880, 0.0
    %v899 = vcombine.high %v889, 0.0
    %v900 = vcombine.high %v896, 0.0
    %v901 = vcombine.low %v221, %v344
    %v902 = vcombine.high %v221, %v344
    %v904 = vunpack.c.l.s4 1983009808
    %v905 = vunpack.c.0.s8 %v904
    %v906 = vlaneseq
    %v907 = vshrl.u32 %v906, 7
    %v908 = vsub.s32 %v905, %v907
    %v909 = vrot.slane %v901, %v908
    %v911 = vunpack.c.l.s4 1983009808
    %v912 = vunpack.c.0.s8 %v911
    %v913 = vlaneseq
    %v914 = vshrl.u32 %v913, 7
    %v915 = vsub.s32 %v912, %v914
    %v916 = vrot.slane %v902, %v915
    %v917 = vcombine.low %v296, %v392
    %v918 = vcombine.high %v296, %v392
    %v920 = vunpack.c.l.s4 1983009808
    %v921 = vunpack.c.0.s8 %v920
    %v922 = vlaneseq
    %v923 = vshrl.u32 %v922, 7
    %v924 = vsub.s32 %v921, %v923
    %v925 = vrot.slane %v917, %v924
    %v927 = vunpack.c.l.s4 1983009808
    %v928 = vunpack.c.0.s8 %v927
    %v929 = vlaneseq
    %v930 = vshrl.u32 %v929, 7
    %v931 = vsub.s32 %v928, %v930
    %v932 = vrot.slane %v918, %v931
    %v933 = vcombine.low %v909, %v925
    %v934 = vcombine.high %v909, %v925
    %v936 = vunpack.c.l.s4 1934713408
    %v937 = vunpack.c.0.s8 %v936
    %v938 = vlaneseq
    %v939 = vshrl.u32 %v938, 7
    %v940 = vsub.s32 %v937, %v939
    %v941 = vrot.slane %v933, %v940
    %v943 = vunpack.c.l.s4 1934713408
    %v944 = vunpack.c.0.s8 %v943
    %v945 = vlaneseq
    %v946 = vshrl.u32 %v945, 7
    %v947 = vsub.s32 %v944, %v946
    %v948 = vrot.slane %v934, %v947
    %v949 = vcombine.low %v916, %v932
    %v950 = vcombine.high %v916, %v932
    %v952 = vunpack.c.l.s4 1934713408
    %v953 = vunpack.c.0.s8 %v952
    %v954 = vlaneseq
    %v955 = vshrl.u32 %v954, 7
    %v956 = vsub.s32 %v953, %v955
    %v957 = vrot.slane %v949, %v956
    %v959 = vunpack.c.l.s4 1934713408
    %v960 = vunpack.c.0.s8 %v959
    %v961 = vlaneseq
    %v962 = vshrl.u32 %v961, 7
    %v963 = vsub.s32 %v960, %v962
    %v964 = vrot.slane %v950, %v963
    %v965 = vcombine.high %v941, 0.0
    %v966 = vcombine.high %v948, 0.0
    %v967 = vcombine.high %v957, 0.0
    %v968 = vcombine.high %v964, 0.0
    %v969 = vcombine.low %v227, %v346
    %v970 = vcombine.high %v227, %v346
    %v972 = vunpack.c.l.s4 1983009808
    %v973 = vunpack.c.0.s8 %v972
    %v974 = vlaneseq
    %v975 = vshrl.u32 %v974, 7
    %v976 = vsub.s32 %v973, %v975
    %v977 = vrot.slane %v969, %v976
    %v979 = vunpack.c.l.s4 1983009808
    %v980 = vunpack.c.0.s8 %v979
    %v981 = vlaneseq
    %v982 = vshrl.u32 %v981, 7
    %v983 = vsub.s32 %v980, %v982
    %v984 = vrot.slane %v970, %v983
    %v985 = vcombine.low %v298, %v394
    %v986 = vcombine.high %v298, %v394
    %v988 = vunpack.c.l.s4 1983009808
    %v989 = vunpack.c.0.s8 %v988
    %v990 = vlaneseq
    %v991 = vshrl.u32 %v990, 7
    %v992 = vsub.s32 %v989, %v991
    %v993 = vrot.slane %v985, %v992
    %v995 = vunpack.c.l.s4 1983009808
    %v996 = vunpack.c.0.s8 %v995
    %v997 = vlaneseq
    %v998 = vshrl.u32 %v997, 7
    %v999 = vsub.s32 %v996, %v998
    %v1000 = vrot.slane %v986, %v999
    %v1001 = vcombine.low %v977, %v993
    %v1002 = vcombine.high %v977, %v993
    %v1004 = vunpack.c.l.s4 1934713408
    %v1005 = vunpack.c.0.s8 %v1004
    %v1006 = vlaneseq
    %v1007 = vshrl.u32 %v1006, 7
    %v1008 = vsub.s32 %v1005, %v1007
    %v1009 = vrot.slane %v1001, %v1008
    %v1011 = vunpack.c.l.s4 1934713408
    %v1012 = vunpack.c.0.s8 %v1011
    %v1013 = vlaneseq
    %v1014 = vshrl.u32 %v1013, 7
    %v1015 = vsub.s32 %v1012, %v1014
    %v1016 = vrot.slane %v1002, %v1015
    %v1017 = vcombine.low %v984, %v1000
    %v1018 = vcombine.high %v984, %v1000
    %v1020 = vunpack.c.l.s4 1934713408
    %v1021 = vunpack.c.0.s8 %v1020
    %v1022 = vlaneseq
    %v1023 = vshrl.u32 %v1022, 7
    %v1024 = vsub.s32 %v1021, %v1023
    %v1025 = vrot.slane %v1017, %v1024
    %v1027 = vunpack.c.l.s4 1934713408
    %v1028 = vunpack.c.0.s8 %v1027
    %v1029 = vlaneseq
    %v1030 = vshrl.u32 %v1029, 7
    %v1031 = vsub.s32 %v1028, %v1030
    %v1032 = vrot.slane %v1018, %v1031
    %v1033 = vcombine.high %v1009, 0.0
    %v1034 = vcombine.high %v1016, 0.0
    %v1035 = vcombine.high %v1025, 0.0
    %v1036 = vcombine.high %v1032, 0.0
    %v1037 = vcombine.low %v231, %v348
    %v1038 = vcombine.high %v231, %v348
    %v1040 = vunpack.c.l.s4 1983009808
    %v1041 = vunpack.c.0.s8 %v1040
    %v1042 = vlaneseq
    %v1043 = vshrl.u32 %v1042, 7
    %v1044 = vsub.s32 %v1041, %v1043
    %v1045 = vrot.slane %v1037, %v1044
    %v1047 = vunpack.c.l.s4 1983009808
    %v1048 = vunpack.c.0.s8 %v1047
    %v1049 = vlaneseq
    %v1050 = vshrl.u32 %v1049, 7
    %v1051 = vsub.s32 %v1048, %v1050
    %v1052 = vrot.slane %v1038, %v1051
    %v1053 = vcombine.low %v300, %v396
    %v1054 = vcombine.high %v300, %v396
    %v1056 = vunpack.c.l.s4 1983009808
    %v1057 = vunpack.c.0.s8 %v1056
    %v1058 = vlaneseq
    %v1059 = vshrl.u32 %v1058, 7
    %v1060 = vsub.s32 %v1057, %v1059
    %v1061 = vrot.slane %v1053, %v1060
    %v1063 = vunpack.c.l.s4 1983009808
    %v1064 = vunpack.c.0.s8 %v1063
    %v1065 = vlaneseq
    %v1066 = vshrl.u32 %v1065, 7
    %v1067 = vsub.s32 %v1064, %v1066
    %v1068 = vrot.slane %v1054, %v1067
    %v1069 = vcombine.low %v1045, %v1061
    %v1070 = vcombine.high %v1045, %v1061
    %v1072 = vunpack.c.l.s4 1934713408
    %v1073 = vunpack.c.0.s8 %v1072
    %v1074 = vlaneseq
    %v1075 = vshrl.u32 %v1074, 7
    %v1076 = vsub.s32 %v1073, %v1075
    %v1077 = vrot.slane %v1069, %v1076
    %v1079 = vunpack.c.l.s4 1934713408
    %v1080 = vunpack.c.0.s8 %v1079
    %v1081 = vlaneseq
    %v1082 = vshrl.u32 %v1081, 7
    %v1083 = vsub.s32 %v1080, %v1082
    %v1084 = vrot.slane %v1070, %v1083
    %v1085 = vcombine.low %v1052, %v1068
    %v1086 = vcombine.high %v1052, %v1068
    %v1088 = vunpack.c.l.s4 1934713408
    %v1089 = vunpack.c.0.s8 %v1088
    %v1090 = vlaneseq
    %v1091 = vshrl.u32 %v1090, 7
    %v1092 = vsub.s32 %v1089, %v1091
    %v1093 = vrot.slane %v1085, %v1092
    %v1095 = vunpack.c.l.s4 1934713408
    %v1096 = vunpack.c.0.s8 %v1095
    %v1097 = vlaneseq
    %v1098 = vshrl.u32 %v1097, 7
    %v1099 = vsub.s32 %v1096, %v1098
    %v1100 = vrot.slane %v1086, %v1099
    %v1101 = vcombine.high %v1077, 0.0
    %v1102 = vcombine.high %v1084, 0.0
    %v1103 = vcombine.high %v1093, 0.0
    %v1104 = vcombine.high %v1100, 0.0
    %v1105 = vcombine.low %v237, %v350
    %v1106 = vcombine.high %v237, %v350
    %v1108 = vunpack.c.l.s4 1983009808
    %v1109 = vunpack.c.0.s8 %v1108
    %v1110 = vlaneseq
    %v1111 = vshrl.u32 %v1110, 7
    %v1112 = vsub.s32 %v1109, %v1111
    %v1113 = vrot.slane %v1105, %v1112
    %v1115 = vunpack.c.l.s4 1983009808
    %v1116 = vunpack.c.0.s8 %v1115
    %v1117 = vlaneseq
    %v1118 = vshrl.u32 %v1117, 7
    %v1119 = vsub.s32 %v1116, %v1118
    %v1120 = vrot.slane %v1106, %v1119
    %v1121 = vcombine.low %v302, %v398
    %v1122 = vcombine.high %v302, %v398
    %v1124 = vunpack.c.l.s4 1983009808
    %v1125 = vunpack.c.0.s8 %v1124
    %v1126 = vlaneseq
    %v1127 = vshrl.u32 %v1126, 7
    %v1128 = vsub.s32 %v1125, %v1127
    %v1129 = vrot.slane %v1121, %v1128
    %v1131 = vunpack.c.l.s4 1983009808
    %v1132 = vunpack.c.0.s8 %v1131
    %v1133 = vlaneseq
    %v1134 = vshrl.u32 %v1133, 7
    %v1135 = vsub.s32 %v1132, %v1134
    %v1136 = vrot.slane %v1122, %v1135
    %v1137 = vcombine.low %v1113, %v1129
    %v1138 = vcombine.high %v1113, %v1129
    %v1140 = vunpack.c.l.s4 1934713408
    %v1141 = vunpack.c.0.s8 %v1140
    %v1142 = vlaneseq
    %v1143 = vshrl.u32 %v1142, 7
    %v1144 = vsub.s32 %v1141, %v1143
    %v1145 = vrot.slane %v1137, %v1144
    %v1147 = vunpack.c.l.s4 1934713408
    %v1148 = vunpack.c.0.s8 %v1147
    %v1149 = vlaneseq
    %v1150 = vshrl.u32 %v1149, 7
    %v1151 = vsub.s32 %v1148, %v1150
    %v1152 = vrot.slane %v1138, %v1151
    %v1153 = vcombine.low %v1120, %v1136
    %v1154 = vcombine.high %v1120, %v1136
    %v1156 = vunpack.c.l.s4 1934713408
    %v1157 = vunpack.c.0.s8 %v1156
    %v1158 = vlaneseq
    %v1159 = vshrl.u32 %v1158, 7
    %v1160 = vsub.s32 %v1157, %v1159
    %v1161 = vrot.slane %v1153, %v1160
    %v1163 = vunpack.c.l.s4 1934713408
    %v1164 = vunpack.c.0.s8 %v1163
    %v1165 = vlaneseq
    %v1166 = vshrl.u32 %v1165, 7
    %v1167 = vsub.s32 %v1164, %v1166
    %v1168 = vrot.slane %v1154, %v1167
    %v1169 = vcombine.high %v1145, 0.0
    %v1170 = vcombine.high %v1152, 0.0
    %v1171 = vcombine.high %v1161, 0.0
    %v1172 = vcombine.high %v1168, 0.0
    %v1173 = vcombine.low %v241, %v352
    %v1174 = vcombine.high %v241, %v352
    %v1176 = vunpack.c.l.s4 1983009808
    %v1177 = vunpack.c.0.s8 %v1176
    %v1178 = vlaneseq
    %v1179 = vshrl.u32 %v1178, 7
    %v1180 = vsub.s32 %v1177, %v1179
    %v1181 = vrot.slane %v1173, %v1180
    %v1183 = vunpack.c.l.s4 1983009808
    %v1184 = vunpack.c.0.s8 %v1183
    %v1185 = vlaneseq
    %v1186 = vshrl.u32 %v1185, 7
    %v1187 = vsub.s32 %v1184, %v1186
    %v1188 = vrot.slane %v1174, %v1187
    %v1189 = vcombine.low %v304, %v400
    %v1190 = vcombine.high %v304, %v400
    %v1192 = vunpack.c.l.s4 1983009808
    %v1193 = vunpack.c.0.s8 %v1192
    %v1194 = vlaneseq
    %v1195 = vshrl.u32 %v1194, 7
    %v1196 = vsub.s32 %v1193, %v1195
    %v1197 = vrot.slane %v1189, %v1196
    %v1199 = vunpack.c.l.s4 1983009808
    %v1200 = vunpack.c.0.s8 %v1199
    %v1201 = vlaneseq
    %v1202 = vshrl.u32 %v1201, 7
    %v1203 = vsub.s32 %v1200, %v1202
    %v1204 = vrot.slane %v1190, %v1203
    %v1205 = vcombine.low %v1181, %v1197
    %v1206 = vcombine.high %v1181, %v1197
    %v1208 = vunpack.c.l.s4 1934713408
    %v1209 = vunpack.c.0.s8 %v1208
    %v1210 = vlaneseq
    %v1211 = vshrl.u32 %v1210, 7
    %v1212 = vsub.s32 %v1209, %v1211
    %v1213 = vrot.slane %v1205, %v1212
    %v1215 = vunpack.c.l.s4 1934713408
    %v1216 = vunpack.c.0.s8 %v1215
    %v1217 = vlaneseq
    %v1218 = vshrl.u32 %v1217, 7
    %v1219 = vsub.s32 %v1216, %v1218
    %v1220 = vrot.slane %v1206, %v1219
    %v1221 = vcombine.low %v1188, %v1204
    %v1222 = vcombine.high %v1188, %v1204
    %v1224 = vunpack.c.l.s4 1934713408
    %v1225 = vunpack.c.0.s8 %v1224
    %v1226 = vlaneseq
    %v1227 = vshrl.u32 %v1226, 7
    %v1228 = vsub.s32 %v1225, %v1227
    %v1229 = vrot.slane %v1221, %v1228
    %v1231 = vunpack.c.l.s4 1934713408
    %v1232 = vunpack.c.0.s8 %v1231
    %v1233 = vlaneseq
    %v1234 = vshrl.u32 %v1233, 7
    %v1235 = vsub.s32 %v1232, %v1234
    %v1236 = vrot.slane %v1222, %v1235
    %v1237 = vcombine.high %v1213, 0.0
    %v1238 = vcombine.high %v1220, 0.0
    %v1239 = vcombine.high %v1229, 0.0
    %v1240 = vcombine.high %v1236, 0.0
    %v1241 = vcombine.low %v247, %v354
    %v1242 = vcombine.high %v247, %v354
    %v1244 = vunpack.c.l.s4 1983009808
    %v1245 = vunpack.c.0.s8 %v1244
    %v1246 = vlaneseq
    %v1247 = vshrl.u32 %v1246, 7
    %v1248 = vsub.s32 %v1245, %v1247
    %v1249 = vrot.slane %v1241, %v1248
    %v1251 = vunpack.c.l.s4 1983009808
    %v1252 = vunpack.c.0.s8 %v1251
    %v1253 = vlaneseq
    %v1254 = vshrl.u32 %v1253, 7
    %v1255 = vsub.s32 %v1252, %v1254
    %v1256 = vrot.slane %v1242, %v1255
    %v1257 = vcombine.low %v306, %v402
    %v1258 = vcombine.high %v306, %v402
    %v1260 = vunpack.c.l.s4 1983009808
    %v1261 = vunpack.c.0.s8 %v1260
    %v1262 = vlaneseq
    %v1263 = vshrl.u32 %v1262, 7
    %v1264 = vsub.s32 %v1261, %v1263
    %v1265 = vrot.slane %v1257, %v1264
    %v1267 = vunpack.c.l.s4 1983009808
    %v1268 = vunpack.c.0.s8 %v1267
    %v1269 = vlaneseq
    %v1270 = vshrl.u32 %v1269, 7
    %v1271 = vsub.s32 %v1268, %v1270
    %v1272 = vrot.slane %v1258, %v1271
    %v1273 = vcombine.low %v1249, %v1265
    %v1274 = vcombine.high %v1249, %v1265
    %v1276 = vunpack.c.l.s4 1934713408
    %v1277 = vunpack.c.0.s8 %v1276
    %v1278 = vlaneseq
    %v1279 = vshrl.u32 %v1278, 7
    %v1280 = vsub.s32 %v1277, %v1279
    %v1281 = vrot.slane %v1273, %v1280
    %v1283 = vunpack.c.l.s4 1934713408
    %v1284 = vunpack.c.0.s8 %v1283
    %v1285 = vlaneseq
    %v1286 = vshrl.u32 %v1285, 7
    %v1287 = vsub.s32 %v1284, %v1286
    %v1288 = vrot.slane %v1274, %v1287
    %v1289 = vcombine.low %v1256, %v1272
    %v1290 = vcombine.high %v1256, %v1272
    %v1292 = vunpack.c.l.s4 1934713408
    %v1293 = vunpack.c.0.s8 %v1292
    %v1294 = vlaneseq
    %v1295 = vshrl.u32 %v1294, 7
    %v1296 = vsub.s32 %v1293, %v1295
    %v1297 = vrot.slane %v1289, %v1296
    %v1299 = vunpack.c.l.s4 1934713408
    %v1300 = vunpack.c.0.s8 %v1299
    %v1301 = vlaneseq
    %v1302 = vshrl.u32 %v1301, 7
    %v1303 = vsub.s32 %v1300, %v1302
    %v1304 = vrot.slane %v1290, %v1303
    %v1305 = vcombine.high %v1281, 0.0
    %v1306 = vcombine.high %v1288, 0.0
    %v1307 = vcombine.high %v1297, 0.0
    %v1308 = vcombine.high %v1304, 0.0
    %v1309 = vcombine.low %v251, %v356
    %v1310 = vcombine.high %v251, %v356
    %v1312 = vunpack.c.l.s4 1983009808
    %v1313 = vunpack.c.0.s8 %v1312
    %v1314 = vlaneseq
    %v1315 = vshrl.u32 %v1314, 7
    %v1316 = vsub.s32 %v1313, %v1315
    %v1317 = vrot.slane %v1309, %v1316
    %v1319 = vunpack.c.l.s4 1983009808
    %v1320 = vunpack.c.0.s8 %v1319
    %v1321 = vlaneseq
    %v1322 = vshrl.u32 %v1321, 7
    %v1323 = vsub.s32 %v1320, %v1322
    %v1324 = vrot.slane %v1310, %v1323
    %v1325 = vcombine.low %v308, %v404
    %v1326 = vcombine.high %v308, %v404
    %v1328 = vunpack.c.l.s4 1983009808
    %v1329 = vunpack.c.0.s8 %v1328
    %v1330 = vlaneseq
    %v1331 = vshrl.u32 %v1330, 7
    %v1332 = vsub.s32 %v1329, %v1331
    %v1333 = vrot.slane %v1325, %v1332
    %v1335 = vunpack.c.l.s4 1983009808
    %v1336 = vunpack.c.0.s8 %v1335
    %v1337 = vlaneseq
    %v1338 = vshrl.u32 %v1337, 7
    %v1339 = vsub.s32 %v1336, %v1338
    %v1340 = vrot.slane %v1326, %v1339
    %v1341 = vcombine.low %v1317, %v1333
    %v1342 = vcombine.high %v1317, %v1333
    %v1344 = vunpack.c.l.s4 1934713408
    %v1345 = vunpack.c.0.s8 %v1344
    %v1346 = vlaneseq
    %v1347 = vshrl.u32 %v1346, 7
    %v1348 = vsub.s32 %v1345, %v1347
    %v1349 = vrot.slane %v1341, %v1348
    %v1351 = vunpack.c.l.s4 1934713408
    %v1352 = vunpack.c.0.s8 %v1351
    %v1353 = vlaneseq
    %v1354 = vshrl.u32 %v1353, 7
    %v1355 = vsub.s32 %v1352, %v1354
    %v1356 = vrot.slane %v1342, %v1355
    %v1357 = vcombine.low %v1324, %v1340
    %v1358 = vcombine.high %v1324, %v1340
    %v1360 = vunpack.c.l.s4 1934713408
    %v1361 = vunpack.c.0.s8 %v1360
    %v1362 = vlaneseq
    %v1363 = vshrl.u32 %v1362, 7
    %v1364 = vsub.s32 %v1361, %v1363
    %v1365 = vrot.slane %v1357, %v1364
    %v1367 = vunpack.c.l.s4 1934713408
    %v1368 = vunpack.c.0.s8 %v1367
    %v1369 = vlaneseq
    %v1370 = vshrl.u32 %v1369, 7
    %v1371 = vsub.s32 %v1368, %v1370
    %v1372 = vrot.slane %v1358, %v1371
    %v1373 = vcombine.high %v1349, 0.0
    %v1374 = vcombine.high %v1356, 0.0
    %v1375 = vcombine.high %v1365, 0.0
    %v1376 = vcombine.high %v1372, 0.0
    %v1377 = vcombine.low %v257, %v358
    %v1378 = vcombine.high %v257, %v358
    %v1380 = vunpack.c.l.s4 1983009808
    %v1381 = vunpack.c.0.s8 %v1380
    %v1382 = vlaneseq
    %v1383 = vshrl.u32 %v1382, 7
    %v1384 = vsub.s32 %v1381, %v1383
    %v1385 = vrot.slane %v1377, %v1384
    %v1387 = vunpack.c.l.s4 1983009808
    %v1388 = vunpack.c.0.s8 %v1387
    %v1389 = vlaneseq
    %v1390 = vshrl.u32 %v1389, 7
    %v1391 = vsub.s32 %v1388, %v1390
    %v1392 = vrot.slane %v1378, %v1391
    %v1393 = vcombine.low %v310, %v406
    %v1394 = vcombine.high %v310, %v406
    %v1396 = vunpack.c.l.s4 1983009808
    %v1397 = vunpack.c.0.s8 %v1396
    %v1398 = vlaneseq
    %v1399 = vshrl.u32 %v1398, 7
    %v1400 = vsub.s32 %v1397, %v1399
    %v1401 = vrot.slane %v1393, %v1400
    %v1403 = vunpack.c.l.s4 1983009808
    %v1404 = vunpack.c.0.s8 %v1403
    %v1405 = vlaneseq
    %v1406 = vshrl.u32 %v1405, 7
    %v1407 = vsub.s32 %v1404, %v1406
    %v1408 = vrot.slane %v1394, %v1407
    %v1409 = vcombine.low %v1385, %v1401
    %v1410 = vcombine.high %v1385, %v1401
    %v1412 = vunpack.c.l.s4 1934713408
    %v1413 = vunpack.c.0.s8 %v1412
    %v1414 = vlaneseq
    %v1415 = vshrl.u32 %v1414, 7
    %v1416 = vsub.s32 %v1413, %v1415
    %v1417 = vrot.slane %v1409, %v1416
    %v1419 = vunpack.c.l.s4 1934713408
    %v1420 = vunpack.c.0.s8 %v1419
    %v1421 = vlaneseq
    %v1422 = vshrl.u32 %v1421, 7
    %v1423 = vsub.s32 %v1420, %v1422
    %v1424 = vrot.slane %v1410, %v1423
    %v1425 = vcombine.low %v1392, %v1408
    %v1426 = vcombine.high %v1392, %v1408
    %v1428 = vunpack.c.l.s4 1934713408
    %v1429 = vunpack.c.0.s8 %v1428
    %v1430 = vlaneseq
    %v1431 = vshrl.u32 %v1430, 7
    %v1432 = vsub.s32 %v1429, %v1431
    %v1433 = vrot.slane %v1425, %v1432
    %v1435 = vunpack.c.l.s4 1934713408
    %v1436 = vunpack.c.0.s8 %v1435
    %v1437 = vlaneseq
    %v1438 = vshrl.u32 %v1437, 7
    %v1439 = vsub.s32 %v1436, %v1438
    %v1440 = vrot.slane %v1426, %v1439
    %v1441 = vcombine.high %v1417, 0.0
    %v1442 = vcombine.high %v1424, 0.0
    %v1443 = vcombine.high %v1433, 0.0
    %v1444 = vcombine.high %v1440, 0.0
    %v1445 = vcombine.low %v261, %v360
    %v1446 = vcombine.high %v261, %v360
    %v1448 = vunpack.c.l.s4 1983009808
    %v1449 = vunpack.c.0.s8 %v1448
    %v1450 = vlaneseq
    %v1451 = vshrl.u32 %v1450, 7
    %v1452 = vsub.s32 %v1449, %v1451
    %v1453 = vrot.slane %v1445, %v1452
    %v1455 = vunpack.c.l.s4 1983009808
    %v1456 = vunpack.c.0.s8 %v1455
    %v1457 = vlaneseq
    %v1458 = vshrl.u32 %v1457, 7
    %v1459 = vsub.s32 %v1456, %v1458
    %v1460 = vrot.slane %v1446, %v1459
    %v1461 = vcombine.low %v312, %v408
    %v1462 = vcombine.high %v312, %v408
    %v1464 = vunpack.c.l.s4 1983009808
    %v1465 = vunpack.c.0.s8 %v1464
    %v1466 = vlaneseq
    %v1467 = vshrl.u32 %v1466, 7
    %v1468 = vsub.s32 %v1465, %v1467
    %v1469 = vrot.slane %v1461, %v1468
    %v1471 = vunpack.c.l.s4 1983009808
    %v1472 = vunpack.c.0.s8 %v1471
    %v1473 = vlaneseq
    %v1474 = vshrl.u32 %v1473, 7
    %v1475 = vsub.s32 %v1472, %v1474
    %v1476 = vrot.slane %v1462, %v1475
    %v1477 = vcombine.low %v1453, %v1469
    %v1478 = vcombine.high %v1453, %v1469
    %v1480 = vunpack.c.l.s4 1934713408
    %v1481 = vunpack.c.0.s8 %v1480
    %v1482 = vlaneseq
    %v1483 = vshrl.u32 %v1482, 7
    %v1484 = vsub.s32 %v1481, %v1483
    %v1485 = vrot.slane %v1477, %v1484
    %v1487 = vunpack.c.l.s4 1934713408
    %v1488 = vunpack.c.0.s8 %v1487
    %v1489 = vlaneseq
    %v1490 = vshrl.u32 %v1489, 7
    %v1491 = vsub.s32 %v1488, %v1490
    %v1492 = vrot.slane %v1478, %v1491
    %v1493 = vcombine.low %v1460, %v1476
    %v1494 = vcombine.high %v1460, %v1476
    %v1496 = vunpack.c.l.s4 1934713408
    %v1497 = vunpack.c.0.s8 %v1496
    %v1498 = vlaneseq
    %v1499 = vshrl.u32 %v1498, 7
    %v1500 = vsub.s32 %v1497, %v1499
    %v1501 = vrot.slane %v1493, %v1500
    %v1503 = vunpack.c.l.s4 1934713408
    %v1504 = vunpack.c.0.s8 %v1503
    %v1505 = vlaneseq
    %v1506 = vshrl.u32 %v1505, 7
    %v1507 = vsub.s32 %v1504, %v1506
    %v1508 = vrot.slane %v1494, %v1507
    %v1509 = vcombine.high %v1485, 0.0
    %v1510 = vcombine.high %v1492, 0.0
    %v1511 = vcombine.high %v1501, 0.0
    %v1512 = vcombine.high %v1508, 0.0
    %v1513 = vcombine.low %v465, %v472
    %v1515 = vunpack.c.l.s4 1983009808
    %v1516 = vunpack.c.0.s8 %v1515
    %v1517 = vlaneseq
    %v1518 = vshrl.u32 %v1517, 7
    %v1519 = vsub.s32 %v1516, %v1518
    %v1520 = vrot.slane %v1513, %v1519
    %v1521 = vcombine.low %v489, %v490
    %v1523 = vunpack.c.l.s4 1983009808
    %v1524 = vunpack.c.0.s8 %v1523
    %v1525 = vlaneseq
    %v1526 = vshrl.u32 %v1525, 7
    %v1527 = vsub.s32 %v1524, %v1526
    %v1528 = vrot.slane %v1521, %v1527
    %v1529 = vcombine.low %v481, %v488
    %v1531 = vunpack.c.l.s4 1983009808
    %v1532 = vunpack.c.0.s8 %v1531
    %v1533 = vlaneseq
    %v1534 = vshrl.u32 %v1533, 7
    %v1535 = vsub.s32 %v1532, %v1534
    %v1536 = vrot.slane %v1529, %v1535
    %v1537 = vcombine.low %v491, %v492
    %v1539 = vunpack.c.l.s4 1983009808
    %v1540 = vunpack.c.0.s8 %v1539
    %v1541 = vlaneseq
    %v1542 = vshrl.u32 %v1541, 7
    %v1543 = vsub.s32 %v1540, %v1542
    %v1544 = vrot.slane %v1537, %v1543
    %v1545 = vcombine.low %v1520, %v1528
    %v1546 = vcombine.high %v1520, %v1528
    %v1548 = vunpack.c.l.s4 1934713408
    %v1549 = vunpack.c.0.s8 %v1548
    %v1550 = vlaneseq
    %v1551 = vshrl.u32 %v1550, 7
    %v1552 = vsub.s32 %v1549, %v1551
    %v1553 = vrot.slane %v1545, %v1552
    %v1555 = vunpack.c.l.s4 1934713408
    %v1556 = vunpack.c.0.s8 %v1555
    %v1557 = vlaneseq
    %v1558 = vshrl.u32 %v1557, 7
    %v1559 = vsub.s32 %v1556, %v1558
    %v1560 = vrot.slane %v1546, %v1559
    %v1561 = vcombine.low %v1536, %v1544
    %v1562 = vcombine.high %v1536, %v1544
    %v1564 = vunpack.c.l.s4 1934713408
    %v1565 = vunpack.c.0.s8 %v1564
    %v1566 = vlaneseq
    %v1567 = vshrl.u32 %v1566, 7
    %v1568 = vsub.s32 %v1565, %v1567
    %v1569 = vrot.slane %v1561, %v1568
    %v1571 = vunpack.c.l.s4 1934713408
    %v1572 = vunpack.c.0.s8 %v1571
    %v1573 = vlaneseq
    %v1574 = vshrl.u32 %v1573, 7
    %v1575 = vsub.s32 %v1572, %v1574
    %v1576 = vrot.slane %v1562, %v1575
    %v1577 = vcombine.low %v1553, %v1569
    %v1578 = vcombine.high %v1553, %v1569
    %v1579 = vcombine.low %v1560, %v1576
    %v1580 = vcombine.high %v1560, %v1576
    %v1581 = vcombine.low %v533, %v540
    %v1583 = vunpack.c.l.s4 1983009808
    %v1584 = vunpack.c.0.s8 %v1583
    %v1585 = vlaneseq
    %v1586 = vshrl.u32 %v1585, 7
    %v1587 = vsub.s32 %v1584, %v1586
    %v1588 = vrot.slane %v1581, %v1587
    %v1589 = vcombine.low %v557, %v558
    %v1591 = vunpack.c.l.s4 1983009808
    %v1592 = vunpack.c.0.s8 %v1591
    %v1593 = vlaneseq
    %v1594 = vshrl.u32 %v1593, 7
    %v1595 = vsub.s32 %v1592, %v1594
    %v1596 = vrot.slane %v1589, %v1595
    %v1597 = vcombine.low %v549, %v556
    %v1599 = vunpack.c.l.s4 1983009808
    %v1600 = vunpack.c.0.s8 %v1599
    %v1601 = vlaneseq
    %v1602 = vshrl.u32 %v1601, 7
    %v1603 = vsub.s32 %v1600, %v1602
    %v1604 = vrot.slane %v1597, %v1603
    %v1605 = vcombine.low %v559, %v560
    %v1607 = vunpack.c.l.s4 1983009808
    %v1608 = vunpack.c.0.s8 %v1607
    %v1609 = vlaneseq
    %v1610 = vshrl.u32 %v1609, 7
    %v1611 = vsub.s32 %v1608, %v1610
    %v1612 = vrot.slane %v1605, %v1611
    %v1613 = vcombine.low %v1588, %v1596
    %v1614 = vcombine.high %v1588, %v1596
    %v1616 = vunpack.c.l.s4 1934713408
    %v1617 = vunpack.c.0.s8 %v1616
    %v1618 = vlaneseq
    %v1619 = vshrl.u32 %v1618, 7
    %v1620 = vsub.s32 %v1617, %v1619
    %v1621 = vrot.slane %v1613, %v1620
    %v1623 = vunpack.c.l.s4 1934713408
    %v1624 = vunpack.c.0.s8 %v1623
    %v1625 = vlaneseq
    %v1626 = vshrl.u32 %v1625, 7
    %v1627 = vsub.s32 %v1624, %v1626
    %v1628 = vrot.slane %v1614, %v1627
    %v1629 = vcombine.low %v1604, %v1612
    %v1630 = vcombine.high %v1604, %v1612
    %v1632 = vunpack.c.l.s4 1934713408
    %v1633 = vunpack.c.0.s8 %v1632
    %v1634 = vlaneseq
    %v1635 = vshrl.u32 %v1634, 7
    %v1636 = vsub.s32 %v1633, %v1635
    %v1637 = vrot.slane %v1629, %v1636
    %v1639 = vunpack.c.l.s4 1934713408
    %v1640 = vunpack.c.0.s8 %v1639
    %v1641 = vlaneseq
    %v1642 = vshrl.u32 %v1641, 7
    %v1643 = vsub.s32 %v1640, %v1642
    %v1644 = vrot.slane %v1630, %v1643
    %v1645 = vcombine.low %v1621, %v1637
    %v1646 = vcombine.high %v1621, %v1637
    %v1647 = vcombine.low %v1628, %v1644
    %v1648 = vcombine.high %v1628, %v1644
    %v1649 = vcombine.low %v601, %v608
    %v1651 = vunpack.c.l.s4 1983009808
    %v1652 = vunpack.c.0.s8 %v1651
    %v1653 = vlaneseq
    %v1654 = vshrl.u32 %v1653, 7
    %v1655 = vsub.s32 %v1652, %v1654
    %v1656 = vrot.slane %v1649, %v1655
    %v1657 = vcombine.low %v625, %v626
    %v1659 = vunpack.c.l.s4 1983009808
    %v1660 = vunpack.c.0.s8 %v1659
    %v1661 = vlaneseq
    %v1662 = vshrl.u32 %v1661, 7
    %v1663 = vsub.s32 %v1660, %v1662
    %v1664 = vrot.slane %v1657, %v1663
    %v1665 = vcombine.low %v617, %v624
    %v1667 = vunpack.c.l.s4 1983009808
    %v1668 = vunpack.c.0.s8 %v1667
    %v1669 = vlaneseq
    %v1670 = vshrl.u32 %v1669, 7
    %v1671 = vsub.s32 %v1668, %v1670
    %v1672 = vrot.slane %v1665, %v1671
    %v1673 = vcombine.low %v627, %v628
    %v1675 = vunpack.c.l.s4 1983009808
    %v1676 = vunpack.c.0.s8 %v1675
    %v1677 = vlaneseq
    %v1678 = vshrl.u32 %v1677, 7
    %v1679 = vsub.s32 %v1676, %v1678
    %v1680 = vrot.slane %v1673, %v1679
    %v1681 = vcombine.low %v1656, %v1664
    %v1682 = vcombine.high %v1656, %v1664
    %v1684 = vunpack.c.l.s4 1934713408
    %v1685 = vunpack.c.0.s8 %v1684
    %v1686 = vlaneseq
    %v1687 = vshrl.u32 %v1686, 7
    %v1688 = vsub.s32 %v1685, %v1687
    %v1689 = vrot.slane %v1681, %v1688
    %v1691 = vunpack.c.l.s4 1934713408
    %v1692 = vunpack.c.0.s8 %v1691
    %v1693 = vlaneseq
    %v1694 = vshrl.u32 %v1693, 7
    %v1695 = vsub.s32 %v1692, %v1694
    %v1696 = vrot.slane %v1682, %v1695
    %v1697 = vcombine.low %v1672, %v1680
    %v1698 = vcombine.high %v1672, %v1680
    %v1700 = vunpack.c.l.s4 1934713408
    %v1701 = vunpack.c.0.s8 %v1700
    %v1702 = vlaneseq
    %v1703 = vshrl.u32 %v1702, 7
    %v1704 = vsub.s32 %v1701, %v1703
    %v1705 = vrot.slane %v1697, %v1704
    %v1707 = vunpack.c.l.s4 1934713408
    %v1708 = vunpack.c.0.s8 %v1707
    %v1709 = vlaneseq
    %v1710 = vshrl.u32 %v1709, 7
    %v1711 = vsub.s32 %v1708, %v1710
    %v1712 = vrot.slane %v1698, %v1711
    %v1713 = vcombine.low %v1689, %v1705
    %v1714 = vcombine.high %v1689, %v1705
    %v1715 = vcombine.low %v1696, %v1712
    %v1716 = vcombine.high %v1696, %v1712
    %v1717 = vcombine.low %v669, %v676
    %v1719 = vunpack.c.l.s4 1983009808
    %v1720 = vunpack.c.0.s8 %v1719
    %v1721 = vlaneseq
    %v1722 = vshrl.u32 %v1721, 7
    %v1723 = vsub.s32 %v1720, %v1722
    %v1724 = vrot.slane %v1717, %v1723
    %v1725 = vcombine.low %v693, %v694
    %v1727 = vunpack.c.l.s4 1983009808
    %v1728 = vunpack.c.0.s8 %v1727
    %v1729 = vlaneseq
    %v1730 = vshrl.u32 %v1729, 7
    %v1731 = vsub.s32 %v1728, %v1730
    %v1732 = vrot.slane %v1725, %v1731
    %v1733 = vcombine.low %v685, %v692
    %v1735 = vunpack.c.l.s4 1983009808
    %v1736 = vunpack.c.0.s8 %v1735
    %v1737 = vlaneseq
    %v1738 = vshrl.u32 %v1737, 7
    %v1739 = vsub.s32 %v1736, %v1738
    %v1740 = vrot.slane %v1733, %v1739
    %v1741 = vcombine.low %v695, %v696
    %v1743 = vunpack.c.l.s4 1983009808
    %v1744 = vunpack.c.0.s8 %v1743
    %v1745 = vlaneseq
    %v1746 = vshrl.u32 %v1745, 7
    %v1747 = vsub.s32 %v1744, %v1746
    %v1748 = vrot.slane %v1741, %v1747
    %v1749 = vcombine.low %v1724, %v1732
    %v1750 = vcombine.high %v1724, %v1732
    %v1752 = vunpack.c.l.s4 1934713408
    %v1753 = vunpack.c.0.s8 %v1752
    %v1754 = vlaneseq
    %v1755 = vshrl.u32 %v1754, 7
    %v1756 = vsub.s32 %v1753, %v1755
    %v1757 = vrot.slane %v1749, %v1756
    %v1759 = vunpack.c.l.s4 1934713408
    %v1760 = vunpack.c.0.s8 %v1759
    %v1761 = vlaneseq
    %v1762 = vshrl.u32 %v1761, 7
    %v1763 = vsub.s32 %v1760, %v1762
    %v1764 = vrot.slane %v1750, %v1763
    %v1765 = vcombine.low %v1740, %v1748
    %v1766 = vcombine.high %v1740, %v1748
    %v1768 = vunpack.c.l.s4 1934713408
    %v1769 = vunpack.c.0.s8 %v1768
    %v1770 = vlaneseq
    %v1771 = vshrl.u32 %v1770, 7
    %v1772 = vsub.s32 %v1769, %v1771
    %v1773 = vrot.slane %v1765, %v1772
    %v1775 = vunpack.c.l.s4 1934713408
    %v1776 = vunpack.c.0.s8 %v1775
    %v1777 = vlaneseq
    %v1778 = vshrl.u32 %v1777, 7
    %v1779 = vsub.s32 %v1776, %v1778
    %v1780 = vrot.slane %v1766, %v1779
    %v1781 = vcombine.low %v1757, %v1773
    %v1782 = vcombine.high %v1757, %v1773
    %v1783 = vcombine.low %v1764, %v1780
    %v1784 = vcombine.high %v1764, %v1780
    %v1785 = vcombine.low %v737, %v744
    %v1787 = vunpack.c.l.s4 1983009808
    %v1788 = vunpack.c.0.s8 %v1787
    %v1789 = vlaneseq
    %v1790 = vshrl.u32 %v1789, 7
    %v1791 = vsub.s32 %v1788, %v1790
    %v1792 = vrot.slane %v1785, %v1791
    %v1793 = vcombine.low %v761, %v762
    %v1795 = vunpack.c.l.s4 1983009808
    %v1796 = vunpack.c.0.s8 %v1795
    %v1797 = vlaneseq
    %v1798 = vshrl.u32 %v1797, 7
    %v1799 = vsub.s32 %v1796, %v1798
    %v1800 = vrot.slane %v1793, %v1799
    %v1801 = vcombine.low %v753, %v760
    %v1803 = vunpack.c.l.s4 1983009808
    %v1804 = vunpack.c.0.s8 %v1803
    %v1805 = vlaneseq
    %v1806 = vshrl.u32 %v1805, 7
    %v1807 = vsub.s32 %v1804, %v1806
    %v1808 = vrot.slane %v1801, %v1807
    %v1809 = vcombine.low %v763, %v764
    %v1811 = vunpack.c.l.s4 1983009808
    %v1812 = vunpack.c.0.s8 %v1811
    %v1813 = vlaneseq
    %v1814 = vshrl.u32 %v1813, 7
    %v1815 = vsub.s32 %v1812, %v1814
    %v1816 = vrot.slane %v1809, %v1815
    %v1817 = vcombine.low %v1792, %v1800
    %v1818 = vcombine.high %v1792, %v1800
    %v1820 = vunpack.c.l.s4 1934713408
    %v1821 = vunpack.c.0.s8 %v1820
    %v1822 = vlaneseq
    %v1823 = vshrl.u32 %v1822, 7
    %v1824 = vsub.s32 %v1821, %v1823
    %v1825 = vrot.slane %v1817, %v1824
    %v1827 = vunpack.c.l.s4 1934713408
    %v1828 = vunpack.c.0.s8 %v1827
    %v1829 = vlaneseq
    %v1830 = vshrl.u32 %v1829, 7
    %v1831 = vsub.s32 %v1828, %v1830
    %v1832 = vrot.slane %v1818, %v1831
    %v1833 = vcombine.low %v1808, %v1816
    %v1834 = vcombine.high %v1808, %v1816
    %v1836 = vunpack.c.l.s4 1934713408
    %v1837 = vunpack.c.0.s8 %v1836
    %v1838 = vlaneseq
    %v1839 = vshrl.u32 %v1838, 7
    %v1840 = vsub.s32 %v1837, %v1839
    %v1841 = vrot.slane %v1833, %v1840
    %v1843 = vunpack.c.l.s4 1934713408
    %v1844 = vunpack.c.0.s8 %v1843
    %v1845 = vlaneseq
    %v1846 = vshrl.u32 %v1845, 7
    %v1847 = vsub.s32 %v1844, %v1846
    %v1848 = vrot.slane %v1834, %v1847
    %v1849 = vcombine.low %v1825, %v1841
    %v1850 = vcombine.high %v1825, %v1841
    %v1851 = vcombine.low %v1832, %v1848
    %v1852 = vcombine.high %v1832, %v1848
    %v1853 = vcombine.low %v805, %v812
    %v1855 = vunpack.c.l.s4 1983009808
    %v1856 = vunpack.c.0.s8 %v1855
    %v1857 = vlaneseq
    %v1858 = vshrl.u32 %v1857, 7
    %v1859 = vsub.s32 %v1856, %v1858
    %v1860 = vrot.slane %v1853, %v1859
    %v1861 = vcombine.low %v829, %v830
    %v1863 = vunpack.c.l.s4 1983009808
    %v1864 = vunpack.c.0.s8 %v1863
    %v1865 = vlaneseq
    %v1866 = vshrl.u32 %v1865, 7
    %v1867 = vsub.s32 %v1864, %v1866
    %v1868 = vrot.slane %v1861, %v1867
    %v1869 = vcombine.low %v821, %v828
    %v1871 = vunpack.c.l.s4 1983009808
    %v1872 = vunpack.c.0.s8 %v1871
    %v1873 = vlaneseq
    %v1874 = vshrl.u32 %v1873, 7
    %v1875 = vsub.s32 %v1872, %v1874
    %v1876 = vrot.slane %v1869, %v1875
    %v1877 = vcombine.low %v831, %v832
    %v1879 = vunpack.c.l.s4 1983009808
    %v1880 = vunpack.c.0.s8 %v1879
    %v1881 = vlaneseq
    %v1882 = vshrl.u32 %v1881, 7
    %v1883 = vsub.s32 %v1880, %v1882
    %v1884 = vrot.slane %v1877, %v1883
    %v1885 = vcombine.low %v1860, %v1868
    %v1886 = vcombine.high %v1860, %v1868
    %v1888 = vunpack.c.l.s4 1934713408
    %v1889 = vunpack.c.0.s8 %v1888
    %v1890 = vlaneseq
    %v1891 = vshrl.u32 %v1890, 7
    %v1892 = vsub.s32 %v1889, %v1891
    %v1893 = vrot.slane %v1885, %v1892
    %v1895 = vunpack.c.l.s4 1934713408
    %v1896 = vunpack.c.0.s8 %v1895
    %v1897 = vlaneseq
    %v1898 = vshrl.u32 %v1897, 7
    %v1899 = vsub.s32 %v1896, %v1898
    %v1900 = vrot.slane %v1886, %v1899
    %v1901 = vcombine.low %v1876, %v1884
    %v1902 = vcombine.high %v1876, %v1884
    %v1904 = vunpack.c.l.s4 1934713408
    %v1905 = vunpack.c.0.s8 %v1904
    %v1906 = vlaneseq
    %v1907 = vshrl.u32 %v1906, 7
    %v1908 = vsub.s32 %v1905, %v1907
    %v1909 = vrot.slane %v1901, %v1908
    %v1911 = vunpack.c.l.s4 1934713408
    %v1912 = vunpack.c.0.s8 %v1911
    %v1913 = vlaneseq
    %v1914 = vshrl.u32 %v1913, 7
    %v1915 = vsub.s32 %v1912, %v1914
    %v1916 = vrot.slane %v1902, %v1915
    %v1917 = vcombine.low %v1893, %v1909
    %v1918 = vcombine.high %v1893, %v1909
    %v1919 = vcombine.low %v1900, %v1916
    %v1920 = vcombine.high %v1900, %v1916
    %v1921 = vcombine.low %v873, %v880
    %v1923 = vunpack.c.l.s4 1983009808
    %v1924 = vunpack.c.0.s8 %v1923
    %v1925 = vlaneseq
    %v1926 = vshrl.u32 %v1925, 7
    %v1927 = vsub.s32 %v1924, %v1926
    %v1928 = vrot.slane %v1921, %v1927
    %v1929 = vcombine.low %v897, %v898
    %v1931 = vunpack.c.l.s4 1983009808
    %v1932 = vunpack.c.0.s8 %v1931
    %v1933 = vlaneseq
    %v1934 = vshrl.u32 %v1933, 7
    %v1935 = vsub.s32 %v1932, %v1934
    %v1936 = vrot.slane %v1929, %v1935
    %v1937 = vcombine.low %v889, %v896
    %v1939 = vunpack.c.l.s4 1983009808
    %v1940 = vunpack.c.0.s8 %v1939
    %v1941 = vlaneseq
    %v1942 = vshrl.u32 %v1941, 7
    %v1943 = vsub.s32 %v1940, %v1942
    %v1944 = vrot.slane %v1937, %v1943
    %v1945 = vcombine.low %v899, %v900
    %v1947 = vunpack.c.l.s4 1983009808
    %v1948 = vunpack.c.0.s8 %v1947
    %v1949 = vlaneseq
    %v1950 = vshrl.u32 %v1949, 7
    %v1951 = vsub.s32 %v1948, %v1950
    %v1952 = vrot.slane %v1945, %v1951
    %v1953 = vcombine.low %v1928, %v1936
    %v1954 = vcombine.high %v1928, %v1936
    %v1956 = vunpack.c.l.s4 1934713408
    %v1957 = vunpack.c.0.s8 %v1956
    %v1958 = vlaneseq
    %v1959 = vshrl.u32 %v1958, 7
    %v1960 = vsub.s32 %v1957, %v1959
    %v1961 = vrot.slane %v1953, %v1960
    %v1963 = vunpack.c.l.s4 1934713408
    %v1964 = vunpack.c.0.s8 %v1963
    %v1965 = vlaneseq
    %v1966 = vshrl.u32 %v1965, 7
    %v1967 = vsub.s32 %v1964, %v1966
    %v1968 = vrot.slane %v1954, %v1967
    %v1969 = vcombine.low %v1944, %v1952
    %v1970 = vcombine.high %v1944, %v1952
    %v1972 = vunpack.c.l.s4 1934713408
    %v1973 = vunpack.c.0.s8 %v1972
    %v1974 = vlaneseq
    %v1975 = vshrl.u32 %v1974, 7
    %v1976 = vsub.s32 %v1973, %v1975
    %v1977 = vrot.slane %v1969, %v1976
    %v1979 = vunpack.c.l.s4 1934713408
    %v1980 = vunpack.c.0.s8 %v1979
    %v1981 = vlaneseq
    %v1982 = vshrl.u32 %v1981, 7
    %v1983 = vsub.s32 %v1980, %v1982
    %v1984 = vrot.slane %v1970, %v1983
    %v1985 = vcombine.low %v1961, %v1977
    %v1986 = vcombine.high %v1961, %v1977
    %v1987 = vcombine.low %v1968, %v1984
    %v1988 = vcombine.high %v1968, %v1984
    %v1989 = vcombine.low %v941, %v948
    %v1991 = vunpack.c.l.s4 1983009808
    %v1992 = vunpack.c.0.s8 %v1991
    %v1993 = vlaneseq
    %v1994 = vshrl.u32 %v1993, 7
    %v1995 = vsub.s32 %v1992, %v1994
    %v1996 = vrot.slane %v1989, %v1995
    %v1997 = vcombine.low %v965, %v966
    %v1999 = vunpack.c.l.s4 1983009808
    %v2000 = vunpack.c.0.s8 %v1999
    %v2001 = vlaneseq
    %v2002 = vshrl.u32 %v2001, 7
    %v2003 = vsub.s32 %v2000, %v2002
    %v2004 = vrot.slane %v1997, %v2003
    %v2005 = vcombine.low %v957, %v964
    %v2007 = vunpack.c.l.s4 1983009808
    %v2008 = vunpack.c.0.s8 %v2007
    %v2009 = vlaneseq
    %v2010 = vshrl.u32 %v2009, 7
    %v2011 = vsub.s32 %v2008, %v2010
    %v2012 = vrot.slane %v2005, %v2011
    %v2013 = vcombine.low %v967, %v968
    %v2015 = vunpack.c.l.s4 1983009808
    %v2016 = vunpack.c.0.s8 %v2015
    %v2017 = vlaneseq
    %v2018 = vshrl.u32 %v2017, 7
    %v2019 = vsub.s32 %v2016, %v2018
    %v2020 = vrot.slane %v2013, %v2019
    %v2021 = vcombine.low %v1996, %v2004
    %v2022 = vcombine.high %v1996, %v2004
    %v2024 = vunpack.c.l.s4 1934713408
    %v2025 = vunpack.c.0.s8 %v2024
    %v2026 = vlaneseq
    %v2027 = vshrl.u32 %v2026, 7
    %v2028 = vsub.s32 %v2025, %v2027
    %v2029 = vrot.slane %v2021, %v2028
    %v2031 = vunpack.c.l.s4 1934713408
    %v2032 = vunpack.c.0.s8 %v2031
    %v2033 = vlaneseq
    %v2034 = vshrl.u32 %v2033, 7
    %v2035 = vsub.s32 %v2032, %v2034
    %v2036 = vrot.slane %v2022, %v2035
    %v2037 = vcombine.low %v2012, %v2020
    %v2038 = vcombine.high %v2012, %v2020
    %v2040 = vunpack.c.l.s4 1934713408
    %v2041 = vunpack.c.0.s8 %v2040
    %v2042 = vlaneseq
    %v2043 = vshrl.u32 %v2042, 7
    %v2044 = vsub.s32 %v2041, %v2043
    %v2045 = vrot.slane %v2037, %v2044
    %v2047 = vunpack.c.l.s4 1934713408
    %v2048 = vunpack.c.0.s8 %v2047
    %v2049 = vlaneseq
    %v2050 = vshrl.u32 %v2049, 7
    %v2051 = vsub.s32 %v2048, %v2050
    %v2052 = vrot.slane %v2038, %v2051
    %v2053 = vcombine.low %v2029, %v2045
    %v2054 = vcombine.high %v2029, %v2045
    %v2055 = vcombine.low %v2036, %v2052
    %v2056 = vcombine.high %v2036, %v2052
    %v2057 = vcombine.low %v1009, %v1016
    %v2059 = vunpack.c.l.s4 1983009808
    %v2060 = vunpack.c.0.s8 %v2059
    %v2061 = vlaneseq
    %v2062 = vshrl.u32 %v2061, 7
    %v2063 = vsub.s32 %v2060, %v2062
    %v2064 = vrot.slane %v2057, %v2063
    %v2065 = vcombine.low %v1033, %v1034
    %v2067 = vunpack.c.l.s4 1983009808
    %v2068 = vunpack.c.0.s8 %v2067
    %v2069 = vlaneseq
    %v2070 = vshrl.u32 %v2069, 7
    %v2071 = vsub.s32 %v2068, %v2070
    %v2072 = vrot.slane %v2065, %v2071
    %v2073 = vcombine.low %v1025, %v1032
    %v2075 = vunpack.c.l.s4 1983009808
    %v2076 = vunpack.c.0.s8 %v2075
    %v2077 = vlaneseq
    %v2078 = vshrl.u32 %v2077, 7
    %v2079 = vsub.s32 %v2076, %v2078
    %v2080 = vrot.slane %v2073, %v2079
    %v2081 = vcombine.low %v1035, %v1036
    %v2083 = vunpack.c.l.s4 1983009808
    %v2084 = vunpack.c.0.s8 %v2083
    %v2085 = vlaneseq
    %v2086 = vshrl.u32 %v2085, 7
    %v2087 = vsub.s32 %v2084, %v2086
    %v2088 = vrot.slane %v2081, %v2087
    %v2089 = vcombine.low %v2064, %v2072
    %v2090 = vcombine.high %v2064, %v2072
    %v2092 = vunpack.c.l.s4 1934713408
    %v2093 = vunpack.c.0.s8 %v2092
    %v2094 = vlaneseq
    %v2095 = vshrl.u32 %v2094, 7
    %v2096 = vsub.s32 %v2093, %v2095
    %v2097 = vrot.slane %v2089, %v2096
    %v2099 = vunpack.c.l.s4 1934713408
    %v2100 = vunpack.c.0.s8 %v2099
    %v2101 = vlaneseq
    %v2102 = vshrl.u32 %v2101, 7
    %v2103 = vsub.s32 %v2100, %v2102
    %v2104 = vrot.slane %v2090, %v2103
    %v2105 = vcombine.low %v2080, %v2088
    %v2106 = vcombine.high %v2080, %v2088
    %v2108 = vunpack.c.l.s4 1934713408
    %v2109 = vunpack.c.0.s8 %v2108
    %v2110 = vlaneseq
    %v2111 = vshrl.u32 %v2110, 7
    %v2112 = vsub.s32 %v2109, %v2111
    %v2113 = vrot.slane %v2105, %v2112
    %v2115 = vunpack.c.l.s4 1934713408
    %v2116 = vunpack.c.0.s8 %v2115
    %v2117 = vlaneseq
    %v2118 = vshrl.u32 %v2117, 7
    %v2119 = vsub.s32 %v2116, %v2118
    %v2120 = vrot.slane %v2106, %v2119
    %v2121 = vcombine.low %v2097, %v2113
    %v2122 = vcombine.high %v2097, %v2113
    %v2123 = vcombine.low %v2104, %v2120
    %v2124 = vcombine.high %v2104, %v2120
    %v2125 = vcombine.low %v1077, %v1084
    %v2127 = vunpack.c.l.s4 1983009808
    %v2128 = vunpack.c.0.s8 %v2127
    %v2129 = vlaneseq
    %v2130 = vshrl.u32 %v2129, 7
    %v2131 = vsub.s32 %v2128, %v2130
    %v2132 = vrot.slane %v2125, %v2131
    %v2133 = vcombine.low %v1101, %v1102
    %v2135 = vunpack.c.l.s4 1983009808
    %v2136 = vunpack.c.0.s8 %v2135
    %v2137 = vlaneseq
    %v2138 = vshrl.u32 %v2137, 7
    %v2139 = vsub.s32 %v2136, %v2138
    %v2140 = vrot.slane %v2133, %v2139
    %v2141 = vcombine.low %v1093, %v1100
    %v2143 = vunpack.c.l.s4 1983009808
    %v2144 = vunpack.c.0.s8 %v2143
    %v2145 = vlaneseq
    %v2146 = vshrl.u32 %v2145, 7
    %v2147 = vsub.s32 %v2144, %v2146
    %v2148 = vrot.slane %v2141, %v2147
    %v2149 = vcombine.low %v1103, %v1104
    %v2151 = vunpack.c.l.s4 1983009808
    %v2152 = vunpack.c.0.s8 %v2151
    %v2153 = vlaneseq
    %v2154 = vshrl.u32 %v2153, 7
    %v2155 = vsub.s32 %v2152, %v2154
    %v2156 = vrot.slane %v2149, %v2155
    %v2157 = vcombine.low %v2132, %v2140
    %v2158 = vcombine.high %v2132, %v2140
    %v2160 = vunpack.c.l.s4 1934713408
    %v2161 = vunpack.c.0.s8 %v2160
    %v2162 = vlaneseq
    %v2163 = vshrl.u32 %v2162, 7
    %v2164 = vsub.s32 %v2161, %v2163
    %v2165 = vrot.slane %v2157, %v2164
    %v2167 = vunpack.c.l.s4 1934713408
    %v2168 = vunpack.c.0.s8 %v2167
    %v2169 = vlaneseq
    %v2170 = vshrl.u32 %v2169, 7
    %v2171 = vsub.s32 %v2168, %v2170
    %v2172 = vrot.slane %v2158, %v2171
    %v2173 = vcombine.low %v2148, %v2156
    %v2174 = vcombine.high %v2148, %v2156
    %v2176 = vunpack.c.l.s4 1934713408
    %v2177 = vunpack.c.0.s8 %v2176
    %v2178 = vlaneseq
    %v2179 = vshrl.u32 %v2178, 7
    %v2180 = vsub.s32 %v2177, %v2179
    %v2181 = vrot.slane %v2173, %v2180
    %v2183 = vunpack.c.l.s4 1934713408
    %v2184 = vunpack.c.0.s8 %v2183
    %v2185 = vlaneseq
    %v2186 = vshrl.u32 %v2185, 7
    %v2187 = vsub.s32 %v2184, %v2186
    %v2188 = vrot.slane %v2174, %v2187
    %v2189 = vcombine.low %v2165, %v2181
    %v2190 = vcombine.high %v2165, %v2181
    %v2191 = vcombine.low %v2172, %v2188
    %v2192 = vcombine.high %v2172, %v2188
    %v2193 = vcombine.low %v1145, %v1152
    %v2195 = vunpack.c.l.s4 1983009808
    %v2196 = vunpack.c.0.s8 %v2195
    %v2197 = vlaneseq
    %v2198 = vshrl.u32 %v2197, 7
    %v2199 = vsub.s32 %v2196, %v2198
    %v2200 = vrot.slane %v2193, %v2199
    %v2201 = vcombine.low %v1169, %v1170
    %v2203 = vunpack.c.l.s4 1983009808
    %v2204 = vunpack.c.0.s8 %v2203
    %v2205 = vlaneseq
    %v2206 = vshrl.u32 %v2205, 7
    %v2207 = vsub.s32 %v2204, %v2206
    %v2208 = vrot.slane %v2201, %v2207
    %v2209 = vcombine.low %v1161, %v1168
    %v2211 = vunpack.c.l.s4 1983009808
    %v2212 = vunpack.c.0.s8 %v2211
    %v2213 = vlaneseq
    %v2214 = vshrl.u32 %v2213, 7
    %v2215 = vsub.s32 %v2212, %v2214
    %v2216 = vrot.slane %v2209, %v2215
    %v2217 = vcombine.low %v1171, %v1172
    %v2219 = vunpack.c.l.s4 1983009808
    %v2220 = vunpack.c.0.s8 %v2219
    %v2221 = vlaneseq
    %v2222 = vshrl.u32 %v2221, 7
    %v2223 = vsub.s32 %v2220, %v2222
    %v2224 = vrot.slane %v2217, %v2223
    %v2225 = vcombine.low %v2200, %v2208
    %v2226 = vcombine.high %v2200, %v2208
    %v2228 = vunpack.c.l.s4 1934713408
    %v2229 = vunpack.c.0.s8 %v2228
    %v2230 = vlaneseq
    %v2231 = vshrl.u32 %v2230, 7
    %v2232 = vsub.s32 %v2229, %v2231
    %v2233 = vrot.slane %v2225, %v2232
    %v2235 = vunpack.c.l.s4 1934713408
    %v2236 = vunpack.c.0.s8 %v2235
    %v2237 = vlaneseq
    %v2238 = vshrl.u32 %v2237, 7
    %v2239 = vsub.s32 %v2236, %v2238
    %v2240 = vrot.slane %v2226, %v2239
    %v2241 = vcombine.low %v2216, %v2224
    %v2242 = vcombine.high %v2216, %v2224
    %v2244 = vunpack.c.l.s4 1934713408
    %v2245 = vunpack.c.0.s8 %v2244
    %v2246 = vlaneseq
    %v2247 = vshrl.u32 %v2246, 7
    %v2248 = vsub.s32 %v2245, %v2247
    %v2249 = vrot.slane %v2241, %v2248
    %v2251 = vunpack.c.l.s4 1934713408
    %v2252 = vunpack.c.0.s8 %v2251
    %v2253 = vlaneseq
    %v2254 = vshrl.u32 %v2253, 7
    %v2255 = vsub.s32 %v2252, %v2254
    %v2256 = vrot.slane %v2242, %v2255
    %v2257 = vcombine.low %v2233, %v2249
    %v2258 = vcombine.high %v2233, %v2249
    %v2259 = vcombine.low %v2240, %v2256
    %v2260 = vcombine.high %v2240, %v2256
    %v2261 = vcombine.low %v1213, %v1220
    %v2263 = vunpack.c.l.s4 1983009808
    %v2264 = vunpack.c.0.s8 %v2263
    %v2265 = vlaneseq
    %v2266 = vshrl.u32 %v2265, 7
    %v2267 = vsub.s32 %v2264, %v2266
    %v2268 = vrot.slane %v2261, %v2267
    %v2269 = vcombine.low %v1237, %v1238
    %v2271 = vunpack.c.l.s4 1983009808
    %v2272 = vunpack.c.0.s8 %v2271
    %v2273 = vlaneseq
    %v2274 = vshrl.u32 %v2273, 7
    %v2275 = vsub.s32 %v2272, %v2274
    %v2276 = vrot.slane %v2269, %v2275
    %v2277 = vcombine.low %v1229, %v1236
    %v2279 = vunpack.c.l.s4 1983009808
    %v2280 = vunpack.c.0.s8 %v2279
    %v2281 = vlaneseq
    %v2282 = vshrl.u32 %v2281, 7
    %v2283 = vsub.s32 %v2280, %v2282
    %v2284 = vrot.slane %v2277, %v2283
    %v2285 = vcombine.low %v1239, %v1240
    %v2287 = vunpack.c.l.s4 1983009808
    %v2288 = vunpack.c.0.s8 %v2287
    %v2289 = vlaneseq
    %v2290 = vshrl.u32 %v2289, 7
    %v2291 = vsub.s32 %v2288, %v2290
    %v2292 = vrot.slane %v2285, %v2291
    %v2293 = vcombine.low %v2268, %v2276
    %v2294 = vcombine.high %v2268, %v2276
    %v2296 = vunpack.c.l.s4 1934713408
    %v2297 = vunpack.c.0.s8 %v2296
    %v2298 = vlaneseq
    %v2299 = vshrl.u32 %v2298, 7
    %v2300 = vsub.s32 %v2297, %v2299
    %v2301 = vrot.slane %v2293, %v2300
    %v2303 = vunpack.c.l.s4 1934713408
    %v2304 = vunpack.c.0.s8 %v2303
    %v2305 = vlaneseq
    %v2306 = vshrl.u32 %v2305, 7
    %v2307 = vsub.s32 %v2304, %v2306
    %v2308 = vrot.slane %v2294, %v2307
    %v2309 = vcombine.low %v2284, %v2292
    %v2310 = vcombine.high %v2284, %v2292
    %v2312 = vunpack.c.l.s4 1934713408
    %v2313 = vunpack.c.0.s8 %v2312
    %v2314 = vlaneseq
    %v2315 = vshrl.u32 %v2314, 7
    %v2316 = vsub.s32 %v2313, %v2315
    %v2317 = vrot.slane %v2309, %v2316
    %v2319 = vunpack.c.l.s4 1934713408
    %v2320 = vunpack.c.0.s8 %v2319
    %v2321 = vlaneseq
    %v2322 = vshrl.u32 %v2321, 7
    %v2323 = vsub.s32 %v2320, %v2322
    %v2324 = vrot.slane %v2310, %v2323
    %v2325 = vcombine.low %v2301, %v2317
    %v2326 = vcombine.high %v2301, %v2317
    %v2327 = vcombine.low %v2308, %v2324
    %v2328 = vcombine.high %v2308, %v2324
    %v2329 = vcombine.low %v1281, %v1288
    %v2331 = vunpack.c.l.s4 1983009808
    %v2332 = vunpack.c.0.s8 %v2331
    %v2333 = vlaneseq
    %v2334 = vshrl.u32 %v2333, 7
    %v2335 = vsub.s32 %v2332, %v2334
    %v2336 = vrot.slane %v2329, %v2335
    %v2337 = vcombine.low %v1305, %v1306
    %v2339 = vunpack.c.l.s4 1983009808
    %v2340 = vunpack.c.0.s8 %v2339
    %v2341 = vlaneseq
    %v2342 = vshrl.u32 %v2341, 7
    %v2343 = vsub.s32 %v2340, %v2342
    %v2344 = vrot.slane %v2337, %v2343
    %v2345 = vcombine.low %v1297, %v1304
    %v2347 = vunpack.c.l.s4 1983009808
    %v2348 = vunpack.c.0.s8 %v2347
    %v2349 = vlaneseq
    %v2350 = vshrl.u32 %v2349, 7
    %v2351 = vsub.s32 %v2348, %v2350
    %v2352 = vrot.slane %v2345, %v2351
    %v2353 = vcombine.low %v1307, %v1308
    %v2355 = vunpack.c.l.s4 1983009808
    %v2356 = vunpack.c.0.s8 %v2355
    %v2357 = vlaneseq
    %v2358 = vshrl.u32 %v2357, 7
    %v2359 = vsub.s32 %v2356, %v2358
    %v2360 = vrot.slane %v2353, %v2359
    %v2361 = vcombine.low %v2336, %v2344
    %v2362 = vcombine.high %v2336, %v2344
    %v2364 = vunpack.c.l.s4 1934713408
    %v2365 = vunpack.c.0.s8 %v2364
    %v2366 = vlaneseq
    %v2367 = vshrl.u32 %v2366, 7
    %v2368 = vsub.s32 %v2365, %v2367
    %v2369 = vrot.slane %v2361, %v2368
    %v2371 = vunpack.c.l.s4 1934713408
    %v2372 = vunpack.c.0.s8 %v2371
    %v2373 = vlaneseq
    %v2374 = vshrl.u32 %v2373, 7
    %v2375 = vsub.s32 %v2372, %v2374
    %v2376 = vrot.slane %v2362, %v2375
    %v2377 = vcombine.low %v2352, %v2360
    %v2378 = vcombine.high %v2352, %v2360
    %v2380 = vunpack.c.l.s4 1934713408
    %v2381 = vunpack.c.0.s8 %v2380
    %v2382 = vlaneseq
    %v2383 = vshrl.u32 %v2382, 7
    %v2384 = vsub.s32 %v2381, %v2383
    %v2385 = vrot.slane %v2377, %v2384
    %v2387 = vunpack.c.l.s4 1934713408
    %v2388 = vunpack.c.0.s8 %v2387
    %v2389 = vlaneseq
    %v2390 = vshrl.u32 %v2389, 7
    %v2391 = vsub.s32 %v2388, %v2390
    %v2392 = vrot.slane %v2378, %v2391
    %v2393 = vcombine.low %v2369, %v2385
    %v2394 = vcombine.high %v2369, %v2385
    %v2395 = vcombine.low %v2376, %v2392
    %v2396 = vcombine.high %v2376, %v2392
    %v2397 = vcombine.low %v1349, %v1356
    %v2399 = vunpack.c.l.s4 1983009808
    %v2400 = vunpack.c.0.s8 %v2399
    %v2401 = vlaneseq
    %v2402 = vshrl.u32 %v2401, 7
    %v2403 = vsub.s32 %v2400, %v2402
    %v2404 = vrot.slane %v2397, %v2403
    %v2405 = vcombine.low %v1373, %v1374
    %v2407 = vunpack.c.l.s4 1983009808
    %v2408 = vunpack.c.0.s8 %v2407
    %v2409 = vlaneseq
    %v2410 = vshrl.u32 %v2409, 7
    %v2411 = vsub.s32 %v2408, %v2410
    %v2412 = vrot.slane %v2405, %v2411
    %v2413 = vcombine.low %v1365, %v1372
    %v2415 = vunpack.c.l.s4 1983009808
    %v2416 = vunpack.c.0.s8 %v2415
    %v2417 = vlaneseq
    %v2418 = vshrl.u32 %v2417, 7
    %v2419 = vsub.s32 %v2416, %v2418
    %v2420 = vrot.slane %v2413, %v2419
    %v2421 = vcombine.low %v1375, %v1376
    %v2423 = vunpack.c.l.s4 1983009808
    %v2424 = vunpack.c.0.s8 %v2423
    %v2425 = vlaneseq
    %v2426 = vshrl.u32 %v2425, 7
    %v2427 = vsub.s32 %v2424, %v2426
    %v2428 = vrot.slane %v2421, %v2427
    %v2429 = vcombine.low %v2404, %v2412
    %v2430 = vcombine.high %v2404, %v2412
    %v2432 = vunpack.c.l.s4 1934713408
    %v2433 = vunpack.c.0.s8 %v2432
    %v2434 = vlaneseq
    %v2435 = vshrl.u32 %v2434, 7
    %v2436 = vsub.s32 %v2433, %v2435
    %v2437 = vrot.slane %v2429, %v2436
    %v2439 = vunpack.c.l.s4 1934713408
    %v2440 = vunpack.c.0.s8 %v2439
    %v2441 = vlaneseq
    %v2442 = vshrl.u32 %v2441, 7
    %v2443 = vsub.s32 %v2440, %v2442
    %v2444 = vrot.slane %v2430, %v2443
    %v2445 = vcombine.low %v2420, %v2428
    %v2446 = vcombine.high %v2420, %v2428
    %v2448 = vunpack.c.l.s4 1934713408
    %v2449 = vunpack.c.0.s8 %v2448
    %v2450 = vlaneseq
    %v2451 = vshrl.u32 %v2450, 7
    %v2452 = vsub.s32 %v2449, %v2451
    %v2453 = vrot.slane %v2445, %v2452
    %v2455 = vunpack.c.l.s4 1934713408
    %v2456 = vunpack.c.0.s8 %v2455
    %v2457 = vlaneseq
    %v2458 = vshrl.u32 %v2457, 7
    %v2459 = vsub.s32 %v2456, %v2458
    %v2460 = vrot.slane %v2446, %v2459
    %v2461 = vcombine.low %v2437, %v2453
    %v2462 = vcombine.high %v2437, %v2453
    %v2463 = vcombine.low %v2444, %v2460
    %v2464 = vcombine.high %v2444, %v2460
    %v2465 = vcombine.low %v1417, %v1424
    %v2467 = vunpack.c.l.s4 1983009808
    %v2468 = vunpack.c.0.s8 %v2467
    %v2469 = vlaneseq
    %v2470 = vshrl.u32 %v2469, 7
    %v2471 = vsub.s32 %v2468, %v2470
    %v2472 = vrot.slane %v2465, %v2471
    %v2473 = vcombine.low %v1441, %v1442
    %v2475 = vunpack.c.l.s4 1983009808
    %v2476 = vunpack.c.0.s8 %v2475
    %v2477 = vlaneseq
    %v2478 = vshrl.u32 %v2477, 7
    %v2479 = vsub.s32 %v2476, %v2478
    %v2480 = vrot.slane %v2473, %v2479
    %v2481 = vcombine.low %v1433, %v1440
    %v2483 = vunpack.c.l.s4 1983009808
    %v2484 = vunpack.c.0.s8 %v2483
    %v2485 = vlaneseq
    %v2486 = vshrl.u32 %v2485, 7
    %v2487 = vsub.s32 %v2484, %v2486
    %v2488 = vrot.slane %v2481, %v2487
    %v2489 = vcombine.low %v1443, %v1444
    %v2491 = vunpack.c.l.s4 1983009808
    %v2492 = vunpack.c.0.s8 %v2491
    %v2493 = vlaneseq
    %v2494 = vshrl.u32 %v2493, 7
    %v2495 = vsub.s32 %v2492, %v2494
    %v2496 = vrot.slane %v2489, %v2495
    %v2497 = vcombine.low %v2472, %v2480
    %v2498 = vcombine.high %v2472, %v2480
    %v2500 = vunpack.c.l.s4 1934713408
    %v2501 = vunpack.c.0.s8 %v2500
    %v2502 = vlaneseq
    %v2503 = vshrl.u32 %v2502, 7
    %v2504 = vsub.s32 %v2501, %v2503
    %v2505 = vrot.slane %v2497, %v2504
    %v2507 = vunpack.c.l.s4 1934713408
    %v2508 = vunpack.c.0.s8 %v2507
    %v2509 = vlaneseq
    %v2510 = vshrl.u32 %v2509, 7
    %v2511 = vsub.s32 %v2508, %v2510
    %v2512 = vrot.slane %v2498, %v2511
    %v2513 = vcombine.low %v2488, %v2496
    %v2514 = vcombine.high %v2488, %v2496
    %v2516 = vunpack.c.l.s4 1934713408
    %v2517 = vunpack.c.0.s8 %v2516
    %v2518 = vlaneseq
    %v2519 = vshrl.u32 %v2518, 7
    %v2520 = vsub.s32 %v2517, %v2519
    %v2521 = vrot.slane %v2513, %v2520
    %v2523 = vunpack.c.l.s4 1934713408
    %v2524 = vunpack.c.0.s8 %v2523
    %v2525 = vlaneseq
    %v2526 = vshrl.u32 %v2525, 7
    %v2527 = vsub.s32 %v2524, %v2526
    %v2528 = vrot.slane %v2514, %v2527
    %v2529 = vcombine.low %v2505, %v2521
    %v2530 = vcombine.high %v2505, %v2521
    %v2531 = vcombine.low %v2512, %v2528
    %v2532 = vcombine.high %v2512, %v2528
    %v2533 = vcombine.low %v1485, %v1492
    %v2535 = vunpack.c.l.s4 1983009808
    %v2536 = vunpack.c.0.s8 %v2535
    %v2537 = vlaneseq
    %v2538 = vshrl.u32 %v2537, 7
    %v2539 = vsub.s32 %v2536, %v2538
    %v2540 = vrot.slane %v2533, %v2539
    %v2541 = vcombine.low %v1509, %v1510
    %v2543 = vunpack.c.l.s4 1983009808
    %v2544 = vunpack.c.0.s8 %v2543
    %v2545 = vlaneseq
    %v2546 = vshrl.u32 %v2545, 7
    %v2547 = vsub.s32 %v2544, %v2546
    %v2548 = vrot.slane %v2541, %v2547
    %v2549 = vcombine.low %v1501, %v1508
    %v2551 = vunpack.c.l.s4 1983009808
    %v2552 = vunpack.c.0.s8 %v2551
    %v2553 = vlaneseq
    %v2554 = vshrl.u32 %v2553, 7
    %v2555 = vsub.s32 %v2552, %v2554
    %v2556 = vrot.slane %v2549, %v2555
    %v2557 = vcombine.low %v1511, %v1512
    %v2559 = vunpack.c.l.s4 1983009808
    %v2560 = vunpack.c.0.s8 %v2559
    %v2561 = vlaneseq
    %v2562 = vshrl.u32 %v2561, 7
    %v2563 = vsub.s32 %v2560, %v2562
    %v2564 = vrot.slane %v2557, %v2563
    %v2565 = vcombine.low %v2540, %v2548
    %v2566 = vcombine.high %v2540, %v2548
    %v2568 = vunpack.c.l.s4 1934713408
    %v2569 = vunpack.c.0.s8 %v2568
    %v2570 = vlaneseq
    %v2571 = vshrl.u32 %v2570, 7
    %v2572 = vsub.s32 %v2569, %v2571
    %v2573 = vrot.slane %v2565, %v2572
    %v2575 = vunpack.c.l.s4 1934713408
    %v2576 = vunpack.c.0.s8 %v2575
    %v2577 = vlaneseq
    %v2578 = vshrl.u32 %v2577, 7
    %v2579 = vsub.s32 %v2576, %v2578
    %v2580 = vrot.slane %v2566, %v2579
    %v2581 = vcombine.low %v2556, %v2564
    %v2582 = vcombine.high %v2556, %v2564
    %v2584 = vunpack.c.l.s4 1934713408
    %v2585 = vunpack.c.0.s8 %v2584
    %v2586 = vlaneseq
    %v2587 = vshrl.u32 %v2586, 7
    %v2588 = vsub.s32 %v2585, %v2587
    %v2589 = vrot.slane %v2581, %v2588
    %v2591 = vunpack.c.l.s4 1934713408
    %v2592 = vunpack.c.0.s8 %v2591
    %v2593 = vlaneseq
    %v2594 = vshrl.u32 %v2593, 7
    %v2595 = vsub.s32 %v2592, %v2594
    %v2596 = vrot.slane %v2582, %v2595
    %v2597 = vcombine.low %v2573, %v2589
    %v2598 = vcombine.high %v2573, %v2589
    %v2599 = vcombine.low %v2580, %v2596
    %v2600 = vcombine.high %v2580, %v2596
    %2601 = vrot.lane.b32.xlu0 %v187, 96
    %v2602 = vpop.permute.xlu0 %2601
    %2603 = vrot.lane.b32.xlu0 %v191, 96
    %v2604 = vpop.permute.xlu0 %2603
    %2605 = vrot.lane.b32.xlu0 %v197, 96
    %v2606 = vpop.permute.xlu0 %2605
    %2607 = vrot.lane.b32.xlu0 %v201, 96
    %v2608 = vpop.permute.xlu0 %2607
    %2609 = vrot.lane.b32.xlu0 %v207, 96
    %v2610 = vpop.permute.xlu0 %2609
    %2611 = vrot.lane.b32.xlu0 %v211, 96
    %v2612 = vpop.permute.xlu0 %2611
    %2613 = vrot.lane.b32.xlu0 %v217, 96
    %v2614 = vpop.permute.xlu0 %2613
    %2615 = vrot.lane.b32.xlu0 %v221, 96
    %v2616 = vpop.permute.xlu0 %2615
    %2617 = vrot.lane.b32.xlu0 %v227, 96
    %v2618 = vpop.permute.xlu0 %2617
    %2619 = vrot.lane.b32.xlu0 %v231, 96
    %v2620 = vpop.permute.xlu0 %2619
    %2621 = vrot.lane.b32.xlu0 %v237, 96
    %v2622 = vpop.permute.xlu0 %2621
    %2623 = vrot.lane.b32.xlu0 %v241, 96
    %v2624 = vpop.permute.xlu0 %2623
    %2625 = vrot.lane.b32.xlu0 %v247, 96
    %v2626 = vpop.permute.xlu0 %2625
    %2627 = vrot.lane.b32.xlu0 %v251, 96
    %v2628 = vpop.permute.xlu0 %2627
    %2629 = vrot.lane.b32.xlu0 %v257, 96
    %v2630 = vpop.permute.xlu0 %2629
    %2631 = vrot.lane.b32.xlu0 %v261, 96
    %v2632 = vpop.permute.xlu0 %2631
    %2633 = vrot.lane.b32.xlu0 %v282, 96
    %v2634 = vpop.permute.xlu0 %2633
    %2635 = vrot.lane.b32.xlu0 %v284, 96
    %v2636 = vpop.permute.xlu0 %2635
    %2637 = vrot.lane.b32.xlu0 %v286, 96
    %v2638 = vpop.permute.xlu0 %2637
    %2639 = vrot.lane.b32.xlu0 %v288, 96
    %v2640 = vpop.permute.xlu0 %2639
    %2641 = vrot.lane.b32.xlu0 %v290, 96
    %v2642 = vpop.permute.xlu0 %2641
    %2643 = vrot.lane.b32.xlu0 %v292, 96
    %v2644 = vpop.permute.xlu0 %2643
    %2645 = vrot.lane.b32.xlu0 %v294, 96
    %v2646 = vpop.permute.xlu0 %2645
    %2647 = vrot.lane.b32.xlu0 %v296, 96
    %v2648 = vpop.permute.xlu0 %2647
    %2649 = vrot.lane.b32.xlu0 %v298, 96
    %v2650 = vpop.permute.xlu0 %2649
    %2651 = vrot.lane.b32.xlu0 %v300, 96
    %v2652 = vpop.permute.xlu0 %2651
    %2653 = vrot.lane.b32.xlu0 %v302, 96
    %v2654 = vpop.permute.xlu0 %2653
    %2655 = vrot.lane.b32.xlu0 %v304, 96
    %v2656 = vpop.permute.xlu0 %2655
    %2657 = vrot.lane.b32.xlu0 %v306, 96
    %v2658 = vpop.permute.xlu0 %2657
    %2659 = vrot.lane.b32.xlu0 %v308, 96
    %v2660 = vpop.permute.xlu0 %2659
    %2661 = vrot.lane.b32.xlu0 %v310, 96
    %v2662 = vpop.permute.xlu0 %2661
    %2663 = vrot.lane.b32.xlu0 %v312, 96
    %v2664 = vpop.permute.xlu0 %2663
    %2665 = vrot.lane.b32.xlu0 %v330, 96
    %v2666 = vpop.permute.xlu0 %2665
    %2667 = vrot.lane.b32.xlu0 %v332, 96
    %v2668 = vpop.permute.xlu0 %2667
    %2669 = vrot.lane.b32.xlu0 %v334, 96
    %v2670 = vpop.permute.xlu0 %2669
    %2671 = vrot.lane.b32.xlu0 %v336, 96
    %v2672 = vpop.permute.xlu0 %2671
    %2673 = vrot.lane.b32.xlu0 %v338, 96
    %v2674 = vpop.permute.xlu0 %2673
    %2675 = vrot.lane.b32.xlu0 %v340, 96
    %v2676 = vpop.permute.xlu0 %2675
    %2677 = vrot.lane.b32.xlu0 %v342, 96
    %v2678 = vpop.permute.xlu0 %2677
    %2679 = vrot.lane.b32.xlu0 %v344, 96
    %v2680 = vpop.permute.xlu0 %2679
    %2681 = vrot.lane.b32.xlu0 %v346, 96
    %v2682 = vpop.permute.xlu0 %2681
    %2683 = vrot.lane.b32.xlu0 %v348, 96
    %v2684 = vpop.permute.xlu0 %2683
    %2685 = vrot.lane.b32.xlu0 %v350, 96
    %v2686 = vpop.permute.xlu0 %2685
    %2687 = vrot.lane.b32.xlu0 %v352, 96
    %v2688 = vpop.permute.xlu0 %2687
    %2689 = vrot.lane.b32.xlu0 %v354, 96
    %v2690 = vpop.permute.xlu0 %2689
    %2691 = vrot.lane.b32.xlu0 %v356, 96
    %v2692 = vpop.permute.xlu0 %2691
    %2693 = vrot.lane.b32.xlu0 %v358, 96
    %v2694 = vpop.permute.xlu0 %2693
    %2695 = vrot.lane.b32.xlu0 %v360, 96
    %v2696 = vpop.permute.xlu0 %2695
    %2697 = vrot.lane.b32.xlu0 %v378, 96
    %v2698 = vpop.permute.xlu0 %2697
    %2699 = vrot.lane.b32.xlu0 %v380, 96
    %v2700 = vpop.permute.xlu0 %2699
    %2701 = vrot.lane.b32.xlu0 %v382, 96
    %v2702 = vpop.permute.xlu0 %2701
    %2703 = vrot.lane.b32.xlu0 %v384, 96
    %v2704 = vpop.permute.xlu0 %2703
    %2705 = vrot.lane.b32.xlu0 %v386, 96
    %v2706 = vpop.permute.xlu0 %2705
    %2707 = vrot.lane.b32.xlu0 %v388, 96
    %v2708 = vpop.permute.xlu0 %2707
    %2709 = vrot.lane.b32.xlu0 %v390, 96
    %v2710 = vpop.permute.xlu0 %2709
    %2711 = vrot.lane.b32.xlu0 %v392, 96
    %v2712 = vpop.permute.xlu0 %2711
    %2713 = vrot.lane.b32.xlu0 %v394, 96
    %v2714 = vpop.permute.xlu0 %2713
    %2715 = vrot.lane.b32.xlu0 %v396, 96
    %v2716 = vpop.permute.xlu0 %2715
    %2717 = vrot.lane.b32.xlu0 %v398, 96
    %v2718 = vpop.permute.xlu0 %2717
    %2719 = vrot.lane.b32.xlu0 %v400, 96
    %v2720 = vpop.permute.xlu0 %2719
    %2721 = vrot.lane.b32.xlu0 %v402, 96
    %v2722 = vpop.permute.xlu0 %2721
    %2723 = vrot.lane.b32.xlu0 %v404, 96
    %v2724 = vpop.permute.xlu0 %2723
    %2725 = vrot.lane.b32.xlu0 %v406, 96
    %v2726 = vpop.permute.xlu0 %2725
    %2727 = vrot.lane.b32.xlu0 %v408, 96
    %v2728 = vpop.permute.xlu0 %2727
    %v2793 = vcombine.low %v2602, %v2666
    %v2794 = vcombine.high %v2602, %v2666
    %v2796 = vunpack.c.l.s4 1983009808
    %v2797 = vunpack.c.0.s8 %v2796
    %v2798 = vlaneseq
    %v2799 = vshrl.u32 %v2798, 7
    %v2800 = vsub.s32 %v2797, %v2799
    %v2801 = vrot.slane %v2793, %v2800
    %v2803 = vunpack.c.l.s4 1983009808
    %v2804 = vunpack.c.0.s8 %v2803
    %v2805 = vlaneseq
    %v2806 = vshrl.u32 %v2805, 7
    %v2807 = vsub.s32 %v2804, %v2806
    %v2808 = vrot.slane %v2794, %v2807
    %v2809 = vcombine.low %v2634, %v2698
    %v2810 = vcombine.high %v2634, %v2698
    %v2812 = vunpack.c.l.s4 1983009808
    %v2813 = vunpack.c.0.s8 %v2812
    %v2814 = vlaneseq
    %v2815 = vshrl.u32 %v2814, 7
    %v2816 = vsub.s32 %v2813, %v2815
    %v2817 = vrot.slane %v2809, %v2816
    %v2819 = vunpack.c.l.s4 1983009808
    %v2820 = vunpack.c.0.s8 %v2819
    %v2821 = vlaneseq
    %v2822 = vshrl.u32 %v2821, 7
    %v2823 = vsub.s32 %v2820, %v2822
    %v2824 = vrot.slane %v2810, %v2823
    %v2825 = vcombine.low %v2801, %v2817
    %v2826 = vcombine.high %v2801, %v2817
    %v2828 = vunpack.c.l.s4 1934713408
    %v2829 = vunpack.c.0.s8 %v2828
    %v2830 = vlaneseq
    %v2831 = vshrl.u32 %v2830, 7
    %v2832 = vsub.s32 %v2829, %v2831
    %v2833 = vrot.slane %v2825, %v2832
    %v2835 = vunpack.c.l.s4 1934713408
    %v2836 = vunpack.c.0.s8 %v2835
    %v2837 = vlaneseq
    %v2838 = vshrl.u32 %v2837, 7
    %v2839 = vsub.s32 %v2836, %v2838
    %v2840 = vrot.slane %v2826, %v2839
    %v2841 = vcombine.low %v2808, %v2824
    %v2842 = vcombine.high %v2808, %v2824
    %v2844 = vunpack.c.l.s4 1934713408
    %v2845 = vunpack.c.0.s8 %v2844
    %v2846 = vlaneseq
    %v2847 = vshrl.u32 %v2846, 7
    %v2848 = vsub.s32 %v2845, %v2847
    %v2849 = vrot.slane %v2841, %v2848
    %v2851 = vunpack.c.l.s4 1934713408
    %v2852 = vunpack.c.0.s8 %v2851
    %v2853 = vlaneseq
    %v2854 = vshrl.u32 %v2853, 7
    %v2855 = vsub.s32 %v2852, %v2854
    %v2856 = vrot.slane %v2842, %v2855
    %v2857 = vcombine.high %v2833, 0.0
    %v2858 = vcombine.high %v2840, 0.0
    %v2859 = vcombine.high %v2849, 0.0
    %v2860 = vcombine.high %v2856, 0.0
    %v2861 = vcombine.low %v2604, %v2668
    %v2862 = vcombine.high %v2604, %v2668
    %v2864 = vunpack.c.l.s4 1983009808
    %v2865 = vunpack.c.0.s8 %v2864
    %v2866 = vlaneseq
    %v2867 = vshrl.u32 %v2866, 7
    %v2868 = vsub.s32 %v2865, %v2867
    %v2869 = vrot.slane %v2861, %v2868
    %v2871 = vunpack.c.l.s4 1983009808
    %v2872 = vunpack.c.0.s8 %v2871
    %v2873 = vlaneseq
    %v2874 = vshrl.u32 %v2873, 7
    %v2875 = vsub.s32 %v2872, %v2874
    %v2876 = vrot.slane %v2862, %v2875
    %v2877 = vcombine.low %v2636, %v2700
    %v2878 = vcombine.high %v2636, %v2700
    %v2880 = vunpack.c.l.s4 1983009808
    %v2881 = vunpack.c.0.s8 %v2880
    %v2882 = vlaneseq
    %v2883 = vshrl.u32 %v2882, 7
    %v2884 = vsub.s32 %v2881, %v2883
    %v2885 = vrot.slane %v2877, %v2884
    %v2887 = vunpack.c.l.s4 1983009808
    %v2888 = vunpack.c.0.s8 %v2887
    %v2889 = vlaneseq
    %v2890 = vshrl.u32 %v2889, 7
    %v2891 = vsub.s32 %v2888, %v2890
    %v2892 = vrot.slane %v2878, %v2891
    %v2893 = vcombine.low %v2869, %v2885
    %v2894 = vcombine.high %v2869, %v2885
    %v2896 = vunpack.c.l.s4 1934713408
    %v2897 = vunpack.c.0.s8 %v2896
    %v2898 = vlaneseq
    %v2899 = vshrl.u32 %v2898, 7
    %v2900 = vsub.s32 %v2897, %v2899
    %v2901 = vrot.slane %v2893, %v2900
    %v2903 = vunpack.c.l.s4 1934713408
    %v2904 = vunpack.c.0.s8 %v2903
    %v2905 = vlaneseq
    %v2906 = vshrl.u32 %v2905, 7
    %v2907 = vsub.s32 %v2904, %v2906
    %v2908 = vrot.slane %v2894, %v2907
    %v2909 = vcombine.low %v2876, %v2892
    %v2910 = vcombine.high %v2876, %v2892
    %v2912 = vunpack.c.l.s4 1934713408
    %v2913 = vunpack.c.0.s8 %v2912
    %v2914 = vlaneseq
    %v2915 = vshrl.u32 %v2914, 7
    %v2916 = vsub.s32 %v2913, %v2915
    %v2917 = vrot.slane %v2909, %v2916
    %v2919 = vunpack.c.l.s4 1934713408
    %v2920 = vunpack.c.0.s8 %v2919
    %v2921 = vlaneseq
    %v2922 = vshrl.u32 %v2921, 7
    %v2923 = vsub.s32 %v2920, %v2922
    %v2924 = vrot.slane %v2910, %v2923
    %v2925 = vcombine.high %v2901, 0.0
    %v2926 = vcombine.high %v2908, 0.0
    %v2927 = vcombine.high %v2917, 0.0
    %v2928 = vcombine.high %v2924, 0.0
    %v2929 = vcombine.low %v2606, %v2670
    %v2930 = vcombine.high %v2606, %v2670
    %v2932 = vunpack.c.l.s4 1983009808
    %v2933 = vunpack.c.0.s8 %v2932
    %v2934 = vlaneseq
    %v2935 = vshrl.u32 %v2934, 7
    %v2936 = vsub.s32 %v2933, %v2935
    %v2937 = vrot.slane %v2929, %v2936
    %v2939 = vunpack.c.l.s4 1983009808
    %v2940 = vunpack.c.0.s8 %v2939
    %v2941 = vlaneseq
    %v2942 = vshrl.u32 %v2941, 7
    %v2943 = vsub.s32 %v2940, %v2942
    %v2944 = vrot.slane %v2930, %v2943
    %v2945 = vcombine.low %v2638, %v2702
    %v2946 = vcombine.high %v2638, %v2702
    %v2948 = vunpack.c.l.s4 1983009808
    %v2949 = vunpack.c.0.s8 %v2948
    %v2950 = vlaneseq
    %v2951 = vshrl.u32 %v2950, 7
    %v2952 = vsub.s32 %v2949, %v2951
    %v2953 = vrot.slane %v2945, %v2952
    %v2955 = vunpack.c.l.s4 1983009808
    %v2956 = vunpack.c.0.s8 %v2955
    %v2957 = vlaneseq
    %v2958 = vshrl.u32 %v2957, 7
    %v2959 = vsub.s32 %v2956, %v2958
    %v2960 = vrot.slane %v2946, %v2959
    %v2961 = vcombine.low %v2937, %v2953
    %v2962 = vcombine.high %v2937, %v2953
    %v2964 = vunpack.c.l.s4 1934713408
    %v2965 = vunpack.c.0.s8 %v2964
    %v2966 = vlaneseq
    %v2967 = vshrl.u32 %v2966, 7
    %v2968 = vsub.s32 %v2965, %v2967
    %v2969 = vrot.slane %v2961, %v2968
    %v2971 = vunpack.c.l.s4 1934713408
    %v2972 = vunpack.c.0.s8 %v2971
    %v2973 = vlaneseq
    %v2974 = vshrl.u32 %v2973, 7
    %v2975 = vsub.s32 %v2972, %v2974
    %v2976 = vrot.slane %v2962, %v2975
    %v2977 = vcombine.low %v2944, %v2960
    %v2978 = vcombine.high %v2944, %v2960
    %v2980 = vunpack.c.l.s4 1934713408
    %v2981 = vunpack.c.0.s8 %v2980
    %v2982 = vlaneseq
    %v2983 = vshrl.u32 %v2982, 7
    %v2984 = vsub.s32 %v2981, %v2983
    %v2985 = vrot.slane %v2977, %v2984
    %v2987 = vunpack.c.l.s4 1934713408
    %v2988 = vunpack.c.0.s8 %v2987
    %v2989 = vlaneseq
    %v2990 = vshrl.u32 %v2989, 7
    %v2991 = vsub.s32 %v2988, %v2990
    %v2992 = vrot.slane %v2978, %v2991
    %v2993 = vcombine.high %v2969, 0.0
    %v2994 = vcombine.high %v2976, 0.0
    %v2995 = vcombine.high %v2985, 0.0
    %v2996 = vcombine.high %v2992, 0.0
    %v2997 = vcombine.low %v2608, %v2672
    %v2998 = vcombine.high %v2608, %v2672
    %v3000 = vunpack.c.l.s4 1983009808
    %v3001 = vunpack.c.0.s8 %v3000
    %v3002 = vlaneseq
    %v3003 = vshrl.u32 %v3002, 7
    %v3004 = vsub.s32 %v3001, %v3003
    %v3005 = vrot.slane %v2997, %v3004
    %v3007 = vunpack.c.l.s4 1983009808
    %v3008 = vunpack.c.0.s8 %v3007
    %v3009 = vlaneseq
    %v3010 = vshrl.u32 %v3009, 7
    %v3011 = vsub.s32 %v3008, %v3010
    %v3012 = vrot.slane %v2998, %v3011
    %v3013 = vcombine.low %v2640, %v2704
    %v3014 = vcombine.high %v2640, %v2704
    %v3016 = vunpack.c.l.s4 1983009808
    %v3017 = vunpack.c.0.s8 %v3016
    %v3018 = vlaneseq
    %v3019 = vshrl.u32 %v3018, 7
    %v3020 = vsub.s32 %v3017, %v3019
    %v3021 = vrot.slane %v3013, %v3020
    %v3023 = vunpack.c.l.s4 1983009808
    %v3024 = vunpack.c.0.s8 %v3023
    %v3025 = vlaneseq
    %v3026 = vshrl.u32 %v3025, 7
    %v3027 = vsub.s32 %v3024, %v3026
    %v3028 = vrot.slane %v3014, %v3027
    %v3029 = vcombine.low %v3005, %v3021
    %v3030 = vcombine.high %v3005, %v3021
    %v3032 = vunpack.c.l.s4 1934713408
    %v3033 = vunpack.c.0.s8 %v3032
    %v3034 = vlaneseq
    %v3035 = vshrl.u32 %v3034, 7
    %v3036 = vsub.s32 %v3033, %v3035
    %v3037 = vrot.slane %v3029, %v3036
    %v3039 = vunpack.c.l.s4 1934713408
    %v3040 = vunpack.c.0.s8 %v3039
    %v3041 = vlaneseq
    %v3042 = vshrl.u32 %v3041, 7
    %v3043 = vsub.s32 %v3040, %v3042
    %v3044 = vrot.slane %v3030, %v3043
    %v3045 = vcombine.low %v3012, %v3028
    %v3046 = vcombine.high %v3012, %v3028
    %v3048 = vunpack.c.l.s4 1934713408
    %v3049 = vunpack.c.0.s8 %v3048
    %v3050 = vlaneseq
    %v3051 = vshrl.u32 %v3050, 7
    %v3052 = vsub.s32 %v3049, %v3051
    %v3053 = vrot.slane %v3045, %v3052
    %v3055 = vunpack.c.l.s4 1934713408
    %v3056 = vunpack.c.0.s8 %v3055
    %v3057 = vlaneseq
    %v3058 = vshrl.u32 %v3057, 7
    %v3059 = vsub.s32 %v3056, %v3058
    %v3060 = vrot.slane %v3046, %v3059
    %v3061 = vcombine.high %v3037, 0.0
    %v3062 = vcombine.high %v3044, 0.0
    %v3063 = vcombine.high %v3053, 0.0
    %v3064 = vcombine.high %v3060, 0.0
    %v3065 = vcombine.low %v2610, %v2674
    %v3066 = vcombine.high %v2610, %v2674
    %v3068 = vunpack.c.l.s4 1983009808
    %v3069 = vunpack.c.0.s8 %v3068
    %v3070 = vlaneseq
    %v3071 = vshrl.u32 %v3070, 7
    %v3072 = vsub.s32 %v3069, %v3071
    %v3073 = vrot.slane %v3065, %v3072
    %v3075 = vunpack.c.l.s4 1983009808
    %v3076 = vunpack.c.0.s8 %v3075
    %v3077 = vlaneseq
    %v3078 = vshrl.u32 %v3077, 7
    %v3079 = vsub.s32 %v3076, %v3078
    %v3080 = vrot.slane %v3066, %v3079
    %v3081 = vcombine.low %v2642, %v2706
    %v3082 = vcombine.high %v2642, %v2706
    %v3084 = vunpack.c.l.s4 1983009808
    %v3085 = vunpack.c.0.s8 %v3084
    %v3086 = vlaneseq
    %v3087 = vshrl.u32 %v3086, 7
    %v3088 = vsub.s32 %v3085, %v3087
    %v3089 = vrot.slane %v3081, %v3088
    %v3091 = vunpack.c.l.s4 1983009808
    %v3092 = vunpack.c.0.s8 %v3091
    %v3093 = vlaneseq
    %v3094 = vshrl.u32 %v3093, 7
    %v3095 = vsub.s32 %v3092, %v3094
    %v3096 = vrot.slane %v3082, %v3095
    %v3097 = vcombine.low %v3073, %v3089
    %v3098 = vcombine.high %v3073, %v3089
    %v3100 = vunpack.c.l.s4 1934713408
    %v3101 = vunpack.c.0.s8 %v3100
    %v3102 = vlaneseq
    %v3103 = vshrl.u32 %v3102, 7
    %v3104 = vsub.s32 %v3101, %v3103
    %v3105 = vrot.slane %v3097, %v3104
    %v3107 = vunpack.c.l.s4 1934713408
    %v3108 = vunpack.c.0.s8 %v3107
    %v3109 = vlaneseq
    %v3110 = vshrl.u32 %v3109, 7
    %v3111 = vsub.s32 %v3108, %v3110
    %v3112 = vrot.slane %v3098, %v3111
    %v3113 = vcombine.low %v3080, %v3096
    %v3114 = vcombine.high %v3080, %v3096
    %v3116 = vunpack.c.l.s4 1934713408
    %v3117 = vunpack.c.0.s8 %v3116
    %v3118 = vlaneseq
    %v3119 = vshrl.u32 %v3118, 7
    %v3120 = vsub.s32 %v3117, %v3119
    %v3121 = vrot.slane %v3113, %v3120
    %v3123 = vunpack.c.l.s4 1934713408
    %v3124 = vunpack.c.0.s8 %v3123
    %v3125 = vlaneseq
    %v3126 = vshrl.u32 %v3125, 7
    %v3127 = vsub.s32 %v3124, %v3126
    %v3128 = vrot.slane %v3114, %v3127
    %v3129 = vcombine.high %v3105, 0.0
    %v3130 = vcombine.high %v3112, 0.0
    %v3131 = vcombine.high %v3121, 0.0
    %v3132 = vcombine.high %v3128, 0.0
    %v3133 = vcombine.low %v2612, %v2676
    %v3134 = vcombine.high %v2612, %v2676
    %v3136 = vunpack.c.l.s4 1983009808
    %v3137 = vunpack.c.0.s8 %v3136
    %v3138 = vlaneseq
    %v3139 = vshrl.u32 %v3138, 7
    %v3140 = vsub.s32 %v3137, %v3139
    %v3141 = vrot.slane %v3133, %v3140
    %v3143 = vunpack.c.l.s4 1983009808
    %v3144 = vunpack.c.0.s8 %v3143
    %v3145 = vlaneseq
    %v3146 = vshrl.u32 %v3145, 7
    %v3147 = vsub.s32 %v3144, %v3146
    %v3148 = vrot.slane %v3134, %v3147
    %v3149 = vcombine.low %v2644, %v2708
    %v3150 = vcombine.high %v2644, %v2708
    %v3152 = vunpack.c.l.s4 1983009808
    %v3153 = vunpack.c.0.s8 %v3152
    %v3154 = vlaneseq
    %v3155 = vshrl.u32 %v3154, 7
    %v3156 = vsub.s32 %v3153, %v3155
    %v3157 = vrot.slane %v3149, %v3156
    %v3159 = vunpack.c.l.s4 1983009808
    %v3160 = vunpack.c.0.s8 %v3159
    %v3161 = vlaneseq
    %v3162 = vshrl.u32 %v3161, 7
    %v3163 = vsub.s32 %v3160, %v3162
    %v3164 = vrot.slane %v3150, %v3163
    %v3165 = vcombine.low %v3141, %v3157
    %v3166 = vcombine.high %v3141, %v3157
    %v3168 = vunpack.c.l.s4 1934713408
    %v3169 = vunpack.c.0.s8 %v3168
    %v3170 = vlaneseq
    %v3171 = vshrl.u32 %v3170, 7
    %v3172 = vsub.s32 %v3169, %v3171
    %v3173 = vrot.slane %v3165, %v3172
    %v3175 = vunpack.c.l.s4 1934713408
    %v3176 = vunpack.c.0.s8 %v3175
    %v3177 = vlaneseq
    %v3178 = vshrl.u32 %v3177, 7
    %v3179 = vsub.s32 %v3176, %v3178
    %v3180 = vrot.slane %v3166, %v3179
    %v3181 = vcombine.low %v3148, %v3164
    %v3182 = vcombine.high %v3148, %v3164
    %v3184 = vunpack.c.l.s4 1934713408
    %v3185 = vunpack.c.0.s8 %v3184
    %v3186 = vlaneseq
    %v3187 = vshrl.u32 %v3186, 7
    %v3188 = vsub.s32 %v3185, %v3187
    %v3189 = vrot.slane %v3181, %v3188
    %v3191 = vunpack.c.l.s4 1934713408
    %v3192 = vunpack.c.0.s8 %v3191
    %v3193 = vlaneseq
    %v3194 = vshrl.u32 %v3193, 7
    %v3195 = vsub.s32 %v3192, %v3194
    %v3196 = vrot.slane %v3182, %v3195
    %v3197 = vcombine.high %v3173, 0.0
    %v3198 = vcombine.high %v3180, 0.0
    %v3199 = vcombine.high %v3189, 0.0
    %v3200 = vcombine.high %v3196, 0.0
    %v3201 = vcombine.low %v2614, %v2678
    %v3202 = vcombine.high %v2614, %v2678
    %v3204 = vunpack.c.l.s4 1983009808
    %v3205 = vunpack.c.0.s8 %v3204
    %v3206 = vlaneseq
    %v3207 = vshrl.u32 %v3206, 7
    %v3208 = vsub.s32 %v3205, %v3207
    %v3209 = vrot.slane %v3201, %v3208
    %v3211 = vunpack.c.l.s4 1983009808
    %v3212 = vunpack.c.0.s8 %v3211
    %v3213 = vlaneseq
    %v3214 = vshrl.u32 %v3213, 7
    %v3215 = vsub.s32 %v3212, %v3214
    %v3216 = vrot.slane %v3202, %v3215
    %v3217 = vcombine.low %v2646, %v2710
    %v3218 = vcombine.high %v2646, %v2710
    %v3220 = vunpack.c.l.s4 1983009808
    %v3221 = vunpack.c.0.s8 %v3220
    %v3222 = vlaneseq
    %v3223 = vshrl.u32 %v3222, 7
    %v3224 = vsub.s32 %v3221, %v3223
    %v3225 = vrot.slane %v3217, %v3224
    %v3227 = vunpack.c.l.s4 1983009808
    %v3228 = vunpack.c.0.s8 %v3227
    %v3229 = vlaneseq
    %v3230 = vshrl.u32 %v3229, 7
    %v3231 = vsub.s32 %v3228, %v3230
    %v3232 = vrot.slane %v3218, %v3231
    %v3233 = vcombine.low %v3209, %v3225
    %v3234 = vcombine.high %v3209, %v3225
    %v3236 = vunpack.c.l.s4 1934713408
    %v3237 = vunpack.c.0.s8 %v3236
    %v3238 = vlaneseq
    %v3239 = vshrl.u32 %v3238, 7
    %v3240 = vsub.s32 %v3237, %v3239
    %v3241 = vrot.slane %v3233, %v3240
    %v3243 = vunpack.c.l.s4 1934713408
    %v3244 = vunpack.c.0.s8 %v3243
    %v3245 = vlaneseq
    %v3246 = vshrl.u32 %v3245, 7
    %v3247 = vsub.s32 %v3244, %v3246
    %v3248 = vrot.slane %v3234, %v3247
    %v3249 = vcombine.low %v3216, %v3232
    %v3250 = vcombine.high %v3216, %v3232
    %v3252 = vunpack.c.l.s4 1934713408
    %v3253 = vunpack.c.0.s8 %v3252
    %v3254 = vlaneseq
    %v3255 = vshrl.u32 %v3254, 7
    %v3256 = vsub.s32 %v3253, %v3255
    %v3257 = vrot.slane %v3249, %v3256
    %v3259 = vunpack.c.l.s4 1934713408
    %v3260 = vunpack.c.0.s8 %v3259
    %v3261 = vlaneseq
    %v3262 = vshrl.u32 %v3261, 7
    %v3263 = vsub.s32 %v3260, %v3262
    %v3264 = vrot.slane %v3250, %v3263
    %v3265 = vcombine.high %v3241, 0.0
    %v3266 = vcombine.high %v3248, 0.0
    %v3267 = vcombine.high %v3257, 0.0
    %v3268 = vcombine.high %v3264, 0.0
    %v3269 = vcombine.low %v2616, %v2680
    %v3270 = vcombine.high %v2616, %v2680
    %v3272 = vunpack.c.l.s4 1983009808
    %v3273 = vunpack.c.0.s8 %v3272
    %v3274 = vlaneseq
    %v3275 = vshrl.u32 %v3274, 7
    %v3276 = vsub.s32 %v3273, %v3275
    %v3277 = vrot.slane %v3269, %v3276
    %v3279 = vunpack.c.l.s4 1983009808
    %v3280 = vunpack.c.0.s8 %v3279
    %v3281 = vlaneseq
    %v3282 = vshrl.u32 %v3281, 7
    %v3283 = vsub.s32 %v3280, %v3282
    %v3284 = vrot.slane %v3270, %v3283
    %v3285 = vcombine.low %v2648, %v2712
    %v3286 = vcombine.high %v2648, %v2712
    %v3288 = vunpack.c.l.s4 1983009808
    %v3289 = vunpack.c.0.s8 %v3288
    %v3290 = vlaneseq
    %v3291 = vshrl.u32 %v3290, 7
    %v3292 = vsub.s32 %v3289, %v3291
    %v3293 = vrot.slane %v3285, %v3292
    %v3295 = vunpack.c.l.s4 1983009808
    %v3296 = vunpack.c.0.s8 %v3295
    %v3297 = vlaneseq
    %v3298 = vshrl.u32 %v3297, 7
    %v3299 = vsub.s32 %v3296, %v3298
    %v3300 = vrot.slane %v3286, %v3299
    %v3301 = vcombine.low %v3277, %v3293
    %v3302 = vcombine.high %v3277, %v3293
    %v3304 = vunpack.c.l.s4 1934713408
    %v3305 = vunpack.c.0.s8 %v3304
    %v3306 = vlaneseq
    %v3307 = vshrl.u32 %v3306, 7
    %v3308 = vsub.s32 %v3305, %v3307
    %v3309 = vrot.slane %v3301, %v3308
    %v3311 = vunpack.c.l.s4 1934713408
    %v3312 = vunpack.c.0.s8 %v3311
    %v3313 = vlaneseq
    %v3314 = vshrl.u32 %v3313, 7
    %v3315 = vsub.s32 %v3312, %v3314
    %v3316 = vrot.slane %v3302, %v3315
    %v3317 = vcombine.low %v3284, %v3300
    %v3318 = vcombine.high %v3284, %v3300
    %v3320 = vunpack.c.l.s4 1934713408
    %v3321 = vunpack.c.0.s8 %v3320
    %v3322 = vlaneseq
    %v3323 = vshrl.u32 %v3322, 7
    %v3324 = vsub.s32 %v3321, %v3323
    %v3325 = vrot.slane %v3317, %v3324
    %v3327 = vunpack.c.l.s4 1934713408
    %v3328 = vunpack.c.0.s8 %v3327
    %v3329 = vlaneseq
    %v3330 = vshrl.u32 %v3329, 7
    %v3331 = vsub.s32 %v3328, %v3330
    %v3332 = vrot.slane %v3318, %v3331
    %v3333 = vcombine.high %v3309, 0.0
    %v3334 = vcombine.high %v3316, 0.0
    %v3335 = vcombine.high %v3325, 0.0
    %v3336 = vcombine.high %v3332, 0.0
    %v3337 = vcombine.low %v2618, %v2682
    %v3338 = vcombine.high %v2618, %v2682
    %v3340 = vunpack.c.l.s4 1983009808
    %v3341 = vunpack.c.0.s8 %v3340
    %v3342 = vlaneseq
    %v3343 = vshrl.u32 %v3342, 7
    %v3344 = vsub.s32 %v3341, %v3343
    %v3345 = vrot.slane %v3337, %v3344
    %v3347 = vunpack.c.l.s4 1983009808
    %v3348 = vunpack.c.0.s8 %v3347
    %v3349 = vlaneseq
    %v3350 = vshrl.u32 %v3349, 7
    %v3351 = vsub.s32 %v3348, %v3350
    %v3352 = vrot.slane %v3338, %v3351
    %v3353 = vcombine.low %v2650, %v2714
    %v3354 = vcombine.high %v2650, %v2714
    %v3356 = vunpack.c.l.s4 1983009808
    %v3357 = vunpack.c.0.s8 %v3356
    %v3358 = vlaneseq
    %v3359 = vshrl.u32 %v3358, 7
    %v3360 = vsub.s32 %v3357, %v3359
    %v3361 = vrot.slane %v3353, %v3360
    %v3363 = vunpack.c.l.s4 1983009808
    %v3364 = vunpack.c.0.s8 %v3363
    %v3365 = vlaneseq
    %v3366 = vshrl.u32 %v3365, 7
    %v3367 = vsub.s32 %v3364, %v3366
    %v3368 = vrot.slane %v3354, %v3367
    %v3369 = vcombine.low %v3345, %v3361
    %v3370 = vcombine.high %v3345, %v3361
    %v3372 = vunpack.c.l.s4 1934713408
    %v3373 = vunpack.c.0.s8 %v3372
    %v3374 = vlaneseq
    %v3375 = vshrl.u32 %v3374, 7
    %v3376 = vsub.s32 %v3373, %v3375
    %v3377 = vrot.slane %v3369, %v3376
    %v3379 = vunpack.c.l.s4 1934713408
    %v3380 = vunpack.c.0.s8 %v3379
    %v3381 = vlaneseq
    %v3382 = vshrl.u32 %v3381, 7
    %v3383 = vsub.s32 %v3380, %v3382
    %v3384 = vrot.slane %v3370, %v3383
    %v3385 = vcombine.low %v3352, %v3368
    %v3386 = vcombine.high %v3352, %v3368
    %v3388 = vunpack.c.l.s4 1934713408
    %v3389 = vunpack.c.0.s8 %v3388
    %v3390 = vlaneseq
    %v3391 = vshrl.u32 %v3390, 7
    %v3392 = vsub.s32 %v3389, %v3391
    %v3393 = vrot.slane %v3385, %v3392
    %v3395 = vunpack.c.l.s4 1934713408
    %v3396 = vunpack.c.0.s8 %v3395
    %v3397 = vlaneseq
    %v3398 = vshrl.u32 %v3397, 7
    %v3399 = vsub.s32 %v3396, %v3398
    %v3400 = vrot.slane %v3386, %v3399
    %v3401 = vcombine.high %v3377, 0.0
    %v3402 = vcombine.high %v3384, 0.0
    %v3403 = vcombine.high %v3393, 0.0
    %v3404 = vcombine.high %v3400, 0.0
    %v3405 = vcombine.low %v2620, %v2684
    %v3406 = vcombine.high %v2620, %v2684
    %v3408 = vunpack.c.l.s4 1983009808
    %v3409 = vunpack.c.0.s8 %v3408
    %v3410 = vlaneseq
    %v3411 = vshrl.u32 %v3410, 7
    %v3412 = vsub.s32 %v3409, %v3411
    %v3413 = vrot.slane %v3405, %v3412
    %v3415 = vunpack.c.l.s4 1983009808
    %v3416 = vunpack.c.0.s8 %v3415
    %v3417 = vlaneseq
    %v3418 = vshrl.u32 %v3417, 7
    %v3419 = vsub.s32 %v3416, %v3418
    %v3420 = vrot.slane %v3406, %v3419
    %v3421 = vcombine.low %v2652, %v2716
    %v3422 = vcombine.high %v2652, %v2716
    %v3424 = vunpack.c.l.s4 1983009808
    %v3425 = vunpack.c.0.s8 %v3424
    %v3426 = vlaneseq
    %v3427 = vshrl.u32 %v3426, 7
    %v3428 = vsub.s32 %v3425, %v3427
    %v3429 = vrot.slane %v3421, %v3428
    %v3431 = vunpack.c.l.s4 1983009808
    %v3432 = vunpack.c.0.s8 %v3431
    %v3433 = vlaneseq
    %v3434 = vshrl.u32 %v3433, 7
    %v3435 = vsub.s32 %v3432, %v3434
    %v3436 = vrot.slane %v3422, %v3435
    %v3437 = vcombine.low %v3413, %v3429
    %v3438 = vcombine.high %v3413, %v3429
    %v3440 = vunpack.c.l.s4 1934713408
    %v3441 = vunpack.c.0.s8 %v3440
    %v3442 = vlaneseq
    %v3443 = vshrl.u32 %v3442, 7
    %v3444 = vsub.s32 %v3441, %v3443
    %v3445 = vrot.slane %v3437, %v3444
    %v3447 = vunpack.c.l.s4 1934713408
    %v3448 = vunpack.c.0.s8 %v3447
    %v3449 = vlaneseq
    %v3450 = vshrl.u32 %v3449, 7
    %v3451 = vsub.s32 %v3448, %v3450
    %v3452 = vrot.slane %v3438, %v3451
    %v3453 = vcombine.low %v3420, %v3436
    %v3454 = vcombine.high %v3420, %v3436
    %v3456 = vunpack.c.l.s4 1934713408
    %v3457 = vunpack.c.0.s8 %v3456
    %v3458 = vlaneseq
    %v3459 = vshrl.u32 %v3458, 7
    %v3460 = vsub.s32 %v3457, %v3459
    %v3461 = vrot.slane %v3453, %v3460
    %v3463 = vunpack.c.l.s4 1934713408
    %v3464 = vunpack.c.0.s8 %v3463
    %v3465 = vlaneseq
    %v3466 = vshrl.u32 %v3465, 7
    %v3467 = vsub.s32 %v3464, %v3466
    %v3468 = vrot.slane %v3454, %v3467
    %v3469 = vcombine.high %v3445, 0.0
    %v3470 = vcombine.high %v3452, 0.0
    %v3471 = vcombine.high %v3461, 0.0
    %v3472 = vcombine.high %v3468, 0.0
    %v3473 = vcombine.low %v2622, %v2686
    %v3474 = vcombine.high %v2622, %v2686
    %v3476 = vunpack.c.l.s4 1983009808
    %v3477 = vunpack.c.0.s8 %v3476
    %v3478 = vlaneseq
    %v3479 = vshrl.u32 %v3478, 7
    %v3480 = vsub.s32 %v3477, %v3479
    %v3481 = vrot.slane %v3473, %v3480
    %v3483 = vunpack.c.l.s4 1983009808
    %v3484 = vunpack.c.0.s8 %v3483
    %v3485 = vlaneseq
    %v3486 = vshrl.u32 %v3485, 7
    %v3487 = vsub.s32 %v3484, %v3486
    %v3488 = vrot.slane %v3474, %v3487
    %v3489 = vcombine.low %v2654, %v2718
    %v3490 = vcombine.high %v2654, %v2718
    %v3492 = vunpack.c.l.s4 1983009808
    %v3493 = vunpack.c.0.s8 %v3492
    %v3494 = vlaneseq
    %v3495 = vshrl.u32 %v3494, 7
    %v3496 = vsub.s32 %v3493, %v3495
    %v3497 = vrot.slane %v3489, %v3496
    %v3499 = vunpack.c.l.s4 1983009808
    %v3500 = vunpack.c.0.s8 %v3499
    %v3501 = vlaneseq
    %v3502 = vshrl.u32 %v3501, 7
    %v3503 = vsub.s32 %v3500, %v3502
    %v3504 = vrot.slane %v3490, %v3503
    %v3505 = vcombine.low %v3481, %v3497
    %v3506 = vcombine.high %v3481, %v3497
    %v3508 = vunpack.c.l.s4 1934713408
    %v3509 = vunpack.c.0.s8 %v3508
    %v3510 = vlaneseq
    %v3511 = vshrl.u32 %v3510, 7
    %v3512 = vsub.s32 %v3509, %v3511
    %v3513 = vrot.slane %v3505, %v3512
    %v3515 = vunpack.c.l.s4 1934713408
    %v3516 = vunpack.c.0.s8 %v3515
    %v3517 = vlaneseq
    %v3518 = vshrl.u32 %v3517, 7
    %v3519 = vsub.s32 %v3516, %v3518
    %v3520 = vrot.slane %v3506, %v3519
    %v3521 = vcombine.low %v3488, %v3504
    %v3522 = vcombine.high %v3488, %v3504
    %v3524 = vunpack.c.l.s4 1934713408
    %v3525 = vunpack.c.0.s8 %v3524
    %v3526 = vlaneseq
    %v3527 = vshrl.u32 %v3526, 7
    %v3528 = vsub.s32 %v3525, %v3527
    %v3529 = vrot.slane %v3521, %v3528
    %v3531 = vunpack.c.l.s4 1934713408
    %v3532 = vunpack.c.0.s8 %v3531
    %v3533 = vlaneseq
    %v3534 = vshrl.u32 %v3533, 7
    %v3535 = vsub.s32 %v3532, %v3534
    %v3536 = vrot.slane %v3522, %v3535
    %v3537 = vcombine.high %v3513, 0.0
    %v3538 = vcombine.high %v3520, 0.0
    %v3539 = vcombine.high %v3529, 0.0
    %v3540 = vcombine.high %v3536, 0.0
    %v3541 = vcombine.low %v2624, %v2688
    %v3542 = vcombine.high %v2624, %v2688
    %v3544 = vunpack.c.l.s4 1983009808
    %v3545 = vunpack.c.0.s8 %v3544
    %v3546 = vlaneseq
    %v3547 = vshrl.u32 %v3546, 7
    %v3548 = vsub.s32 %v3545, %v3547
    %v3549 = vrot.slane %v3541, %v3548
    %v3551 = vunpack.c.l.s4 1983009808
    %v3552 = vunpack.c.0.s8 %v3551
    %v3553 = vlaneseq
    %v3554 = vshrl.u32 %v3553, 7
    %v3555 = vsub.s32 %v3552, %v3554
    %v3556 = vrot.slane %v3542, %v3555
    %v3557 = vcombine.low %v2656, %v2720
    %v3558 = vcombine.high %v2656, %v2720
    %v3560 = vunpack.c.l.s4 1983009808
    %v3561 = vunpack.c.0.s8 %v3560
    %v3562 = vlaneseq
    %v3563 = vshrl.u32 %v3562, 7
    %v3564 = vsub.s32 %v3561, %v3563
    %v3565 = vrot.slane %v3557, %v3564
    %v3567 = vunpack.c.l.s4 1983009808
    %v3568 = vunpack.c.0.s8 %v3567
    %v3569 = vlaneseq
    %v3570 = vshrl.u32 %v3569, 7
    %v3571 = vsub.s32 %v3568, %v3570
    %v3572 = vrot.slane %v3558, %v3571
    %v3573 = vcombine.low %v3549, %v3565
    %v3574 = vcombine.high %v3549, %v3565
    %v3576 = vunpack.c.l.s4 1934713408
    %v3577 = vunpack.c.0.s8 %v3576
    %v3578 = vlaneseq
    %v3579 = vshrl.u32 %v3578, 7
    %v3580 = vsub.s32 %v3577, %v3579
    %v3581 = vrot.slane %v3573, %v3580
    %v3583 = vunpack.c.l.s4 1934713408
    %v3584 = vunpack.c.0.s8 %v3583
    %v3585 = vlaneseq
    %v3586 = vshrl.u32 %v3585, 7
    %v3587 = vsub.s32 %v3584, %v3586
    %v3588 = vrot.slane %v3574, %v3587
    %v3589 = vcombine.low %v3556, %v3572
    %v3590 = vcombine.high %v3556, %v3572
    %v3592 = vunpack.c.l.s4 1934713408
    %v3593 = vunpack.c.0.s8 %v3592
    %v3594 = vlaneseq
    %v3595 = vshrl.u32 %v3594, 7
    %v3596 = vsub.s32 %v3593, %v3595
    %v3597 = vrot.slane %v3589, %v3596
    %v3599 = vunpack.c.l.s4 1934713408
    %v3600 = vunpack.c.0.s8 %v3599
    %v3601 = vlaneseq
    %v3602 = vshrl.u32 %v3601, 7
    %v3603 = vsub.s32 %v3600, %v3602
    %v3604 = vrot.slane %v3590, %v3603
    %v3605 = vcombine.high %v3581, 0.0
    %v3606 = vcombine.high %v3588, 0.0
    %v3607 = vcombine.high %v3597, 0.0
    %v3608 = vcombine.high %v3604, 0.0
    %v3609 = vcombine.low %v2626, %v2690
    %v3610 = vcombine.high %v2626, %v2690
    %v3612 = vunpack.c.l.s4 1983009808
    %v3613 = vunpack.c.0.s8 %v3612
    %v3614 = vlaneseq
    %v3615 = vshrl.u32 %v3614, 7
    %v3616 = vsub.s32 %v3613, %v3615
    %v3617 = vrot.slane %v3609, %v3616
    %v3619 = vunpack.c.l.s4 1983009808
    %v3620 = vunpack.c.0.s8 %v3619
    %v3621 = vlaneseq
    %v3622 = vshrl.u32 %v3621, 7
    %v3623 = vsub.s32 %v3620, %v3622
    %v3624 = vrot.slane %v3610, %v3623
    %v3625 = vcombine.low %v2658, %v2722
    %v3626 = vcombine.high %v2658, %v2722
    %v3628 = vunpack.c.l.s4 1983009808
    %v3629 = vunpack.c.0.s8 %v3628
    %v3630 = vlaneseq
    %v3631 = vshrl.u32 %v3630, 7
    %v3632 = vsub.s32 %v3629, %v3631
    %v3633 = vrot.slane %v3625, %v3632
    %v3635 = vunpack.c.l.s4 1983009808
    %v3636 = vunpack.c.0.s8 %v3635
    %v3637 = vlaneseq
    %v3638 = vshrl.u32 %v3637, 7
    %v3639 = vsub.s32 %v3636, %v3638
    %v3640 = vrot.slane %v3626, %v3639
    %v3641 = vcombine.low %v3617, %v3633
    %v3642 = vcombine.high %v3617, %v3633
    %v3644 = vunpack.c.l.s4 1934713408
    %v3645 = vunpack.c.0.s8 %v3644
    %v3646 = vlaneseq
    %v3647 = vshrl.u32 %v3646, 7
    %v3648 = vsub.s32 %v3645, %v3647
    %v3649 = vrot.slane %v3641, %v3648
    %v3651 = vunpack.c.l.s4 1934713408
    %v3652 = vunpack.c.0.s8 %v3651
    %v3653 = vlaneseq
    %v3654 = vshrl.u32 %v3653, 7
    %v3655 = vsub.s32 %v3652, %v3654
    %v3656 = vrot.slane %v3642, %v3655
    %v3657 = vcombine.low %v3624, %v3640
    %v3658 = vcombine.high %v3624, %v3640
    %v3660 = vunpack.c.l.s4 1934713408
    %v3661 = vunpack.c.0.s8 %v3660
    %v3662 = vlaneseq
    %v3663 = vshrl.u32 %v3662, 7
    %v3664 = vsub.s32 %v3661, %v3663
    %v3665 = vrot.slane %v3657, %v3664
    %v3667 = vunpack.c.l.s4 1934713408
    %v3668 = vunpack.c.0.s8 %v3667
    %v3669 = vlaneseq
    %v3670 = vshrl.u32 %v3669, 7
    %v3671 = vsub.s32 %v3668, %v3670
    %v3672 = vrot.slane %v3658, %v3671
    %v3673 = vcombine.high %v3649, 0.0
    %v3674 = vcombine.high %v3656, 0.0
    %v3675 = vcombine.high %v3665, 0.0
    %v3676 = vcombine.high %v3672, 0.0
    %v3677 = vcombine.low %v2628, %v2692
    %v3678 = vcombine.high %v2628, %v2692
    %v3680 = vunpack.c.l.s4 1983009808
    %v3681 = vunpack.c.0.s8 %v3680
    %v3682 = vlaneseq
    %v3683 = vshrl.u32 %v3682, 7
    %v3684 = vsub.s32 %v3681, %v3683
    %v3685 = vrot.slane %v3677, %v3684
    %v3687 = vunpack.c.l.s4 1983009808
    %v3688 = vunpack.c.0.s8 %v3687
    %v3689 = vlaneseq
    %v3690 = vshrl.u32 %v3689, 7
    %v3691 = vsub.s32 %v3688, %v3690
    %v3692 = vrot.slane %v3678, %v3691
    %v3693 = vcombine.low %v2660, %v2724
    %v3694 = vcombine.high %v2660, %v2724
    %v3696 = vunpack.c.l.s4 1983009808
    %v3697 = vunpack.c.0.s8 %v3696
    %v3698 = vlaneseq
    %v3699 = vshrl.u32 %v3698, 7
    %v3700 = vsub.s32 %v3697, %v3699
    %v3701 = vrot.slane %v3693, %v3700
    %v3703 = vunpack.c.l.s4 1983009808
    %v3704 = vunpack.c.0.s8 %v3703
    %v3705 = vlaneseq
    %v3706 = vshrl.u32 %v3705, 7
    %v3707 = vsub.s32 %v3704, %v3706
    %v3708 = vrot.slane %v3694, %v3707
    %v3709 = vcombine.low %v3685, %v3701
    %v3710 = vcombine.high %v3685, %v3701
    %v3712 = vunpack.c.l.s4 1934713408
    %v3713 = vunpack.c.0.s8 %v3712
    %v3714 = vlaneseq
    %v3715 = vshrl.u32 %v3714, 7
    %v3716 = vsub.s32 %v3713, %v3715
    %v3717 = vrot.slane %v3709, %v3716
    %v3719 = vunpack.c.l.s4 1934713408
    %v3720 = vunpack.c.0.s8 %v3719
    %v3721 = vlaneseq
    %v3722 = vshrl.u32 %v3721, 7
    %v3723 = vsub.s32 %v3720, %v3722
    %v3724 = vrot.slane %v3710, %v3723
    %v3725 = vcombine.low %v3692, %v3708
    %v3726 = vcombine.high %v3692, %v3708
    %v3728 = vunpack.c.l.s4 1934713408
    %v3729 = vunpack.c.0.s8 %v3728
    %v3730 = vlaneseq
    %v3731 = vshrl.u32 %v3730, 7
    %v3732 = vsub.s32 %v3729, %v3731
    %v3733 = vrot.slane %v3725, %v3732
    %v3735 = vunpack.c.l.s4 1934713408
    %v3736 = vunpack.c.0.s8 %v3735
    %v3737 = vlaneseq
    %v3738 = vshrl.u32 %v3737, 7
    %v3739 = vsub.s32 %v3736, %v3738
    %v3740 = vrot.slane %v3726, %v3739
    %v3741 = vcombine.high %v3717, 0.0
    %v3742 = vcombine.high %v3724, 0.0
    %v3743 = vcombine.high %v3733, 0.0
    %v3744 = vcombine.high %v3740, 0.0
    %v3745 = vcombine.low %v2630, %v2694
    %v3746 = vcombine.high %v2630, %v2694
    %v3748 = vunpack.c.l.s4 1983009808
    %v3749 = vunpack.c.0.s8 %v3748
    %v3750 = vlaneseq
    %v3751 = vshrl.u32 %v3750, 7
    %v3752 = vsub.s32 %v3749, %v3751
    %v3753 = vrot.slane %v3745, %v3752
    %v3755 = vunpack.c.l.s4 1983009808
    %v3756 = vunpack.c.0.s8 %v3755
    %v3757 = vlaneseq
    %v3758 = vshrl.u32 %v3757, 7
    %v3759 = vsub.s32 %v3756, %v3758
    %v3760 = vrot.slane %v3746, %v3759
    %v3761 = vcombine.low %v2662, %v2726
    %v3762 = vcombine.high %v2662, %v2726
    %v3764 = vunpack.c.l.s4 1983009808
    %v3765 = vunpack.c.0.s8 %v3764
    %v3766 = vlaneseq
    %v3767 = vshrl.u32 %v3766, 7
    %v3768 = vsub.s32 %v3765, %v3767
    %v3769 = vrot.slane %v3761, %v3768
    %v3771 = vunpack.c.l.s4 1983009808
    %v3772 = vunpack.c.0.s8 %v3771
    %v3773 = vlaneseq
    %v3774 = vshrl.u32 %v3773, 7
    %v3775 = vsub.s32 %v3772, %v3774
    %v3776 = vrot.slane %v3762, %v3775
    %v3777 = vcombine.low %v3753, %v3769
    %v3778 = vcombine.high %v3753, %v3769
    %v3780 = vunpack.c.l.s4 1934713408
    %v3781 = vunpack.c.0.s8 %v3780
    %v3782 = vlaneseq
    %v3783 = vshrl.u32 %v3782, 7
    %v3784 = vsub.s32 %v3781, %v3783
    %v3785 = vrot.slane %v3777, %v3784
    %v3787 = vunpack.c.l.s4 1934713408
    %v3788 = vunpack.c.0.s8 %v3787
    %v3789 = vlaneseq
    %v3790 = vshrl.u32 %v3789, 7
    %v3791 = vsub.s32 %v3788, %v3790
    %v3792 = vrot.slane %v3778, %v3791
    %v3793 = vcombine.low %v3760, %v3776
    %v3794 = vcombine.high %v3760, %v3776
    %v3796 = vunpack.c.l.s4 1934713408
    %v3797 = vunpack.c.0.s8 %v3796
    %v3798 = vlaneseq
    %v3799 = vshrl.u32 %v3798, 7
    %v3800 = vsub.s32 %v3797, %v3799
    %v3801 = vrot.slane %v3793, %v3800
    %v3803 = vunpack.c.l.s4 1934713408
    %v3804 = vunpack.c.0.s8 %v3803
    %v3805 = vlaneseq
    %v3806 = vshrl.u32 %v3805, 7
    %v3807 = vsub.s32 %v3804, %v3806
    %v3808 = vrot.slane %v3794, %v3807
    %v3809 = vcombine.high %v3785, 0.0
    %v3810 = vcombine.high %v3792, 0.0
    %v3811 = vcombine.high %v3801, 0.0
    %v3812 = vcombine.high %v3808, 0.0
    %v3813 = vcombine.low %v2632, %v2696
    %v3814 = vcombine.high %v2632, %v2696
    %v3816 = vunpack.c.l.s4 1983009808
    %v3817 = vunpack.c.0.s8 %v3816
    %v3818 = vlaneseq
    %v3819 = vshrl.u32 %v3818, 7
    %v3820 = vsub.s32 %v3817, %v3819
    %v3821 = vrot.slane %v3813, %v3820
    %v3823 = vunpack.c.l.s4 1983009808
    %v3824 = vunpack.c.0.s8 %v3823
    %v3825 = vlaneseq
    %v3826 = vshrl.u32 %v3825, 7
    %v3827 = vsub.s32 %v3824, %v3826
    %v3828 = vrot.slane %v3814, %v3827
    %v3829 = vcombine.low %v2664, %v2728
    %v3830 = vcombine.high %v2664, %v2728
    %v3832 = vunpack.c.l.s4 1983009808
    %v3833 = vunpack.c.0.s8 %v3832
    %v3834 = vlaneseq
    %v3835 = vshrl.u32 %v3834, 7
    %v3836 = vsub.s32 %v3833, %v3835
    %v3837 = vrot.slane %v3829, %v3836
    %v3839 = vunpack.c.l.s4 1983009808
    %v3840 = vunpack.c.0.s8 %v3839
    %v3841 = vlaneseq
    %v3842 = vshrl.u32 %v3841, 7
    %v3843 = vsub.s32 %v3840, %v3842
    %v3844 = vrot.slane %v3830, %v3843
    %v3845 = vcombine.low %v3821, %v3837
    %v3846 = vcombine.high %v3821, %v3837
    %v3848 = vunpack.c.l.s4 1934713408
    %v3849 = vunpack.c.0.s8 %v3848
    %v3850 = vlaneseq
    %v3851 = vshrl.u32 %v3850, 7
    %v3852 = vsub.s32 %v3849, %v3851
    %v3853 = vrot.slane %v3845, %v3852
    %v3855 = vunpack.c.l.s4 1934713408
    %v3856 = vunpack.c.0.s8 %v3855
    %v3857 = vlaneseq
    %v3858 = vshrl.u32 %v3857, 7
    %v3859 = vsub.s32 %v3856, %v3858
    %v3860 = vrot.slane %v3846, %v3859
    %v3861 = vcombine.low %v3828, %v3844
    %v3862 = vcombine.high %v3828, %v3844
    %v3864 = vunpack.c.l.s4 1934713408
    %v3865 = vunpack.c.0.s8 %v3864
    %v3866 = vlaneseq
    %v3867 = vshrl.u32 %v3866, 7
    %v3868 = vsub.s32 %v3865, %v3867
    %v3869 = vrot.slane %v3861, %v3868
    %v3871 = vunpack.c.l.s4 1934713408
    %v3872 = vunpack.c.0.s8 %v3871
    %v3873 = vlaneseq
    %v3874 = vshrl.u32 %v3873, 7
    %v3875 = vsub.s32 %v3872, %v3874
    %v3876 = vrot.slane %v3862, %v3875
    %v3877 = vcombine.high %v3853, 0.0
    %v3878 = vcombine.high %v3860, 0.0
    %v3879 = vcombine.high %v3869, 0.0
    %v3880 = vcombine.high %v3876, 0.0
    %v3881 = vcombine.low %v2833, %v2840
    %v3883 = vunpack.c.l.s4 1983009808
    %v3884 = vunpack.c.0.s8 %v3883
    %v3885 = vlaneseq
    %v3886 = vshrl.u32 %v3885, 7
    %v3887 = vsub.s32 %v3884, %v3886
    %v3888 = vrot.slane %v3881, %v3887
    %v3889 = vcombine.low %v2857, %v2858
    %v3891 = vunpack.c.l.s4 1983009808
    %v3892 = vunpack.c.0.s8 %v3891
    %v3893 = vlaneseq
    %v3894 = vshrl.u32 %v3893, 7
    %v3895 = vsub.s32 %v3892, %v3894
    %v3896 = vrot.slane %v3889, %v3895
    %v3897 = vcombine.low %v2849, %v2856
    %v3899 = vunpack.c.l.s4 1983009808
    %v3900 = vunpack.c.0.s8 %v3899
    %v3901 = vlaneseq
    %v3902 = vshrl.u32 %v3901, 7
    %v3903 = vsub.s32 %v3900, %v3902
    %v3904 = vrot.slane %v3897, %v3903
    %v3905 = vcombine.low %v2859, %v2860
    %v3907 = vunpack.c.l.s4 1983009808
    %v3908 = vunpack.c.0.s8 %v3907
    %v3909 = vlaneseq
    %v3910 = vshrl.u32 %v3909, 7
    %v3911 = vsub.s32 %v3908, %v3910
    %v3912 = vrot.slane %v3905, %v3911
    %v3913 = vcombine.low %v3888, %v3896
    %v3914 = vcombine.high %v3888, %v3896
    %v3916 = vunpack.c.l.s4 1934713408
    %v3917 = vunpack.c.0.s8 %v3916
    %v3918 = vlaneseq
    %v3919 = vshrl.u32 %v3918, 7
    %v3920 = vsub.s32 %v3917, %v3919
    %v3921 = vrot.slane %v3913, %v3920
    %v3923 = vunpack.c.l.s4 1934713408
    %v3924 = vunpack.c.0.s8 %v3923
    %v3925 = vlaneseq
    %v3926 = vshrl.u32 %v3925, 7
    %v3927 = vsub.s32 %v3924, %v3926
    %v3928 = vrot.slane %v3914, %v3927
    %v3929 = vcombine.low %v3904, %v3912
    %v3930 = vcombine.high %v3904, %v3912
    %v3932 = vunpack.c.l.s4 1934713408
    %v3933 = vunpack.c.0.s8 %v3932
    %v3934 = vlaneseq
    %v3935 = vshrl.u32 %v3934, 7
    %v3936 = vsub.s32 %v3933, %v3935
    %v3937 = vrot.slane %v3929, %v3936
    %v3939 = vunpack.c.l.s4 1934713408
    %v3940 = vunpack.c.0.s8 %v3939
    %v3941 = vlaneseq
    %v3942 = vshrl.u32 %v3941, 7
    %v3943 = vsub.s32 %v3940, %v3942
    %v3944 = vrot.slane %v3930, %v3943
    %v3945 = vcombine.low %v3921, %v3937
    %v3946 = vcombine.high %v3921, %v3937
    %v3947 = vcombine.low %v3928, %v3944
    %v3948 = vcombine.high %v3928, %v3944
    %v3949 = vcombine.low %v2901, %v2908
    %v3951 = vunpack.c.l.s4 1983009808
    %v3952 = vunpack.c.0.s8 %v3951
    %v3953 = vlaneseq
    %v3954 = vshrl.u32 %v3953, 7
    %v3955 = vsub.s32 %v3952, %v3954
    %v3956 = vrot.slane %v3949, %v3955
    %v3957 = vcombine.low %v2925, %v2926
    %v3959 = vunpack.c.l.s4 1983009808
    %v3960 = vunpack.c.0.s8 %v3959
    %v3961 = vlaneseq
    %v3962 = vshrl.u32 %v3961, 7
    %v3963 = vsub.s32 %v3960, %v3962
    %v3964 = vrot.slane %v3957, %v3963
    %v3965 = vcombine.low %v2917, %v2924
    %v3967 = vunpack.c.l.s4 1983009808
    %v3968 = vunpack.c.0.s8 %v3967
    %v3969 = vlaneseq
    %v3970 = vshrl.u32 %v3969, 7
    %v3971 = vsub.s32 %v3968, %v3970
    %v3972 = vrot.slane %v3965, %v3971
    %v3973 = vcombine.low %v2927, %v2928
    %v3975 = vunpack.c.l.s4 1983009808
    %v3976 = vunpack.c.0.s8 %v3975
    %v3977 = vlaneseq
    %v3978 = vshrl.u32 %v3977, 7
    %v3979 = vsub.s32 %v3976, %v3978
    %v3980 = vrot.slane %v3973, %v3979
    %v3981 = vcombine.low %v3956, %v3964
    %v3982 = vcombine.high %v3956, %v3964
    %v3984 = vunpack.c.l.s4 1934713408
    %v3985 = vunpack.c.0.s8 %v3984
    %v3986 = vlaneseq
    %v3987 = vshrl.u32 %v3986, 7
    %v3988 = vsub.s32 %v3985, %v3987
    %v3989 = vrot.slane %v3981, %v3988
    %v3991 = vunpack.c.l.s4 1934713408
    %v3992 = vunpack.c.0.s8 %v3991
    %v3993 = vlaneseq
    %v3994 = vshrl.u32 %v3993, 7
    %v3995 = vsub.s32 %v3992, %v3994
    %v3996 = vrot.slane %v3982, %v3995
    %v3997 = vcombine.low %v3972, %v3980
    %v3998 = vcombine.high %v3972, %v3980
    %v4000 = vunpack.c.l.s4 1934713408
    %v4001 = vunpack.c.0.s8 %v4000
    %v4002 = vlaneseq
    %v4003 = vshrl.u32 %v4002, 7
    %v4004 = vsub.s32 %v4001, %v4003
    %v4005 = vrot.slane %v3997, %v4004
    %v4007 = vunpack.c.l.s4 1934713408
    %v4008 = vunpack.c.0.s8 %v4007
    %v4009 = vlaneseq
    %v4010 = vshrl.u32 %v4009, 7
    %v4011 = vsub.s32 %v4008, %v4010
    %v4012 = vrot.slane %v3998, %v4011
    %v4013 = vcombine.low %v3989, %v4005
    %v4014 = vcombine.high %v3989, %v4005
    %v4015 = vcombine.low %v3996, %v4012
    %v4016 = vcombine.high %v3996, %v4012
    %v4017 = vcombine.low %v2969, %v2976
    %v4019 = vunpack.c.l.s4 1983009808
    %v4020 = vunpack.c.0.s8 %v4019
    %v4021 = vlaneseq
    %v4022 = vshrl.u32 %v4021, 7
    %v4023 = vsub.s32 %v4020, %v4022
    %v4024 = vrot.slane %v4017, %v4023
    %v4025 = vcombine.low %v2993, %v2994
    %v4027 = vunpack.c.l.s4 1983009808
    %v4028 = vunpack.c.0.s8 %v4027
    %v4029 = vlaneseq
    %v4030 = vshrl.u32 %v4029, 7
    %v4031 = vsub.s32 %v4028, %v4030
    %v4032 = vrot.slane %v4025, %v4031
    %v4033 = vcombine.low %v2985, %v2992
    %v4035 = vunpack.c.l.s4 1983009808
    %v4036 = vunpack.c.0.s8 %v4035
    %v4037 = vlaneseq
    %v4038 = vshrl.u32 %v4037, 7
    %v4039 = vsub.s32 %v4036, %v4038
    %v4040 = vrot.slane %v4033, %v4039
    %v4041 = vcombine.low %v2995, %v2996
    %v4043 = vunpack.c.l.s4 1983009808
    %v4044 = vunpack.c.0.s8 %v4043
    %v4045 = vlaneseq
    %v4046 = vshrl.u32 %v4045, 7
    %v4047 = vsub.s32 %v4044, %v4046
    %v4048 = vrot.slane %v4041, %v4047
    %v4049 = vcombine.low %v4024, %v4032
    %v4050 = vcombine.high %v4024, %v4032
    %v4052 = vunpack.c.l.s4 1934713408
    %v4053 = vunpack.c.0.s8 %v4052
    %v4054 = vlaneseq
    %v4055 = vshrl.u32 %v4054, 7
    %v4056 = vsub.s32 %v4053, %v4055
    %v4057 = vrot.slane %v4049, %v4056
    %v4059 = vunpack.c.l.s4 1934713408
    %v4060 = vunpack.c.0.s8 %v4059
    %v4061 = vlaneseq
    %v4062 = vshrl.u32 %v4061, 7
    %v4063 = vsub.s32 %v4060, %v4062
    %v4064 = vrot.slane %v4050, %v4063
    %v4065 = vcombine.low %v4040, %v4048
    %v4066 = vcombine.high %v4040, %v4048
    %v4068 = vunpack.c.l.s4 1934713408
    %v4069 = vunpack.c.0.s8 %v4068
    %v4070 = vlaneseq
    %v4071 = vshrl.u32 %v4070, 7
    %v4072 = vsub.s32 %v4069, %v4071
    %v4073 = vrot.slane %v4065, %v4072
    %v4075 = vunpack.c.l.s4 1934713408
    %v4076 = vunpack.c.0.s8 %v4075
    %v4077 = vlaneseq
    %v4078 = vshrl.u32 %v4077, 7
    %v4079 = vsub.s32 %v4076, %v4078
    %v4080 = vrot.slane %v4066, %v4079
    %v4081 = vcombine.low %v4057, %v4073
    %v4082 = vcombine.high %v4057, %v4073
    %v4083 = vcombine.low %v4064, %v4080
    %v4084 = vcombine.high %v4064, %v4080
    %v4085 = vcombine.low %v3037, %v3044
    %v4087 = vunpack.c.l.s4 1983009808
    %v4088 = vunpack.c.0.s8 %v4087
    %v4089 = vlaneseq
    %v4090 = vshrl.u32 %v4089, 7
    %v4091 = vsub.s32 %v4088, %v4090
    %v4092 = vrot.slane %v4085, %v4091
    %v4093 = vcombine.low %v3061, %v3062
    %v4095 = vunpack.c.l.s4 1983009808
    %v4096 = vunpack.c.0.s8 %v4095
    %v4097 = vlaneseq
    %v4098 = vshrl.u32 %v4097, 7
    %v4099 = vsub.s32 %v4096, %v4098
    %v4100 = vrot.slane %v4093, %v4099
    %v4101 = vcombine.low %v3053, %v3060
    %v4103 = vunpack.c.l.s4 1983009808
    %v4104 = vunpack.c.0.s8 %v4103
    %v4105 = vlaneseq
    %v4106 = vshrl.u32 %v4105, 7
    %v4107 = vsub.s32 %v4104, %v4106
    %v4108 = vrot.slane %v4101, %v4107
    %v4109 = vcombine.low %v3063, %v3064
    %v4111 = vunpack.c.l.s4 1983009808
    %v4112 = vunpack.c.0.s8 %v4111
    %v4113 = vlaneseq
    %v4114 = vshrl.u32 %v4113, 7
    %v4115 = vsub.s32 %v4112, %v4114
    %v4116 = vrot.slane %v4109, %v4115
    %v4117 = vcombine.low %v4092, %v4100
    %v4118 = vcombine.high %v4092, %v4100
    %v4120 = vunpack.c.l.s4 1934713408
    %v4121 = vunpack.c.0.s8 %v4120
    %v4122 = vlaneseq
    %v4123 = vshrl.u32 %v4122, 7
    %v4124 = vsub.s32 %v4121, %v4123
    %v4125 = vrot.slane %v4117, %v4124
    %v4127 = vunpack.c.l.s4 1934713408
    %v4128 = vunpack.c.0.s8 %v4127
    %v4129 = vlaneseq
    %v4130 = vshrl.u32 %v4129, 7
    %v4131 = vsub.s32 %v4128, %v4130
    %v4132 = vrot.slane %v4118, %v4131
    %v4133 = vcombine.low %v4108, %v4116
    %v4134 = vcombine.high %v4108, %v4116
    %v4136 = vunpack.c.l.s4 1934713408
    %v4137 = vunpack.c.0.s8 %v4136
    %v4138 = vlaneseq
    %v4139 = vshrl.u32 %v4138, 7
    %v4140 = vsub.s32 %v4137, %v4139
    %v4141 = vrot.slane %v4133, %v4140
    %v4143 = vunpack.c.l.s4 1934713408
    %v4144 = vunpack.c.0.s8 %v4143
    %v4145 = vlaneseq
    %v4146 = vshrl.u32 %v4145, 7
    %v4147 = vsub.s32 %v4144, %v4146
    %v4148 = vrot.slane %v4134, %v4147
    %v4149 = vcombine.low %v4125, %v4141
    %v4150 = vcombine.high %v4125, %v4141
    %v4151 = vcombine.low %v4132, %v4148
    %v4152 = vcombine.high %v4132, %v4148
    %v4153 = vcombine.low %v3105, %v3112
    %v4155 = vunpack.c.l.s4 1983009808
    %v4156 = vunpack.c.0.s8 %v4155
    %v4157 = vlaneseq
    %v4158 = vshrl.u32 %v4157, 7
    %v4159 = vsub.s32 %v4156, %v4158
    %v4160 = vrot.slane %v4153, %v4159
    %v4161 = vcombine.low %v3129, %v3130
    %v4163 = vunpack.c.l.s4 1983009808
    %v4164 = vunpack.c.0.s8 %v4163
    %v4165 = vlaneseq
    %v4166 = vshrl.u32 %v4165, 7
    %v4167 = vsub.s32 %v4164, %v4166
    %v4168 = vrot.slane %v4161, %v4167
    %v4169 = vcombine.low %v3121, %v3128
    %v4171 = vunpack.c.l.s4 1983009808
    %v4172 = vunpack.c.0.s8 %v4171
    %v4173 = vlaneseq
    %v4174 = vshrl.u32 %v4173, 7
    %v4175 = vsub.s32 %v4172, %v4174
    %v4176 = vrot.slane %v4169, %v4175
    %v4177 = vcombine.low %v3131, %v3132
    %v4179 = vunpack.c.l.s4 1983009808
    %v4180 = vunpack.c.0.s8 %v4179
    %v4181 = vlaneseq
    %v4182 = vshrl.u32 %v4181, 7
    %v4183 = vsub.s32 %v4180, %v4182
    %v4184 = vrot.slane %v4177, %v4183
    %v4185 = vcombine.low %v4160, %v4168
    %v4186 = vcombine.high %v4160, %v4168
    %v4188 = vunpack.c.l.s4 1934713408
    %v4189 = vunpack.c.0.s8 %v4188
    %v4190 = vlaneseq
    %v4191 = vshrl.u32 %v4190, 7
    %v4192 = vsub.s32 %v4189, %v4191
    %v4193 = vrot.slane %v4185, %v4192
    %v4195 = vunpack.c.l.s4 1934713408
    %v4196 = vunpack.c.0.s8 %v4195
    %v4197 = vlaneseq
    %v4198 = vshrl.u32 %v4197, 7
    %v4199 = vsub.s32 %v4196, %v4198
    %v4200 = vrot.slane %v4186, %v4199
    %v4201 = vcombine.low %v4176, %v4184
    %v4202 = vcombine.high %v4176, %v4184
    %v4204 = vunpack.c.l.s4 1934713408
    %v4205 = vunpack.c.0.s8 %v4204
    %v4206 = vlaneseq
    %v4207 = vshrl.u32 %v4206, 7
    %v4208 = vsub.s32 %v4205, %v4207
    %v4209 = vrot.slane %v4201, %v4208
    %v4211 = vunpack.c.l.s4 1934713408
    %v4212 = vunpack.c.0.s8 %v4211
    %v4213 = vlaneseq
    %v4214 = vshrl.u32 %v4213, 7
    %v4215 = vsub.s32 %v4212, %v4214
    %v4216 = vrot.slane %v4202, %v4215
    %v4217 = vcombine.low %v4193, %v4209
    %v4218 = vcombine.high %v4193, %v4209
    %v4219 = vcombine.low %v4200, %v4216
    %v4220 = vcombine.high %v4200, %v4216
    %v4221 = vcombine.low %v3173, %v3180
    %v4223 = vunpack.c.l.s4 1983009808
    %v4224 = vunpack.c.0.s8 %v4223
    %v4225 = vlaneseq
    %v4226 = vshrl.u32 %v4225, 7
    %v4227 = vsub.s32 %v4224, %v4226
    %v4228 = vrot.slane %v4221, %v4227
    %v4229 = vcombine.low %v3197, %v3198
    %v4231 = vunpack.c.l.s4 1983009808
    %v4232 = vunpack.c.0.s8 %v4231
    %v4233 = vlaneseq
    %v4234 = vshrl.u32 %v4233, 7
    %v4235 = vsub.s32 %v4232, %v4234
    %v4236 = vrot.slane %v4229, %v4235
    %v4237 = vcombine.low %v3189, %v3196
    %v4239 = vunpack.c.l.s4 1983009808
    %v4240 = vunpack.c.0.s8 %v4239
    %v4241 = vlaneseq
    %v4242 = vshrl.u32 %v4241, 7
    %v4243 = vsub.s32 %v4240, %v4242
    %v4244 = vrot.slane %v4237, %v4243
    %v4245 = vcombine.low %v3199, %v3200
    %v4247 = vunpack.c.l.s4 1983009808
    %v4248 = vunpack.c.0.s8 %v4247
    %v4249 = vlaneseq
    %v4250 = vshrl.u32 %v4249, 7
    %v4251 = vsub.s32 %v4248, %v4250
    %v4252 = vrot.slane %v4245, %v4251
    %v4253 = vcombine.low %v4228, %v4236
    %v4254 = vcombine.high %v4228, %v4236
    %v4256 = vunpack.c.l.s4 1934713408
    %v4257 = vunpack.c.0.s8 %v4256
    %v4258 = vlaneseq
    %v4259 = vshrl.u32 %v4258, 7
    %v4260 = vsub.s32 %v4257, %v4259
    %v4261 = vrot.slane %v4253, %v4260
    %v4263 = vunpack.c.l.s4 1934713408
    %v4264 = vunpack.c.0.s8 %v4263
    %v4265 = vlaneseq
    %v4266 = vshrl.u32 %v4265, 7
    %v4267 = vsub.s32 %v4264, %v4266
    %v4268 = vrot.slane %v4254, %v4267
    %v4269 = vcombine.low %v4244, %v4252
    %v4270 = vcombine.high %v4244, %v4252
    %v4272 = vunpack.c.l.s4 1934713408
    %v4273 = vunpack.c.0.s8 %v4272
    %v4274 = vlaneseq
    %v4275 = vshrl.u32 %v4274, 7
    %v4276 = vsub.s32 %v4273, %v4275
    %v4277 = vrot.slane %v4269, %v4276
    %v4279 = vunpack.c.l.s4 1934713408
    %v4280 = vunpack.c.0.s8 %v4279
    %v4281 = vlaneseq
    %v4282 = vshrl.u32 %v4281, 7
    %v4283 = vsub.s32 %v4280, %v4282
    %v4284 = vrot.slane %v4270, %v4283
    %v4285 = vcombine.low %v4261, %v4277
    %v4286 = vcombine.high %v4261, %v4277
    %v4287 = vcombine.low %v4268, %v4284
    %v4288 = vcombine.high %v4268, %v4284
    %v4289 = vcombine.low %v3241, %v3248
    %v4291 = vunpack.c.l.s4 1983009808
    %v4292 = vunpack.c.0.s8 %v4291
    %v4293 = vlaneseq
    %v4294 = vshrl.u32 %v4293, 7
    %v4295 = vsub.s32 %v4292, %v4294
    %v4296 = vrot.slane %v4289, %v4295
    %v4297 = vcombine.low %v3265, %v3266
    %v4299 = vunpack.c.l.s4 1983009808
    %v4300 = vunpack.c.0.s8 %v4299
    %v4301 = vlaneseq
    %v4302 = vshrl.u32 %v4301, 7
    %v4303 = vsub.s32 %v4300, %v4302
    %v4304 = vrot.slane %v4297, %v4303
    %v4305 = vcombine.low %v3257, %v3264
    %v4307 = vunpack.c.l.s4 1983009808
    %v4308 = vunpack.c.0.s8 %v4307
    %v4309 = vlaneseq
    %v4310 = vshrl.u32 %v4309, 7
    %v4311 = vsub.s32 %v4308, %v4310
    %v4312 = vrot.slane %v4305, %v4311
    %v4313 = vcombine.low %v3267, %v3268
    %v4315 = vunpack.c.l.s4 1983009808
    %v4316 = vunpack.c.0.s8 %v4315
    %v4317 = vlaneseq
    %v4318 = vshrl.u32 %v4317, 7
    %v4319 = vsub.s32 %v4316, %v4318
    %v4320 = vrot.slane %v4313, %v4319
    %v4321 = vcombine.low %v4296, %v4304
    %v4322 = vcombine.high %v4296, %v4304
    %v4324 = vunpack.c.l.s4 1934713408
    %v4325 = vunpack.c.0.s8 %v4324
    %v4326 = vlaneseq
    %v4327 = vshrl.u32 %v4326, 7
    %v4328 = vsub.s32 %v4325, %v4327
    %v4329 = vrot.slane %v4321, %v4328
    %v4331 = vunpack.c.l.s4 1934713408
    %v4332 = vunpack.c.0.s8 %v4331
    %v4333 = vlaneseq
    %v4334 = vshrl.u32 %v4333, 7
    %v4335 = vsub.s32 %v4332, %v4334
    %v4336 = vrot.slane %v4322, %v4335
    %v4337 = vcombine.low %v4312, %v4320
    %v4338 = vcombine.high %v4312, %v4320
    %v4340 = vunpack.c.l.s4 1934713408
    %v4341 = vunpack.c.0.s8 %v4340
    %v4342 = vlaneseq
    %v4343 = vshrl.u32 %v4342, 7
    %v4344 = vsub.s32 %v4341, %v4343
    %v4345 = vrot.slane %v4337, %v4344
    %v4347 = vunpack.c.l.s4 1934713408
    %v4348 = vunpack.c.0.s8 %v4347
    %v4349 = vlaneseq
    %v4350 = vshrl.u32 %v4349, 7
    %v4351 = vsub.s32 %v4348, %v4350
    %v4352 = vrot.slane %v4338, %v4351
    %v4353 = vcombine.low %v4329, %v4345
    %v4354 = vcombine.high %v4329, %v4345
    %v4355 = vcombine.low %v4336, %v4352
    %v4356 = vcombine.high %v4336, %v4352
    %v4357 = vcombine.low %v3309, %v3316
    %v4359 = vunpack.c.l.s4 1983009808
    %v4360 = vunpack.c.0.s8 %v4359
    %v4361 = vlaneseq
    %v4362 = vshrl.u32 %v4361, 7
    %v4363 = vsub.s32 %v4360, %v4362
    %v4364 = vrot.slane %v4357, %v4363
    %v4365 = vcombine.low %v3333, %v3334
    %v4367 = vunpack.c.l.s4 1983009808
    %v4368 = vunpack.c.0.s8 %v4367
    %v4369 = vlaneseq
    %v4370 = vshrl.u32 %v4369, 7
    %v4371 = vsub.s32 %v4368, %v4370
    %v4372 = vrot.slane %v4365, %v4371
    %v4373 = vcombine.low %v3325, %v3332
    %v4375 = vunpack.c.l.s4 1983009808
    %v4376 = vunpack.c.0.s8 %v4375
    %v4377 = vlaneseq
    %v4378 = vshrl.u32 %v4377, 7
    %v4379 = vsub.s32 %v4376, %v4378
    %v4380 = vrot.slane %v4373, %v4379
    %v4381 = vcombine.low %v3335, %v3336
    %v4383 = vunpack.c.l.s4 1983009808
    %v4384 = vunpack.c.0.s8 %v4383
    %v4385 = vlaneseq
    %v4386 = vshrl.u32 %v4385, 7
    %v4387 = vsub.s32 %v4384, %v4386
    %v4388 = vrot.slane %v4381, %v4387
    %v4389 = vcombine.low %v4364, %v4372
    %v4390 = vcombine.high %v4364, %v4372
    %v4392 = vunpack.c.l.s4 1934713408
    %v4393 = vunpack.c.0.s8 %v4392
    %v4394 = vlaneseq
    %v4395 = vshrl.u32 %v4394, 7
    %v4396 = vsub.s32 %v4393, %v4395
    %v4397 = vrot.slane %v4389, %v4396
    %v4399 = vunpack.c.l.s4 1934713408
    %v4400 = vunpack.c.0.s8 %v4399
    %v4401 = vlaneseq
    %v4402 = vshrl.u32 %v4401, 7
    %v4403 = vsub.s32 %v4400, %v4402
    %v4404 = vrot.slane %v4390, %v4403
    %v4405 = vcombine.low %v4380, %v4388
    %v4406 = vcombine.high %v4380, %v4388
    %v4408 = vunpack.c.l.s4 1934713408
    %v4409 = vunpack.c.0.s8 %v4408
    %v4410 = vlaneseq
    %v4411 = vshrl.u32 %v4410, 7
    %v4412 = vsub.s32 %v4409, %v4411
    %v4413 = vrot.slane %v4405, %v4412
    %v4415 = vunpack.c.l.s4 1934713408
    %v4416 = vunpack.c.0.s8 %v4415
    %v4417 = vlaneseq
    %v4418 = vshrl.u32 %v4417, 7
    %v4419 = vsub.s32 %v4416, %v4418
    %v4420 = vrot.slane %v4406, %v4419
    %v4421 = vcombine.low %v4397, %v4413
    %v4422 = vcombine.high %v4397, %v4413
    %v4423 = vcombine.low %v4404, %v4420
    %v4424 = vcombine.high %v4404, %v4420
    %v4425 = vcombine.low %v3377, %v3384
    %v4427 = vunpack.c.l.s4 1983009808
    %v4428 = vunpack.c.0.s8 %v4427
    %v4429 = vlaneseq
    %v4430 = vshrl.u32 %v4429, 7
    %v4431 = vsub.s32 %v4428, %v4430
    %v4432 = vrot.slane %v4425, %v4431
    %v4433 = vcombine.low %v3401, %v3402
    %v4435 = vunpack.c.l.s4 1983009808
    %v4436 = vunpack.c.0.s8 %v4435
    %v4437 = vlaneseq
    %v4438 = vshrl.u32 %v4437, 7
    %v4439 = vsub.s32 %v4436, %v4438
    %v4440 = vrot.slane %v4433, %v4439
    %v4441 = vcombine.low %v3393, %v3400
    %v4443 = vunpack.c.l.s4 1983009808
    %v4444 = vunpack.c.0.s8 %v4443
    %v4445 = vlaneseq
    %v4446 = vshrl.u32 %v4445, 7
    %v4447 = vsub.s32 %v4444, %v4446
    %v4448 = vrot.slane %v4441, %v4447
    %v4449 = vcombine.low %v3403, %v3404
    %v4451 = vunpack.c.l.s4 1983009808
    %v4452 = vunpack.c.0.s8 %v4451
    %v4453 = vlaneseq
    %v4454 = vshrl.u32 %v4453, 7
    %v4455 = vsub.s32 %v4452, %v4454
    %v4456 = vrot.slane %v4449, %v4455
    %v4457 = vcombine.low %v4432, %v4440
    %v4458 = vcombine.high %v4432, %v4440
    %v4460 = vunpack.c.l.s4 1934713408
    %v4461 = vunpack.c.0.s8 %v4460
    %v4462 = vlaneseq
    %v4463 = vshrl.u32 %v4462, 7
    %v4464 = vsub.s32 %v4461, %v4463
    %v4465 = vrot.slane %v4457, %v4464
    %v4467 = vunpack.c.l.s4 1934713408
    %v4468 = vunpack.c.0.s8 %v4467
    %v4469 = vlaneseq
    %v4470 = vshrl.u32 %v4469, 7
    %v4471 = vsub.s32 %v4468, %v4470
    %v4472 = vrot.slane %v4458, %v4471
    %v4473 = vcombine.low %v4448, %v4456
    %v4474 = vcombine.high %v4448, %v4456
    %v4476 = vunpack.c.l.s4 1934713408
    %v4477 = vunpack.c.0.s8 %v4476
    %v4478 = vlaneseq
    %v4479 = vshrl.u32 %v4478, 7
    %v4480 = vsub.s32 %v4477, %v4479
    %v4481 = vrot.slane %v4473, %v4480
    %v4483 = vunpack.c.l.s4 1934713408
    %v4484 = vunpack.c.0.s8 %v4483
    %v4485 = vlaneseq
    %v4486 = vshrl.u32 %v4485, 7
    %v4487 = vsub.s32 %v4484, %v4486
    %v4488 = vrot.slane %v4474, %v4487
    %v4489 = vcombine.low %v4465, %v4481
    %v4490 = vcombine.high %v4465, %v4481
    %v4491 = vcombine.low %v4472, %v4488
    %v4492 = vcombine.high %v4472, %v4488
    %v4493 = vcombine.low %v3445, %v3452
    %v4495 = vunpack.c.l.s4 1983009808
    %v4496 = vunpack.c.0.s8 %v4495
    %v4497 = vlaneseq
    %v4498 = vshrl.u32 %v4497, 7
    %v4499 = vsub.s32 %v4496, %v4498
    %v4500 = vrot.slane %v4493, %v4499
    %v4501 = vcombine.low %v3469, %v3470
    %v4503 = vunpack.c.l.s4 1983009808
    %v4504 = vunpack.c.0.s8 %v4503
    %v4505 = vlaneseq
    %v4506 = vshrl.u32 %v4505, 7
    %v4507 = vsub.s32 %v4504, %v4506
    %v4508 = vrot.slane %v4501, %v4507
    %v4509 = vcombine.low %v3461, %v3468
    %v4511 = vunpack.c.l.s4 1983009808
    %v4512 = vunpack.c.0.s8 %v4511
    %v4513 = vlaneseq
    %v4514 = vshrl.u32 %v4513, 7
    %v4515 = vsub.s32 %v4512, %v4514
    %v4516 = vrot.slane %v4509, %v4515
    %v4517 = vcombine.low %v3471, %v3472
    %v4519 = vunpack.c.l.s4 1983009808
    %v4520 = vunpack.c.0.s8 %v4519
    %v4521 = vlaneseq
    %v4522 = vshrl.u32 %v4521, 7
    %v4523 = vsub.s32 %v4520, %v4522
    %v4524 = vrot.slane %v4517, %v4523
    %v4525 = vcombine.low %v4500, %v4508
    %v4526 = vcombine.high %v4500, %v4508
    %v4528 = vunpack.c.l.s4 1934713408
    %v4529 = vunpack.c.0.s8 %v4528
    %v4530 = vlaneseq
    %v4531 = vshrl.u32 %v4530, 7
    %v4532 = vsub.s32 %v4529, %v4531
    %v4533 = vrot.slane %v4525, %v4532
    %v4535 = vunpack.c.l.s4 1934713408
    %v4536 = vunpack.c.0.s8 %v4535
    %v4537 = vlaneseq
    %v4538 = vshrl.u32 %v4537, 7
    %v4539 = vsub.s32 %v4536, %v4538
    %v4540 = vrot.slane %v4526, %v4539
    %v4541 = vcombine.low %v4516, %v4524
    %v4542 = vcombine.high %v4516, %v4524
    %v4544 = vunpack.c.l.s4 1934713408
    %v4545 = vunpack.c.0.s8 %v4544
    %v4546 = vlaneseq
    %v4547 = vshrl.u32 %v4546, 7
    %v4548 = vsub.s32 %v4545, %v4547
    %v4549 = vrot.slane %v4541, %v4548
    %v4551 = vunpack.c.l.s4 1934713408
    %v4552 = vunpack.c.0.s8 %v4551
    %v4553 = vlaneseq
    %v4554 = vshrl.u32 %v4553, 7
    %v4555 = vsub.s32 %v4552, %v4554
    %v4556 = vrot.slane %v4542, %v4555
    %v4557 = vcombine.low %v4533, %v4549
    %v4558 = vcombine.high %v4533, %v4549
    %v4559 = vcombine.low %v4540, %v4556
    %v4560 = vcombine.high %v4540, %v4556
    %v4561 = vcombine.low %v3513, %v3520
    %v4563 = vunpack.c.l.s4 1983009808
    %v4564 = vunpack.c.0.s8 %v4563
    %v4565 = vlaneseq
    %v4566 = vshrl.u32 %v4565, 7
    %v4567 = vsub.s32 %v4564, %v4566
    %v4568 = vrot.slane %v4561, %v4567
    %v4569 = vcombine.low %v3537, %v3538
    %v4571 = vunpack.c.l.s4 1983009808
    %v4572 = vunpack.c.0.s8 %v4571
    %v4573 = vlaneseq
    %v4574 = vshrl.u32 %v4573, 7
    %v4575 = vsub.s32 %v4572, %v4574
    %v4576 = vrot.slane %v4569, %v4575
    %v4577 = vcombine.low %v3529, %v3536
    %v4579 = vunpack.c.l.s4 1983009808
    %v4580 = vunpack.c.0.s8 %v4579
    %v4581 = vlaneseq
    %v4582 = vshrl.u32 %v4581, 7
    %v4583 = vsub.s32 %v4580, %v4582
    %v4584 = vrot.slane %v4577, %v4583
    %v4585 = vcombine.low %v3539, %v3540
    %v4587 = vunpack.c.l.s4 1983009808
    %v4588 = vunpack.c.0.s8 %v4587
    %v4589 = vlaneseq
    %v4590 = vshrl.u32 %v4589, 7
    %v4591 = vsub.s32 %v4588, %v4590
    %v4592 = vrot.slane %v4585, %v4591
    %v4593 = vcombine.low %v4568, %v4576
    %v4594 = vcombine.high %v4568, %v4576
    %v4596 = vunpack.c.l.s4 1934713408
    %v4597 = vunpack.c.0.s8 %v4596
    %v4598 = vlaneseq
    %v4599 = vshrl.u32 %v4598, 7
    %v4600 = vsub.s32 %v4597, %v4599
    %v4601 = vrot.slane %v4593, %v4600
    %v4603 = vunpack.c.l.s4 1934713408
    %v4604 = vunpack.c.0.s8 %v4603
    %v4605 = vlaneseq
    %v4606 = vshrl.u32 %v4605, 7
    %v4607 = vsub.s32 %v4604, %v4606
    %v4608 = vrot.slane %v4594, %v4607
    %v4609 = vcombine.low %v4584, %v4592
    %v4610 = vcombine.high %v4584, %v4592
    %v4612 = vunpack.c.l.s4 1934713408
    %v4613 = vunpack.c.0.s8 %v4612
    %v4614 = vlaneseq
    %v4615 = vshrl.u32 %v4614, 7
    %v4616 = vsub.s32 %v4613, %v4615
    %v4617 = vrot.slane %v4609, %v4616
    %v4619 = vunpack.c.l.s4 1934713408
    %v4620 = vunpack.c.0.s8 %v4619
    %v4621 = vlaneseq
    %v4622 = vshrl.u32 %v4621, 7
    %v4623 = vsub.s32 %v4620, %v4622
    %v4624 = vrot.slane %v4610, %v4623
    %v4625 = vcombine.low %v4601, %v4617
    %v4626 = vcombine.high %v4601, %v4617
    %v4627 = vcombine.low %v4608, %v4624
    %v4628 = vcombine.high %v4608, %v4624
    %v4629 = vcombine.low %v3581, %v3588
    %v4631 = vunpack.c.l.s4 1983009808
    %v4632 = vunpack.c.0.s8 %v4631
    %v4633 = vlaneseq
    %v4634 = vshrl.u32 %v4633, 7
    %v4635 = vsub.s32 %v4632, %v4634
    %v4636 = vrot.slane %v4629, %v4635
    %v4637 = vcombine.low %v3605, %v3606
    %v4639 = vunpack.c.l.s4 1983009808
    %v4640 = vunpack.c.0.s8 %v4639
    %v4641 = vlaneseq
    %v4642 = vshrl.u32 %v4641, 7
    %v4643 = vsub.s32 %v4640, %v4642
    %v4644 = vrot.slane %v4637, %v4643
    %v4645 = vcombine.low %v3597, %v3604
    %v4647 = vunpack.c.l.s4 1983009808
    %v4648 = vunpack.c.0.s8 %v4647
    %v4649 = vlaneseq
    %v4650 = vshrl.u32 %v4649, 7
    %v4651 = vsub.s32 %v4648, %v4650
    %v4652 = vrot.slane %v4645, %v4651
    %v4653 = vcombine.low %v3607, %v3608
    %v4655 = vunpack.c.l.s4 1983009808
    %v4656 = vunpack.c.0.s8 %v4655
    %v4657 = vlaneseq
    %v4658 = vshrl.u32 %v4657, 7
    %v4659 = vsub.s32 %v4656, %v4658
    %v4660 = vrot.slane %v4653, %v4659
    %v4661 = vcombine.low %v4636, %v4644
    %v4662 = vcombine.high %v4636, %v4644
    %v4664 = vunpack.c.l.s4 1934713408
    %v4665 = vunpack.c.0.s8 %v4664
    %v4666 = vlaneseq
    %v4667 = vshrl.u32 %v4666, 7
    %v4668 = vsub.s32 %v4665, %v4667
    %v4669 = vrot.slane %v4661, %v4668
    %v4671 = vunpack.c.l.s4 1934713408
    %v4672 = vunpack.c.0.s8 %v4671
    %v4673 = vlaneseq
    %v4674 = vshrl.u32 %v4673, 7
    %v4675 = vsub.s32 %v4672, %v4674
    %v4676 = vrot.slane %v4662, %v4675
    %v4677 = vcombine.low %v4652, %v4660
    %v4678 = vcombine.high %v4652, %v4660
    %v4680 = vunpack.c.l.s4 1934713408
    %v4681 = vunpack.c.0.s8 %v4680
    %v4682 = vlaneseq
    %v4683 = vshrl.u32 %v4682, 7
    %v4684 = vsub.s32 %v4681, %v4683
    %v4685 = vrot.slane %v4677, %v4684
    %v4687 = vunpack.c.l.s4 1934713408
    %v4688 = vunpack.c.0.s8 %v4687
    %v4689 = vlaneseq
    %v4690 = vshrl.u32 %v4689, 7
    %v4691 = vsub.s32 %v4688, %v4690
    %v4692 = vrot.slane %v4678, %v4691
    %v4693 = vcombine.low %v4669, %v4685
    %v4694 = vcombine.high %v4669, %v4685
    %v4695 = vcombine.low %v4676, %v4692
    %v4696 = vcombine.high %v4676, %v4692
    %v4697 = vcombine.low %v3649, %v3656
    %v4699 = vunpack.c.l.s4 1983009808
    %v4700 = vunpack.c.0.s8 %v4699
    %v4701 = vlaneseq
    %v4702 = vshrl.u32 %v4701, 7
    %v4703 = vsub.s32 %v4700, %v4702
    %v4704 = vrot.slane %v4697, %v4703
    %v4705 = vcombine.low %v3673, %v3674
    %v4707 = vunpack.c.l.s4 1983009808
    %v4708 = vunpack.c.0.s8 %v4707
    %v4709 = vlaneseq
    %v4710 = vshrl.u32 %v4709, 7
    %v4711 = vsub.s32 %v4708, %v4710
    %v4712 = vrot.slane %v4705, %v4711
    %v4713 = vcombine.low %v3665, %v3672
    %v4715 = vunpack.c.l.s4 1983009808
    %v4716 = vunpack.c.0.s8 %v4715
    %v4717 = vlaneseq
    %v4718 = vshrl.u32 %v4717, 7
    %v4719 = vsub.s32 %v4716, %v4718
    %v4720 = vrot.slane %v4713, %v4719
    %v4721 = vcombine.low %v3675, %v3676
    %v4723 = vunpack.c.l.s4 1983009808
    %v4724 = vunpack.c.0.s8 %v4723
    %v4725 = vlaneseq
    %v4726 = vshrl.u32 %v4725, 7
    %v4727 = vsub.s32 %v4724, %v4726
    %v4728 = vrot.slane %v4721, %v4727
    %v4729 = vcombine.low %v4704, %v4712
    %v4730 = vcombine.high %v4704, %v4712
    %v4732 = vunpack.c.l.s4 1934713408
    %v4733 = vunpack.c.0.s8 %v4732
    %v4734 = vlaneseq
    %v4735 = vshrl.u32 %v4734, 7
    %v4736 = vsub.s32 %v4733, %v4735
    %v4737 = vrot.slane %v4729, %v4736
    %v4739 = vunpack.c.l.s4 1934713408
    %v4740 = vunpack.c.0.s8 %v4739
    %v4741 = vlaneseq
    %v4742 = vshrl.u32 %v4741, 7
    %v4743 = vsub.s32 %v4740, %v4742
    %v4744 = vrot.slane %v4730, %v4743
    %v4745 = vcombine.low %v4720, %v4728
    %v4746 = vcombine.high %v4720, %v4728
    %v4748 = vunpack.c.l.s4 1934713408
    %v4749 = vunpack.c.0.s8 %v4748
    %v4750 = vlaneseq
    %v4751 = vshrl.u32 %v4750, 7
    %v4752 = vsub.s32 %v4749, %v4751
    %v4753 = vrot.slane %v4745, %v4752
    %v4755 = vunpack.c.l.s4 1934713408
    %v4756 = vunpack.c.0.s8 %v4755
    %v4757 = vlaneseq
    %v4758 = vshrl.u32 %v4757, 7
    %v4759 = vsub.s32 %v4756, %v4758
    %v4760 = vrot.slane %v4746, %v4759
    %v4761 = vcombine.low %v4737, %v4753
    %v4762 = vcombine.high %v4737, %v4753
    %v4763 = vcombine.low %v4744, %v4760
    %v4764 = vcombine.high %v4744, %v4760
    %v4765 = vcombine.low %v3717, %v3724
    %v4767 = vunpack.c.l.s4 1983009808
    %v4768 = vunpack.c.0.s8 %v4767
    %v4769 = vlaneseq
    %v4770 = vshrl.u32 %v4769, 7
    %v4771 = vsub.s32 %v4768, %v4770
    %v4772 = vrot.slane %v4765, %v4771
    %v4773 = vcombine.low %v3741, %v3742
    %v4775 = vunpack.c.l.s4 1983009808
    %v4776 = vunpack.c.0.s8 %v4775
    %v4777 = vlaneseq
    %v4778 = vshrl.u32 %v4777, 7
    %v4779 = vsub.s32 %v4776, %v4778
    %v4780 = vrot.slane %v4773, %v4779
    %v4781 = vcombine.low %v3733, %v3740
    %v4783 = vunpack.c.l.s4 1983009808
    %v4784 = vunpack.c.0.s8 %v4783
    %v4785 = vlaneseq
    %v4786 = vshrl.u32 %v4785, 7
    %v4787 = vsub.s32 %v4784, %v4786
    %v4788 = vrot.slane %v4781, %v4787
    %v4789 = vcombine.low %v3743, %v3744
    %v4791 = vunpack.c.l.s4 1983009808
    %v4792 = vunpack.c.0.s8 %v4791
    %v4793 = vlaneseq
    %v4794 = vshrl.u32 %v4793, 7
    %v4795 = vsub.s32 %v4792, %v4794
    %v4796 = vrot.slane %v4789, %v4795
    %v4797 = vcombine.low %v4772, %v4780
    %v4798 = vcombine.high %v4772, %v4780
    %v4800 = vunpack.c.l.s4 1934713408
    %v4801 = vunpack.c.0.s8 %v4800
    %v4802 = vlaneseq
    %v4803 = vshrl.u32 %v4802, 7
    %v4804 = vsub.s32 %v4801, %v4803
    %v4805 = vrot.slane %v4797, %v4804
    %v4807 = vunpack.c.l.s4 1934713408
    %v4808 = vunpack.c.0.s8 %v4807
    %v4809 = vlaneseq
    %v4810 = vshrl.u32 %v4809, 7
    %v4811 = vsub.s32 %v4808, %v4810
    %v4812 = vrot.slane %v4798, %v4811
    %v4813 = vcombine.low %v4788, %v4796
    %v4814 = vcombine.high %v4788, %v4796
    %v4816 = vunpack.c.l.s4 1934713408
    %v4817 = vunpack.c.0.s8 %v4816
    %v4818 = vlaneseq
    %v4819 = vshrl.u32 %v4818, 7
    %v4820 = vsub.s32 %v4817, %v4819
    %v4821 = vrot.slane %v4813, %v4820
    %v4823 = vunpack.c.l.s4 1934713408
    %v4824 = vunpack.c.0.s8 %v4823
    %v4825 = vlaneseq
    %v4826 = vshrl.u32 %v4825, 7
    %v4827 = vsub.s32 %v4824, %v4826
    %v4828 = vrot.slane %v4814, %v4827
    %v4829 = vcombine.low %v4805, %v4821
    %v4830 = vcombine.high %v4805, %v4821
    %v4831 = vcombine.low %v4812, %v4828
    %v4832 = vcombine.high %v4812, %v4828
    %v4833 = vcombine.low %v3785, %v3792
    %v4835 = vunpack.c.l.s4 1983009808
    %v4836 = vunpack.c.0.s8 %v4835
    %v4837 = vlaneseq
    %v4838 = vshrl.u32 %v4837, 7
    %v4839 = vsub.s32 %v4836, %v4838
    %v4840 = vrot.slane %v4833, %v4839
    %v4841 = vcombine.low %v3809, %v3810
    %v4843 = vunpack.c.l.s4 1983009808
    %v4844 = vunpack.c.0.s8 %v4843
    %v4845 = vlaneseq
    %v4846 = vshrl.u32 %v4845, 7
    %v4847 = vsub.s32 %v4844, %v4846
    %v4848 = vrot.slane %v4841, %v4847
    %v4849 = vcombine.low %v3801, %v3808
    %v4851 = vunpack.c.l.s4 1983009808
    %v4852 = vunpack.c.0.s8 %v4851
    %v4853 = vlaneseq
    %v4854 = vshrl.u32 %v4853, 7
    %v4855 = vsub.s32 %v4852, %v4854
    %v4856 = vrot.slane %v4849, %v4855
    %v4857 = vcombine.low %v3811, %v3812
    %v4859 = vunpack.c.l.s4 1983009808
    %v4860 = vunpack.c.0.s8 %v4859
    %v4861 = vlaneseq
    %v4862 = vshrl.u32 %v4861, 7
    %v4863 = vsub.s32 %v4860, %v4862
    %v4864 = vrot.slane %v4857, %v4863
    %v4865 = vcombine.low %v4840, %v4848
    %v4866 = vcombine.high %v4840, %v4848
    %v4868 = vunpack.c.l.s4 1934713408
    %v4869 = vunpack.c.0.s8 %v4868
    %v4870 = vlaneseq
    %v4871 = vshrl.u32 %v4870, 7
    %v4872 = vsub.s32 %v4869, %v4871
    %v4873 = vrot.slane %v4865, %v4872
    %v4875 = vunpack.c.l.s4 1934713408
    %v4876 = vunpack.c.0.s8 %v4875
    %v4877 = vlaneseq
    %v4878 = vshrl.u32 %v4877, 7
    %v4879 = vsub.s32 %v4876, %v4878
    %v4880 = vrot.slane %v4866, %v4879
    %v4881 = vcombine.low %v4856, %v4864
    %v4882 = vcombine.high %v4856, %v4864
    %v4884 = vunpack.c.l.s4 1934713408
    %v4885 = vunpack.c.0.s8 %v4884
    %v4886 = vlaneseq
    %v4887 = vshrl.u32 %v4886, 7
    %v4888 = vsub.s32 %v4885, %v4887
    %v4889 = vrot.slane %v4881, %v4888
    %v4891 = vunpack.c.l.s4 1934713408
    %v4892 = vunpack.c.0.s8 %v4891
    %v4893 = vlaneseq
    %v4894 = vshrl.u32 %v4893, 7
    %v4895 = vsub.s32 %v4892, %v4894
    %v4896 = vrot.slane %v4882, %v4895
    %v4897 = vcombine.low %v4873, %v4889
    %v4898 = vcombine.high %v4873, %v4889
    %v4899 = vcombine.low %v4880, %v4896
    %v4900 = vcombine.high %v4880, %v4896
    %v4901 = vcombine.low %v3853, %v3860
    %v4903 = vunpack.c.l.s4 1983009808
    %v4904 = vunpack.c.0.s8 %v4903
    %v4905 = vlaneseq
    %v4906 = vshrl.u32 %v4905, 7
    %v4907 = vsub.s32 %v4904, %v4906
    %v4908 = vrot.slane %v4901, %v4907
    %v4909 = vcombine.low %v3877, %v3878
    %v4911 = vunpack.c.l.s4 1983009808
    %v4912 = vunpack.c.0.s8 %v4911
    %v4913 = vlaneseq
    %v4914 = vshrl.u32 %v4913, 7
    %v4915 = vsub.s32 %v4912, %v4914
    %v4916 = vrot.slane %v4909, %v4915
    %v4917 = vcombine.low %v3869, %v3876
    %v4919 = vunpack.c.l.s4 1983009808
    %v4920 = vunpack.c.0.s8 %v4919
    %v4921 = vlaneseq
    %v4922 = vshrl.u32 %v4921, 7
    %v4923 = vsub.s32 %v4920, %v4922
    %v4924 = vrot.slane %v4917, %v4923
    %v4925 = vcombine.low %v3879, %v3880
    %v4927 = vunpack.c.l.s4 1983009808
    %v4928 = vunpack.c.0.s8 %v4927
    %v4929 = vlaneseq
    %v4930 = vshrl.u32 %v4929, 7
    %v4931 = vsub.s32 %v4928, %v4930
    %v4932 = vrot.slane %v4925, %v4931
    %v4933 = vcombine.low %v4908, %v4916
    %v4934 = vcombine.high %v4908, %v4916
    %v4936 = vunpack.c.l.s4 1934713408
    %v4937 = vunpack.c.0.s8 %v4936
    %v4938 = vlaneseq
    %v4939 = vshrl.u32 %v4938, 7
    %v4940 = vsub.s32 %v4937, %v4939
    %v4941 = vrot.slane %v4933, %v4940
    %v4943 = vunpack.c.l.s4 1934713408
    %v4944 = vunpack.c.0.s8 %v4943
    %v4945 = vlaneseq
    %v4946 = vshrl.u32 %v4945, 7
    %v4947 = vsub.s32 %v4944, %v4946
    %v4948 = vrot.slane %v4934, %v4947
    %v4949 = vcombine.low %v4924, %v4932
    %v4950 = vcombine.high %v4924, %v4932
    %v4952 = vunpack.c.l.s4 1934713408
    %v4953 = vunpack.c.0.s8 %v4952
    %v4954 = vlaneseq
    %v4955 = vshrl.u32 %v4954, 7
    %v4956 = vsub.s32 %v4953, %v4955
    %v4957 = vrot.slane %v4949, %v4956
    %v4959 = vunpack.c.l.s4 1934713408
    %v4960 = vunpack.c.0.s8 %v4959
    %v4961 = vlaneseq
    %v4962 = vshrl.u32 %v4961, 7
    %v4963 = vsub.s32 %v4960, %v4962
    %v4964 = vrot.slane %v4950, %v4963
    %v4965 = vcombine.low %v4941, %v4957
    %v4966 = vcombine.high %v4941, %v4957
    %v4967 = vcombine.low %v4948, %v4964
    %v4968 = vcombine.high %v4948, %v4964
    %4985 = vrot.lane.b32.xlu0 %v189, 64
    %v4986 = vpop.permute.xlu0 %4985
    %4987 = vrot.lane.b32.xlu0 %v193, 64
    %v4988 = vpop.permute.xlu0 %4987
    %4989 = vrot.lane.b32.xlu0 %v199, 64
    %v4990 = vpop.permute.xlu0 %4989
    %4991 = vrot.lane.b32.xlu0 %v203, 64
    %v4992 = vpop.permute.xlu0 %4991
    %4993 = vrot.lane.b32.xlu0 %v209, 64
    %v4994 = vpop.permute.xlu0 %4993
    %4995 = vrot.lane.b32.xlu0 %v213, 64
    %v4996 = vpop.permute.xlu0 %4995
    %4997 = vrot.lane.b32.xlu0 %v219, 64
    %v4998 = vpop.permute.xlu0 %4997
    %4999 = vrot.lane.b32.xlu0 %v223, 64
    %v5000 = vpop.permute.xlu0 %4999
    %5001 = vrot.lane.b32.xlu0 %v229, 64
    %v5002 = vpop.permute.xlu0 %5001
    %5003 = vrot.lane.b32.xlu0 %v233, 64
    %v5004 = vpop.permute.xlu0 %5003
    %5005 = vrot.lane.b32.xlu0 %v239, 64
    %v5006 = vpop.permute.xlu0 %5005
    %5007 = vrot.lane.b32.xlu0 %v243, 64
    %v5008 = vpop.permute.xlu0 %5007
    %5009 = vrot.lane.b32.xlu0 %v249, 64
    %v5010 = vpop.permute.xlu0 %5009
    %5011 = vrot.lane.b32.xlu0 %v253, 64
    %v5012 = vpop.permute.xlu0 %5011
    %5013 = vrot.lane.b32.xlu0 %v259, 64
    %v5014 = vpop.permute.xlu0 %5013
    %5015 = vrot.lane.b32.xlu0 %v263, 64
    %v5016 = vpop.permute.xlu0 %5015
    %5017 = vrot.lane.b32.xlu0 %v189, 32
    %v5018 = vpop.permute.xlu0 %5017
    %5019 = vrot.lane.b32.xlu0 %v193, 32
    %v5020 = vpop.permute.xlu0 %5019
    %5021 = vrot.lane.b32.xlu0 %v199, 32
    %v5022 = vpop.permute.xlu0 %5021
    %5023 = vrot.lane.b32.xlu0 %v203, 32
    %v5024 = vpop.permute.xlu0 %5023
    %5025 = vrot.lane.b32.xlu0 %v209, 32
    %v5026 = vpop.permute.xlu0 %5025
    %5027 = vrot.lane.b32.xlu0 %v213, 32
    %v5028 = vpop.permute.xlu0 %5027
    %5029 = vrot.lane.b32.xlu0 %v219, 32
    %v5030 = vpop.permute.xlu0 %5029
    %5031 = vrot.lane.b32.xlu0 %v223, 32
    %v5032 = vpop.permute.xlu0 %5031
    %5033 = vrot.lane.b32.xlu0 %v229, 32
    %v5034 = vpop.permute.xlu0 %5033
    %5035 = vrot.lane.b32.xlu0 %v233, 32
    %v5036 = vpop.permute.xlu0 %5035
    %5037 = vrot.lane.b32.xlu0 %v239, 32
    %v5038 = vpop.permute.xlu0 %5037
    %5039 = vrot.lane.b32.xlu0 %v243, 32
    %v5040 = vpop.permute.xlu0 %5039
    %5041 = vrot.lane.b32.xlu0 %v249, 32
    %v5042 = vpop.permute.xlu0 %5041
    %5043 = vrot.lane.b32.xlu0 %v253, 32
    %v5044 = vpop.permute.xlu0 %5043
    %5045 = vrot.lane.b32.xlu0 %v259, 32
    %v5046 = vpop.permute.xlu0 %5045
    %5047 = vrot.lane.b32.xlu0 %v263, 32
    %v5048 = vpop.permute.xlu0 %5047
    %5049 = vrot.lane.b32.xlu0 %v187, 64
    %v5050 = vpop.permute.xlu0 %5049
    %5051 = vrot.lane.b32.xlu0 %v191, 64
    %v5052 = vpop.permute.xlu0 %5051
    %5053 = vrot.lane.b32.xlu0 %v197, 64
    %v5054 = vpop.permute.xlu0 %5053
    %5055 = vrot.lane.b32.xlu0 %v201, 64
    %v5056 = vpop.permute.xlu0 %5055
    %5057 = vrot.lane.b32.xlu0 %v207, 64
    %v5058 = vpop.permute.xlu0 %5057
    %5059 = vrot.lane.b32.xlu0 %v211, 64
    %v5060 = vpop.permute.xlu0 %5059
    %5061 = vrot.lane.b32.xlu0 %v217, 64
    %v5062 = vpop.permute.xlu0 %5061
    %5063 = vrot.lane.b32.xlu0 %v221, 64
    %v5064 = vpop.permute.xlu0 %5063
    %5065 = vrot.lane.b32.xlu0 %v227, 64
    %v5066 = vpop.permute.xlu0 %5065
    %5067 = vrot.lane.b32.xlu0 %v231, 64
    %v5068 = vpop.permute.xlu0 %5067
    %5069 = vrot.lane.b32.xlu0 %v237, 64
    %v5070 = vpop.permute.xlu0 %5069
    %5071 = vrot.lane.b32.xlu0 %v241, 64
    %v5072 = vpop.permute.xlu0 %5071
    %5073 = vrot.lane.b32.xlu0 %v247, 64
    %v5074 = vpop.permute.xlu0 %5073
    %5075 = vrot.lane.b32.xlu0 %v251, 64
    %v5076 = vpop.permute.xlu0 %5075
    %5077 = vrot.lane.b32.xlu0 %v257, 64
    %v5078 = vpop.permute.xlu0 %5077
    %5079 = vrot.lane.b32.xlu0 %v261, 64
    %v5080 = vpop.permute.xlu0 %5079
    %5081 = vrot.lane.b32.xlu0 %v2602, 64
    %v5082 = vpop.permute.xlu0 %5081
    %5083 = vrot.lane.b32.xlu0 %v2604, 64
    %v5084 = vpop.permute.xlu0 %5083
    %5085 = vrot.lane.b32.xlu0 %v2606, 64
    %v5086 = vpop.permute.xlu0 %5085
    %5087 = vrot.lane.b32.xlu0 %v2608, 64
    %v5088 = vpop.permute.xlu0 %5087
    %5089 = vrot.lane.b32.xlu0 %v2610, 64
    %v5090 = vpop.permute.xlu0 %5089
    %5091 = vrot.lane.b32.xlu0 %v2612, 64
    %v5092 = vpop.permute.xlu0 %5091
    %5093 = vrot.lane.b32.xlu0 %v2614, 64
    %v5094 = vpop.permute.xlu0 %5093
    %5095 = vrot.lane.b32.xlu0 %v2616, 64
    %v5096 = vpop.permute.xlu0 %5095
    %5097 = vrot.lane.b32.xlu0 %v2618, 64
    %v5098 = vpop.permute.xlu0 %5097
    %5099 = vrot.lane.b32.xlu0 %v2620, 64
    %v5100 = vpop.permute.xlu0 %5099
    %5101 = vrot.lane.b32.xlu0 %v2622, 64
    %v5102 = vpop.permute.xlu0 %5101
    %5103 = vrot.lane.b32.xlu0 %v2624, 64
    %v5104 = vpop.permute.xlu0 %5103
    %5105 = vrot.lane.b32.xlu0 %v2626, 64
    %v5106 = vpop.permute.xlu0 %5105
    %5107 = vrot.lane.b32.xlu0 %v2628, 64
    %v5108 = vpop.permute.xlu0 %5107
    %5109 = vrot.lane.b32.xlu0 %v2630, 64
    %v5110 = vpop.permute.xlu0 %5109
    %5111 = vrot.lane.b32.xlu0 %v2632, 64
    %v5112 = vpop.permute.xlu0 %5111
    %5113 = vrot.lane.b32.xlu0 %v4986, 64
    %v5114 = vpop.permute.xlu0 %5113
    %5115 = vrot.lane.b32.xlu0 %v4988, 64
    %v5116 = vpop.permute.xlu0 %5115
    %5117 = vrot.lane.b32.xlu0 %v4990, 64
    %v5118 = vpop.permute.xlu0 %5117
    %5119 = vrot.lane.b32.xlu0 %v4992, 64
    %v5120 = vpop.permute.xlu0 %5119
    %5121 = vrot.lane.b32.xlu0 %v4994, 64
    %v5122 = vpop.permute.xlu0 %5121
    %5123 = vrot.lane.b32.xlu0 %v4996, 64
    %v5124 = vpop.permute.xlu0 %5123
    %5125 = vrot.lane.b32.xlu0 %v4998, 64
    %v5126 = vpop.permute.xlu0 %5125
    %5127 = vrot.lane.b32.xlu0 %v5000, 64
    %v5128 = vpop.permute.xlu0 %5127
    %5129 = vrot.lane.b32.xlu0 %v5002, 64
    %v5130 = vpop.permute.xlu0 %5129
    %5131 = vrot.lane.b32.xlu0 %v5004, 64
    %v5132 = vpop.permute.xlu0 %5131
    %5133 = vrot.lane.b32.xlu0 %v5006, 64
    %v5134 = vpop.permute.xlu0 %5133
    %5135 = vrot.lane.b32.xlu0 %v5008, 64
    %v5136 = vpop.permute.xlu0 %5135
    %5137 = vrot.lane.b32.xlu0 %v5010, 64
    %v5138 = vpop.permute.xlu0 %5137
    %5139 = vrot.lane.b32.xlu0 %v5012, 64
    %v5140 = vpop.permute.xlu0 %5139
    %5141 = vrot.lane.b32.xlu0 %v5014, 64
    %v5142 = vpop.permute.xlu0 %5141
    %5143 = vrot.lane.b32.xlu0 %v5016, 64
    %v5144 = vpop.permute.xlu0 %5143
    %5145 = vrot.lane.b32.xlu0 %v5018, 64
    %v5146 = vpop.permute.xlu0 %5145
    %5147 = vrot.lane.b32.xlu0 %v5020, 64
    %v5148 = vpop.permute.xlu0 %5147
    %5149 = vrot.lane.b32.xlu0 %v5022, 64
    %v5150 = vpop.permute.xlu0 %5149
    %5151 = vrot.lane.b32.xlu0 %v5024, 64
    %v5152 = vpop.permute.xlu0 %5151
    %5153 = vrot.lane.b32.xlu0 %v5026, 64
    %v5154 = vpop.permute.xlu0 %5153
    %5155 = vrot.lane.b32.xlu0 %v5028, 64
    %v5156 = vpop.permute.xlu0 %5155
    %5157 = vrot.lane.b32.xlu0 %v5030, 64
    %v5158 = vpop.permute.xlu0 %5157
    %5159 = vrot.lane.b32.xlu0 %v5032, 64
    %v5160 = vpop.permute.xlu0 %5159
    %5161 = vrot.lane.b32.xlu0 %v5034, 64
    %v5162 = vpop.permute.xlu0 %5161
    %5163 = vrot.lane.b32.xlu0 %v5036, 64
    %v5164 = vpop.permute.xlu0 %5163
    %5165 = vrot.lane.b32.xlu0 %v5038, 64
    %v5166 = vpop.permute.xlu0 %5165
    %5167 = vrot.lane.b32.xlu0 %v5040, 64
    %v5168 = vpop.permute.xlu0 %5167
    %5169 = vrot.lane.b32.xlu0 %v5042, 64
    %v5170 = vpop.permute.xlu0 %5169
    %5171 = vrot.lane.b32.xlu0 %v5044, 64
    %v5172 = vpop.permute.xlu0 %5171
    %5173 = vrot.lane.b32.xlu0 %v5046, 64
    %v5174 = vpop.permute.xlu0 %5173
    %5175 = vrot.lane.b32.xlu0 %v5048, 64
    %v5176 = vpop.permute.xlu0 %5175
    %v5241 = vcombine.low %v5050, %v5114
    %v5242 = vcombine.high %v5050, %v5114
    %v5244 = vunpack.c.l.s4 1983009808
    %v5245 = vunpack.c.0.s8 %v5244
    %v5246 = vlaneseq
    %v5247 = vshrl.u32 %v5246, 7
    %v5248 = vsub.s32 %v5245, %v5247
    %v5249 = vrot.slane %v5241, %v5248
    %v5251 = vunpack.c.l.s4 1983009808
    %v5252 = vunpack.c.0.s8 %v5251
    %v5253 = vlaneseq
    %v5254 = vshrl.u32 %v5253, 7
    %v5255 = vsub.s32 %v5252, %v5254
    %v5256 = vrot.slane %v5242, %v5255
    %v5257 = vcombine.low %v5082, %v5146
    %v5258 = vcombine.high %v5082, %v5146
    %v5260 = vunpack.c.l.s4 1983009808
    %v5261 = vunpack.c.0.s8 %v5260
    %v5262 = vlaneseq
    %v5263 = vshrl.u32 %v5262, 7
    %v5264 = vsub.s32 %v5261, %v5263
    %v5265 = vrot.slane %v5257, %v5264
    %v5267 = vunpack.c.l.s4 1983009808
    %v5268 = vunpack.c.0.s8 %v5267
    %v5269 = vlaneseq
    %v5270 = vshrl.u32 %v5269, 7
    %v5271 = vsub.s32 %v5268, %v5270
    %v5272 = vrot.slane %v5258, %v5271
    %v5273 = vcombine.low %v5249, %v5265
    %v5274 = vcombine.high %v5249, %v5265
    %v5276 = vunpack.c.l.s4 1934713408
    %v5277 = vunpack.c.0.s8 %v5276
    %v5278 = vlaneseq
    %v5279 = vshrl.u32 %v5278, 7
    %v5280 = vsub.s32 %v5277, %v5279
    %v5281 = vrot.slane %v5273, %v5280
    %v5283 = vunpack.c.l.s4 1934713408
    %v5284 = vunpack.c.0.s8 %v5283
    %v5285 = vlaneseq
    %v5286 = vshrl.u32 %v5285, 7
    %v5287 = vsub.s32 %v5284, %v5286
    %v5288 = vrot.slane %v5274, %v5287
    %v5289 = vcombine.low %v5256, %v5272
    %v5290 = vcombine.high %v5256, %v5272
    %v5292 = vunpack.c.l.s4 1934713408
    %v5293 = vunpack.c.0.s8 %v5292
    %v5294 = vlaneseq
    %v5295 = vshrl.u32 %v5294, 7
    %v5296 = vsub.s32 %v5293, %v5295
    %v5297 = vrot.slane %v5289, %v5296
    %v5299 = vunpack.c.l.s4 1934713408
    %v5300 = vunpack.c.0.s8 %v5299
    %v5301 = vlaneseq
    %v5302 = vshrl.u32 %v5301, 7
    %v5303 = vsub.s32 %v5300, %v5302
    %v5304 = vrot.slane %v5290, %v5303
    %v5305 = vcombine.high %v5281, 0.0
    %v5306 = vcombine.high %v5288, 0.0
    %v5307 = vcombine.high %v5297, 0.0
    %v5308 = vcombine.high %v5304, 0.0
    %v5309 = vcombine.low %v5052, %v5116
    %v5310 = vcombine.high %v5052, %v5116
    %v5312 = vunpack.c.l.s4 1983009808
    %v5313 = vunpack.c.0.s8 %v5312
    %v5314 = vlaneseq
    %v5315 = vshrl.u32 %v5314, 7
    %v5316 = vsub.s32 %v5313, %v5315
    %v5317 = vrot.slane %v5309, %v5316
    %v5319 = vunpack.c.l.s4 1983009808
    %v5320 = vunpack.c.0.s8 %v5319
    %v5321 = vlaneseq
    %v5322 = vshrl.u32 %v5321, 7
    %v5323 = vsub.s32 %v5320, %v5322
    %v5324 = vrot.slane %v5310, %v5323
    %v5325 = vcombine.low %v5084, %v5148
    %v5326 = vcombine.high %v5084, %v5148
    %v5328 = vunpack.c.l.s4 1983009808
    %v5329 = vunpack.c.0.s8 %v5328
    %v5330 = vlaneseq
    %v5331 = vshrl.u32 %v5330, 7
    %v5332 = vsub.s32 %v5329, %v5331
    %v5333 = vrot.slane %v5325, %v5332
    %v5335 = vunpack.c.l.s4 1983009808
    %v5336 = vunpack.c.0.s8 %v5335
    %v5337 = vlaneseq
    %v5338 = vshrl.u32 %v5337, 7
    %v5339 = vsub.s32 %v5336, %v5338
    %v5340 = vrot.slane %v5326, %v5339
    %v5341 = vcombine.low %v5317, %v5333
    %v5342 = vcombine.high %v5317, %v5333
    %v5344 = vunpack.c.l.s4 1934713408
    %v5345 = vunpack.c.0.s8 %v5344
    %v5346 = vlaneseq
    %v5347 = vshrl.u32 %v5346, 7
    %v5348 = vsub.s32 %v5345, %v5347
    %v5349 = vrot.slane %v5341, %v5348
    %v5351 = vunpack.c.l.s4 1934713408
    %v5352 = vunpack.c.0.s8 %v5351
    %v5353 = vlaneseq
    %v5354 = vshrl.u32 %v5353, 7
    %v5355 = vsub.s32 %v5352, %v5354
    %v5356 = vrot.slane %v5342, %v5355
    %v5357 = vcombine.low %v5324, %v5340
    %v5358 = vcombine.high %v5324, %v5340
    %v5360 = vunpack.c.l.s4 1934713408
    %v5361 = vunpack.c.0.s8 %v5360
    %v5362 = vlaneseq
    %v5363 = vshrl.u32 %v5362, 7
    %v5364 = vsub.s32 %v5361, %v5363
    %v5365 = vrot.slane %v5357, %v5364
    %v5367 = vunpack.c.l.s4 1934713408
    %v5368 = vunpack.c.0.s8 %v5367
    %v5369 = vlaneseq
    %v5370 = vshrl.u32 %v5369, 7
    %v5371 = vsub.s32 %v5368, %v5370
    %v5372 = vrot.slane %v5358, %v5371
    %v5373 = vcombine.high %v5349, 0.0
    %v5374 = vcombine.high %v5356, 0.0
    %v5375 = vcombine.high %v5365, 0.0
    %v5376 = vcombine.high %v5372, 0.0
    %v5377 = vcombine.low %v5054, %v5118
    %v5378 = vcombine.high %v5054, %v5118
    %v5380 = vunpack.c.l.s4 1983009808
    %v5381 = vunpack.c.0.s8 %v5380
    %v5382 = vlaneseq
    %v5383 = vshrl.u32 %v5382, 7
    %v5384 = vsub.s32 %v5381, %v5383
    %v5385 = vrot.slane %v5377, %v5384
    %v5387 = vunpack.c.l.s4 1983009808
    %v5388 = vunpack.c.0.s8 %v5387
    %v5389 = vlaneseq
    %v5390 = vshrl.u32 %v5389, 7
    %v5391 = vsub.s32 %v5388, %v5390
    %v5392 = vrot.slane %v5378, %v5391
    %v5393 = vcombine.low %v5086, %v5150
    %v5394 = vcombine.high %v5086, %v5150
    %v5396 = vunpack.c.l.s4 1983009808
    %v5397 = vunpack.c.0.s8 %v5396
    %v5398 = vlaneseq
    %v5399 = vshrl.u32 %v5398, 7
    %v5400 = vsub.s32 %v5397, %v5399
    %v5401 = vrot.slane %v5393, %v5400
    %v5403 = vunpack.c.l.s4 1983009808
    %v5404 = vunpack.c.0.s8 %v5403
    %v5405 = vlaneseq
    %v5406 = vshrl.u32 %v5405, 7
    %v5407 = vsub.s32 %v5404, %v5406
    %v5408 = vrot.slane %v5394, %v5407
    %v5409 = vcombine.low %v5385, %v5401
    %v5410 = vcombine.high %v5385, %v5401
    %v5412 = vunpack.c.l.s4 1934713408
    %v5413 = vunpack.c.0.s8 %v5412
    %v5414 = vlaneseq
    %v5415 = vshrl.u32 %v5414, 7
    %v5416 = vsub.s32 %v5413, %v5415
    %v5417 = vrot.slane %v5409, %v5416
    %v5419 = vunpack.c.l.s4 1934713408
    %v5420 = vunpack.c.0.s8 %v5419
    %v5421 = vlaneseq
    %v5422 = vshrl.u32 %v5421, 7
    %v5423 = vsub.s32 %v5420, %v5422
    %v5424 = vrot.slane %v5410, %v5423
    %v5425 = vcombine.low %v5392, %v5408
    %v5426 = vcombine.high %v5392, %v5408
    %v5428 = vunpack.c.l.s4 1934713408
    %v5429 = vunpack.c.0.s8 %v5428
    %v5430 = vlaneseq
    %v5431 = vshrl.u32 %v5430, 7
    %v5432 = vsub.s32 %v5429, %v5431
    %v5433 = vrot.slane %v5425, %v5432
    %v5435 = vunpack.c.l.s4 1934713408
    %v5436 = vunpack.c.0.s8 %v5435
    %v5437 = vlaneseq
    %v5438 = vshrl.u32 %v5437, 7
    %v5439 = vsub.s32 %v5436, %v5438
    %v5440 = vrot.slane %v5426, %v5439
    %v5441 = vcombine.high %v5417, 0.0
    %v5442 = vcombine.high %v5424, 0.0
    %v5443 = vcombine.high %v5433, 0.0
    %v5444 = vcombine.high %v5440, 0.0
    %v5445 = vcombine.low %v5056, %v5120
    %v5446 = vcombine.high %v5056, %v5120
    %v5448 = vunpack.c.l.s4 1983009808
    %v5449 = vunpack.c.0.s8 %v5448
    %v5450 = vlaneseq
    %v5451 = vshrl.u32 %v5450, 7
    %v5452 = vsub.s32 %v5449, %v5451
    %v5453 = vrot.slane %v5445, %v5452
    %v5455 = vunpack.c.l.s4 1983009808
    %v5456 = vunpack.c.0.s8 %v5455
    %v5457 = vlaneseq
    %v5458 = vshrl.u32 %v5457, 7
    %v5459 = vsub.s32 %v5456, %v5458
    %v5460 = vrot.slane %v5446, %v5459
    %v5461 = vcombine.low %v5088, %v5152
    %v5462 = vcombine.high %v5088, %v5152
    %v5464 = vunpack.c.l.s4 1983009808
    %v5465 = vunpack.c.0.s8 %v5464
    %v5466 = vlaneseq
    %v5467 = vshrl.u32 %v5466, 7
    %v5468 = vsub.s32 %v5465, %v5467
    %v5469 = vrot.slane %v5461, %v5468
    %v5471 = vunpack.c.l.s4 1983009808
    %v5472 = vunpack.c.0.s8 %v5471
    %v5473 = vlaneseq
    %v5474 = vshrl.u32 %v5473, 7
    %v5475 = vsub.s32 %v5472, %v5474
    %v5476 = vrot.slane %v5462, %v5475
    %v5477 = vcombine.low %v5453, %v5469
    %v5478 = vcombine.high %v5453, %v5469
    %v5480 = vunpack.c.l.s4 1934713408
    %v5481 = vunpack.c.0.s8 %v5480
    %v5482 = vlaneseq
    %v5483 = vshrl.u32 %v5482, 7
    %v5484 = vsub.s32 %v5481, %v5483
    %v5485 = vrot.slane %v5477, %v5484
    %v5487 = vunpack.c.l.s4 1934713408
    %v5488 = vunpack.c.0.s8 %v5487
    %v5489 = vlaneseq
    %v5490 = vshrl.u32 %v5489, 7
    %v5491 = vsub.s32 %v5488, %v5490
    %v5492 = vrot.slane %v5478, %v5491
    %v5493 = vcombine.low %v5460, %v5476
    %v5494 = vcombine.high %v5460, %v5476
    %v5496 = vunpack.c.l.s4 1934713408
    %v5497 = vunpack.c.0.s8 %v5496
    %v5498 = vlaneseq
    %v5499 = vshrl.u32 %v5498, 7
    %v5500 = vsub.s32 %v5497, %v5499
    %v5501 = vrot.slane %v5493, %v5500
    %v5503 = vunpack.c.l.s4 1934713408
    %v5504 = vunpack.c.0.s8 %v5503
    %v5505 = vlaneseq
    %v5506 = vshrl.u32 %v5505, 7
    %v5507 = vsub.s32 %v5504, %v5506
    %v5508 = vrot.slane %v5494, %v5507
    %v5509 = vcombine.high %v5485, 0.0
    %v5510 = vcombine.high %v5492, 0.0
    %v5511 = vcombine.high %v5501, 0.0
    %v5512 = vcombine.high %v5508, 0.0
    %v5513 = vcombine.low %v5058, %v5122
    %v5514 = vcombine.high %v5058, %v5122
    %v5516 = vunpack.c.l.s4 1983009808
    %v5517 = vunpack.c.0.s8 %v5516
    %v5518 = vlaneseq
    %v5519 = vshrl.u32 %v5518, 7
    %v5520 = vsub.s32 %v5517, %v5519
    %v5521 = vrot.slane %v5513, %v5520
    %v5523 = vunpack.c.l.s4 1983009808
    %v5524 = vunpack.c.0.s8 %v5523
    %v5525 = vlaneseq
    %v5526 = vshrl.u32 %v5525, 7
    %v5527 = vsub.s32 %v5524, %v5526
    %v5528 = vrot.slane %v5514, %v5527
    %v5529 = vcombine.low %v5090, %v5154
    %v5530 = vcombine.high %v5090, %v5154
    %v5532 = vunpack.c.l.s4 1983009808
    %v5533 = vunpack.c.0.s8 %v5532
    %v5534 = vlaneseq
    %v5535 = vshrl.u32 %v5534, 7
    %v5536 = vsub.s32 %v5533, %v5535
    %v5537 = vrot.slane %v5529, %v5536
    %v5539 = vunpack.c.l.s4 1983009808
    %v5540 = vunpack.c.0.s8 %v5539
    %v5541 = vlaneseq
    %v5542 = vshrl.u32 %v5541, 7
    %v5543 = vsub.s32 %v5540, %v5542
    %v5544 = vrot.slane %v5530, %v5543
    %v5545 = vcombine.low %v5521, %v5537
    %v5546 = vcombine.high %v5521, %v5537
    %v5548 = vunpack.c.l.s4 1934713408
    %v5549 = vunpack.c.0.s8 %v5548
    %v5550 = vlaneseq
    %v5551 = vshrl.u32 %v5550, 7
    %v5552 = vsub.s32 %v5549, %v5551
    %v5553 = vrot.slane %v5545, %v5552
    %v5555 = vunpack.c.l.s4 1934713408
    %v5556 = vunpack.c.0.s8 %v5555
    %v5557 = vlaneseq
    %v5558 = vshrl.u32 %v5557, 7
    %v5559 = vsub.s32 %v5556, %v5558
    %v5560 = vrot.slane %v5546, %v5559
    %v5561 = vcombine.low %v5528, %v5544
    %v5562 = vcombine.high %v5528, %v5544
    %v5564 = vunpack.c.l.s4 1934713408
    %v5565 = vunpack.c.0.s8 %v5564
    %v5566 = vlaneseq
    %v5567 = vshrl.u32 %v5566, 7
    %v5568 = vsub.s32 %v5565, %v5567
    %v5569 = vrot.slane %v5561, %v5568
    %v5571 = vunpack.c.l.s4 1934713408
    %v5572 = vunpack.c.0.s8 %v5571
    %v5573 = vlaneseq
    %v5574 = vshrl.u32 %v5573, 7
    %v5575 = vsub.s32 %v5572, %v5574
    %v5576 = vrot.slane %v5562, %v5575
    %v5577 = vcombine.high %v5553, 0.0
    %v5578 = vcombine.high %v5560, 0.0
    %v5579 = vcombine.high %v5569, 0.0
    %v5580 = vcombine.high %v5576, 0.0
    %v5581 = vcombine.low %v5060, %v5124
    %v5582 = vcombine.high %v5060, %v5124
    %v5584 = vunpack.c.l.s4 1983009808
    %v5585 = vunpack.c.0.s8 %v5584
    %v5586 = vlaneseq
    %v5587 = vshrl.u32 %v5586, 7
    %v5588 = vsub.s32 %v5585, %v5587
    %v5589 = vrot.slane %v5581, %v5588
    %v5591 = vunpack.c.l.s4 1983009808
    %v5592 = vunpack.c.0.s8 %v5591
    %v5593 = vlaneseq
    %v5594 = vshrl.u32 %v5593, 7
    %v5595 = vsub.s32 %v5592, %v5594
    %v5596 = vrot.slane %v5582, %v5595
    %v5597 = vcombine.low %v5092, %v5156
    %v5598 = vcombine.high %v5092, %v5156
    %v5600 = vunpack.c.l.s4 1983009808
    %v5601 = vunpack.c.0.s8 %v5600
    %v5602 = vlaneseq
    %v5603 = vshrl.u32 %v5602, 7
    %v5604 = vsub.s32 %v5601, %v5603
    %v5605 = vrot.slane %v5597, %v5604
    %v5607 = vunpack.c.l.s4 1983009808
    %v5608 = vunpack.c.0.s8 %v5607
    %v5609 = vlaneseq
    %v5610 = vshrl.u32 %v5609, 7
    %v5611 = vsub.s32 %v5608, %v5610
    %v5612 = vrot.slane %v5598, %v5611
    %v5613 = vcombine.low %v5589, %v5605
    %v5614 = vcombine.high %v5589, %v5605
    %v5616 = vunpack.c.l.s4 1934713408
    %v5617 = vunpack.c.0.s8 %v5616
    %v5618 = vlaneseq
    %v5619 = vshrl.u32 %v5618, 7
    %v5620 = vsub.s32 %v5617, %v5619
    %v5621 = vrot.slane %v5613, %v5620
    %v5623 = vunpack.c.l.s4 1934713408
    %v5624 = vunpack.c.0.s8 %v5623
    %v5625 = vlaneseq
    %v5626 = vshrl.u32 %v5625, 7
    %v5627 = vsub.s32 %v5624, %v5626
    %v5628 = vrot.slane %v5614, %v5627
    %v5629 = vcombine.low %v5596, %v5612
    %v5630 = vcombine.high %v5596, %v5612
    %v5632 = vunpack.c.l.s4 1934713408
    %v5633 = vunpack.c.0.s8 %v5632
    %v5634 = vlaneseq
    %v5635 = vshrl.u32 %v5634, 7
    %v5636 = vsub.s32 %v5633, %v5635
    %v5637 = vrot.slane %v5629, %v5636
    %v5639 = vunpack.c.l.s4 1934713408
    %v5640 = vunpack.c.0.s8 %v5639
    %v5641 = vlaneseq
    %v5642 = vshrl.u32 %v5641, 7
    %v5643 = vsub.s32 %v5640, %v5642
    %v5644 = vrot.slane %v5630, %v5643
    %v5645 = vcombine.high %v5621, 0.0
    %v5646 = vcombine.high %v5628, 0.0
    %v5647 = vcombine.high %v5637, 0.0
    %v5648 = vcombine.high %v5644, 0.0
    %v5649 = vcombine.low %v5062, %v5126
    %v5650 = vcombine.high %v5062, %v5126
    %v5652 = vunpack.c.l.s4 1983009808
    %v5653 = vunpack.c.0.s8 %v5652
    %v5654 = vlaneseq
    %v5655 = vshrl.u32 %v5654, 7
    %v5656 = vsub.s32 %v5653, %v5655
    %v5657 = vrot.slane %v5649, %v5656
    %v5659 = vunpack.c.l.s4 1983009808
    %v5660 = vunpack.c.0.s8 %v5659
    %v5661 = vlaneseq
    %v5662 = vshrl.u32 %v5661, 7
    %v5663 = vsub.s32 %v5660, %v5662
    %v5664 = vrot.slane %v5650, %v5663
    %v5665 = vcombine.low %v5094, %v5158
    %v5666 = vcombine.high %v5094, %v5158
    %v5668 = vunpack.c.l.s4 1983009808
    %v5669 = vunpack.c.0.s8 %v5668
    %v5670 = vlaneseq
    %v5671 = vshrl.u32 %v5670, 7
    %v5672 = vsub.s32 %v5669, %v5671
    %v5673 = vrot.slane %v5665, %v5672
    %v5675 = vunpack.c.l.s4 1983009808
    %v5676 = vunpack.c.0.s8 %v5675
    %v5677 = vlaneseq
    %v5678 = vshrl.u32 %v5677, 7
    %v5679 = vsub.s32 %v5676, %v5678
    %v5680 = vrot.slane %v5666, %v5679
    %v5681 = vcombine.low %v5657, %v5673
    %v5682 = vcombine.high %v5657, %v5673
    %v5684 = vunpack.c.l.s4 1934713408
    %v5685 = vunpack.c.0.s8 %v5684
    %v5686 = vlaneseq
    %v5687 = vshrl.u32 %v5686, 7
    %v5688 = vsub.s32 %v5685, %v5687
    %v5689 = vrot.slane %v5681, %v5688
    %v5691 = vunpack.c.l.s4 1934713408
    %v5692 = vunpack.c.0.s8 %v5691
    %v5693 = vlaneseq
    %v5694 = vshrl.u32 %v5693, 7
    %v5695 = vsub.s32 %v5692, %v5694
    %v5696 = vrot.slane %v5682, %v5695
    %v5697 = vcombine.low %v5664, %v5680
    %v5698 = vcombine.high %v5664, %v5680
    %v5700 = vunpack.c.l.s4 1934713408
    %v5701 = vunpack.c.0.s8 %v5700
    %v5702 = vlaneseq
    %v5703 = vshrl.u32 %v5702, 7
    %v5704 = vsub.s32 %v5701, %v5703
    %v5705 = vrot.slane %v5697, %v5704
    %v5707 = vunpack.c.l.s4 1934713408
    %v5708 = vunpack.c.0.s8 %v5707
    %v5709 = vlaneseq
    %v5710 = vshrl.u32 %v5709, 7
    %v5711 = vsub.s32 %v5708, %v5710
    %v5712 = vrot.slane %v5698, %v5711
    %v5713 = vcombine.high %v5689, 0.0
    %v5714 = vcombine.high %v5696, 0.0
    %v5715 = vcombine.high %v5705, 0.0
    %v5716 = vcombine.high %v5712, 0.0
    %v5717 = vcombine.low %v5064, %v5128
    %v5718 = vcombine.high %v5064, %v5128
    %v5720 = vunpack.c.l.s4 1983009808
    %v5721 = vunpack.c.0.s8 %v5720
    %v5722 = vlaneseq
    %v5723 = vshrl.u32 %v5722, 7
    %v5724 = vsub.s32 %v5721, %v5723
    %v5725 = vrot.slane %v5717, %v5724
    %v5727 = vunpack.c.l.s4 1983009808
    %v5728 = vunpack.c.0.s8 %v5727
    %v5729 = vlaneseq
    %v5730 = vshrl.u32 %v5729, 7
    %v5731 = vsub.s32 %v5728, %v5730
    %v5732 = vrot.slane %v5718, %v5731
    %v5733 = vcombine.low %v5096, %v5160
    %v5734 = vcombine.high %v5096, %v5160
    %v5736 = vunpack.c.l.s4 1983009808
    %v5737 = vunpack.c.0.s8 %v5736
    %v5738 = vlaneseq
    %v5739 = vshrl.u32 %v5738, 7
    %v5740 = vsub.s32 %v5737, %v5739
    %v5741 = vrot.slane %v5733, %v5740
    %v5743 = vunpack.c.l.s4 1983009808
    %v5744 = vunpack.c.0.s8 %v5743
    %v5745 = vlaneseq
    %v5746 = vshrl.u32 %v5745, 7
    %v5747 = vsub.s32 %v5744, %v5746
    %v5748 = vrot.slane %v5734, %v5747
    %v5749 = vcombine.low %v5725, %v5741
    %v5750 = vcombine.high %v5725, %v5741
    %v5752 = vunpack.c.l.s4 1934713408
    %v5753 = vunpack.c.0.s8 %v5752
    %v5754 = vlaneseq
    %v5755 = vshrl.u32 %v5754, 7
    %v5756 = vsub.s32 %v5753, %v5755
    %v5757 = vrot.slane %v5749, %v5756
    %v5759 = vunpack.c.l.s4 1934713408
    %v5760 = vunpack.c.0.s8 %v5759
    %v5761 = vlaneseq
    %v5762 = vshrl.u32 %v5761, 7
    %v5763 = vsub.s32 %v5760, %v5762
    %v5764 = vrot.slane %v5750, %v5763
    %v5765 = vcombine.low %v5732, %v5748
    %v5766 = vcombine.high %v5732, %v5748
    %v5768 = vunpack.c.l.s4 1934713408
    %v5769 = vunpack.c.0.s8 %v5768
    %v5770 = vlaneseq
    %v5771 = vshrl.u32 %v5770, 7
    %v5772 = vsub.s32 %v5769, %v5771
    %v5773 = vrot.slane %v5765, %v5772
    %v5775 = vunpack.c.l.s4 1934713408
    %v5776 = vunpack.c.0.s8 %v5775
    %v5777 = vlaneseq
    %v5778 = vshrl.u32 %v5777, 7
    %v5779 = vsub.s32 %v5776, %v5778
    %v5780 = vrot.slane %v5766, %v5779
    %v5781 = vcombine.high %v5757, 0.0
    %v5782 = vcombine.high %v5764, 0.0
    %v5783 = vcombine.high %v5773, 0.0
    %v5784 = vcombine.high %v5780, 0.0
    %v5785 = vcombine.low %v5066, %v5130
    %v5786 = vcombine.high %v5066, %v5130
    %v5788 = vunpack.c.l.s4 1983009808
    %v5789 = vunpack.c.0.s8 %v5788
    %v5790 = vlaneseq
    %v5791 = vshrl.u32 %v5790, 7
    %v5792 = vsub.s32 %v5789, %v5791
    %v5793 = vrot.slane %v5785, %v5792
    %v5795 = vunpack.c.l.s4 1983009808
    %v5796 = vunpack.c.0.s8 %v5795
    %v5797 = vlaneseq
    %v5798 = vshrl.u32 %v5797, 7
    %v5799 = vsub.s32 %v5796, %v5798
    %v5800 = vrot.slane %v5786, %v5799
    %v5801 = vcombine.low %v5098, %v5162
    %v5802 = vcombine.high %v5098, %v5162
    %v5804 = vunpack.c.l.s4 1983009808
    %v5805 = vunpack.c.0.s8 %v5804
    %v5806 = vlaneseq
    %v5807 = vshrl.u32 %v5806, 7
    %v5808 = vsub.s32 %v5805, %v5807
    %v5809 = vrot.slane %v5801, %v5808
    %v5811 = vunpack.c.l.s4 1983009808
    %v5812 = vunpack.c.0.s8 %v5811
    %v5813 = vlaneseq
    %v5814 = vshrl.u32 %v5813, 7
    %v5815 = vsub.s32 %v5812, %v5814
    %v5816 = vrot.slane %v5802, %v5815
    %v5817 = vcombine.low %v5793, %v5809
    %v5818 = vcombine.high %v5793, %v5809
    %v5820 = vunpack.c.l.s4 1934713408
    %v5821 = vunpack.c.0.s8 %v5820
    %v5822 = vlaneseq
    %v5823 = vshrl.u32 %v5822, 7
    %v5824 = vsub.s32 %v5821, %v5823
    %v5825 = vrot.slane %v5817, %v5824
    %v5827 = vunpack.c.l.s4 1934713408
    %v5828 = vunpack.c.0.s8 %v5827
    %v5829 = vlaneseq
    %v5830 = vshrl.u32 %v5829, 7
    %v5831 = vsub.s32 %v5828, %v5830
    %v5832 = vrot.slane %v5818, %v5831
    %v5833 = vcombine.low %v5800, %v5816
    %v5834 = vcombine.high %v5800, %v5816
    %v5836 = vunpack.c.l.s4 1934713408
    %v5837 = vunpack.c.0.s8 %v5836
    %v5838 = vlaneseq
    %v5839 = vshrl.u32 %v5838, 7
    %v5840 = vsub.s32 %v5837, %v5839
    %v5841 = vrot.slane %v5833, %v5840
    %v5843 = vunpack.c.l.s4 1934713408
    %v5844 = vunpack.c.0.s8 %v5843
    %v5845 = vlaneseq
    %v5846 = vshrl.u32 %v5845, 7
    %v5847 = vsub.s32 %v5844, %v5846
    %v5848 = vrot.slane %v5834, %v5847
    %v5849 = vcombine.high %v5825, 0.0
    %v5850 = vcombine.high %v5832, 0.0
    %v5851 = vcombine.high %v5841, 0.0
    %v5852 = vcombine.high %v5848, 0.0
    %v5853 = vcombine.low %v5068, %v5132
    %v5854 = vcombine.high %v5068, %v5132
    %v5856 = vunpack.c.l.s4 1983009808
    %v5857 = vunpack.c.0.s8 %v5856
    %v5858 = vlaneseq
    %v5859 = vshrl.u32 %v5858, 7
    %v5860 = vsub.s32 %v5857, %v5859
    %v5861 = vrot.slane %v5853, %v5860
    %v5863 = vunpack.c.l.s4 1983009808
    %v5864 = vunpack.c.0.s8 %v5863
    %v5865 = vlaneseq
    %v5866 = vshrl.u32 %v5865, 7
    %v5867 = vsub.s32 %v5864, %v5866
    %v5868 = vrot.slane %v5854, %v5867
    %v5869 = vcombine.low %v5100, %v5164
    %v5870 = vcombine.high %v5100, %v5164
    %v5872 = vunpack.c.l.s4 1983009808
    %v5873 = vunpack.c.0.s8 %v5872
    %v5874 = vlaneseq
    %v5875 = vshrl.u32 %v5874, 7
    %v5876 = vsub.s32 %v5873, %v5875
    %v5877 = vrot.slane %v5869, %v5876
    %v5879 = vunpack.c.l.s4 1983009808
    %v5880 = vunpack.c.0.s8 %v5879
    %v5881 = vlaneseq
    %v5882 = vshrl.u32 %v5881, 7
    %v5883 = vsub.s32 %v5880, %v5882
    %v5884 = vrot.slane %v5870, %v5883
    %v5885 = vcombine.low %v5861, %v5877
    %v5886 = vcombine.high %v5861, %v5877
    %v5888 = vunpack.c.l.s4 1934713408
    %v5889 = vunpack.c.0.s8 %v5888
    %v5890 = vlaneseq
    %v5891 = vshrl.u32 %v5890, 7
    %v5892 = vsub.s32 %v5889, %v5891
    %v5893 = vrot.slane %v5885, %v5892
    %v5895 = vunpack.c.l.s4 1934713408
    %v5896 = vunpack.c.0.s8 %v5895
    %v5897 = vlaneseq
    %v5898 = vshrl.u32 %v5897, 7
    %v5899 = vsub.s32 %v5896, %v5898
    %v5900 = vrot.slane %v5886, %v5899
    %v5901 = vcombine.low %v5868, %v5884
    %v5902 = vcombine.high %v5868, %v5884
    %v5904 = vunpack.c.l.s4 1934713408
    %v5905 = vunpack.c.0.s8 %v5904
    %v5906 = vlaneseq
    %v5907 = vshrl.u32 %v5906, 7
    %v5908 = vsub.s32 %v5905, %v5907
    %v5909 = vrot.slane %v5901, %v5908
    %v5911 = vunpack.c.l.s4 1934713408
    %v5912 = vunpack.c.0.s8 %v5911
    %v5913 = vlaneseq
    %v5914 = vshrl.u32 %v5913, 7
    %v5915 = vsub.s32 %v5912, %v5914
    %v5916 = vrot.slane %v5902, %v5915
    %v5917 = vcombine.high %v5893, 0.0
    %v5918 = vcombine.high %v5900, 0.0
    %v5919 = vcombine.high %v5909, 0.0
    %v5920 = vcombine.high %v5916, 0.0
    %v5921 = vcombine.low %v5070, %v5134
    %v5922 = vcombine.high %v5070, %v5134
    %v5924 = vunpack.c.l.s4 1983009808
    %v5925 = vunpack.c.0.s8 %v5924
    %v5926 = vlaneseq
    %v5927 = vshrl.u32 %v5926, 7
    %v5928 = vsub.s32 %v5925, %v5927
    %v5929 = vrot.slane %v5921, %v5928
    %v5931 = vunpack.c.l.s4 1983009808
    %v5932 = vunpack.c.0.s8 %v5931
    %v5933 = vlaneseq
    %v5934 = vshrl.u32 %v5933, 7
    %v5935 = vsub.s32 %v5932, %v5934
    %v5936 = vrot.slane %v5922, %v5935
    %v5937 = vcombine.low %v5102, %v5166
    %v5938 = vcombine.high %v5102, %v5166
    %v5940 = vunpack.c.l.s4 1983009808
    %v5941 = vunpack.c.0.s8 %v5940
    %v5942 = vlaneseq
    %v5943 = vshrl.u32 %v5942, 7
    %v5944 = vsub.s32 %v5941, %v5943
    %v5945 = vrot.slane %v5937, %v5944
    %v5947 = vunpack.c.l.s4 1983009808
    %v5948 = vunpack.c.0.s8 %v5947
    %v5949 = vlaneseq
    %v5950 = vshrl.u32 %v5949, 7
    %v5951 = vsub.s32 %v5948, %v5950
    %v5952 = vrot.slane %v5938, %v5951
    %v5953 = vcombine.low %v5929, %v5945
    %v5954 = vcombine.high %v5929, %v5945
    %v5956 = vunpack.c.l.s4 1934713408
    %v5957 = vunpack.c.0.s8 %v5956
    %v5958 = vlaneseq
    %v5959 = vshrl.u32 %v5958, 7
    %v5960 = vsub.s32 %v5957, %v5959
    %v5961 = vrot.slane %v5953, %v5960
    %v5963 = vunpack.c.l.s4 1934713408
    %v5964 = vunpack.c.0.s8 %v5963
    %v5965 = vlaneseq
    %v5966 = vshrl.u32 %v5965, 7
    %v5967 = vsub.s32 %v5964, %v5966
    %v5968 = vrot.slane %v5954, %v5967
    %v5969 = vcombine.low %v5936, %v5952
    %v5970 = vcombine.high %v5936, %v5952
    %v5972 = vunpack.c.l.s4 1934713408
    %v5973 = vunpack.c.0.s8 %v5972
    %v5974 = vlaneseq
    %v5975 = vshrl.u32 %v5974, 7
    %v5976 = vsub.s32 %v5973, %v5975
    %v5977 = vrot.slane %v5969, %v5976
    %v5979 = vunpack.c.l.s4 1934713408
    %v5980 = vunpack.c.0.s8 %v5979
    %v5981 = vlaneseq
    %v5982 = vshrl.u32 %v5981, 7
    %v5983 = vsub.s32 %v5980, %v5982
    %v5984 = vrot.slane %v5970, %v5983
    %v5985 = vcombine.high %v5961, 0.0
    %v5986 = vcombine.high %v5968, 0.0
    %v5987 = vcombine.high %v5977, 0.0
    %v5988 = vcombine.high %v5984, 0.0
    %v5989 = vcombine.low %v5072, %v5136
    %v5990 = vcombine.high %v5072, %v5136
    %v5992 = vunpack.c.l.s4 1983009808
    %v5993 = vunpack.c.0.s8 %v5992
    %v5994 = vlaneseq
    %v5995 = vshrl.u32 %v5994, 7
    %v5996 = vsub.s32 %v5993, %v5995
    %v5997 = vrot.slane %v5989, %v5996
    %v5999 = vunpack.c.l.s4 1983009808
    %v6000 = vunpack.c.0.s8 %v5999
    %v6001 = vlaneseq
    %v6002 = vshrl.u32 %v6001, 7
    %v6003 = vsub.s32 %v6000, %v6002
    %v6004 = vrot.slane %v5990, %v6003
    %v6005 = vcombine.low %v5104, %v5168
    %v6006 = vcombine.high %v5104, %v5168
    %v6008 = vunpack.c.l.s4 1983009808
    %v6009 = vunpack.c.0.s8 %v6008
    %v6010 = vlaneseq
    %v6011 = vshrl.u32 %v6010, 7
    %v6012 = vsub.s32 %v6009, %v6011
    %v6013 = vrot.slane %v6005, %v6012
    %v6015 = vunpack.c.l.s4 1983009808
    %v6016 = vunpack.c.0.s8 %v6015
    %v6017 = vlaneseq
    %v6018 = vshrl.u32 %v6017, 7
    %v6019 = vsub.s32 %v6016, %v6018
    %v6020 = vrot.slane %v6006, %v6019
    %v6021 = vcombine.low %v5997, %v6013
    %v6022 = vcombine.high %v5997, %v6013
    %v6024 = vunpack.c.l.s4 1934713408
    %v6025 = vunpack.c.0.s8 %v6024
    %v6026 = vlaneseq
    %v6027 = vshrl.u32 %v6026, 7
    %v6028 = vsub.s32 %v6025, %v6027
    %v6029 = vrot.slane %v6021, %v6028
    %v6031 = vunpack.c.l.s4 1934713408
    %v6032 = vunpack.c.0.s8 %v6031
    %v6033 = vlaneseq
    %v6034 = vshrl.u32 %v6033, 7
    %v6035 = vsub.s32 %v6032, %v6034
    %v6036 = vrot.slane %v6022, %v6035
    %v6037 = vcombine.low %v6004, %v6020
    %v6038 = vcombine.high %v6004, %v6020
    %v6040 = vunpack.c.l.s4 1934713408
    %v6041 = vunpack.c.0.s8 %v6040
    %v6042 = vlaneseq
    %v6043 = vshrl.u32 %v6042, 7
    %v6044 = vsub.s32 %v6041, %v6043
    %v6045 = vrot.slane %v6037, %v6044
    %v6047 = vunpack.c.l.s4 1934713408
    %v6048 = vunpack.c.0.s8 %v6047
    %v6049 = vlaneseq
    %v6050 = vshrl.u32 %v6049, 7
    %v6051 = vsub.s32 %v6048, %v6050
    %v6052 = vrot.slane %v6038, %v6051
    %v6053 = vcombine.high %v6029, 0.0
    %v6054 = vcombine.high %v6036, 0.0
    %v6055 = vcombine.high %v6045, 0.0
    %v6056 = vcombine.high %v6052, 0.0
    %v6057 = vcombine.low %v5074, %v5138
    %v6058 = vcombine.high %v5074, %v5138
    %v6060 = vunpack.c.l.s4 1983009808
    %v6061 = vunpack.c.0.s8 %v6060
    %v6062 = vlaneseq
    %v6063 = vshrl.u32 %v6062, 7
    %v6064 = vsub.s32 %v6061, %v6063
    %v6065 = vrot.slane %v6057, %v6064
    %v6067 = vunpack.c.l.s4 1983009808
    %v6068 = vunpack.c.0.s8 %v6067
    %v6069 = vlaneseq
    %v6070 = vshrl.u32 %v6069, 7
    %v6071 = vsub.s32 %v6068, %v6070
    %v6072 = vrot.slane %v6058, %v6071
    %v6073 = vcombine.low %v5106, %v5170
    %v6074 = vcombine.high %v5106, %v5170
    %v6076 = vunpack.c.l.s4 1983009808
    %v6077 = vunpack.c.0.s8 %v6076
    %v6078 = vlaneseq
    %v6079 = vshrl.u32 %v6078, 7
    %v6080 = vsub.s32 %v6077, %v6079
    %v6081 = vrot.slane %v6073, %v6080
    %v6083 = vunpack.c.l.s4 1983009808
    %v6084 = vunpack.c.0.s8 %v6083
    %v6085 = vlaneseq
    %v6086 = vshrl.u32 %v6085, 7
    %v6087 = vsub.s32 %v6084, %v6086
    %v6088 = vrot.slane %v6074, %v6087
    %v6089 = vcombine.low %v6065, %v6081
    %v6090 = vcombine.high %v6065, %v6081
    %v6092 = vunpack.c.l.s4 1934713408
    %v6093 = vunpack.c.0.s8 %v6092
    %v6094 = vlaneseq
    %v6095 = vshrl.u32 %v6094, 7
    %v6096 = vsub.s32 %v6093, %v6095
    %v6097 = vrot.slane %v6089, %v6096
    %v6099 = vunpack.c.l.s4 1934713408
    %v6100 = vunpack.c.0.s8 %v6099
    %v6101 = vlaneseq
    %v6102 = vshrl.u32 %v6101, 7
    %v6103 = vsub.s32 %v6100, %v6102
    %v6104 = vrot.slane %v6090, %v6103
    %v6105 = vcombine.low %v6072, %v6088
    %v6106 = vcombine.high %v6072, %v6088
    %v6108 = vunpack.c.l.s4 1934713408
    %v6109 = vunpack.c.0.s8 %v6108
    %v6110 = vlaneseq
    %v6111 = vshrl.u32 %v6110, 7
    %v6112 = vsub.s32 %v6109, %v6111
    %v6113 = vrot.slane %v6105, %v6112
    %v6115 = vunpack.c.l.s4 1934713408
    %v6116 = vunpack.c.0.s8 %v6115
    %v6117 = vlaneseq
    %v6118 = vshrl.u32 %v6117, 7
    %v6119 = vsub.s32 %v6116, %v6118
    %v6120 = vrot.slane %v6106, %v6119
    %v6121 = vcombine.high %v6097, 0.0
    %v6122 = vcombine.high %v6104, 0.0
    %v6123 = vcombine.high %v6113, 0.0
    %v6124 = vcombine.high %v6120, 0.0
    %v6125 = vcombine.low %v5076, %v5140
    %v6126 = vcombine.high %v5076, %v5140
    %v6128 = vunpack.c.l.s4 1983009808
    %v6129 = vunpack.c.0.s8 %v6128
    %v6130 = vlaneseq
    %v6131 = vshrl.u32 %v6130, 7
    %v6132 = vsub.s32 %v6129, %v6131
    %v6133 = vrot.slane %v6125, %v6132
    %v6135 = vunpack.c.l.s4 1983009808
    %v6136 = vunpack.c.0.s8 %v6135
    %v6137 = vlaneseq
    %v6138 = vshrl.u32 %v6137, 7
    %v6139 = vsub.s32 %v6136, %v6138
    %v6140 = vrot.slane %v6126, %v6139
    %v6141 = vcombine.low %v5108, %v5172
    %v6142 = vcombine.high %v5108, %v5172
    %v6144 = vunpack.c.l.s4 1983009808
    %v6145 = vunpack.c.0.s8 %v6144
    %v6146 = vlaneseq
    %v6147 = vshrl.u32 %v6146, 7
    %v6148 = vsub.s32 %v6145, %v6147
    %v6149 = vrot.slane %v6141, %v6148
    %v6151 = vunpack.c.l.s4 1983009808
    %v6152 = vunpack.c.0.s8 %v6151
    %v6153 = vlaneseq
    %v6154 = vshrl.u32 %v6153, 7
    %v6155 = vsub.s32 %v6152, %v6154
    %v6156 = vrot.slane %v6142, %v6155
    %v6157 = vcombine.low %v6133, %v6149
    %v6158 = vcombine.high %v6133, %v6149
    %v6160 = vunpack.c.l.s4 1934713408
    %v6161 = vunpack.c.0.s8 %v6160
    %v6162 = vlaneseq
    %v6163 = vshrl.u32 %v6162, 7
    %v6164 = vsub.s32 %v6161, %v6163
    %v6165 = vrot.slane %v6157, %v6164
    %v6167 = vunpack.c.l.s4 1934713408
    %v6168 = vunpack.c.0.s8 %v6167
    %v6169 = vlaneseq
    %v6170 = vshrl.u32 %v6169, 7
    %v6171 = vsub.s32 %v6168, %v6170
    %v6172 = vrot.slane %v6158, %v6171
    %v6173 = vcombine.low %v6140, %v6156
    %v6174 = vcombine.high %v6140, %v6156
    %v6176 = vunpack.c.l.s4 1934713408
    %v6177 = vunpack.c.0.s8 %v6176
    %v6178 = vlaneseq
    %v6179 = vshrl.u32 %v6178, 7
    %v6180 = vsub.s32 %v6177, %v6179
    %v6181 = vrot.slane %v6173, %v6180
    %v6183 = vunpack.c.l.s4 1934713408
    %v6184 = vunpack.c.0.s8 %v6183
    %v6185 = vlaneseq
    %v6186 = vshrl.u32 %v6185, 7
    %v6187 = vsub.s32 %v6184, %v6186
    %v6188 = vrot.slane %v6174, %v6187
    %v6189 = vcombine.high %v6165, 0.0
    %v6190 = vcombine.high %v6172, 0.0
    %v6191 = vcombine.high %v6181, 0.0
    %v6192 = vcombine.high %v6188, 0.0
    %v6193 = vcombine.low %v5078, %v5142
    %v6194 = vcombine.high %v5078, %v5142
    %v6196 = vunpack.c.l.s4 1983009808
    %v6197 = vunpack.c.0.s8 %v6196
    %v6198 = vlaneseq
    %v6199 = vshrl.u32 %v6198, 7
    %v6200 = vsub.s32 %v6197, %v6199
    %v6201 = vrot.slane %v6193, %v6200
    %v6203 = vunpack.c.l.s4 1983009808
    %v6204 = vunpack.c.0.s8 %v6203
    %v6205 = vlaneseq
    %v6206 = vshrl.u32 %v6205, 7
    %v6207 = vsub.s32 %v6204, %v6206
    %v6208 = vrot.slane %v6194, %v6207
    %v6209 = vcombine.low %v5110, %v5174
    %v6210 = vcombine.high %v5110, %v5174
    %v6212 = vunpack.c.l.s4 1983009808
    %v6213 = vunpack.c.0.s8 %v6212
    %v6214 = vlaneseq
    %v6215 = vshrl.u32 %v6214, 7
    %v6216 = vsub.s32 %v6213, %v6215
    %v6217 = vrot.slane %v6209, %v6216
    %v6219 = vunpack.c.l.s4 1983009808
    %v6220 = vunpack.c.0.s8 %v6219
    %v6221 = vlaneseq
    %v6222 = vshrl.u32 %v6221, 7
    %v6223 = vsub.s32 %v6220, %v6222
    %v6224 = vrot.slane %v6210, %v6223
    %v6225 = vcombine.low %v6201, %v6217
    %v6226 = vcombine.high %v6201, %v6217
    %v6228 = vunpack.c.l.s4 1934713408
    %v6229 = vunpack.c.0.s8 %v6228
    %v6230 = vlaneseq
    %v6231 = vshrl.u32 %v6230, 7
    %v6232 = vsub.s32 %v6229, %v6231
    %v6233 = vrot.slane %v6225, %v6232
    %v6235 = vunpack.c.l.s4 1934713408
    %v6236 = vunpack.c.0.s8 %v6235
    %v6237 = vlaneseq
    %v6238 = vshrl.u32 %v6237, 7
    %v6239 = vsub.s32 %v6236, %v6238
    %v6240 = vrot.slane %v6226, %v6239
    %v6241 = vcombine.low %v6208, %v6224
    %v6242 = vcombine.high %v6208, %v6224
    %v6244 = vunpack.c.l.s4 1934713408
    %v6245 = vunpack.c.0.s8 %v6244
    %v6246 = vlaneseq
    %v6247 = vshrl.u32 %v6246, 7
    %v6248 = vsub.s32 %v6245, %v6247
    %v6249 = vrot.slane %v6241, %v6248
    %v6251 = vunpack.c.l.s4 1934713408
    %v6252 = vunpack.c.0.s8 %v6251
    %v6253 = vlaneseq
    %v6254 = vshrl.u32 %v6253, 7
    %v6255 = vsub.s32 %v6252, %v6254
    %v6256 = vrot.slane %v6242, %v6255
    %v6257 = vcombine.high %v6233, 0.0
    %v6258 = vcombine.high %v6240, 0.0
    %v6259 = vcombine.high %v6249, 0.0
    %v6260 = vcombine.high %v6256, 0.0
    %v6261 = vcombine.low %v5080, %v5144
    %v6262 = vcombine.high %v5080, %v5144
    %v6264 = vunpack.c.l.s4 1983009808
    %v6265 = vunpack.c.0.s8 %v6264
    %v6266 = vlaneseq
    %v6267 = vshrl.u32 %v6266, 7
    %v6268 = vsub.s32 %v6265, %v6267
    %v6269 = vrot.slane %v6261, %v6268
    %v6271 = vunpack.c.l.s4 1983009808
    %v6272 = vunpack.c.0.s8 %v6271
    %v6273 = vlaneseq
    %v6274 = vshrl.u32 %v6273, 7
    %v6275 = vsub.s32 %v6272, %v6274
    %v6276 = vrot.slane %v6262, %v6275
    %v6277 = vcombine.low %v5112, %v5176
    %v6278 = vcombine.high %v5112, %v5176
    %v6280 = vunpack.c.l.s4 1983009808
    %v6281 = vunpack.c.0.s8 %v6280
    %v6282 = vlaneseq
    %v6283 = vshrl.u32 %v6282, 7
    %v6284 = vsub.s32 %v6281, %v6283
    %v6285 = vrot.slane %v6277, %v6284
    %v6287 = vunpack.c.l.s4 1983009808
    %v6288 = vunpack.c.0.s8 %v6287
    %v6289 = vlaneseq
    %v6290 = vshrl.u32 %v6289, 7
    %v6291 = vsub.s32 %v6288, %v6290
    %v6292 = vrot.slane %v6278, %v6291
    %v6293 = vcombine.low %v6269, %v6285
    %v6294 = vcombine.high %v6269, %v6285
    %v6296 = vunpack.c.l.s4 1934713408
    %v6297 = vunpack.c.0.s8 %v6296
    %v6298 = vlaneseq
    %v6299 = vshrl.u32 %v6298, 7
    %v6300 = vsub.s32 %v6297, %v6299
    %v6301 = vrot.slane %v6293, %v6300
    %v6303 = vunpack.c.l.s4 1934713408
    %v6304 = vunpack.c.0.s8 %v6303
    %v6305 = vlaneseq
    %v6306 = vshrl.u32 %v6305, 7
    %v6307 = vsub.s32 %v6304, %v6306
    %v6308 = vrot.slane %v6294, %v6307
    %v6309 = vcombine.low %v6276, %v6292
    %v6310 = vcombine.high %v6276, %v6292
    %v6312 = vunpack.c.l.s4 1934713408
    %v6313 = vunpack.c.0.s8 %v6312
    %v6314 = vlaneseq
    %v6315 = vshrl.u32 %v6314, 7
    %v6316 = vsub.s32 %v6313, %v6315
    %v6317 = vrot.slane %v6309, %v6316
    %v6319 = vunpack.c.l.s4 1934713408
    %v6320 = vunpack.c.0.s8 %v6319
    %v6321 = vlaneseq
    %v6322 = vshrl.u32 %v6321, 7
    %v6323 = vsub.s32 %v6320, %v6322
    %v6324 = vrot.slane %v6310, %v6323
    %v6325 = vcombine.high %v6301, 0.0
    %v6326 = vcombine.high %v6308, 0.0
    %v6327 = vcombine.high %v6317, 0.0
    %v6328 = vcombine.high %v6324, 0.0
    %v6329 = vcombine.low %v5281, %v5288
    %v6331 = vunpack.c.l.s4 1983009808
    %v6332 = vunpack.c.0.s8 %v6331
    %v6333 = vlaneseq
    %v6334 = vshrl.u32 %v6333, 7
    %v6335 = vsub.s32 %v6332, %v6334
    %v6336 = vrot.slane %v6329, %v6335
    %v6337 = vcombine.low %v5305, %v5306
    %v6339 = vunpack.c.l.s4 1983009808
    %v6340 = vunpack.c.0.s8 %v6339
    %v6341 = vlaneseq
    %v6342 = vshrl.u32 %v6341, 7
    %v6343 = vsub.s32 %v6340, %v6342
    %v6344 = vrot.slane %v6337, %v6343
    %v6345 = vcombine.low %v5297, %v5304
    %v6347 = vunpack.c.l.s4 1983009808
    %v6348 = vunpack.c.0.s8 %v6347
    %v6349 = vlaneseq
    %v6350 = vshrl.u32 %v6349, 7
    %v6351 = vsub.s32 %v6348, %v6350
    %v6352 = vrot.slane %v6345, %v6351
    %v6353 = vcombine.low %v5307, %v5308
    %v6355 = vunpack.c.l.s4 1983009808
    %v6356 = vunpack.c.0.s8 %v6355
    %v6357 = vlaneseq
    %v6358 = vshrl.u32 %v6357, 7
    %v6359 = vsub.s32 %v6356, %v6358
    %v6360 = vrot.slane %v6353, %v6359
    %v6361 = vcombine.low %v6336, %v6344
    %v6362 = vcombine.high %v6336, %v6344
    %v6364 = vunpack.c.l.s4 1934713408
    %v6365 = vunpack.c.0.s8 %v6364
    %v6366 = vlaneseq
    %v6367 = vshrl.u32 %v6366, 7
    %v6368 = vsub.s32 %v6365, %v6367
    %v6369 = vrot.slane %v6361, %v6368
    %v6371 = vunpack.c.l.s4 1934713408
    %v6372 = vunpack.c.0.s8 %v6371
    %v6373 = vlaneseq
    %v6374 = vshrl.u32 %v6373, 7
    %v6375 = vsub.s32 %v6372, %v6374
    %v6376 = vrot.slane %v6362, %v6375
    %v6377 = vcombine.low %v6352, %v6360
    %v6378 = vcombine.high %v6352, %v6360
    %v6380 = vunpack.c.l.s4 1934713408
    %v6381 = vunpack.c.0.s8 %v6380
    %v6382 = vlaneseq
    %v6383 = vshrl.u32 %v6382, 7
    %v6384 = vsub.s32 %v6381, %v6383
    %v6385 = vrot.slane %v6377, %v6384
    %v6387 = vunpack.c.l.s4 1934713408
    %v6388 = vunpack.c.0.s8 %v6387
    %v6389 = vlaneseq
    %v6390 = vshrl.u32 %v6389, 7
    %v6391 = vsub.s32 %v6388, %v6390
    %v6392 = vrot.slane %v6378, %v6391
    %v6393 = vcombine.low %v6369, %v6385
    %v6394 = vcombine.high %v6369, %v6385
    %v6395 = vcombine.low %v6376, %v6392
    %v6396 = vcombine.high %v6376, %v6392
    %v6397 = vcombine.low %v5349, %v5356
    %v6399 = vunpack.c.l.s4 1983009808
    %v6400 = vunpack.c.0.s8 %v6399
    %v6401 = vlaneseq
    %v6402 = vshrl.u32 %v6401, 7
    %v6403 = vsub.s32 %v6400, %v6402
    %v6404 = vrot.slane %v6397, %v6403
    %v6405 = vcombine.low %v5373, %v5374
    %v6407 = vunpack.c.l.s4 1983009808
    %v6408 = vunpack.c.0.s8 %v6407
    %v6409 = vlaneseq
    %v6410 = vshrl.u32 %v6409, 7
    %v6411 = vsub.s32 %v6408, %v6410
    %v6412 = vrot.slane %v6405, %v6411
    %v6413 = vcombine.low %v5365, %v5372
    %v6415 = vunpack.c.l.s4 1983009808
    %v6416 = vunpack.c.0.s8 %v6415
    %v6417 = vlaneseq
    %v6418 = vshrl.u32 %v6417, 7
    %v6419 = vsub.s32 %v6416, %v6418
    %v6420 = vrot.slane %v6413, %v6419
    %v6421 = vcombine.low %v5375, %v5376
    %v6423 = vunpack.c.l.s4 1983009808
    %v6424 = vunpack.c.0.s8 %v6423
    %v6425 = vlaneseq
    %v6426 = vshrl.u32 %v6425, 7
    %v6427 = vsub.s32 %v6424, %v6426
    %v6428 = vrot.slane %v6421, %v6427
    %v6429 = vcombine.low %v6404, %v6412
    %v6430 = vcombine.high %v6404, %v6412
    %v6432 = vunpack.c.l.s4 1934713408
    %v6433 = vunpack.c.0.s8 %v6432
    %v6434 = vlaneseq
    %v6435 = vshrl.u32 %v6434, 7
    %v6436 = vsub.s32 %v6433, %v6435
    %v6437 = vrot.slane %v6429, %v6436
    %v6439 = vunpack.c.l.s4 1934713408
    %v6440 = vunpack.c.0.s8 %v6439
    %v6441 = vlaneseq
    %v6442 = vshrl.u32 %v6441, 7
    %v6443 = vsub.s32 %v6440, %v6442
    %v6444 = vrot.slane %v6430, %v6443
    %v6445 = vcombine.low %v6420, %v6428
    %v6446 = vcombine.high %v6420, %v6428
    %v6448 = vunpack.c.l.s4 1934713408
    %v6449 = vunpack.c.0.s8 %v6448
    %v6450 = vlaneseq
    %v6451 = vshrl.u32 %v6450, 7
    %v6452 = vsub.s32 %v6449, %v6451
    %v6453 = vrot.slane %v6445, %v6452
    %v6455 = vunpack.c.l.s4 1934713408
    %v6456 = vunpack.c.0.s8 %v6455
    %v6457 = vlaneseq
    %v6458 = vshrl.u32 %v6457, 7
    %v6459 = vsub.s32 %v6456, %v6458
    %v6460 = vrot.slane %v6446, %v6459
    %v6461 = vcombine.low %v6437, %v6453
    %v6462 = vcombine.high %v6437, %v6453
    %v6463 = vcombine.low %v6444, %v6460
    %v6464 = vcombine.high %v6444, %v6460
    %v6465 = vcombine.low %v5417, %v5424
    %v6467 = vunpack.c.l.s4 1983009808
    %v6468 = vunpack.c.0.s8 %v6467
    %v6469 = vlaneseq
    %v6470 = vshrl.u32 %v6469, 7
    %v6471 = vsub.s32 %v6468, %v6470
    %v6472 = vrot.slane %v6465, %v6471
    %v6473 = vcombine.low %v5441, %v5442
    %v6475 = vunpack.c.l.s4 1983009808
    %v6476 = vunpack.c.0.s8 %v6475
    %v6477 = vlaneseq
    %v6478 = vshrl.u32 %v6477, 7
    %v6479 = vsub.s32 %v6476, %v6478
    %v6480 = vrot.slane %v6473, %v6479
    %v6481 = vcombine.low %v5433, %v5440
    %v6483 = vunpack.c.l.s4 1983009808
    %v6484 = vunpack.c.0.s8 %v6483
    %v6485 = vlaneseq
    %v6486 = vshrl.u32 %v6485, 7
    %v6487 = vsub.s32 %v6484, %v6486
    %v6488 = vrot.slane %v6481, %v6487
    %v6489 = vcombine.low %v5443, %v5444
    %v6491 = vunpack.c.l.s4 1983009808
    %v6492 = vunpack.c.0.s8 %v6491
    %v6493 = vlaneseq
    %v6494 = vshrl.u32 %v6493, 7
    %v6495 = vsub.s32 %v6492, %v6494
    %v6496 = vrot.slane %v6489, %v6495
    %v6497 = vcombine.low %v6472, %v6480
    %v6498 = vcombine.high %v6472, %v6480
    %v6500 = vunpack.c.l.s4 1934713408
    %v6501 = vunpack.c.0.s8 %v6500
    %v6502 = vlaneseq
    %v6503 = vshrl.u32 %v6502, 7
    %v6504 = vsub.s32 %v6501, %v6503
    %v6505 = vrot.slane %v6497, %v6504
    %v6507 = vunpack.c.l.s4 1934713408
    %v6508 = vunpack.c.0.s8 %v6507
    %v6509 = vlaneseq
    %v6510 = vshrl.u32 %v6509, 7
    %v6511 = vsub.s32 %v6508, %v6510
    %v6512 = vrot.slane %v6498, %v6511
    %v6513 = vcombine.low %v6488, %v6496
    %v6514 = vcombine.high %v6488, %v6496
    %v6516 = vunpack.c.l.s4 1934713408
    %v6517 = vunpack.c.0.s8 %v6516
    %v6518 = vlaneseq
    %v6519 = vshrl.u32 %v6518, 7
    %v6520 = vsub.s32 %v6517, %v6519
    %v6521 = vrot.slane %v6513, %v6520
    %v6523 = vunpack.c.l.s4 1934713408
    %v6524 = vunpack.c.0.s8 %v6523
    %v6525 = vlaneseq
    %v6526 = vshrl.u32 %v6525, 7
    %v6527 = vsub.s32 %v6524, %v6526
    %v6528 = vrot.slane %v6514, %v6527
    %v6529 = vcombine.low %v6505, %v6521
    %v6530 = vcombine.high %v6505, %v6521
    %v6531 = vcombine.low %v6512, %v6528
    %v6532 = vcombine.high %v6512, %v6528
    %v6533 = vcombine.low %v5485, %v5492
    %v6535 = vunpack.c.l.s4 1983009808
    %v6536 = vunpack.c.0.s8 %v6535
    %v6537 = vlaneseq
    %v6538 = vshrl.u32 %v6537, 7
    %v6539 = vsub.s32 %v6536, %v6538
    %v6540 = vrot.slane %v6533, %v6539
    %v6541 = vcombine.low %v5509, %v5510
    %v6543 = vunpack.c.l.s4 1983009808
    %v6544 = vunpack.c.0.s8 %v6543
    %v6545 = vlaneseq
    %v6546 = vshrl.u32 %v6545, 7
    %v6547 = vsub.s32 %v6544, %v6546
    %v6548 = vrot.slane %v6541, %v6547
    %v6549 = vcombine.low %v5501, %v5508
    %v6551 = vunpack.c.l.s4 1983009808
    %v6552 = vunpack.c.0.s8 %v6551
    %v6553 = vlaneseq
    %v6554 = vshrl.u32 %v6553, 7
    %v6555 = vsub.s32 %v6552, %v6554
    %v6556 = vrot.slane %v6549, %v6555
    %v6557 = vcombine.low %v5511, %v5512
    %v6559 = vunpack.c.l.s4 1983009808
    %v6560 = vunpack.c.0.s8 %v6559
    %v6561 = vlaneseq
    %v6562 = vshrl.u32 %v6561, 7
    %v6563 = vsub.s32 %v6560, %v6562
    %v6564 = vrot.slane %v6557, %v6563
    %v6565 = vcombine.low %v6540, %v6548
    %v6566 = vcombine.high %v6540, %v6548
    %v6568 = vunpack.c.l.s4 1934713408
    %v6569 = vunpack.c.0.s8 %v6568
    %v6570 = vlaneseq
    %v6571 = vshrl.u32 %v6570, 7
    %v6572 = vsub.s32 %v6569, %v6571
    %v6573 = vrot.slane %v6565, %v6572
    %v6575 = vunpack.c.l.s4 1934713408
    %v6576 = vunpack.c.0.s8 %v6575
    %v6577 = vlaneseq
    %v6578 = vshrl.u32 %v6577, 7
    %v6579 = vsub.s32 %v6576, %v6578
    %v6580 = vrot.slane %v6566, %v6579
    %v6581 = vcombine.low %v6556, %v6564
    %v6582 = vcombine.high %v6556, %v6564
    %v6584 = vunpack.c.l.s4 1934713408
    %v6585 = vunpack.c.0.s8 %v6584
    %v6586 = vlaneseq
    %v6587 = vshrl.u32 %v6586, 7
    %v6588 = vsub.s32 %v6585, %v6587
    %v6589 = vrot.slane %v6581, %v6588
    %v6591 = vunpack.c.l.s4 1934713408
    %v6592 = vunpack.c.0.s8 %v6591
    %v6593 = vlaneseq
    %v6594 = vshrl.u32 %v6593, 7
    %v6595 = vsub.s32 %v6592, %v6594
    %v6596 = vrot.slane %v6582, %v6595
    %v6597 = vcombine.low %v6573, %v6589
    %v6598 = vcombine.high %v6573, %v6589
    %v6599 = vcombine.low %v6580, %v6596
    %v6600 = vcombine.high %v6580, %v6596
    %v6601 = vcombine.low %v5553, %v5560
    %v6603 = vunpack.c.l.s4 1983009808
    %v6604 = vunpack.c.0.s8 %v6603
    %v6605 = vlaneseq
    %v6606 = vshrl.u32 %v6605, 7
    %v6607 = vsub.s32 %v6604, %v6606
    %v6608 = vrot.slane %v6601, %v6607
    %v6609 = vcombine.low %v5577, %v5578
    %v6611 = vunpack.c.l.s4 1983009808
    %v6612 = vunpack.c.0.s8 %v6611
    %v6613 = vlaneseq
    %v6614 = vshrl.u32 %v6613, 7
    %v6615 = vsub.s32 %v6612, %v6614
    %v6616 = vrot.slane %v6609, %v6615
    %v6617 = vcombine.low %v5569, %v5576
    %v6619 = vunpack.c.l.s4 1983009808
    %v6620 = vunpack.c.0.s8 %v6619
    %v6621 = vlaneseq
    %v6622 = vshrl.u32 %v6621, 7
    %v6623 = vsub.s32 %v6620, %v6622
    %v6624 = vrot.slane %v6617, %v6623
    %v6625 = vcombine.low %v5579, %v5580
    %v6627 = vunpack.c.l.s4 1983009808
    %v6628 = vunpack.c.0.s8 %v6627
    %v6629 = vlaneseq
    %v6630 = vshrl.u32 %v6629, 7
    %v6631 = vsub.s32 %v6628, %v6630
    %v6632 = vrot.slane %v6625, %v6631
    %v6633 = vcombine.low %v6608, %v6616
    %v6634 = vcombine.high %v6608, %v6616
    %v6636 = vunpack.c.l.s4 1934713408
    %v6637 = vunpack.c.0.s8 %v6636
    %v6638 = vlaneseq
    %v6639 = vshrl.u32 %v6638, 7
    %v6640 = vsub.s32 %v6637, %v6639
    %v6641 = vrot.slane %v6633, %v6640
    %v6643 = vunpack.c.l.s4 1934713408
    %v6644 = vunpack.c.0.s8 %v6643
    %v6645 = vlaneseq
    %v6646 = vshrl.u32 %v6645, 7
    %v6647 = vsub.s32 %v6644, %v6646
    %v6648 = vrot.slane %v6634, %v6647
    %v6649 = vcombine.low %v6624, %v6632
    %v6650 = vcombine.high %v6624, %v6632
    %v6652 = vunpack.c.l.s4 1934713408
    %v6653 = vunpack.c.0.s8 %v6652
    %v6654 = vlaneseq
    %v6655 = vshrl.u32 %v6654, 7
    %v6656 = vsub.s32 %v6653, %v6655
    %v6657 = vrot.slane %v6649, %v6656
    %v6659 = vunpack.c.l.s4 1934713408
    %v6660 = vunpack.c.0.s8 %v6659
    %v6661 = vlaneseq
    %v6662 = vshrl.u32 %v6661, 7
    %v6663 = vsub.s32 %v6660, %v6662
    %v6664 = vrot.slane %v6650, %v6663
    %v6665 = vcombine.low %v6641, %v6657
    %v6666 = vcombine.high %v6641, %v6657
    %v6667 = vcombine.low %v6648, %v6664
    %v6668 = vcombine.high %v6648, %v6664
    %v6669 = vcombine.low %v5621, %v5628
    %v6671 = vunpack.c.l.s4 1983009808
    %v6672 = vunpack.c.0.s8 %v6671
    %v6673 = vlaneseq
    %v6674 = vshrl.u32 %v6673, 7
    %v6675 = vsub.s32 %v6672, %v6674
    %v6676 = vrot.slane %v6669, %v6675
    %v6677 = vcombine.low %v5645, %v5646
    %v6679 = vunpack.c.l.s4 1983009808
    %v6680 = vunpack.c.0.s8 %v6679
    %v6681 = vlaneseq
    %v6682 = vshrl.u32 %v6681, 7
    %v6683 = vsub.s32 %v6680, %v6682
    %v6684 = vrot.slane %v6677, %v6683
    %v6685 = vcombine.low %v5637, %v5644
    %v6687 = vunpack.c.l.s4 1983009808
    %v6688 = vunpack.c.0.s8 %v6687
    %v6689 = vlaneseq
    %v6690 = vshrl.u32 %v6689, 7
    %v6691 = vsub.s32 %v6688, %v6690
    %v6692 = vrot.slane %v6685, %v6691
    %v6693 = vcombine.low %v5647, %v5648
    %v6695 = vunpack.c.l.s4 1983009808
    %v6696 = vunpack.c.0.s8 %v6695
    %v6697 = vlaneseq
    %v6698 = vshrl.u32 %v6697, 7
    %v6699 = vsub.s32 %v6696, %v6698
    %v6700 = vrot.slane %v6693, %v6699
    %v6701 = vcombine.low %v6676, %v6684
    %v6702 = vcombine.high %v6676, %v6684
    %v6704 = vunpack.c.l.s4 1934713408
    %v6705 = vunpack.c.0.s8 %v6704
    %v6706 = vlaneseq
    %v6707 = vshrl.u32 %v6706, 7
    %v6708 = vsub.s32 %v6705, %v6707
    %v6709 = vrot.slane %v6701, %v6708
    %v6711 = vunpack.c.l.s4 1934713408
    %v6712 = vunpack.c.0.s8 %v6711
    %v6713 = vlaneseq
    %v6714 = vshrl.u32 %v6713, 7
    %v6715 = vsub.s32 %v6712, %v6714
    %v6716 = vrot.slane %v6702, %v6715
    %v6717 = vcombine.low %v6692, %v6700
    %v6718 = vcombine.high %v6692, %v6700
    %v6720 = vunpack.c.l.s4 1934713408
    %v6721 = vunpack.c.0.s8 %v6720
    %v6722 = vlaneseq
    %v6723 = vshrl.u32 %v6722, 7
    %v6724 = vsub.s32 %v6721, %v6723
    %v6725 = vrot.slane %v6717, %v6724
    %v6727 = vunpack.c.l.s4 1934713408
    %v6728 = vunpack.c.0.s8 %v6727
    %v6729 = vlaneseq
    %v6730 = vshrl.u32 %v6729, 7
    %v6731 = vsub.s32 %v6728, %v6730
    %v6732 = vrot.slane %v6718, %v6731
    %v6733 = vcombine.low %v6709, %v6725
    %v6734 = vcombine.high %v6709, %v6725
    %v6735 = vcombine.low %v6716, %v6732
    %v6736 = vcombine.high %v6716, %v6732
    %v6737 = vcombine.low %v5689, %v5696
    %v6739 = vunpack.c.l.s4 1983009808
    %v6740 = vunpack.c.0.s8 %v6739
    %v6741 = vlaneseq
    %v6742 = vshrl.u32 %v6741, 7
    %v6743 = vsub.s32 %v6740, %v6742
    %v6744 = vrot.slane %v6737, %v6743
    %v6745 = vcombine.low %v5713, %v5714
    %v6747 = vunpack.c.l.s4 1983009808
    %v6748 = vunpack.c.0.s8 %v6747
    %v6749 = vlaneseq
    %v6750 = vshrl.u32 %v6749, 7
    %v6751 = vsub.s32 %v6748, %v6750
    %v6752 = vrot.slane %v6745, %v6751
    %v6753 = vcombine.low %v5705, %v5712
    %v6755 = vunpack.c.l.s4 1983009808
    %v6756 = vunpack.c.0.s8 %v6755
    %v6757 = vlaneseq
    %v6758 = vshrl.u32 %v6757, 7
    %v6759 = vsub.s32 %v6756, %v6758
    %v6760 = vrot.slane %v6753, %v6759
    %v6761 = vcombine.low %v5715, %v5716
    %v6763 = vunpack.c.l.s4 1983009808
    %v6764 = vunpack.c.0.s8 %v6763
    %v6765 = vlaneseq
    %v6766 = vshrl.u32 %v6765, 7
    %v6767 = vsub.s32 %v6764, %v6766
    %v6768 = vrot.slane %v6761, %v6767
    %v6769 = vcombine.low %v6744, %v6752
    %v6770 = vcombine.high %v6744, %v6752
    %v6772 = vunpack.c.l.s4 1934713408
    %v6773 = vunpack.c.0.s8 %v6772
    %v6774 = vlaneseq
    %v6775 = vshrl.u32 %v6774, 7
    %v6776 = vsub.s32 %v6773, %v6775
    %v6777 = vrot.slane %v6769, %v6776
    %v6779 = vunpack.c.l.s4 1934713408
    %v6780 = vunpack.c.0.s8 %v6779
    %v6781 = vlaneseq
    %v6782 = vshrl.u32 %v6781, 7
    %v6783 = vsub.s32 %v6780, %v6782
    %v6784 = vrot.slane %v6770, %v6783
    %v6785 = vcombine.low %v6760, %v6768
    %v6786 = vcombine.high %v6760, %v6768
    %v6788 = vunpack.c.l.s4 1934713408
    %v6789 = vunpack.c.0.s8 %v6788
    %v6790 = vlaneseq
    %v6791 = vshrl.u32 %v6790, 7
    %v6792 = vsub.s32 %v6789, %v6791
    %v6793 = vrot.slane %v6785, %v6792
    %v6795 = vunpack.c.l.s4 1934713408
    %v6796 = vunpack.c.0.s8 %v6795
    %v6797 = vlaneseq
    %v6798 = vshrl.u32 %v6797, 7
    %v6799 = vsub.s32 %v6796, %v6798
    %v6800 = vrot.slane %v6786, %v6799
    %v6801 = vcombine.low %v6777, %v6793
    %v6802 = vcombine.high %v6777, %v6793
    %v6803 = vcombine.low %v6784, %v6800
    %v6804 = vcombine.high %v6784, %v6800
    %v6805 = vcombine.low %v5757, %v5764
    %v6807 = vunpack.c.l.s4 1983009808
    %v6808 = vunpack.c.0.s8 %v6807
    %v6809 = vlaneseq
    %v6810 = vshrl.u32 %v6809, 7
    %v6811 = vsub.s32 %v6808, %v6810
    %v6812 = vrot.slane %v6805, %v6811
    %v6813 = vcombine.low %v5781, %v5782
    %v6815 = vunpack.c.l.s4 1983009808
    %v6816 = vunpack.c.0.s8 %v6815
    %v6817 = vlaneseq
    %v6818 = vshrl.u32 %v6817, 7
    %v6819 = vsub.s32 %v6816, %v6818
    %v6820 = vrot.slane %v6813, %v6819
    %v6821 = vcombine.low %v5773, %v5780
    %v6823 = vunpack.c.l.s4 1983009808
    %v6824 = vunpack.c.0.s8 %v6823
    %v6825 = vlaneseq
    %v6826 = vshrl.u32 %v6825, 7
    %v6827 = vsub.s32 %v6824, %v6826
    %v6828 = vrot.slane %v6821, %v6827
    %v6829 = vcombine.low %v5783, %v5784
    %v6831 = vunpack.c.l.s4 1983009808
    %v6832 = vunpack.c.0.s8 %v6831
    %v6833 = vlaneseq
    %v6834 = vshrl.u32 %v6833, 7
    %v6835 = vsub.s32 %v6832, %v6834
    %v6836 = vrot.slane %v6829, %v6835
    %v6837 = vcombine.low %v6812, %v6820
    %v6838 = vcombine.high %v6812, %v6820
    %v6840 = vunpack.c.l.s4 1934713408
    %v6841 = vunpack.c.0.s8 %v6840
    %v6842 = vlaneseq
    %v6843 = vshrl.u32 %v6842, 7
    %v6844 = vsub.s32 %v6841, %v6843
    %v6845 = vrot.slane %v6837, %v6844
    %v6847 = vunpack.c.l.s4 1934713408
    %v6848 = vunpack.c.0.s8 %v6847
    %v6849 = vlaneseq
    %v6850 = vshrl.u32 %v6849, 7
    %v6851 = vsub.s32 %v6848, %v6850
    %v6852 = vrot.slane %v6838, %v6851
    %v6853 = vcombine.low %v6828, %v6836
    %v6854 = vcombine.high %v6828, %v6836
    %v6856 = vunpack.c.l.s4 1934713408
    %v6857 = vunpack.c.0.s8 %v6856
    %v6858 = vlaneseq
    %v6859 = vshrl.u32 %v6858, 7
    %v6860 = vsub.s32 %v6857, %v6859
    %v6861 = vrot.slane %v6853, %v6860
    %v6863 = vunpack.c.l.s4 1934713408
    %v6864 = vunpack.c.0.s8 %v6863
    %v6865 = vlaneseq
    %v6866 = vshrl.u32 %v6865, 7
    %v6867 = vsub.s32 %v6864, %v6866
    %v6868 = vrot.slane %v6854, %v6867
    %v6869 = vcombine.low %v6845, %v6861
    %v6870 = vcombine.high %v6845, %v6861
    %v6871 = vcombine.low %v6852, %v6868
    %v6872 = vcombine.high %v6852, %v6868
    %v6873 = vcombine.low %v5825, %v5832
    %v6875 = vunpack.c.l.s4 1983009808
    %v6876 = vunpack.c.0.s8 %v6875
    %v6877 = vlaneseq
    %v6878 = vshrl.u32 %v6877, 7
    %v6879 = vsub.s32 %v6876, %v6878
    %v6880 = vrot.slane %v6873, %v6879
    %v6881 = vcombine.low %v5849, %v5850
    %v6883 = vunpack.c.l.s4 1983009808
    %v6884 = vunpack.c.0.s8 %v6883
    %v6885 = vlaneseq
    %v6886 = vshrl.u32 %v6885, 7
    %v6887 = vsub.s32 %v6884, %v6886
    %v6888 = vrot.slane %v6881, %v6887
    %v6889 = vcombine.low %v5841, %v5848
    %v6891 = vunpack.c.l.s4 1983009808
    %v6892 = vunpack.c.0.s8 %v6891
    %v6893 = vlaneseq
    %v6894 = vshrl.u32 %v6893, 7
    %v6895 = vsub.s32 %v6892, %v6894
    %v6896 = vrot.slane %v6889, %v6895
    %v6897 = vcombine.low %v5851, %v5852
    %v6899 = vunpack.c.l.s4 1983009808
    %v6900 = vunpack.c.0.s8 %v6899
    %v6901 = vlaneseq
    %v6902 = vshrl.u32 %v6901, 7
    %v6903 = vsub.s32 %v6900, %v6902
    %v6904 = vrot.slane %v6897, %v6903
    %v6905 = vcombine.low %v6880, %v6888
    %v6906 = vcombine.high %v6880, %v6888
    %v6908 = vunpack.c.l.s4 1934713408
    %v6909 = vunpack.c.0.s8 %v6908
    %v6910 = vlaneseq
    %v6911 = vshrl.u32 %v6910, 7
    %v6912 = vsub.s32 %v6909, %v6911
    %v6913 = vrot.slane %v6905, %v6912
    %v6915 = vunpack.c.l.s4 1934713408
    %v6916 = vunpack.c.0.s8 %v6915
    %v6917 = vlaneseq
    %v6918 = vshrl.u32 %v6917, 7
    %v6919 = vsub.s32 %v6916, %v6918
    %v6920 = vrot.slane %v6906, %v6919
    %v6921 = vcombine.low %v6896, %v6904
    %v6922 = vcombine.high %v6896, %v6904
    %v6924 = vunpack.c.l.s4 1934713408
    %v6925 = vunpack.c.0.s8 %v6924
    %v6926 = vlaneseq
    %v6927 = vshrl.u32 %v6926, 7
    %v6928 = vsub.s32 %v6925, %v6927
    %v6929 = vrot.slane %v6921, %v6928
    %v6931 = vunpack.c.l.s4 1934713408
    %v6932 = vunpack.c.0.s8 %v6931
    %v6933 = vlaneseq
    %v6934 = vshrl.u32 %v6933, 7
    %v6935 = vsub.s32 %v6932, %v6934
    %v6936 = vrot.slane %v6922, %v6935
    %v6937 = vcombine.low %v6913, %v6929
    %v6938 = vcombine.high %v6913, %v6929
    %v6939 = vcombine.low %v6920, %v6936
    %v6940 = vcombine.high %v6920, %v6936
    %v6941 = vcombine.low %v5893, %v5900
    %v6943 = vunpack.c.l.s4 1983009808
    %v6944 = vunpack.c.0.s8 %v6943
    %v6945 = vlaneseq
    %v6946 = vshrl.u32 %v6945, 7
    %v6947 = vsub.s32 %v6944, %v6946
    %v6948 = vrot.slane %v6941, %v6947
    %v6949 = vcombine.low %v5917, %v5918
    %v6951 = vunpack.c.l.s4 1983009808
    %v6952 = vunpack.c.0.s8 %v6951
    %v6953 = vlaneseq
    %v6954 = vshrl.u32 %v6953, 7
    %v6955 = vsub.s32 %v6952, %v6954
    %v6956 = vrot.slane %v6949, %v6955
    %v6957 = vcombine.low %v5909, %v5916
    %v6959 = vunpack.c.l.s4 1983009808
    %v6960 = vunpack.c.0.s8 %v6959
    %v6961 = vlaneseq
    %v6962 = vshrl.u32 %v6961, 7
    %v6963 = vsub.s32 %v6960, %v6962
    %v6964 = vrot.slane %v6957, %v6963
    %v6965 = vcombine.low %v5919, %v5920
    %v6967 = vunpack.c.l.s4 1983009808
    %v6968 = vunpack.c.0.s8 %v6967
    %v6969 = vlaneseq
    %v6970 = vshrl.u32 %v6969, 7
    %v6971 = vsub.s32 %v6968, %v6970
    %v6972 = vrot.slane %v6965, %v6971
    %v6973 = vcombine.low %v6948, %v6956
    %v6974 = vcombine.high %v6948, %v6956
    %v6976 = vunpack.c.l.s4 1934713408
    %v6977 = vunpack.c.0.s8 %v6976
    %v6978 = vlaneseq
    %v6979 = vshrl.u32 %v6978, 7
    %v6980 = vsub.s32 %v6977, %v6979
    %v6981 = vrot.slane %v6973, %v6980
    %v6983 = vunpack.c.l.s4 1934713408
    %v6984 = vunpack.c.0.s8 %v6983
    %v6985 = vlaneseq
    %v6986 = vshrl.u32 %v6985, 7
    %v6987 = vsub.s32 %v6984, %v6986
    %v6988 = vrot.slane %v6974, %v6987
    %v6989 = vcombine.low %v6964, %v6972
    %v6990 = vcombine.high %v6964, %v6972
    %v6992 = vunpack.c.l.s4 1934713408
    %v6993 = vunpack.c.0.s8 %v6992
    %v6994 = vlaneseq
    %v6995 = vshrl.u32 %v6994, 7
    %v6996 = vsub.s32 %v6993, %v6995
    %v6997 = vrot.slane %v6989, %v6996
    %v6999 = vunpack.c.l.s4 1934713408
    %v7000 = vunpack.c.0.s8 %v6999
    %v7001 = vlaneseq
    %v7002 = vshrl.u32 %v7001, 7
    %v7003 = vsub.s32 %v7000, %v7002
    %v7004 = vrot.slane %v6990, %v7003
    %v7005 = vcombine.low %v6981, %v6997
    %v7006 = vcombine.high %v6981, %v6997
    %v7007 = vcombine.low %v6988, %v7004
    %v7008 = vcombine.high %v6988, %v7004
    %v7009 = vcombine.low %v5961, %v5968
    %v7011 = vunpack.c.l.s4 1983009808
    %v7012 = vunpack.c.0.s8 %v7011
    %v7013 = vlaneseq
    %v7014 = vshrl.u32 %v7013, 7
    %v7015 = vsub.s32 %v7012, %v7014
    %v7016 = vrot.slane %v7009, %v7015
    %v7017 = vcombine.low %v5985, %v5986
    %v7019 = vunpack.c.l.s4 1983009808
    %v7020 = vunpack.c.0.s8 %v7019
    %v7021 = vlaneseq
    %v7022 = vshrl.u32 %v7021, 7
    %v7023 = vsub.s32 %v7020, %v7022
    %v7024 = vrot.slane %v7017, %v7023
    %v7025 = vcombine.low %v5977, %v5984
    %v7027 = vunpack.c.l.s4 1983009808
    %v7028 = vunpack.c.0.s8 %v7027
    %v7029 = vlaneseq
    %v7030 = vshrl.u32 %v7029, 7
    %v7031 = vsub.s32 %v7028, %v7030
    %v7032 = vrot.slane %v7025, %v7031
    %v7033 = vcombine.low %v5987, %v5988
    %v7035 = vunpack.c.l.s4 1983009808
    %v7036 = vunpack.c.0.s8 %v7035
    %v7037 = vlaneseq
    %v7038 = vshrl.u32 %v7037, 7
    %v7039 = vsub.s32 %v7036, %v7038
    %v7040 = vrot.slane %v7033, %v7039
    %v7041 = vcombine.low %v7016, %v7024
    %v7042 = vcombine.high %v7016, %v7024
    %v7044 = vunpack.c.l.s4 1934713408
    %v7045 = vunpack.c.0.s8 %v7044
    %v7046 = vlaneseq
    %v7047 = vshrl.u32 %v7046, 7
    %v7048 = vsub.s32 %v7045, %v7047
    %v7049 = vrot.slane %v7041, %v7048
    %v7051 = vunpack.c.l.s4 1934713408
    %v7052 = vunpack.c.0.s8 %v7051
    %v7053 = vlaneseq
    %v7054 = vshrl.u32 %v7053, 7
    %v7055 = vsub.s32 %v7052, %v7054
    %v7056 = vrot.slane %v7042, %v7055
    %v7057 = vcombine.low %v7032, %v7040
    %v7058 = vcombine.high %v7032, %v7040
    %v7060 = vunpack.c.l.s4 1934713408
    %v7061 = vunpack.c.0.s8 %v7060
    %v7062 = vlaneseq
    %v7063 = vshrl.u32 %v7062, 7
    %v7064 = vsub.s32 %v7061, %v7063
    %v7065 = vrot.slane %v7057, %v7064
    %v7067 = vunpack.c.l.s4 1934713408
    %v7068 = vunpack.c.0.s8 %v7067
    %v7069 = vlaneseq
    %v7070 = vshrl.u32 %v7069, 7
    %v7071 = vsub.s32 %v7068, %v7070
    %v7072 = vrot.slane %v7058, %v7071
    %v7073 = vcombine.low %v7049, %v7065
    %v7074 = vcombine.high %v7049, %v7065
    %v7075 = vcombine.low %v7056, %v7072
    %v7076 = vcombine.high %v7056, %v7072
    %v7077 = vcombine.low %v6029, %v6036
    %v7079 = vunpack.c.l.s4 1983009808
    %v7080 = vunpack.c.0.s8 %v7079
    %v7081 = vlaneseq
    %v7082 = vshrl.u32 %v7081, 7
    %v7083 = vsub.s32 %v7080, %v7082
    %v7084 = vrot.slane %v7077, %v7083
    %v7085 = vcombine.low %v6053, %v6054
    %v7087 = vunpack.c.l.s4 1983009808
    %v7088 = vunpack.c.0.s8 %v7087
    %v7089 = vlaneseq
    %v7090 = vshrl.u32 %v7089, 7
    %v7091 = vsub.s32 %v7088, %v7090
    %v7092 = vrot.slane %v7085, %v7091
    %v7093 = vcombine.low %v6045, %v6052
    %v7095 = vunpack.c.l.s4 1983009808
    %v7096 = vunpack.c.0.s8 %v7095
    %v7097 = vlaneseq
    %v7098 = vshrl.u32 %v7097, 7
    %v7099 = vsub.s32 %v7096, %v7098
    %v7100 = vrot.slane %v7093, %v7099
    %v7101 = vcombine.low %v6055, %v6056
    %v7103 = vunpack.c.l.s4 1983009808
    %v7104 = vunpack.c.0.s8 %v7103
    %v7105 = vlaneseq
    %v7106 = vshrl.u32 %v7105, 7
    %v7107 = vsub.s32 %v7104, %v7106
    %v7108 = vrot.slane %v7101, %v7107
    %v7109 = vcombine.low %v7084, %v7092
    %v7110 = vcombine.high %v7084, %v7092
    %v7112 = vunpack.c.l.s4 1934713408
    %v7113 = vunpack.c.0.s8 %v7112
    %v7114 = vlaneseq
    %v7115 = vshrl.u32 %v7114, 7
    %v7116 = vsub.s32 %v7113, %v7115
    %v7117 = vrot.slane %v7109, %v7116
    %v7119 = vunpack.c.l.s4 1934713408
    %v7120 = vunpack.c.0.s8 %v7119
    %v7121 = vlaneseq
    %v7122 = vshrl.u32 %v7121, 7
    %v7123 = vsub.s32 %v7120, %v7122
    %v7124 = vrot.slane %v7110, %v7123
    %v7125 = vcombine.low %v7100, %v7108
    %v7126 = vcombine.high %v7100, %v7108
    %v7128 = vunpack.c.l.s4 1934713408
    %v7129 = vunpack.c.0.s8 %v7128
    %v7130 = vlaneseq
    %v7131 = vshrl.u32 %v7130, 7
    %v7132 = vsub.s32 %v7129, %v7131
    %v7133 = vrot.slane %v7125, %v7132
    %v7135 = vunpack.c.l.s4 1934713408
    %v7136 = vunpack.c.0.s8 %v7135
    %v7137 = vlaneseq
    %v7138 = vshrl.u32 %v7137, 7
    %v7139 = vsub.s32 %v7136, %v7138
    %v7140 = vrot.slane %v7126, %v7139
    %v7141 = vcombine.low %v7117, %v7133
    %v7142 = vcombine.high %v7117, %v7133
    %v7143 = vcombine.low %v7124, %v7140
    %v7144 = vcombine.high %v7124, %v7140
    %v7145 = vcombine.low %v6097, %v6104
    %v7147 = vunpack.c.l.s4 1983009808
    %v7148 = vunpack.c.0.s8 %v7147
    %v7149 = vlaneseq
    %v7150 = vshrl.u32 %v7149, 7
    %v7151 = vsub.s32 %v7148, %v7150
    %v7152 = vrot.slane %v7145, %v7151
    %v7153 = vcombine.low %v6121, %v6122
    %v7155 = vunpack.c.l.s4 1983009808
    %v7156 = vunpack.c.0.s8 %v7155
    %v7157 = vlaneseq
    %v7158 = vshrl.u32 %v7157, 7
    %v7159 = vsub.s32 %v7156, %v7158
    %v7160 = vrot.slane %v7153, %v7159
    %v7161 = vcombine.low %v6113, %v6120
    %v7163 = vunpack.c.l.s4 1983009808
    %v7164 = vunpack.c.0.s8 %v7163
    %v7165 = vlaneseq
    %v7166 = vshrl.u32 %v7165, 7
    %v7167 = vsub.s32 %v7164, %v7166
    %v7168 = vrot.slane %v7161, %v7167
    %v7169 = vcombine.low %v6123, %v6124
    %v7171 = vunpack.c.l.s4 1983009808
    %v7172 = vunpack.c.0.s8 %v7171
    %v7173 = vlaneseq
    %v7174 = vshrl.u32 %v7173, 7
    %v7175 = vsub.s32 %v7172, %v7174
    %v7176 = vrot.slane %v7169, %v7175
    %v7177 = vcombine.low %v7152, %v7160
    %v7178 = vcombine.high %v7152, %v7160
    %v7180 = vunpack.c.l.s4 1934713408
    %v7181 = vunpack.c.0.s8 %v7180
    %v7182 = vlaneseq
    %v7183 = vshrl.u32 %v7182, 7
    %v7184 = vsub.s32 %v7181, %v7183
    %v7185 = vrot.slane %v7177, %v7184
    %v7187 = vunpack.c.l.s4 1934713408
    %v7188 = vunpack.c.0.s8 %v7187
    %v7189 = vlaneseq
    %v7190 = vshrl.u32 %v7189, 7
    %v7191 = vsub.s32 %v7188, %v7190
    %v7192 = vrot.slane %v7178, %v7191
    %v7193 = vcombine.low %v7168, %v7176
    %v7194 = vcombine.high %v7168, %v7176
    %v7196 = vunpack.c.l.s4 1934713408
    %v7197 = vunpack.c.0.s8 %v7196
    %v7198 = vlaneseq
    %v7199 = vshrl.u32 %v7198, 7
    %v7200 = vsub.s32 %v7197, %v7199
    %v7201 = vrot.slane %v7193, %v7200
    %v7203 = vunpack.c.l.s4 1934713408
    %v7204 = vunpack.c.0.s8 %v7203
    %v7205 = vlaneseq
    %v7206 = vshrl.u32 %v7205, 7
    %v7207 = vsub.s32 %v7204, %v7206
    %v7208 = vrot.slane %v7194, %v7207
    %v7209 = vcombine.low %v7185, %v7201
    %v7210 = vcombine.high %v7185, %v7201
    %v7211 = vcombine.low %v7192, %v7208
    %v7212 = vcombine.high %v7192, %v7208
    %v7213 = vcombine.low %v6165, %v6172
    %v7215 = vunpack.c.l.s4 1983009808
    %v7216 = vunpack.c.0.s8 %v7215
    %v7217 = vlaneseq
    %v7218 = vshrl.u32 %v7217, 7
    %v7219 = vsub.s32 %v7216, %v7218
    %v7220 = vrot.slane %v7213, %v7219
    %v7221 = vcombine.low %v6189, %v6190
    %v7223 = vunpack.c.l.s4 1983009808
    %v7224 = vunpack.c.0.s8 %v7223
    %v7225 = vlaneseq
    %v7226 = vshrl.u32 %v7225, 7
    %v7227 = vsub.s32 %v7224, %v7226
    %v7228 = vrot.slane %v7221, %v7227
    %v7229 = vcombine.low %v6181, %v6188
    %v7231 = vunpack.c.l.s4 1983009808
    %v7232 = vunpack.c.0.s8 %v7231
    %v7233 = vlaneseq
    %v7234 = vshrl.u32 %v7233, 7
    %v7235 = vsub.s32 %v7232, %v7234
    %v7236 = vrot.slane %v7229, %v7235
    %v7237 = vcombine.low %v6191, %v6192
    %v7239 = vunpack.c.l.s4 1983009808
    %v7240 = vunpack.c.0.s8 %v7239
    %v7241 = vlaneseq
    %v7242 = vshrl.u32 %v7241, 7
    %v7243 = vsub.s32 %v7240, %v7242
    %v7244 = vrot.slane %v7237, %v7243
    %v7245 = vcombine.low %v7220, %v7228
    %v7246 = vcombine.high %v7220, %v7228
    %v7248 = vunpack.c.l.s4 1934713408
    %v7249 = vunpack.c.0.s8 %v7248
    %v7250 = vlaneseq
    %v7251 = vshrl.u32 %v7250, 7
    %v7252 = vsub.s32 %v7249, %v7251
    %v7253 = vrot.slane %v7245, %v7252
    %v7255 = vunpack.c.l.s4 1934713408
    %v7256 = vunpack.c.0.s8 %v7255
    %v7257 = vlaneseq
    %v7258 = vshrl.u32 %v7257, 7
    %v7259 = vsub.s32 %v7256, %v7258
    %v7260 = vrot.slane %v7246, %v7259
    %v7261 = vcombine.low %v7236, %v7244
    %v7262 = vcombine.high %v7236, %v7244
    %v7264 = vunpack.c.l.s4 1934713408
    %v7265 = vunpack.c.0.s8 %v7264
    %v7266 = vlaneseq
    %v7267 = vshrl.u32 %v7266, 7
    %v7268 = vsub.s32 %v7265, %v7267
    %v7269 = vrot.slane %v7261, %v7268
    %v7271 = vunpack.c.l.s4 1934713408
    %v7272 = vunpack.c.0.s8 %v7271
    %v7273 = vlaneseq
    %v7274 = vshrl.u32 %v7273, 7
    %v7275 = vsub.s32 %v7272, %v7274
    %v7276 = vrot.slane %v7262, %v7275
    %v7277 = vcombine.low %v7253, %v7269
    %v7278 = vcombine.high %v7253, %v7269
    %v7279 = vcombine.low %v7260, %v7276
    %v7280 = vcombine.high %v7260, %v7276
    %v7281 = vcombine.low %v6233, %v6240
    %v7283 = vunpack.c.l.s4 1983009808
    %v7284 = vunpack.c.0.s8 %v7283
    %v7285 = vlaneseq
    %v7286 = vshrl.u32 %v7285, 7
    %v7287 = vsub.s32 %v7284, %v7286
    %v7288 = vrot.slane %v7281, %v7287
    %v7289 = vcombine.low %v6257, %v6258
    %v7291 = vunpack.c.l.s4 1983009808
    %v7292 = vunpack.c.0.s8 %v7291
    %v7293 = vlaneseq
    %v7294 = vshrl.u32 %v7293, 7
    %v7295 = vsub.s32 %v7292, %v7294
    %v7296 = vrot.slane %v7289, %v7295
    %v7297 = vcombine.low %v6249, %v6256
    %v7299 = vunpack.c.l.s4 1983009808
    %v7300 = vunpack.c.0.s8 %v7299
    %v7301 = vlaneseq
    %v7302 = vshrl.u32 %v7301, 7
    %v7303 = vsub.s32 %v7300, %v7302
    %v7304 = vrot.slane %v7297, %v7303
    %v7305 = vcombine.low %v6259, %v6260
    %v7307 = vunpack.c.l.s4 1983009808
    %v7308 = vunpack.c.0.s8 %v7307
    %v7309 = vlaneseq
    %v7310 = vshrl.u32 %v7309, 7
    %v7311 = vsub.s32 %v7308, %v7310
    %v7312 = vrot.slane %v7305, %v7311
    %v7313 = vcombine.low %v7288, %v7296
    %v7314 = vcombine.high %v7288, %v7296
    %v7316 = vunpack.c.l.s4 1934713408
    %v7317 = vunpack.c.0.s8 %v7316
    %v7318 = vlaneseq
    %v7319 = vshrl.u32 %v7318, 7
    %v7320 = vsub.s32 %v7317, %v7319
    %v7321 = vrot.slane %v7313, %v7320
    %v7323 = vunpack.c.l.s4 1934713408
    %v7324 = vunpack.c.0.s8 %v7323
    %v7325 = vlaneseq
    %v7326 = vshrl.u32 %v7325, 7
    %v7327 = vsub.s32 %v7324, %v7326
    %v7328 = vrot.slane %v7314, %v7327
    %v7329 = vcombine.low %v7304, %v7312
    %v7330 = vcombine.high %v7304, %v7312
    %v7332 = vunpack.c.l.s4 1934713408
    %v7333 = vunpack.c.0.s8 %v7332
    %v7334 = vlaneseq
    %v7335 = vshrl.u32 %v7334, 7
    %v7336 = vsub.s32 %v7333, %v7335
    %v7337 = vrot.slane %v7329, %v7336
    %v7339 = vunpack.c.l.s4 1934713408
    %v7340 = vunpack.c.0.s8 %v7339
    %v7341 = vlaneseq
    %v7342 = vshrl.u32 %v7341, 7
    %v7343 = vsub.s32 %v7340, %v7342
    %v7344 = vrot.slane %v7330, %v7343
    %v7345 = vcombine.low %v7321, %v7337
    %v7346 = vcombine.high %v7321, %v7337
    %v7347 = vcombine.low %v7328, %v7344
    %v7348 = vcombine.high %v7328, %v7344
    %v7349 = vcombine.low %v6301, %v6308
    %v7351 = vunpack.c.l.s4 1983009808
    %v7352 = vunpack.c.0.s8 %v7351
    %v7353 = vlaneseq
    %v7354 = vshrl.u32 %v7353, 7
    %v7355 = vsub.s32 %v7352, %v7354
    %v7356 = vrot.slane %v7349, %v7355
    %v7357 = vcombine.low %v6325, %v6326
    %v7359 = vunpack.c.l.s4 1983009808
    %v7360 = vunpack.c.0.s8 %v7359
    %v7361 = vlaneseq
    %v7362 = vshrl.u32 %v7361, 7
    %v7363 = vsub.s32 %v7360, %v7362
    %v7364 = vrot.slane %v7357, %v7363
    %v7365 = vcombine.low %v6317, %v6324
    %v7367 = vunpack.c.l.s4 1983009808
    %v7368 = vunpack.c.0.s8 %v7367
    %v7369 = vlaneseq
    %v7370 = vshrl.u32 %v7369, 7
    %v7371 = vsub.s32 %v7368, %v7370
    %v7372 = vrot.slane %v7365, %v7371
    %v7373 = vcombine.low %v6327, %v6328
    %v7375 = vunpack.c.l.s4 1983009808
    %v7376 = vunpack.c.0.s8 %v7375
    %v7377 = vlaneseq
    %v7378 = vshrl.u32 %v7377, 7
    %v7379 = vsub.s32 %v7376, %v7378
    %v7380 = vrot.slane %v7373, %v7379
    %v7381 = vcombine.low %v7356, %v7364
    %v7382 = vcombine.high %v7356, %v7364
    %v7384 = vunpack.c.l.s4 1934713408
    %v7385 = vunpack.c.0.s8 %v7384
    %v7386 = vlaneseq
    %v7387 = vshrl.u32 %v7386, 7
    %v7388 = vsub.s32 %v7385, %v7387
    %v7389 = vrot.slane %v7381, %v7388
    %v7391 = vunpack.c.l.s4 1934713408
    %v7392 = vunpack.c.0.s8 %v7391
    %v7393 = vlaneseq
    %v7394 = vshrl.u32 %v7393, 7
    %v7395 = vsub.s32 %v7392, %v7394
    %v7396 = vrot.slane %v7382, %v7395
    %v7397 = vcombine.low %v7372, %v7380
    %v7398 = vcombine.high %v7372, %v7380
    %v7400 = vunpack.c.l.s4 1934713408
    %v7401 = vunpack.c.0.s8 %v7400
    %v7402 = vlaneseq
    %v7403 = vshrl.u32 %v7402, 7
    %v7404 = vsub.s32 %v7401, %v7403
    %v7405 = vrot.slane %v7397, %v7404
    %v7407 = vunpack.c.l.s4 1934713408
    %v7408 = vunpack.c.0.s8 %v7407
    %v7409 = vlaneseq
    %v7410 = vshrl.u32 %v7409, 7
    %v7411 = vsub.s32 %v7408, %v7410
    %v7412 = vrot.slane %v7398, %v7411
    %v7413 = vcombine.low %v7389, %v7405
    %v7414 = vcombine.high %v7389, %v7405
    %v7415 = vcombine.low %v7396, %v7412
    %v7416 = vcombine.high %v7396, %v7412
    %v7417 = vpack.c.bf16 %v1645, %v1577
    %v7418 = vpack.c.bf16 %v1646, %v1578
    %v7419 = vpack.c.bf16 %v1647, %v1579
    %v7420 = vpack.c.bf16 %v1648, %v1580
    %v7421 = vpack.c.bf16 %v1781, %v1713
    %v7422 = vpack.c.bf16 %v1782, %v1714
    %v7423 = vpack.c.bf16 %v1783, %v1715
    %v7424 = vpack.c.bf16 %v1784, %v1716
    %v7425 = vpack.c.bf16 %v1917, %v1849
    %v7426 = vpack.c.bf16 %v1918, %v1850
    %v7427 = vpack.c.bf16 %v1919, %v1851
    %v7428 = vpack.c.bf16 %v1920, %v1852
    %v7429 = vpack.c.bf16 %v2053, %v1985
    %v7430 = vpack.c.bf16 %v2054, %v1986
    %v7431 = vpack.c.bf16 %v2055, %v1987
    %v7432 = vpack.c.bf16 %v2056, %v1988
    %v7433 = vpack.c.bf16 %v2189, %v2121
    %v7434 = vpack.c.bf16 %v2190, %v2122
    %v7435 = vpack.c.bf16 %v2191, %v2123
    %v7436 = vpack.c.bf16 %v2192, %v2124
    %v7437 = vpack.c.bf16 %v2325, %v2257
    %v7438 = vpack.c.bf16 %v2326, %v2258
    %v7439 = vpack.c.bf16 %v2327, %v2259
    %v7440 = vpack.c.bf16 %v2328, %v2260
    %v7441 = vpack.c.bf16 %v2461, %v2393
    %v7442 = vpack.c.bf16 %v2462, %v2394
    %v7443 = vpack.c.bf16 %v2463, %v2395
    %v7444 = vpack.c.bf16 %v2464, %v2396
    %v7445 = vpack.c.bf16 %v2597, %v2529
    %v7446 = vpack.c.bf16 %v2598, %v2530
    %v7447 = vpack.c.bf16 %v2599, %v2531
    %v7448 = vpack.c.bf16 %v2600, %v2532
    %v7449 = vpack.c.bf16 %v4013, %v3945
    %v7450 = vpack.c.bf16 %v4014, %v3946
    %v7451 = vpack.c.bf16 %v4015, %v3947
    %v7452 = vpack.c.bf16 %v4016, %v3948
    %v7453 = vpack.c.bf16 %v4149, %v4081
    %v7454 = vpack.c.bf16 %v4150, %v4082
    %v7455 = vpack.c.bf16 %v4151, %v4083
    %v7456 = vpack.c.bf16 %v4152, %v4084
    %v7457 = vpack.c.bf16 %v4285, %v4217
    %v7458 = vpack.c.bf16 %v4286, %v4218
    %v7459 = vpack.c.bf16 %v4287, %v4219
    %v7460 = vpack.c.bf16 %v4288, %v4220
    %v7461 = vpack.c.bf16 %v4421, %v4353
    %v7462 = vpack.c.bf16 %v4422, %v4354
    %v7463 = vpack.c.bf16 %v4423, %v4355
    %v7464 = vpack.c.bf16 %v4424, %v4356
    %v7465 = vpack.c.bf16 %v4557, %v4489
    %v7466 = vpack.c.bf16 %v4558, %v4490
    %v7467 = vpack.c.bf16 %v4559, %v4491
    %v7468 = vpack.c.bf16 %v4560, %v4492
    %v7469 = vpack.c.bf16 %v4693, %v4625
    %v7470 = vpack.c.bf16 %v4694, %v4626
    %v7471 = vpack.c.bf16 %v4695, %v4627
    %v7472 = vpack.c.bf16 %v4696, %v4628
    %v7473 = vpack.c.bf16 %v4829, %v4761
    %v7474 = vpack.c.bf16 %v4830, %v4762
    %v7475 = vpack.c.bf16 %v4831, %v4763
    %v7476 = vpack.c.bf16 %v4832, %v4764
    %v7477 = vpack.c.bf16 %v4965, %v4897
    %v7478 = vpack.c.bf16 %v4966, %v4898
    %v7479 = vpack.c.bf16 %v4967, %v4899
    %v7480 = vpack.c.bf16 %v4968, %v4900
    %v7481 = vld [vmem:[#allocation2] sm:$0xff]
    %v7482 = vld [vmem:[#allocation2 + $0x8] sm:$0xff]
    %v7483 = vld [vmem:[#allocation2 + $0x10] sm:$0xff]
    %v7484 = vld [vmem:[#allocation2 + $0x18] sm:$0xff]
    %v7485 = vld [vmem:[#allocation2 + $0x20] sm:$0xff]
    %v7486 = vld [vmem:[#allocation2 + $0x28] sm:$0xff]
    %v7487 = vld [vmem:[#allocation2 + $0x30] sm:$0xff]
    %v7488 = vld [vmem:[#allocation2 + $0x38] sm:$0xff]
    %v7489 = vld [vmem:[#allocation2 + $0x40] sm:$0xff]
    %v7490 = vld [vmem:[#allocation2 + $0x48] sm:$0xff]
    %v7491 = vld [vmem:[#allocation2 + $0x50] sm:$0xff]
    %v7492 = vld [vmem:[#allocation2 + $0x58] sm:$0xff]
    %v7493 = vld [vmem:[#allocation2 + $0x60] sm:$0xff]
    %v7494 = vld [vmem:[#allocation2 + $0x68] sm:$0xff]
    %v7495 = vld [vmem:[#allocation2 + $0x70] sm:$0xff]
    %v7496 = vld [vmem:[#allocation2 + $0x78] sm:$0xff]
    %v7497 = vld [vmem:[#allocation2 + $0x80] sm:$0xff]
    %v7498 = vld [vmem:[#allocation2 + $0x88] sm:$0xff]
    %v7499 = vld [vmem:[#allocation2 + $0x90] sm:$0xff]
    %v7500 = vld [vmem:[#allocation2 + $0x98] sm:$0xff]
    %v7501 = vld [vmem:[#allocation2 + $0xa0] sm:$0xff]
    %v7502 = vld [vmem:[#allocation2 + $0xa8] sm:$0xff]
    %v7503 = vld [vmem:[#allocation2 + $0xb0] sm:$0xff]
    %v7504 = vld [vmem:[#allocation2 + $0xb8] sm:$0xff]
    %v7505 = vld [vmem:[#allocation2 + $0xc0] sm:$0xff]
    %v7506 = vld [vmem:[#allocation2 + $0xc8] sm:$0xff]
    %v7507 = vld [vmem:[#allocation2 + $0xd0] sm:$0xff]
    %v7508 = vld [vmem:[#allocation2 + $0xd8] sm:$0xff]
    %v7509 = vld [vmem:[#allocation2 + $0xe0] sm:$0xff]
    %v7510 = vld [vmem:[#allocation2 + $0xe8] sm:$0xff]
    %v7511 = vld [vmem:[#allocation2 + $0xf0] sm:$0xff]
    %v7512 = vld [vmem:[#allocation2 + $0xf8] sm:$0xff]
    %v7513 = vld [vmem:[#allocation2 + $0x100] sm:$0xff]
    %v7514 = vld [vmem:[#allocation2 + $0x108] sm:$0xff]
    %v7515 = vld [vmem:[#allocation2 + $0x110] sm:$0xff]
    %v7516 = vld [vmem:[#allocation2 + $0x118] sm:$0xff]
    %v7517 = vld [vmem:[#allocation2 + $0x120] sm:$0xff]
    %v7518 = vld [vmem:[#allocation2 + $0x128] sm:$0xff]
    %v7519 = vld [vmem:[#allocation2 + $0x130] sm:$0xff]
    %v7520 = vld [vmem:[#allocation2 + $0x138] sm:$0xff]
    %v7521 = vld [vmem:[#allocation2 + $0x140] sm:$0xff]
    %v7522 = vld [vmem:[#allocation2 + $0x148] sm:$0xff]
    %v7523 = vld [vmem:[#allocation2 + $0x150] sm:$0xff]
    %v7524 = vld [vmem:[#allocation2 + $0x158] sm:$0xff]
    %v7525 = vld [vmem:[#allocation2 + $0x160] sm:$0xff]
    %v7526 = vld [vmem:[#allocation2 + $0x168] sm:$0xff]
    %v7527 = vld [vmem:[#allocation2 + $0x170] sm:$0xff]
    %v7528 = vld [vmem:[#allocation2 + $0x178] sm:$0xff]
    %v7529 = vld [vmem:[#allocation2 + $0x180] sm:$0xff]
    %v7530 = vld [vmem:[#allocation2 + $0x188] sm:$0xff]
    %v7531 = vld [vmem:[#allocation2 + $0x190] sm:$0xff]
    %v7532 = vld [vmem:[#allocation2 + $0x198] sm:$0xff]
    %v7533 = vld [vmem:[#allocation2 + $0x1a0] sm:$0xff]
    %v7534 = vld [vmem:[#allocation2 + $0x1a8] sm:$0xff]
    %v7535 = vld [vmem:[#allocation2 + $0x1b0] sm:$0xff]
    %v7536 = vld [vmem:[#allocation2 + $0x1b8] sm:$0xff]
    %v7537 = vld [vmem:[#allocation2 + $0x1c0] sm:$0xff]
    %v7538 = vld [vmem:[#allocation2 + $0x1c8] sm:$0xff]
    %v7539 = vld [vmem:[#allocation2 + $0x1d0] sm:$0xff]
    %v7540 = vld [vmem:[#allocation2 + $0x1d8] sm:$0xff]
    %v7541 = vld [vmem:[#allocation2 + $0x1e0] sm:$0xff]
    %v7542 = vld [vmem:[#allocation2 + $0x1e8] sm:$0xff]
    %v7543 = vld [vmem:[#allocation2 + $0x1f0] sm:$0xff]
    %v7544 = vld [vmem:[#allocation2 + $0x1f8] sm:$0xff]
    %vm7545 = vcmask 64512
    %v7547 = vsel %vm7545, %v7417, 0
    %v7550 = vsel %vm7545, %v7449, 0
    %7552 = vmatprep.subr.bf16.mxu0 0
    %7553 = vmatpush1.bf16.xpose.msra.mxu0 %v7550
    %7554 = vmatprep.subr.bf16.mxu0 0
    %7555 = vmatpush1.bf16.xpose.msra.mxu0 0
    %7556 = vmatprep.subr.bf16.mxu0 0
    %7557 = vmatpush1.bf16.xpose.msra.mxu0 0
    %7558 = vmatprep.subr.bf16.mxu0 0
    %7559 = vmatpush1.bf16.xpose.msra.mxu0 0
    %7560 = vmatprep.subr.bf16.mxu0 0
    %7561 = vmatpush1.bf16.xpose.msra.mxu0 0
    %7562 = vmatprep.subr.bf16.mxu0 0
    %7563 = vmatpush1.bf16.xpose.msra.mxu0 0
    %7564 = vmatprep.subr.bf16.mxu0 0
    %7565 = vmatpush1.bf16.xpose.msra.mxu0 0
    %7566 = vmatprep.subr.bf16.mxu0 0
    %7567 = vmatpush1.bf16.xpose.msra.mxu0 0
    %7568 = vmatprep.subr.bf16.mxu0 0
    %7569 = vmatpush1.bf16.xpose.msra.mxu0 0
    %7570 = vmatprep.subr.bf16.mxu0 0
    %7571 = vmatpush1.bf16.xpose.msra.mxu0 0
    %7572 = vmatprep.subr.bf16.mxu0 0
    %7573 = vmatpush1.bf16.xpose.msra.mxu0 0
    %7574 = vmatprep.subr.bf16.mxu0 0
    %7575 = vmatpush1.bf16.xpose.msra.mxu0 0
    %7576 = vmatprep.subr.bf16.mxu0 0
    %7577 = vmatpush1.bf16.xpose.msra.mxu0 0
    %7578 = vmatprep.subr.bf16.mxu0 0
    %7579 = vmatpush1.bf16.xpose.msra.mxu0 0
    %7580 = vmatprep.subr.bf16.mxu0 0
    %7581 = vmatpush1.bf16.xpose.msra.mxu0 0
    %7582 = vmatprep.subr.bf16.mxu0 0
    %7583 = vmatpush1.bf16.xpose.msra.mxu0 0
    %7584 = vmatprep.mubr.bf16.mxu0 0
    %7585 = vmatmul.mubr.bf16.gmra.mrb[0].mxu0 %v7547
    %v7586 = vpop.f32.mrb[0].mxu0
    %v7587 = vadd.f32 %v7481, %v7586
    %v7588 = vpop.f32.mrb[0].mxu0
    %v7589 = vpop.f32.mrb[0].mxu0
    %v7590 = vadd.f32 %v7482, %v7589
    %v7591 = vpop.f32.mrb[0].mxu0
    %7592 = vdwg.mxu0
    %v7594 = vsel %vm7545, %v7418, 0
    %v7597 = vsel %vm7545, %v7450, 0
    %7599 = vmatprep.subr.bf16.mxu0 0
    %7600 = vmatpush1.bf16.xpose.msra.mxu0 %v7597
    %7601 = vmatprep.subr.bf16.mxu0 0
    %7602 = vmatpush1.bf16.xpose.msra.mxu0 0
    %7603 = vmatprep.subr.bf16.mxu0 0
    %7604 = vmatpush1.bf16.xpose.msra.mxu0 0
    %7605 = vmatprep.subr.bf16.mxu0 0
    %7606 = vmatpush1.bf16.xpose.msra.mxu0 0
    %7607 = vmatprep.subr.bf16.mxu0 0
    %7608 = vmatpush1.bf16.xpose.msra.mxu0 0
    %7609 = vmatprep.subr.bf16.mxu0 0
    %7610 = vmatpush1.bf16.xpose.msra.mxu0 0
    %7611 = vmatprep.subr.bf16.mxu0 0
    %7612 = vmatpush1.bf16.xpose.msra.mxu0 0
    %7613 = vmatprep.subr.bf16.mxu0 0
    %7614 = vmatpush1.bf16.xpose.msra.mxu0 0
    %7615 = vmatprep.subr.bf16.mxu0 0
    %7616 = vmatpush1.bf16.xpose.msra.mxu0 0
    %7617 = vmatprep.subr.bf16.mxu0 0
    %7618 = vmatpush1.bf16.xpose.msra.mxu0 0
    %7619 = vmatprep.subr.bf16.mxu0 0
    %7620 = vmatpush1.bf16.xpose.msra.mxu0 0
    %7621 = vmatprep.subr.bf16.mxu0 0
    %7622 = vmatpush1.bf16.xpose.msra.mxu0 0
    %7623 = vmatprep.subr.bf16.mxu0 0
    %7624 = vmatpush1.bf16.xpose.msra.mxu0 0
    %7625 = vmatprep.subr.bf16.mxu0 0
    %7626 = vmatpush1.bf16.xpose.msra.mxu0 0
    %7627 = vmatprep.subr.bf16.mxu0 0
    %7628 = vmatpush1.bf16.xpose.msra.mxu0 0
    %7629 = vmatprep.subr.bf16.mxu0 0
    %7630 = vmatpush1.bf16.xpose.msra.mxu0 0
    %7631 = vmatprep.mubr.bf16.mxu0 0
    %7632 = vmatmul.mubr.bf16.gmra.mrb[0].mxu0 %v7594
    %v7633 = vpop.f32.mrb[0].mxu0
    %v7634 = vadd.f32 %v7483, %v7633
    %v7635 = vpop.f32.mrb[0].mxu0
    %v7636 = vpop.f32.mrb[0].mxu0
    %v7637 = vadd.f32 %v7484, %v7636
    %v7638 = vpop.f32.mrb[0].mxu0
    %7639 = vdwg.mxu0
    %v7641 = vsel %vm7545, %v7419, 0
    %v7644 = vsel %vm7545, %v7451, 0
    %7646 = vmatprep.subr.bf16.mxu0 0
    %7647 = vmatpush1.bf16.xpose.msra.mxu0 %v7644
    %7648 = vmatprep.subr.bf16.mxu0 0
    %7649 = vmatpush1.bf16.xpose.msra.mxu0 0
    %7650 = vmatprep.subr.bf16.mxu0 0
    %7651 = vmatpush1.bf16.xpose.msra.mxu0 0
    %7652 = vmatprep.subr.bf16.mxu0 0
    %7653 = vmatpush1.bf16.xpose.msra.mxu0 0
    %7654 = vmatprep.subr.bf16.mxu0 0
    %7655 = vmatpush1.bf16.xpose.msra.mxu0 0
    %7656 = vmatprep.subr.bf16.mxu0 0
    %7657 = vmatpush1.bf16.xpose.msra.mxu0 0
    %7658 = vmatprep.subr.bf16.mxu0 0
    %7659 = vmatpush1.bf16.xpose.msra.mxu0 0
    %7660 = vmatprep.subr.bf16.mxu0 0
    %7661 = vmatpush1.bf16.xpose.msra.mxu0 0
    %7662 = vmatprep.subr.bf16.mxu0 0
    %7663 = vmatpush1.bf16.xpose.msra.mxu0 0
    %7664 = vmatprep.subr.bf16.mxu0 0
    %7665 = vmatpush1.bf16.xpose.msra.mxu0 0
    %7666 = vmatprep.subr.bf16.mxu0 0
    %7667 = vmatpush1.bf16.xpose.msra.mxu0 0
    %7668 = vmatprep.subr.bf16.mxu0 0
    %7669 = vmatpush1.bf16.xpose.msra.mxu0 0
    %7670 = vmatprep.subr.bf16.mxu0 0
    %7671 = vmatpush1.bf16.xpose.msra.mxu0 0
    %7672 = vmatprep.subr.bf16.mxu0 0
    %7673 = vmatpush1.bf16.xpose.msra.mxu0 0
    %7674 = vmatprep.subr.bf16.mxu0 0
    %7675 = vmatpush1.bf16.xpose.msra.mxu0 0
    %7676 = vmatprep.subr.bf16.mxu0 0
    %7677 = vmatpush1.bf16.xpose.msra.mxu0 0
    %7678 = vmatprep.mubr.bf16.mxu0 0
    %7679 = vmatmul.mubr.bf16.gmra.mrb[0].mxu0 %v7641
    %v7680 = vpop.f32.mrb[0].mxu0
    %v7681 = vadd.f32 %v7485, %v7680
    %v7682 = vpop.f32.mrb[0].mxu0
    %v7683 = vpop.f32.mrb[0].mxu0
    %v7684 = vadd.f32 %v7486, %v7683
    %v7685 = vpop.f32.mrb[0].mxu0
    %7686 = vdwg.mxu0
    %v7688 = vsel %vm7545, %v7420, 0
    %v7691 = vsel %vm7545, %v7452, 0
    %7693 = vmatprep.subr.bf16.mxu0 0
    %7694 = vmatpush1.bf16.xpose.msra.mxu0 %v7691
    %7695 = vmatprep.subr.bf16.mxu0 0
    %7696 = vmatpush1.bf16.xpose.msra.mxu0 0
    %7697 = vmatprep.subr.bf16.mxu0 0
    %7698 = vmatpush1.bf16.xpose.msra.mxu0 0
    %7699 = vmatprep.subr.bf16.mxu0 0
    %7700 = vmatpush1.bf16.xpose.msra.mxu0 0
    %7701 = vmatprep.subr.bf16.mxu0 0
    %7702 = vmatpush1.bf16.xpose.msra.mxu0 0
    %7703 = vmatprep.subr.bf16.mxu0 0
    %7704 = vmatpush1.bf16.xpose.msra.mxu0 0
    %7705 = vmatprep.subr.bf16.mxu0 0
    %7706 = vmatpush1.bf16.xpose.msra.mxu0 0
    %7707 = vmatprep.subr.bf16.mxu0 0
    %7708 = vmatpush1.bf16.xpose.msra.mxu0 0
    %7709 = vmatprep.subr.bf16.mxu0 0
    %7710 = vmatpush1.bf16.xpose.msra.mxu0 0
    %7711 = vmatprep.subr.bf16.mxu0 0
    %7712 = vmatpush1.bf16.xpose.msra.mxu0 0
    %7713 = vmatprep.subr.bf16.mxu0 0
    %7714 = vmatpush1.bf16.xpose.msra.mxu0 0
    %7715 = vmatprep.subr.bf16.mxu0 0
    %7716 = vmatpush1.bf16.xpose.msra.mxu0 0
    %7717 = vmatprep.subr.bf16.mxu0 0
    %7718 = vmatpush1.bf16.xpose.msra.mxu0 0
    %7719 = vmatprep.subr.bf16.mxu0 0
    %7720 = vmatpush1.bf16.xpose.msra.mxu0 0
    %7721 = vmatprep.subr.bf16.mxu0 0
    %7722 = vmatpush1.bf16.xpose.msra.mxu0 0
    %7723 = vmatprep.subr.bf16.mxu0 0
    %7724 = vmatpush1.bf16.xpose.msra.mxu0 0
    %7725 = vmatprep.mubr.bf16.mxu0 0
    %7726 = vmatmul.mubr.bf16.gmra.mrb[0].mxu0 %v7688
    %v7727 = vpop.f32.mrb[0].mxu0
    %v7728 = vadd.f32 %v7487, %v7727
    %v7729 = vpop.f32.mrb[0].mxu0
    %v7730 = vpop.f32.mrb[0].mxu0
    %v7731 = vadd.f32 %v7488, %v7730
    %v7732 = vpop.f32.mrb[0].mxu0
    %7733 = vdwg.mxu0
    %v7735 = vsel %vm7545, %v7421, 0
    %v7738 = vsel %vm7545, %v7453, 0
    %7740 = vmatprep.subr.bf16.mxu0 0
    %7741 = vmatpush1.bf16.xpose.msra.mxu0 %v7738
    %7742 = vmatprep.subr.bf16.mxu0 0
    %7743 = vmatpush1.bf16.xpose.msra.mxu0 0
    %7744 = vmatprep.subr.bf16.mxu0 0
    %7745 = vmatpush1.bf16.xpose.msra.mxu0 0
    %7746 = vmatprep.subr.bf16.mxu0 0
    %7747 = vmatpush1.bf16.xpose.msra.mxu0 0
    %7748 = vmatprep.subr.bf16.mxu0 0
    %7749 = vmatpush1.bf16.xpose.msra.mxu0 0
    %7750 = vmatprep.subr.bf16.mxu0 0
    %7751 = vmatpush1.bf16.xpose.msra.mxu0 0
    %7752 = vmatprep.subr.bf16.mxu0 0
    %7753 = vmatpush1.bf16.xpose.msra.mxu0 0
    %7754 = vmatprep.subr.bf16.mxu0 0
    %7755 = vmatpush1.bf16.xpose.msra.mxu0 0
    %7756 = vmatprep.subr.bf16.mxu0 0
    %7757 = vmatpush1.bf16.xpose.msra.mxu0 0
    %7758 = vmatprep.subr.bf16.mxu0 0
    %7759 = vmatpush1.bf16.xpose.msra.mxu0 0
    %7760 = vmatprep.subr.bf16.mxu0 0
    %7761 = vmatpush1.bf16.xpose.msra.mxu0 0
    %7762 = vmatprep.subr.bf16.mxu0 0
    %7763 = vmatpush1.bf16.xpose.msra.mxu0 0
    %7764 = vmatprep.subr.bf16.mxu0 0
    %7765 = vmatpush1.bf16.xpose.msra.mxu0 0
    %7766 = vmatprep.subr.bf16.mxu0 0
    %7767 = vmatpush1.bf16.xpose.msra.mxu0 0
    %7768 = vmatprep.subr.bf16.mxu0 0
    %7769 = vmatpush1.bf16.xpose.msra.mxu0 0
    %7770 = vmatprep.subr.bf16.mxu0 0
    %7771 = vmatpush1.bf16.xpose.msra.mxu0 0
    %7772 = vmatprep.mubr.bf16.mxu0 0
    %7773 = vmatmul.mubr.bf16.gmra.mrb[0].mxu0 %v7735
    %v7774 = vpop.f32.mrb[0].mxu0
    %v7775 = vadd.f32 %v7489, %v7774
    %v7776 = vpop.f32.mrb[0].mxu0
    %v7777 = vpop.f32.mrb[0].mxu0
    %v7778 = vadd.f32 %v7490, %v7777
    %v7779 = vpop.f32.mrb[0].mxu0
    %7780 = vdwg.mxu0
    %v7782 = vsel %vm7545, %v7422, 0
    %v7785 = vsel %vm7545, %v7454, 0
    %7787 = vmatprep.subr.bf16.mxu0 0
    %7788 = vmatpush1.bf16.xpose.msra.mxu0 %v7785
    %7789 = vmatprep.subr.bf16.mxu0 0
    %7790 = vmatpush1.bf16.xpose.msra.mxu0 0
    %7791 = vmatprep.subr.bf16.mxu0 0
    %7792 = vmatpush1.bf16.xpose.msra.mxu0 0
    %7793 = vmatprep.subr.bf16.mxu0 0
    %7794 = vmatpush1.bf16.xpose.msra.mxu0 0
    %7795 = vmatprep.subr.bf16.mxu0 0
    %7796 = vmatpush1.bf16.xpose.msra.mxu0 0
    %7797 = vmatprep.subr.bf16.mxu0 0
    %7798 = vmatpush1.bf16.xpose.msra.mxu0 0
    %7799 = vmatprep.subr.bf16.mxu0 0
    %7800 = vmatpush1.bf16.xpose.msra.mxu0 0
    %7801 = vmatprep.subr.bf16.mxu0 0
    %7802 = vmatpush1.bf16.xpose.msra.mxu0 0
    %7803 = vmatprep.subr.bf16.mxu0 0
    %7804 = vmatpush1.bf16.xpose.msra.mxu0 0
    %7805 = vmatprep.subr.bf16.mxu0 0
    %7806 = vmatpush1.bf16.xpose.msra.mxu0 0
    %7807 = vmatprep.subr.bf16.mxu0 0
    %7808 = vmatpush1.bf16.xpose.msra.mxu0 0
    %7809 = vmatprep.subr.bf16.mxu0 0
    %7810 = vmatpush1.bf16.xpose.msra.mxu0 0
    %7811 = vmatprep.subr.bf16.mxu0 0
    %7812 = vmatpush1.bf16.xpose.msra.mxu0 0
    %7813 = vmatprep.subr.bf16.mxu0 0
    %7814 = vmatpush1.bf16.xpose.msra.mxu0 0
    %7815 = vmatprep.subr.bf16.mxu0 0
    %7816 = vmatpush1.bf16.xpose.msra.mxu0 0
    %7817 = vmatprep.subr.bf16.mxu0 0
    %7818 = vmatpush1.bf16.xpose.msra.mxu0 0
    %7819 = vmatprep.mubr.bf16.mxu0 0
    %7820 = vmatmul.mubr.bf16.gmra.mrb[0].mxu0 %v7782
    %v7821 = vpop.f32.mrb[0].mxu0
    %v7822 = vadd.f32 %v7491, %v7821
    %v7823 = vpop.f32.mrb[0].mxu0
    %v7824 = vpop.f32.mrb[0].mxu0
    %v7825 = vadd.f32 %v7492, %v7824
    %v7826 = vpop.f32.mrb[0].mxu0
    %7827 = vdwg.mxu0
    %v7829 = vsel %vm7545, %v7423, 0
    %v7832 = vsel %vm7545, %v7455, 0
    %7834 = vmatprep.subr.bf16.mxu0 0
    %7835 = vmatpush1.bf16.xpose.msra.mxu0 %v7832
    %7836 = vmatprep.subr.bf16.mxu0 0
    %7837 = vmatpush1.bf16.xpose.msra.mxu0 0
    %7838 = vmatprep.subr.bf16.mxu0 0
    %7839 = vmatpush1.bf16.xpose.msra.mxu0 0
    %7840 = vmatprep.subr.bf16.mxu0 0
    %7841 = vmatpush1.bf16.xpose.msra.mxu0 0
    %7842 = vmatprep.subr.bf16.mxu0 0
    %7843 = vmatpush1.bf16.xpose.msra.mxu0 0
    %7844 = vmatprep.subr.bf16.mxu0 0
    %7845 = vmatpush1.bf16.xpose.msra.mxu0 0
    %7846 = vmatprep.subr.bf16.mxu0 0
    %7847 = vmatpush1.bf16.xpose.msra.mxu0 0
    %7848 = vmatprep.subr.bf16.mxu0 0
    %7849 = vmatpush1.bf16.xpose.msra.mxu0 0
    %7850 = vmatprep.subr.bf16.mxu0 0
    %7851 = vmatpush1.bf16.xpose.msra.mxu0 0
    %7852 = vmatprep.subr.bf16.mxu0 0
    %7853 = vmatpush1.bf16.xpose.msra.mxu0 0
    %7854 = vmatprep.subr.bf16.mxu0 0
    %7855 = vmatpush1.bf16.xpose.msra.mxu0 0
    %7856 = vmatprep.subr.bf16.mxu0 0
    %7857 = vmatpush1.bf16.xpose.msra.mxu0 0
    %7858 = vmatprep.subr.bf16.mxu0 0
    %7859 = vmatpush1.bf16.xpose.msra.mxu0 0
    %7860 = vmatprep.subr.bf16.mxu0 0
    %7861 = vmatpush1.bf16.xpose.msra.mxu0 0
    %7862 = vmatprep.subr.bf16.mxu0 0
    %7863 = vmatpush1.bf16.xpose.msra.mxu0 0
    %7864 = vmatprep.subr.bf16.mxu0 0
    %7865 = vmatpush1.bf16.xpose.msra.mxu0 0
    %7866 = vmatprep.mubr.bf16.mxu0 0
    %7867 = vmatmul.mubr.bf16.gmra.mrb[0].mxu0 %v7829
    %v7868 = vpop.f32.mrb[0].mxu0
    %v7869 = vadd.f32 %v7493, %v7868
    %v7870 = vpop.f32.mrb[0].mxu0
    %v7871 = vpop.f32.mrb[0].mxu0
    %v7872 = vadd.f32 %v7494, %v7871
    %v7873 = vpop.f32.mrb[0].mxu0
    %7874 = vdwg.mxu0
    %v7876 = vsel %vm7545, %v7424, 0
    %v7879 = vsel %vm7545, %v7456, 0
    %7881 = vmatprep.subr.bf16.mxu0 0
    %7882 = vmatpush1.bf16.xpose.msra.mxu0 %v7879
    %7883 = vmatprep.subr.bf16.mxu0 0
    %7884 = vmatpush1.bf16.xpose.msra.mxu0 0
    %7885 = vmatprep.subr.bf16.mxu0 0
    %7886 = vmatpush1.bf16.xpose.msra.mxu0 0
    %7887 = vmatprep.subr.bf16.mxu0 0
    %7888 = vmatpush1.bf16.xpose.msra.mxu0 0
    %7889 = vmatprep.subr.bf16.mxu0 0
    %7890 = vmatpush1.bf16.xpose.msra.mxu0 0
    %7891 = vmatprep.subr.bf16.mxu0 0
    %7892 = vmatpush1.bf16.xpose.msra.mxu0 0
    %7893 = vmatprep.subr.bf16.mxu0 0
    %7894 = vmatpush1.bf16.xpose.msra.mxu0 0
    %7895 = vmatprep.subr.bf16.mxu0 0
    %7896 = vmatpush1.bf16.xpose.msra.mxu0 0
    %7897 = vmatprep.subr.bf16.mxu0 0
    %7898 = vmatpush1.bf16.xpose.msra.mxu0 0
    %7899 = vmatprep.subr.bf16.mxu0 0
    %7900 = vmatpush1.bf16.xpose.msra.mxu0 0
    %7901 = vmatprep.subr.bf16.mxu0 0
    %7902 = vmatpush1.bf16.xpose.msra.mxu0 0
    %7903 = vmatprep.subr.bf16.mxu0 0
    %7904 = vmatpush1.bf16.xpose.msra.mxu0 0
    %7905 = vmatprep.subr.bf16.mxu0 0
    %7906 = vmatpush1.bf16.xpose.msra.mxu0 0
    %7907 = vmatprep.subr.bf16.mxu0 0
    %7908 = vmatpush1.bf16.xpose.msra.mxu0 0
    %7909 = vmatprep.subr.bf16.mxu0 0
    %7910 = vmatpush1.bf16.xpose.msra.mxu0 0
    %7911 = vmatprep.subr.bf16.mxu0 0
    %7912 = vmatpush1.bf16.xpose.msra.mxu0 0
    %7913 = vmatprep.mubr.bf16.mxu0 0
    %7914 = vmatmul.mubr.bf16.gmra.mrb[0].mxu0 %v7876
    %v7915 = vpop.f32.mrb[0].mxu0
    %v7916 = vadd.f32 %v7495, %v7915
    %v7917 = vpop.f32.mrb[0].mxu0
    %v7918 = vpop.f32.mrb[0].mxu0
    %v7919 = vadd.f32 %v7496, %v7918
    %v7920 = vpop.f32.mrb[0].mxu0
    %7921 = vdwg.mxu0
    %v7923 = vsel %vm7545, %v7425, 0
    %v7926 = vsel %vm7545, %v7457, 0
    %7928 = vmatprep.subr.bf16.mxu0 0
    %7929 = vmatpush1.bf16.xpose.msra.mxu0 %v7926
    %7930 = vmatprep.subr.bf16.mxu0 0
    %7931 = vmatpush1.bf16.xpose.msra.mxu0 0
    %7932 = vmatprep.subr.bf16.mxu0 0
    %7933 = vmatpush1.bf16.xpose.msra.mxu0 0
    %7934 = vmatprep.subr.bf16.mxu0 0
    %7935 = vmatpush1.bf16.xpose.msra.mxu0 0
    %7936 = vmatprep.subr.bf16.mxu0 0
    %7937 = vmatpush1.bf16.xpose.msra.mxu0 0
    %7938 = vmatprep.subr.bf16.mxu0 0
    %7939 = vmatpush1.bf16.xpose.msra.mxu0 0
    %7940 = vmatprep.subr.bf16.mxu0 0
    %7941 = vmatpush1.bf16.xpose.msra.mxu0 0
    %7942 = vmatprep.subr.bf16.mxu0 0
    %7943 = vmatpush1.bf16.xpose.msra.mxu0 0
    %7944 = vmatprep.subr.bf16.mxu0 0
    %7945 = vmatpush1.bf16.xpose.msra.mxu0 0
    %7946 = vmatprep.subr.bf16.mxu0 0
    %7947 = vmatpush1.bf16.xpose.msra.mxu0 0
    %7948 = vmatprep.subr.bf16.mxu0 0
    %7949 = vmatpush1.bf16.xpose.msra.mxu0 0
    %7950 = vmatprep.subr.bf16.mxu0 0
    %7951 = vmatpush1.bf16.xpose.msra.mxu0 0
    %7952 = vmatprep.subr.bf16.mxu0 0
    %7953 = vmatpush1.bf16.xpose.msra.mxu0 0
    %7954 = vmatprep.subr.bf16.mxu0 0
    %7955 = vmatpush1.bf16.xpose.msra.mxu0 0
    %7956 = vmatprep.subr.bf16.mxu0 0
    %7957 = vmatpush1.bf16.xpose.msra.mxu0 0
    %7958 = vmatprep.subr.bf16.mxu0 0
    %7959 = vmatpush1.bf16.xpose.msra.mxu0 0
    %7960 = vmatprep.mubr.bf16.mxu0 0
    %7961 = vmatmul.mubr.bf16.gmra.mrb[0].mxu0 %v7923
    %v7962 = vpop.f32.mrb[0].mxu0
    %v7963 = vadd.f32 %v7497, %v7962
    %v7964 = vpop.f32.mrb[0].mxu0
    %v7965 = vpop.f32.mrb[0].mxu0
    %v7966 = vadd.f32 %v7498, %v7965
    %v7967 = vpop.f32.mrb[0].mxu0
    %7968 = vdwg.mxu0
    %v7970 = vsel %vm7545, %v7426, 0
    %v7973 = vsel %vm7545, %v7458, 0
    %7975 = vmatprep.subr.bf16.mxu0 0
    %7976 = vmatpush1.bf16.xpose.msra.mxu0 %v7973
    %7977 = vmatprep.subr.bf16.mxu0 0
    %7978 = vmatpush1.bf16.xpose.msra.mxu0 0
    %7979 = vmatprep.subr.bf16.mxu0 0
    %7980 = vmatpush1.bf16.xpose.msra.mxu0 0
    %7981 = vmatprep.subr.bf16.mxu0 0
    %7982 = vmatpush1.bf16.xpose.msra.mxu0 0
    %7983 = vmatprep.subr.bf16.mxu0 0
    %7984 = vmatpush1.bf16.xpose.msra.mxu0 0
    %7985 = vmatprep.subr.bf16.mxu0 0
    %7986 = vmatpush1.bf16.xpose.msra.mxu0 0
    %7987 = vmatprep.subr.bf16.mxu0 0
    %7988 = vmatpush1.bf16.xpose.msra.mxu0 0
    %7989 = vmatprep.subr.bf16.mxu0 0
    %7990 = vmatpush1.bf16.xpose.msra.mxu0 0
    %7991 = vmatprep.subr.bf16.mxu0 0
    %7992 = vmatpush1.bf16.xpose.msra.mxu0 0
    %7993 = vmatprep.subr.bf16.mxu0 0
    %7994 = vmatpush1.bf16.xpose.msra.mxu0 0
    %7995 = vmatprep.subr.bf16.mxu0 0
    %7996 = vmatpush1.bf16.xpose.msra.mxu0 0
    %7997 = vmatprep.subr.bf16.mxu0 0
    %7998 = vmatpush1.bf16.xpose.msra.mxu0 0
    %7999 = vmatprep.subr.bf16.mxu0 0
    %8000 = vmatpush1.bf16.xpose.msra.mxu0 0
    %8001 = vmatprep.subr.bf16.mxu0 0
    %8002 = vmatpush1.bf16.xpose.msra.mxu0 0
    %8003 = vmatprep.subr.bf16.mxu0 0
    %8004 = vmatpush1.bf16.xpose.msra.mxu0 0
    %8005 = vmatprep.subr.bf16.mxu0 0
    %8006 = vmatpush1.bf16.xpose.msra.mxu0 0
    %8007 = vmatprep.mubr.bf16.mxu0 0
    %8008 = vmatmul.mubr.bf16.gmra.mrb[0].mxu0 %v7970
    %v8009 = vpop.f32.mrb[0].mxu0
    %v8010 = vadd.f32 %v7499, %v8009
    %v8011 = vpop.f32.mrb[0].mxu0
    %v8012 = vpop.f32.mrb[0].mxu0
    %v8013 = vadd.f32 %v7500, %v8012
    %v8014 = vpop.f32.mrb[0].mxu0
    %8015 = vdwg.mxu0
    %v8017 = vsel %vm7545, %v7427, 0
    %v8020 = vsel %vm7545, %v7459, 0
    %8022 = vmatprep.subr.bf16.mxu0 0
    %8023 = vmatpush1.bf16.xpose.msra.mxu0 %v8020
    %8024 = vmatprep.subr.bf16.mxu0 0
    %8025 = vmatpush1.bf16.xpose.msra.mxu0 0
    %8026 = vmatprep.subr.bf16.mxu0 0
    %8027 = vmatpush1.bf16.xpose.msra.mxu0 0
    %8028 = vmatprep.subr.bf16.mxu0 0
    %8029 = vmatpush1.bf16.xpose.msra.mxu0 0
    %8030 = vmatprep.subr.bf16.mxu0 0
    %8031 = vmatpush1.bf16.xpose.msra.mxu0 0
    %8032 = vmatprep.subr.bf16.mxu0 0
    %8033 = vmatpush1.bf16.xpose.msra.mxu0 0
    %8034 = vmatprep.subr.bf16.mxu0 0
    %8035 = vmatpush1.bf16.xpose.msra.mxu0 0
    %8036 = vmatprep.subr.bf16.mxu0 0
    %8037 = vmatpush1.bf16.xpose.msra.mxu0 0
    %8038 = vmatprep.subr.bf16.mxu0 0
    %8039 = vmatpush1.bf16.xpose.msra.mxu0 0
    %8040 = vmatprep.subr.bf16.mxu0 0
    %8041 = vmatpush1.bf16.xpose.msra.mxu0 0
    %8042 = vmatprep.subr.bf16.mxu0 0
    %8043 = vmatpush1.bf16.xpose.msra.mxu0 0
    %8044 = vmatprep.subr.bf16.mxu0 0
    %8045 = vmatpush1.bf16.xpose.msra.mxu0 0
    %8046 = vmatprep.subr.bf16.mxu0 0
    %8047 = vmatpush1.bf16.xpose.msra.mxu0 0
    %8048 = vmatprep.subr.bf16.mxu0 0
    %8049 = vmatpush1.bf16.xpose.msra.mxu0 0
    %8050 = vmatprep.subr.bf16.mxu0 0
    %8051 = vmatpush1.bf16.xpose.msra.mxu0 0
    %8052 = vmatprep.subr.bf16.mxu0 0
    %8053 = vmatpush1.bf16.xpose.msra.mxu0 0
    %8054 = vmatprep.mubr.bf16.mxu0 0
    %8055 = vmatmul.mubr.bf16.gmra.mrb[0].mxu0 %v8017
    %v8056 = vpop.f32.mrb[0].mxu0
    %v8057 = vadd.f32 %v7501, %v8056
    %v8058 = vpop.f32.mrb[0].mxu0
    %v8059 = vpop.f32.mrb[0].mxu0
    %v8060 = vadd.f32 %v7502, %v8059
    %v8061 = vpop.f32.mrb[0].mxu0
    %8062 = vdwg.mxu0
    %v8064 = vsel %vm7545, %v7428, 0
    %v8067 = vsel %vm7545, %v7460, 0
    %8069 = vmatprep.subr.bf16.mxu0 0
    %8070 = vmatpush1.bf16.xpose.msra.mxu0 %v8067
    %8071 = vmatprep.subr.bf16.mxu0 0
    %8072 = vmatpush1.bf16.xpose.msra.mxu0 0
    %8073 = vmatprep.subr.bf16.mxu0 0
    %8074 = vmatpush1.bf16.xpose.msra.mxu0 0
    %8075 = vmatprep.subr.bf16.mxu0 0
    %8076 = vmatpush1.bf16.xpose.msra.mxu0 0
    %8077 = vmatprep.subr.bf16.mxu0 0
    %8078 = vmatpush1.bf16.xpose.msra.mxu0 0
    %8079 = vmatprep.subr.bf16.mxu0 0
    %8080 = vmatpush1.bf16.xpose.msra.mxu0 0
    %8081 = vmatprep.subr.bf16.mxu0 0
    %8082 = vmatpush1.bf16.xpose.msra.mxu0 0
    %8083 = vmatprep.subr.bf16.mxu0 0
    %8084 = vmatpush1.bf16.xpose.msra.mxu0 0
    %8085 = vmatprep.subr.bf16.mxu0 0
    %8086 = vmatpush1.bf16.xpose.msra.mxu0 0
    %8087 = vmatprep.subr.bf16.mxu0 0
    %8088 = vmatpush1.bf16.xpose.msra.mxu0 0
    %8089 = vmatprep.subr.bf16.mxu0 0
    %8090 = vmatpush1.bf16.xpose.msra.mxu0 0
    %8091 = vmatprep.subr.bf16.mxu0 0
    %8092 = vmatpush1.bf16.xpose.msra.mxu0 0
    %8093 = vmatprep.subr.bf16.mxu0 0
    %8094 = vmatpush1.bf16.xpose.msra.mxu0 0
    %8095 = vmatprep.subr.bf16.mxu0 0
    %8096 = vmatpush1.bf16.xpose.msra.mxu0 0
    %8097 = vmatprep.subr.bf16.mxu0 0
    %8098 = vmatpush1.bf16.xpose.msra.mxu0 0
    %8099 = vmatprep.subr.bf16.mxu0 0
    %8100 = vmatpush1.bf16.xpose.msra.mxu0 0
    %8101 = vmatprep.mubr.bf16.mxu0 0
    %8102 = vmatmul.mubr.bf16.gmra.mrb[0].mxu0 %v8064
    %v8103 = vpop.f32.mrb[0].mxu0
    %v8104 = vadd.f32 %v7503, %v8103
    %v8105 = vpop.f32.mrb[0].mxu0
    %v8106 = vpop.f32.mrb[0].mxu0
    %v8107 = vadd.f32 %v7504, %v8106
    %v8108 = vpop.f32.mrb[0].mxu0
    %8109 = vdwg.mxu0
    %v8111 = vsel %vm7545, %v7429, 0
    %v8114 = vsel %vm7545, %v7461, 0
    %8116 = vmatprep.subr.bf16.mxu0 0
    %8117 = vmatpush1.bf16.xpose.msra.mxu0 %v8114
    %8118 = vmatprep.subr.bf16.mxu0 0
    %8119 = vmatpush1.bf16.xpose.msra.mxu0 0
    %8120 = vmatprep.subr.bf16.mxu0 0
    %8121 = vmatpush1.bf16.xpose.msra.mxu0 0
    %8122 = vmatprep.subr.bf16.mxu0 0
    %8123 = vmatpush1.bf16.xpose.msra.mxu0 0
    %8124 = vmatprep.subr.bf16.mxu0 0
    %8125 = vmatpush1.bf16.xpose.msra.mxu0 0
    %8126 = vmatprep.subr.bf16.mxu0 0
    %8127 = vmatpush1.bf16.xpose.msra.mxu0 0
    %8128 = vmatprep.subr.bf16.mxu0 0
    %8129 = vmatpush1.bf16.xpose.msra.mxu0 0
    %8130 = vmatprep.subr.bf16.mxu0 0
    %8131 = vmatpush1.bf16.xpose.msra.mxu0 0
    %8132 = vmatprep.subr.bf16.mxu0 0
    %8133 = vmatpush1.bf16.xpose.msra.mxu0 0
    %8134 = vmatprep.subr.bf16.mxu0 0
    %8135 = vmatpush1.bf16.xpose.msra.mxu0 0
    %8136 = vmatprep.subr.bf16.mxu0 0
    %8137 = vmatpush1.bf16.xpose.msra.mxu0 0
    %8138 = vmatprep.subr.bf16.mxu0 0
    %8139 = vmatpush1.bf16.xpose.msra.mxu0 0
    %8140 = vmatprep.subr.bf16.mxu0 0
    %8141 = vmatpush1.bf16.xpose.msra.mxu0 0
    %8142 = vmatprep.subr.bf16.mxu0 0
    %8143 = vmatpush1.bf16.xpose.msra.mxu0 0
    %8144 = vmatprep.subr.bf16.mxu0 0
    %8145 = vmatpush1.bf16.xpose.msra.mxu0 0
    %8146 = vmatprep.subr.bf16.mxu0 0
    %8147 = vmatpush1.bf16.xpose.msra.mxu0 0
    %8148 = vmatprep.mubr.bf16.mxu0 0
    %8149 = vmatmul.mubr.bf16.gmra.mrb[0].mxu0 %v8111
    %v8150 = vpop.f32.mrb[0].mxu0
    %v8151 = vadd.f32 %v7505, %v8150
    %v8152 = vpop.f32.mrb[0].mxu0
    %v8153 = vpop.f32.mrb[0].mxu0
    %v8154 = vadd.f32 %v7506, %v8153
    %v8155 = vpop.f32.mrb[0].mxu0
    %8156 = vdwg.mxu0
    %v8158 = vsel %vm7545, %v7430, 0
    %v8161 = vsel %vm7545, %v7462, 0
    %8163 = vmatprep.subr.bf16.mxu0 0
    %8164 = vmatpush1.bf16.xpose.msra.mxu0 %v8161
    %8165 = vmatprep.subr.bf16.mxu0 0
    %8166 = vmatpush1.bf16.xpose.msra.mxu0 0
    %8167 = vmatprep.subr.bf16.mxu0 0
    %8168 = vmatpush1.bf16.xpose.msra.mxu0 0
    %8169 = vmatprep.subr.bf16.mxu0 0
    %8170 = vmatpush1.bf16.xpose.msra.mxu0 0
    %8171 = vmatprep.subr.bf16.mxu0 0
    %8172 = vmatpush1.bf16.xpose.msra.mxu0 0
    %8173 = vmatprep.subr.bf16.mxu0 0
    %8174 = vmatpush1.bf16.xpose.msra.mxu0 0
    %8175 = vmatprep.subr.bf16.mxu0 0
    %8176 = vmatpush1.bf16.xpose.msra.mxu0 0
    %8177 = vmatprep.subr.bf16.mxu0 0
    %8178 = vmatpush1.bf16.xpose.msra.mxu0 0
    %8179 = vmatprep.subr.bf16.mxu0 0
    %8180 = vmatpush1.bf16.xpose.msra.mxu0 0
    %8181 = vmatprep.subr.bf16.mxu0 0
    %8182 = vmatpush1.bf16.xpose.msra.mxu0 0
    %8183 = vmatprep.subr.bf16.mxu0 0
    %8184 = vmatpush1.bf16.xpose.msra.mxu0 0
    %8185 = vmatprep.subr.bf16.mxu0 0
    %8186 = vmatpush1.bf16.xpose.msra.mxu0 0
    %8187 = vmatprep.subr.bf16.mxu0 0
    %8188 = vmatpush1.bf16.xpose.msra.mxu0 0
    %8189 = vmatprep.subr.bf16.mxu0 0
    %8190 = vmatpush1.bf16.xpose.msra.mxu0 0
    %8191 = vmatprep.subr.bf16.mxu0 0
    %8192 = vmatpush1.bf16.xpose.msra.mxu0 0
    %8193 = vmatprep.subr.bf16.mxu0 0
    %8194 = vmatpush1.bf16.xpose.msra.mxu0 0
    %8195 = vmatprep.mubr.bf16.mxu0 0
    %8196 = vmatmul.mubr.bf16.gmra.mrb[0].mxu0 %v8158
    %v8197 = vpop.f32.mrb[0].mxu0
    %v8198 = vadd.f32 %v7507, %v8197
    %v8199 = vpop.f32.mrb[0].mxu0
    %v8200 = vpop.f32.mrb[0].mxu0
    %v8201 = vadd.f32 %v7508, %v8200
    %v8202 = vpop.f32.mrb[0].mxu0
    %8203 = vdwg.mxu0
    %v8205 = vsel %vm7545, %v7431, 0
    %v8208 = vsel %vm7545, %v7463, 0
    %8210 = vmatprep.subr.bf16.mxu0 0
    %8211 = vmatpush1.bf16.xpose.msra.mxu0 %v8208
    %8212 = vmatprep.subr.bf16.mxu0 0
    %8213 = vmatpush1.bf16.xpose.msra.mxu0 0
    %8214 = vmatprep.subr.bf16.mxu0 0
    %8215 = vmatpush1.bf16.xpose.msra.mxu0 0
    %8216 = vmatprep.subr.bf16.mxu0 0
    %8217 = vmatpush1.bf16.xpose.msra.mxu0 0
    %8218 = vmatprep.subr.bf16.mxu0 0
    %8219 = vmatpush1.bf16.xpose.msra.mxu0 0
    %8220 = vmatprep.subr.bf16.mxu0 0
    %8221 = vmatpush1.bf16.xpose.msra.mxu0 0
    %8222 = vmatprep.subr.bf16.mxu0 0
    %8223 = vmatpush1.bf16.xpose.msra.mxu0 0
    %8224 = vmatprep.subr.bf16.mxu0 0
    %8225 = vmatpush1.bf16.xpose.msra.mxu0 0
    %8226 = vmatprep.subr.bf16.mxu0 0
    %8227 = vmatpush1.bf16.xpose.msra.mxu0 0
    %8228 = vmatprep.subr.bf16.mxu0 0
    %8229 = vmatpush1.bf16.xpose.msra.mxu0 0
    %8230 = vmatprep.subr.bf16.mxu0 0
    %8231 = vmatpush1.bf16.xpose.msra.mxu0 0
    %8232 = vmatprep.subr.bf16.mxu0 0
    %8233 = vmatpush1.bf16.xpose.msra.mxu0 0
    %8234 = vmatprep.subr.bf16.mxu0 0
    %8235 = vmatpush1.bf16.xpose.msra.mxu0 0
    %8236 = vmatprep.subr.bf16.mxu0 0
    %8237 = vmatpush1.bf16.xpose.msra.mxu0 0
    %8238 = vmatprep.subr.bf16.mxu0 0
    %8239 = vmatpush1.bf16.xpose.msra.mxu0 0
    %8240 = vmatprep.subr.bf16.mxu0 0
    %8241 = vmatpush1.bf16.xpose.msra.mxu0 0
    %8242 = vmatprep.mubr.bf16.mxu0 0
    %8243 = vmatmul.mubr.bf16.gmra.mrb[0].mxu0 %v8205
    %v8244 = vpop.f32.mrb[0].mxu0
    %v8245 = vadd.f32 %v7509, %v8244
    %v8246 = vpop.f32.mrb[0].mxu0
    %v8247 = vpop.f32.mrb[0].mxu0
    %v8248 = vadd.f32 %v7510, %v8247
    %v8249 = vpop.f32.mrb[0].mxu0
    %8250 = vdwg.mxu0
    %v8252 = vsel %vm7545, %v7432, 0
    %v8255 = vsel %vm7545, %v7464, 0
    %8257 = vmatprep.subr.bf16.mxu0 0
    %8258 = vmatpush1.bf16.xpose.msra.mxu0 %v8255
    %8259 = vmatprep.subr.bf16.mxu0 0
    %8260 = vmatpush1.bf16.xpose.msra.mxu0 0
    %8261 = vmatprep.subr.bf16.mxu0 0
    %8262 = vmatpush1.bf16.xpose.msra.mxu0 0
    %8263 = vmatprep.subr.bf16.mxu0 0
    %8264 = vmatpush1.bf16.xpose.msra.mxu0 0
    %8265 = vmatprep.subr.bf16.mxu0 0
    %8266 = vmatpush1.bf16.xpose.msra.mxu0 0
    %8267 = vmatprep.subr.bf16.mxu0 0
    %8268 = vmatpush1.bf16.xpose.msra.mxu0 0
    %8269 = vmatprep.subr.bf16.mxu0 0
    %8270 = vmatpush1.bf16.xpose.msra.mxu0 0
    %8271 = vmatprep.subr.bf16.mxu0 0
    %8272 = vmatpush1.bf16.xpose.msra.mxu0 0
    %8273 = vmatprep.subr.bf16.mxu0 0
    %8274 = vmatpush1.bf16.xpose.msra.mxu0 0
    %8275 = vmatprep.subr.bf16.mxu0 0
    %8276 = vmatpush1.bf16.xpose.msra.mxu0 0
    %8277 = vmatprep.subr.bf16.mxu0 0
    %8278 = vmatpush1.bf16.xpose.msra.mxu0 0
    %8279 = vmatprep.subr.bf16.mxu0 0
    %8280 = vmatpush1.bf16.xpose.msra.mxu0 0
    %8281 = vmatprep.subr.bf16.mxu0 0
    %8282 = vmatpush1.bf16.xpose.msra.mxu0 0
    %8283 = vmatprep.subr.bf16.mxu0 0
    %8284 = vmatpush1.bf16.xpose.msra.mxu0 0
    %8285 = vmatprep.subr.bf16.mxu0 0
    %8286 = vmatpush1.bf16.xpose.msra.mxu0 0
    %8287 = vmatprep.subr.bf16.mxu0 0
    %8288 = vmatpush1.bf16.xpose.msra.mxu0 0
    %8289 = vmatprep.mubr.bf16.mxu0 0
    %8290 = vmatmul.mubr.bf16.gmra.mrb[0].mxu0 %v8252
    %v8291 = vpop.f32.mrb[0].mxu0
    %v8292 = vadd.f32 %v7511, %v8291
    %v8293 = vpop.f32.mrb[0].mxu0
    %v8294 = vpop.f32.mrb[0].mxu0
    %v8295 = vadd.f32 %v7512, %v8294
    %v8296 = vpop.f32.mrb[0].mxu0
    %8297 = vdwg.mxu0
    %v8299 = vsel %vm7545, %v7433, 0
    %v8302 = vsel %vm7545, %v7465, 0
    %8304 = vmatprep.subr.bf16.mxu0 0
    %8305 = vmatpush1.bf16.xpose.msra.mxu0 %v8302
    %8306 = vmatprep.subr.bf16.mxu0 0
    %8307 = vmatpush1.bf16.xpose.msra.mxu0 0
    %8308 = vmatprep.subr.bf16.mxu0 0
    %8309 = vmatpush1.bf16.xpose.msra.mxu0 0
    %8310 = vmatprep.subr.bf16.mxu0 0
    %8311 = vmatpush1.bf16.xpose.msra.mxu0 0
    %8312 = vmatprep.subr.bf16.mxu0 0
    %8313 = vmatpush1.bf16.xpose.msra.mxu0 0
    %8314 = vmatprep.subr.bf16.mxu0 0
    %8315 = vmatpush1.bf16.xpose.msra.mxu0 0
    %8316 = vmatprep.subr.bf16.mxu0 0
    %8317 = vmatpush1.bf16.xpose.msra.mxu0 0
    %8318 = vmatprep.subr.bf16.mxu0 0
    %8319 = vmatpush1.bf16.xpose.msra.mxu0 0
    %8320 = vmatprep.subr.bf16.mxu0 0
    %8321 = vmatpush1.bf16.xpose.msra.mxu0 0
    %8322 = vmatprep.subr.bf16.mxu0 0
    %8323 = vmatpush1.bf16.xpose.msra.mxu0 0
    %8324 = vmatprep.subr.bf16.mxu0 0
    %8325 = vmatpush1.bf16.xpose.msra.mxu0 0
    %8326 = vmatprep.subr.bf16.mxu0 0
    %8327 = vmatpush1.bf16.xpose.msra.mxu0 0
    %8328 = vmatprep.subr.bf16.mxu0 0
    %8329 = vmatpush1.bf16.xpose.msra.mxu0 0
    %8330 = vmatprep.subr.bf16.mxu0 0
    %8331 = vmatpush1.bf16.xpose.msra.mxu0 0
    %8332 = vmatprep.subr.bf16.mxu0 0
    %8333 = vmatpush1.bf16.xpose.msra.mxu0 0
    %8334 = vmatprep.subr.bf16.mxu0 0
    %8335 = vmatpush1.bf16.xpose.msra.mxu0 0
    %8336 = vmatprep.mubr.bf16.mxu0 0
    %8337 = vmatmul.mubr.bf16.gmra.mrb[0].mxu0 %v8299
    %v8338 = vpop.f32.mrb[0].mxu0
    %v8339 = vadd.f32 %v7513, %v8338
    %v8340 = vpop.f32.mrb[0].mxu0
    %v8341 = vpop.f32.mrb[0].mxu0
    %v8342 = vadd.f32 %v7514, %v8341
    %v8343 = vpop.f32.mrb[0].mxu0
    %8344 = vdwg.mxu0
    %v8346 = vsel %vm7545, %v7434, 0
    %v8349 = vsel %vm7545, %v7466, 0
    %8351 = vmatprep.subr.bf16.mxu0 0
    %8352 = vmatpush1.bf16.xpose.msra.mxu0 %v8349
    %8353 = vmatprep.subr.bf16.mxu0 0
    %8354 = vmatpush1.bf16.xpose.msra.mxu0 0
    %8355 = vmatprep.subr.bf16.mxu0 0
    %8356 = vmatpush1.bf16.xpose.msra.mxu0 0
    %8357 = vmatprep.subr.bf16.mxu0 0
    %8358 = vmatpush1.bf16.xpose.msra.mxu0 0
    %8359 = vmatprep.subr.bf16.mxu0 0
    %8360 = vmatpush1.bf16.xpose.msra.mxu0 0
    %8361 = vmatprep.subr.bf16.mxu0 0
    %8362 = vmatpush1.bf16.xpose.msra.mxu0 0
    %8363 = vmatprep.subr.bf16.mxu0 0
    %8364 = vmatpush1.bf16.xpose.msra.mxu0 0
    %8365 = vmatprep.subr.bf16.mxu0 0
    %8366 = vmatpush1.bf16.xpose.msra.mxu0 0
    %8367 = vmatprep.subr.bf16.mxu0 0
    %8368 = vmatpush1.bf16.xpose.msra.mxu0 0
    %8369 = vmatprep.subr.bf16.mxu0 0
    %8370 = vmatpush1.bf16.xpose.msra.mxu0 0
    %8371 = vmatprep.subr.bf16.mxu0 0
    %8372 = vmatpush1.bf16.xpose.msra.mxu0 0
    %8373 = vmatprep.subr.bf16.mxu0 0
    %8374 = vmatpush1.bf16.xpose.msra.mxu0 0
    %8375 = vmatprep.subr.bf16.mxu0 0
    %8376 = vmatpush1.bf16.xpose.msra.mxu0 0
    %8377 = vmatprep.subr.bf16.mxu0 0
    %8378 = vmatpush1.bf16.xpose.msra.mxu0 0
    %8379 = vmatprep.subr.bf16.mxu0 0
    %8380 = vmatpush1.bf16.xpose.msra.mxu0 0
    %8381 = vmatprep.subr.bf16.mxu0 0
    %8382 = vmatpush1.bf16.xpose.msra.mxu0 0
    %8383 = vmatprep.mubr.bf16.mxu0 0
    %8384 = vmatmul.mubr.bf16.gmra.mrb[0].mxu0 %v8346
    %v8385 = vpop.f32.mrb[0].mxu0
    %v8386 = vadd.f32 %v7515, %v8385
    %v8387 = vpop.f32.mrb[0].mxu0
    %v8388 = vpop.f32.mrb[0].mxu0
    %v8389 = vadd.f32 %v7516, %v8388
    %v8390 = vpop.f32.mrb[0].mxu0
    %8391 = vdwg.mxu0
    %v8393 = vsel %vm7545, %v7435, 0
    %v8396 = vsel %vm7545, %v7467, 0
    %8398 = vmatprep.subr.bf16.mxu0 0
    %8399 = vmatpush1.bf16.xpose.msra.mxu0 %v8396
    %8400 = vmatprep.subr.bf16.mxu0 0
    %8401 = vmatpush1.bf16.xpose.msra.mxu0 0
    %8402 = vmatprep.subr.bf16.mxu0 0
    %8403 = vmatpush1.bf16.xpose.msra.mxu0 0
    %8404 = vmatprep.subr.bf16.mxu0 0
    %8405 = vmatpush1.bf16.xpose.msra.mxu0 0
    %8406 = vmatprep.subr.bf16.mxu0 0
    %8407 = vmatpush1.bf16.xpose.msra.mxu0 0
    %8408 = vmatprep.subr.bf16.mxu0 0
    %8409 = vmatpush1.bf16.xpose.msra.mxu0 0
    %8410 = vmatprep.subr.bf16.mxu0 0
    %8411 = vmatpush1.bf16.xpose.msra.mxu0 0
    %8412 = vmatprep.subr.bf16.mxu0 0
    %8413 = vmatpush1.bf16.xpose.msra.mxu0 0
    %8414 = vmatprep.subr.bf16.mxu0 0
    %8415 = vmatpush1.bf16.xpose.msra.mxu0 0
    %8416 = vmatprep.subr.bf16.mxu0 0
    %8417 = vmatpush1.bf16.xpose.msra.mxu0 0
    %8418 = vmatprep.subr.bf16.mxu0 0
    %8419 = vmatpush1.bf16.xpose.msra.mxu0 0
    %8420 = vmatprep.subr.bf16.mxu0 0
    %8421 = vmatpush1.bf16.xpose.msra.mxu0 0
    %8422 = vmatprep.subr.bf16.mxu0 0
    %8423 = vmatpush1.bf16.xpose.msra.mxu0 0
    %8424 = vmatprep.subr.bf16.mxu0 0
    %8425 = vmatpush1.bf16.xpose.msra.mxu0 0
    %8426 = vmatprep.subr.bf16.mxu0 0
    %8427 = vmatpush1.bf16.xpose.msra.mxu0 0
    %8428 = vmatprep.subr.bf16.mxu0 0
    %8429 = vmatpush1.bf16.xpose.msra.mxu0 0
    %8430 = vmatprep.mubr.bf16.mxu0 0
    %8431 = vmatmul.mubr.bf16.gmra.mrb[0].mxu0 %v8393
    %v8432 = vpop.f32.mrb[0].mxu0
    %v8433 = vadd.f32 %v7517, %v8432
    %v8434 = vpop.f32.mrb[0].mxu0
    %v8435 = vpop.f32.mrb[0].mxu0
    %v8436 = vadd.f32 %v7518, %v8435
    %v8437 = vpop.f32.mrb[0].mxu0
    %8438 = vdwg.mxu0
    %v8440 = vsel %vm7545, %v7436, 0
    %v8443 = vsel %vm7545, %v7468, 0
    %8445 = vmatprep.subr.bf16.mxu0 0
    %8446 = vmatpush1.bf16.xpose.msra.mxu0 %v8443
    %8447 = vmatprep.subr.bf16.mxu0 0
    %8448 = vmatpush1.bf16.xpose.msra.mxu0 0
    %8449 = vmatprep.subr.bf16.mxu0 0
    %8450 = vmatpush1.bf16.xpose.msra.mxu0 0
    %8451 = vmatprep.subr.bf16.mxu0 0
    %8452 = vmatpush1.bf16.xpose.msra.mxu0 0
    %8453 = vmatprep.subr.bf16.mxu0 0
    %8454 = vmatpush1.bf16.xpose.msra.mxu0 0
    %8455 = vmatprep.subr.bf16.mxu0 0
    %8456 = vmatpush1.bf16.xpose.msra.mxu0 0
    %8457 = vmatprep.subr.bf16.mxu0 0
    %8458 = vmatpush1.bf16.xpose.msra.mxu0 0
    %8459 = vmatprep.subr.bf16.mxu0 0
    %8460 = vmatpush1.bf16.xpose.msra.mxu0 0
    %8461 = vmatprep.subr.bf16.mxu0 0
    %8462 = vmatpush1.bf16.xpose.msra.mxu0 0
    %8463 = vmatprep.subr.bf16.mxu0 0
    %8464 = vmatpush1.bf16.xpose.msra.mxu0 0
    %8465 = vmatprep.subr.bf16.mxu0 0
    %8466 = vmatpush1.bf16.xpose.msra.mxu0 0
    %8467 = vmatprep.subr.bf16.mxu0 0
    %8468 = vmatpush1.bf16.xpose.msra.mxu0 0
    %8469 = vmatprep.subr.bf16.mxu0 0
    %8470 = vmatpush1.bf16.xpose.msra.mxu0 0
    %8471 = vmatprep.subr.bf16.mxu0 0
    %8472 = vmatpush1.bf16.xpose.msra.mxu0 0
    %8473 = vmatprep.subr.bf16.mxu0 0
    %8474 = vmatpush1.bf16.xpose.msra.mxu0 0
    %8475 = vmatprep.subr.bf16.mxu0 0
    %8476 = vmatpush1.bf16.xpose.msra.mxu0 0
    %8477 = vmatprep.mubr.bf16.mxu0 0
    %8478 = vmatmul.mubr.bf16.gmra.mrb[0].mxu0 %v8440
    %v8479 = vpop.f32.mrb[0].mxu0
    %v8480 = vadd.f32 %v7519, %v8479
    %v8481 = vpop.f32.mrb[0].mxu0
    %v8482 = vpop.f32.mrb[0].mxu0
    %v8483 = vadd.f32 %v7520, %v8482
    %v8484 = vpop.f32.mrb[0].mxu0
    %8485 = vdwg.mxu0
    %v8487 = vsel %vm7545, %v7437, 0
    %v8490 = vsel %vm7545, %v7469, 0
    %8492 = vmatprep.subr.bf16.mxu0 0
    %8493 = vmatpush1.bf16.xpose.msra.mxu0 %v8490
    %8494 = vmatprep.subr.bf16.mxu0 0
    %8495 = vmatpush1.bf16.xpose.msra.mxu0 0
    %8496 = vmatprep.subr.bf16.mxu0 0
    %8497 = vmatpush1.bf16.xpose.msra.mxu0 0
    %8498 = vmatprep.subr.bf16.mxu0 0
    %8499 = vmatpush1.bf16.xpose.msra.mxu0 0
    %8500 = vmatprep.subr.bf16.mxu0 0
    %8501 = vmatpush1.bf16.xpose.msra.mxu0 0
    %8502 = vmatprep.subr.bf16.mxu0 0
    %8503 = vmatpush1.bf16.xpose.msra.mxu0 0
    %8504 = vmatprep.subr.bf16.mxu0 0
    %8505 = vmatpush1.bf16.xpose.msra.mxu0 0
    %8506 = vmatprep.subr.bf16.mxu0 0
    %8507 = vmatpush1.bf16.xpose.msra.mxu0 0
    %8508 = vmatprep.subr.bf16.mxu0 0
    %8509 = vmatpush1.bf16.xpose.msra.mxu0 0
    %8510 = vmatprep.subr.bf16.mxu0 0
    %8511 = vmatpush1.bf16.xpose.msra.mxu0 0
    %8512 = vmatprep.subr.bf16.mxu0 0
    %8513 = vmatpush1.bf16.xpose.msra.mxu0 0
    %8514 = vmatprep.subr.bf16.mxu0 0
    %8515 = vmatpush1.bf16.xpose.msra.mxu0 0
    %8516 = vmatprep.subr.bf16.mxu0 0
    %8517 = vmatpush1.bf16.xpose.msra.mxu0 0
    %8518 = vmatprep.subr.bf16.mxu0 0
    %8519 = vmatpush1.bf16.xpose.msra.mxu0 0
    %8520 = vmatprep.subr.bf16.mxu0 0
    %8521 = vmatpush1.bf16.xpose.msra.mxu0 0
    %8522 = vmatprep.subr.bf16.mxu0 0
    %8523 = vmatpush1.bf16.xpose.msra.mxu0 0
    %8524 = vmatprep.mubr.bf16.mxu0 0
    %8525 = vmatmul.mubr.bf16.gmra.mrb[0].mxu0 %v8487
    %v8526 = vpop.f32.mrb[0].mxu0
    %v8527 = vadd.f32 %v7521, %v8526
    %v8528 = vpop.f32.mrb[0].mxu0
    %v8529 = vpop.f32.mrb[0].mxu0
    %v8530 = vadd.f32 %v7522, %v8529
    %v8531 = vpop.f32.mrb[0].mxu0
    %8532 = vdwg.mxu0
    %v8534 = vsel %vm7545, %v7438, 0
    %v8537 = vsel %vm7545, %v7470, 0
    %8539 = vmatprep.subr.bf16.mxu0 0
    %8540 = vmatpush1.bf16.xpose.msra.mxu0 %v8537
    %8541 = vmatprep.subr.bf16.mxu0 0
    %8542 = vmatpush1.bf16.xpose.msra.mxu0 0
    %8543 = vmatprep.subr.bf16.mxu0 0
    %8544 = vmatpush1.bf16.xpose.msra.mxu0 0
    %8545 = vmatprep.subr.bf16.mxu0 0
    %8546 = vmatpush1.bf16.xpose.msra.mxu0 0
    %8547 = vmatprep.subr.bf16.mxu0 0
    %8548 = vmatpush1.bf16.xpose.msra.mxu0 0
    %8549 = vmatprep.subr.bf16.mxu0 0
    %8550 = vmatpush1.bf16.xpose.msra.mxu0 0
    %8551 = vmatprep.subr.bf16.mxu0 0
    %8552 = vmatpush1.bf16.xpose.msra.mxu0 0
    %8553 = vmatprep.subr.bf16.mxu0 0
    %8554 = vmatpush1.bf16.xpose.msra.mxu0 0
    %8555 = vmatprep.subr.bf16.mxu0 0
    %8556 = vmatpush1.bf16.xpose.msra.mxu0 0
    %8557 = vmatprep.subr.bf16.mxu0 0
    %8558 = vmatpush1.bf16.xpose.msra.mxu0 0
    %8559 = vmatprep.subr.bf16.mxu0 0
    %8560 = vmatpush1.bf16.xpose.msra.mxu0 0
    %8561 = vmatprep.subr.bf16.mxu0 0
    %8562 = vmatpush1.bf16.xpose.msra.mxu0 0
    %8563 = vmatprep.subr.bf16.mxu0 0
    %8564 = vmatpush1.bf16.xpose.msra.mxu0 0
    %8565 = vmatprep.subr.bf16.mxu0 0
    %8566 = vmatpush1.bf16.xpose.msra.mxu0 0
    %8567 = vmatprep.subr.bf16.mxu0 0
    %8568 = vmatpush1.bf16.xpose.msra.mxu0 0
    %8569 = vmatprep.subr.bf16.mxu0 0
    %8570 = vmatpush1.bf16.xpose.msra.mxu0 0
    %8571 = vmatprep.mubr.bf16.mxu0 0
    %8572 = vmatmul.mubr.bf16.gmra.mrb[0].mxu0 %v8534
    %v8573 = vpop.f32.mrb[0].mxu0
    %v8574 = vadd.f32 %v7523, %v8573
    %v8575 = vpop.f32.mrb[0].mxu0
    %v8576 = vpop.f32.mrb[0].mxu0
    %v8577 = vadd.f32 %v7524, %v8576
    %v8578 = vpop.f32.mrb[0].mxu0
    %8579 = vdwg.mxu0
    %v8581 = vsel %vm7545, %v7439, 0
    %v8584 = vsel %vm7545, %v7471, 0
    %8586 = vmatprep.subr.bf16.mxu0 0
    %8587 = vmatpush1.bf16.xpose.msra.mxu0 %v8584
    %8588 = vmatprep.subr.bf16.mxu0 0
    %8589 = vmatpush1.bf16.xpose.msra.mxu0 0
    %8590 = vmatprep.subr.bf16.mxu0 0
    %8591 = vmatpush1.bf16.xpose.msra.mxu0 0
    %8592 = vmatprep.subr.bf16.mxu0 0
    %8593 = vmatpush1.bf16.xpose.msra.mxu0 0
    %8594 = vmatprep.subr.bf16.mxu0 0
    %8595 = vmatpush1.bf16.xpose.msra.mxu0 0
    %8596 = vmatprep.subr.bf16.mxu0 0
    %8597 = vmatpush1.bf16.xpose.msra.mxu0 0
    %8598 = vmatprep.subr.bf16.mxu0 0
    %8599 = vmatpush1.bf16.xpose.msra.mxu0 0
    %8600 = vmatprep.subr.bf16.mxu0 0
    %8601 = vmatpush1.bf16.xpose.msra.mxu0 0
    %8602 = vmatprep.subr.bf16.mxu0 0
    %8603 = vmatpush1.bf16.xpose.msra.mxu0 0
    %8604 = vmatprep.subr.bf16.mxu0 0
    %8605 = vmatpush1.bf16.xpose.msra.mxu0 0
    %8606 = vmatprep.subr.bf16.mxu0 0
    %8607 = vmatpush1.bf16.xpose.msra.mxu0 0
    %8608 = vmatprep.subr.bf16.mxu0 0
    %8609 = vmatpush1.bf16.xpose.msra.mxu0 0
    %8610 = vmatprep.subr.bf16.mxu0 0
    %8611 = vmatpush1.bf16.xpose.msra.mxu0 0
    %8612 = vmatprep.subr.bf16.mxu0 0
    %8613 = vmatpush1.bf16.xpose.msra.mxu0 0
    %8614 = vmatprep.subr.bf16.mxu0 0
    %8615 = vmatpush1.bf16.xpose.msra.mxu0 0
    %8616 = vmatprep.subr.bf16.mxu0 0
    %8617 = vmatpush1.bf16.xpose.msra.mxu0 0
    %8618 = vmatprep.mubr.bf16.mxu0 0
    %8619 = vmatmul.mubr.bf16.gmra.mrb[0].mxu0 %v8581
    %v8620 = vpop.f32.mrb[0].mxu0
    %v8621 = vadd.f32 %v7525, %v8620
    %v8622 = vpop.f32.mrb[0].mxu0
    %v8623 = vpop.f32.mrb[0].mxu0
    %v8624 = vadd.f32 %v7526, %v8623
    %v8625 = vpop.f32.mrb[0].mxu0
    %8626 = vdwg.mxu0
    %v8628 = vsel %vm7545, %v7440, 0
    %v8631 = vsel %vm7545, %v7472, 0
    %8633 = vmatprep.subr.bf16.mxu0 0
    %8634 = vmatpush1.bf16.xpose.msra.mxu0 %v8631
    %8635 = vmatprep.subr.bf16.mxu0 0
    %8636 = vmatpush1.bf16.xpose.msra.mxu0 0
    %8637 = vmatprep.subr.bf16.mxu0 0
    %8638 = vmatpush1.bf16.xpose.msra.mxu0 0
    %8639 = vmatprep.subr.bf16.mxu0 0
    %8640 = vmatpush1.bf16.xpose.msra.mxu0 0
    %8641 = vmatprep.subr.bf16.mxu0 0
    %8642 = vmatpush1.bf16.xpose.msra.mxu0 0
    %8643 = vmatprep.subr.bf16.mxu0 0
    %8644 = vmatpush1.bf16.xpose.msra.mxu0 0
    %8645 = vmatprep.subr.bf16.mxu0 0
    %8646 = vmatpush1.bf16.xpose.msra.mxu0 0
    %8647 = vmatprep.subr.bf16.mxu0 0
    %8648 = vmatpush1.bf16.xpose.msra.mxu0 0
    %8649 = vmatprep.subr.bf16.mxu0 0
    %8650 = vmatpush1.bf16.xpose.msra.mxu0 0
    %8651 = vmatprep.subr.bf16.mxu0 0
    %8652 = vmatpush1.bf16.xpose.msra.mxu0 0
    %8653 = vmatprep.subr.bf16.mxu0 0
    %8654 = vmatpush1.bf16.xpose.msra.mxu0 0
    %8655 = vmatprep.subr.bf16.mxu0 0
    %8656 = vmatpush1.bf16.xpose.msra.mxu0 0
    %8657 = vmatprep.subr.bf16.mxu0 0
    %8658 = vmatpush1.bf16.xpose.msra.mxu0 0
    %8659 = vmatprep.subr.bf16.mxu0 0
    %8660 = vmatpush1.bf16.xpose.msra.mxu0 0
    %8661 = vmatprep.subr.bf16.mxu0 0
    %8662 = vmatpush1.bf16.xpose.msra.mxu0 0
    %8663 = vmatprep.subr.bf16.mxu0 0
    %8664 = vmatpush1.bf16.xpose.msra.mxu0 0
    %8665 = vmatprep.mubr.bf16.mxu0 0
    %8666 = vmatmul.mubr.bf16.gmra.mrb[0].mxu0 %v8628
    %v8667 = vpop.f32.mrb[0].mxu0
    %v8668 = vadd.f32 %v7527, %v8667
    %v8669 = vpop.f32.mrb[0].mxu0
    %v8670 = vpop.f32.mrb[0].mxu0
    %v8671 = vadd.f32 %v7528, %v8670
    %v8672 = vpop.f32.mrb[0].mxu0
    %8673 = vdwg.mxu0
    %v8675 = vsel %vm7545, %v7441, 0
    %v8678 = vsel %vm7545, %v7473, 0
    %8680 = vmatprep.subr.bf16.mxu0 0
    %8681 = vmatpush1.bf16.xpose.msra.mxu0 %v8678
    %8682 = vmatprep.subr.bf16.mxu0 0
    %8683 = vmatpush1.bf16.xpose.msra.mxu0 0
    %8684 = vmatprep.subr.bf16.mxu0 0
    %8685 = vmatpush1.bf16.xpose.msra.mxu0 0
    %8686 = vmatprep.subr.bf16.mxu0 0
    %8687 = vmatpush1.bf16.xpose.msra.mxu0 0
    %8688 = vmatprep.subr.bf16.mxu0 0
    %8689 = vmatpush1.bf16.xpose.msra.mxu0 0
    %8690 = vmatprep.subr.bf16.mxu0 0
    %8691 = vmatpush1.bf16.xpose.msra.mxu0 0
    %8692 = vmatprep.subr.bf16.mxu0 0
    %8693 = vmatpush1.bf16.xpose.msra.mxu0 0
    %8694 = vmatprep.subr.bf16.mxu0 0
    %8695 = vmatpush1.bf16.xpose.msra.mxu0 0
    %8696 = vmatprep.subr.bf16.mxu0 0
    %8697 = vmatpush1.bf16.xpose.msra.mxu0 0
    %8698 = vmatprep.subr.bf16.mxu0 0
    %8699 = vmatpush1.bf16.xpose.msra.mxu0 0
    %8700 = vmatprep.subr.bf16.mxu0 0
    %8701 = vmatpush1.bf16.xpose.msra.mxu0 0
    %8702 = vmatprep.subr.bf16.mxu0 0
    %8703 = vmatpush1.bf16.xpose.msra.mxu0 0
    %8704 = vmatprep.subr.bf16.mxu0 0
    %8705 = vmatpush1.bf16.xpose.msra.mxu0 0
    %8706 = vmatprep.subr.bf16.mxu0 0
    %8707 = vmatpush1.bf16.xpose.msra.mxu0 0
    %8708 = vmatprep.subr.bf16.mxu0 0
    %8709 = vmatpush1.bf16.xpose.msra.mxu0 0
    %8710 = vmatprep.subr.bf16.mxu0 0
    %8711 = vmatpush1.bf16.xpose.msra.mxu0 0
    %8712 = vmatprep.mubr.bf16.mxu0 0
    %8713 = vmatmul.mubr.bf16.gmra.mrb[0].mxu0 %v8675
    %v8714 = vpop.f32.mrb[0].mxu0
    %v8715 = vadd.f32 %v7529, %v8714
    %v8716 = vpop.f32.mrb[0].mxu0
    %v8717 = vpop.f32.mrb[0].mxu0
    %v8718 = vadd.f32 %v7530, %v8717
    %v8719 = vpop.f32.mrb[0].mxu0
    %8720 = vdwg.mxu0
    %v8722 = vsel %vm7545, %v7442, 0
    %v8725 = vsel %vm7545, %v7474, 0
    %8727 = vmatprep.subr.bf16.mxu0 0
    %8728 = vmatpush1.bf16.xpose.msra.mxu0 %v8725
    %8729 = vmatprep.subr.bf16.mxu0 0
    %8730 = vmatpush1.bf16.xpose.msra.mxu0 0
    %8731 = vmatprep.subr.bf16.mxu0 0
    %8732 = vmatpush1.bf16.xpose.msra.mxu0 0
    %8733 = vmatprep.subr.bf16.mxu0 0
    %8734 = vmatpush1.bf16.xpose.msra.mxu0 0
    %8735 = vmatprep.subr.bf16.mxu0 0
    %8736 = vmatpush1.bf16.xpose.msra.mxu0 0
    %8737 = vmatprep.subr.bf16.mxu0 0
    %8738 = vmatpush1.bf16.xpose.msra.mxu0 0
    %8739 = vmatprep.subr.bf16.mxu0 0
    %8740 = vmatpush1.bf16.xpose.msra.mxu0 0
    %8741 = vmatprep.subr.bf16.mxu0 0
    %8742 = vmatpush1.bf16.xpose.msra.mxu0 0
    %8743 = vmatprep.subr.bf16.mxu0 0
    %8744 = vmatpush1.bf16.xpose.msra.mxu0 0
    %8745 = vmatprep.subr.bf16.mxu0 0
    %8746 = vmatpush1.bf16.xpose.msra.mxu0 0
    %8747 = vmatprep.subr.bf16.mxu0 0
    %8748 = vmatpush1.bf16.xpose.msra.mxu0 0
    %8749 = vmatprep.subr.bf16.mxu0 0
    %8750 = vmatpush1.bf16.xpose.msra.mxu0 0
    %8751 = vmatprep.subr.bf16.mxu0 0
    %8752 = vmatpush1.bf16.xpose.msra.mxu0 0
    %8753 = vmatprep.subr.bf16.mxu0 0
    %8754 = vmatpush1.bf16.xpose.msra.mxu0 0
    %8755 = vmatprep.subr.bf16.mxu0 0
    %8756 = vmatpush1.bf16.xpose.msra.mxu0 0
    %8757 = vmatprep.subr.bf16.mxu0 0
    %8758 = vmatpush1.bf16.xpose.msra.mxu0 0
    %8759 = vmatprep.mubr.bf16.mxu0 0
    %8760 = vmatmul.mubr.bf16.gmra.mrb[0].mxu0 %v8722
    %v8761 = vpop.f32.mrb[0].mxu0
    %v8762 = vadd.f32 %v7531, %v8761
    %v8763 = vpop.f32.mrb[0].mxu0
    %v8764 = vpop.f32.mrb[0].mxu0
    %v8765 = vadd.f32 %v7532, %v8764
    %v8766 = vpop.f32.mrb[0].mxu0
    %8767 = vdwg.mxu0
    %v8769 = vsel %vm7545, %v7443, 0
    %v8772 = vsel %vm7545, %v7475, 0
    %8774 = vmatprep.subr.bf16.mxu0 0
    %8775 = vmatpush1.bf16.xpose.msra.mxu0 %v8772
    %8776 = vmatprep.subr.bf16.mxu0 0
    %8777 = vmatpush1.bf16.xpose.msra.mxu0 0
    %8778 = vmatprep.subr.bf16.mxu0 0
    %8779 = vmatpush1.bf16.xpose.msra.mxu0 0
    %8780 = vmatprep.subr.bf16.mxu0 0
    %8781 = vmatpush1.bf16.xpose.msra.mxu0 0
    %8782 = vmatprep.subr.bf16.mxu0 0
    %8783 = vmatpush1.bf16.xpose.msra.mxu0 0
    %8784 = vmatprep.subr.bf16.mxu0 0
    %8785 = vmatpush1.bf16.xpose.msra.mxu0 0
    %8786 = vmatprep.subr.bf16.mxu0 0
    %8787 = vmatpush1.bf16.xpose.msra.mxu0 0
    %8788 = vmatprep.subr.bf16.mxu0 0
    %8789 = vmatpush1.bf16.xpose.msra.mxu0 0
    %8790 = vmatprep.subr.bf16.mxu0 0
    %8791 = vmatpush1.bf16.xpose.msra.mxu0 0
    %8792 = vmatprep.subr.bf16.mxu0 0
    %8793 = vmatpush1.bf16.xpose.msra.mxu0 0
    %8794 = vmatprep.subr.bf16.mxu0 0
    %8795 = vmatpush1.bf16.xpose.msra.mxu0 0
    %8796 = vmatprep.subr.bf16.mxu0 0
    %8797 = vmatpush1.bf16.xpose.msra.mxu0 0
    %8798 = vmatprep.subr.bf16.mxu0 0
    %8799 = vmatpush1.bf16.xpose.msra.mxu0 0
    %8800 = vmatprep.subr.bf16.mxu0 0
    %8801 = vmatpush1.bf16.xpose.msra.mxu0 0
    %8802 = vmatprep.subr.bf16.mxu0 0
    %8803 = vmatpush1.bf16.xpose.msra.mxu0 0
    %8804 = vmatprep.subr.bf16.mxu0 0
    %8805 = vmatpush1.bf16.xpose.msra.mxu0 0
    %8806 = vmatprep.mubr.bf16.mxu0 0
    %8807 = vmatmul.mubr.bf16.gmra.mrb[0].mxu0 %v8769
    %v8808 = vpop.f32.mrb[0].mxu0
    %v8809 = vadd.f32 %v7533, %v8808
    %v8810 = vpop.f32.mrb[0].mxu0
    %v8811 = vpop.f32.mrb[0].mxu0
    %v8812 = vadd.f32 %v7534, %v8811
    %v8813 = vpop.f32.mrb[0].mxu0
    %8814 = vdwg.mxu0
    %v8816 = vsel %vm7545, %v7444, 0
    %v8819 = vsel %vm7545, %v7476, 0
    %8821 = vmatprep.subr.bf16.mxu0 0
    %8822 = vmatpush1.bf16.xpose.msra.mxu0 %v8819
    %8823 = vmatprep.subr.bf16.mxu0 0
    %8824 = vmatpush1.bf16.xpose.msra.mxu0 0
    %8825 = vmatprep.subr.bf16.mxu0 0
    %8826 = vmatpush1.bf16.xpose.msra.mxu0 0
    %8827 = vmatprep.subr.bf16.mxu0 0
    %8828 = vmatpush1.bf16.xpose.msra.mxu0 0
    %8829 = vmatprep.subr.bf16.mxu0 0
    %8830 = vmatpush1.bf16.xpose.msra.mxu0 0
    %8831 = vmatprep.subr.bf16.mxu0 0
    %8832 = vmatpush1.bf16.xpose.msra.mxu0 0
    %8833 = vmatprep.subr.bf16.mxu0 0
    %8834 = vmatpush1.bf16.xpose.msra.mxu0 0
    %8835 = vmatprep.subr.bf16.mxu0 0
    %8836 = vmatpush1.bf16.xpose.msra.mxu0 0
    %8837 = vmatprep.subr.bf16.mxu0 0
    %8838 = vmatpush1.bf16.xpose.msra.mxu0 0
    %8839 = vmatprep.subr.bf16.mxu0 0
    %8840 = vmatpush1.bf16.xpose.msra.mxu0 0
    %8841 = vmatprep.subr.bf16.mxu0 0
    %8842 = vmatpush1.bf16.xpose.msra.mxu0 0
    %8843 = vmatprep.subr.bf16.mxu0 0
    %8844 = vmatpush1.bf16.xpose.msra.mxu0 0
    %8845 = vmatprep.subr.bf16.mxu0 0
    %8846 = vmatpush1.bf16.xpose.msra.mxu0 0
    %8847 = vmatprep.subr.bf16.mxu0 0
    %8848 = vmatpush1.bf16.xpose.msra.mxu0 0
    %8849 = vmatprep.subr.bf16.mxu0 0
    %8850 = vmatpush1.bf16.xpose.msra.mxu0 0
    %8851 = vmatprep.subr.bf16.mxu0 0
    %8852 = vmatpush1.bf16.xpose.msra.mxu0 0
    %8853 = vmatprep.mubr.bf16.mxu0 0
    %8854 = vmatmul.mubr.bf16.gmra.mrb[0].mxu0 %v8816
    %v8855 = vpop.f32.mrb[0].mxu0
    %v8856 = vadd.f32 %v7535, %v8855
    %v8857 = vpop.f32.mrb[0].mxu0
    %v8858 = vpop.f32.mrb[0].mxu0
    %v8859 = vadd.f32 %v7536, %v8858
    %v8860 = vpop.f32.mrb[0].mxu0
    %8861 = vdwg.mxu0
    %v8863 = vsel %vm7545, %v7445, 0
    %v8866 = vsel %vm7545, %v7477, 0
    %8868 = vmatprep.subr.bf16.mxu0 0
    %8869 = vmatpush1.bf16.xpose.msra.mxu0 %v8866
    %8870 = vmatprep.subr.bf16.mxu0 0
    %8871 = vmatpush1.bf16.xpose.msra.mxu0 0
    %8872 = vmatprep.subr.bf16.mxu0 0
    %8873 = vmatpush1.bf16.xpose.msra.mxu0 0
    %8874 = vmatprep.subr.bf16.mxu0 0
    %8875 = vmatpush1.bf16.xpose.msra.mxu0 0
    %8876 = vmatprep.subr.bf16.mxu0 0
    %8877 = vmatpush1.bf16.xpose.msra.mxu0 0
    %8878 = vmatprep.subr.bf16.mxu0 0
    %8879 = vmatpush1.bf16.xpose.msra.mxu0 0
    %8880 = vmatprep.subr.bf16.mxu0 0
    %8881 = vmatpush1.bf16.xpose.msra.mxu0 0
    %8882 = vmatprep.subr.bf16.mxu0 0
    %8883 = vmatpush1.bf16.xpose.msra.mxu0 0
    %8884 = vmatprep.subr.bf16.mxu0 0
    %8885 = vmatpush1.bf16.xpose.msra.mxu0 0
    %8886 = vmatprep.subr.bf16.mxu0 0
    %8887 = vmatpush1.bf16.xpose.msra.mxu0 0
    %8888 = vmatprep.subr.bf16.mxu0 0
    %8889 = vmatpush1.bf16.xpose.msra.mxu0 0
    %8890 = vmatprep.subr.bf16.mxu0 0
    %8891 = vmatpush1.bf16.xpose.msra.mxu0 0
    %8892 = vmatprep.subr.bf16.mxu0 0
    %8893 = vmatpush1.bf16.xpose.msra.mxu0 0
    %8894 = vmatprep.subr.bf16.mxu0 0
    %8895 = vmatpush1.bf16.xpose.msra.mxu0 0
    %8896 = vmatprep.subr.bf16.mxu0 0
    %8897 = vmatpush1.bf16.xpose.msra.mxu0 0
    %8898 = vmatprep.subr.bf16.mxu0 0
    %8899 = vmatpush1.bf16.xpose.msra.mxu0 0
    %8900 = vmatprep.mubr.bf16.mxu0 0
    %8901 = vmatmul.mubr.bf16.gmra.mrb[0].mxu0 %v8863
    %v8902 = vpop.f32.mrb[0].mxu0
    %v8903 = vadd.f32 %v7537, %v8902
    %v8904 = vpop.f32.mrb[0].mxu0
    %v8905 = vpop.f32.mrb[0].mxu0
    %v8906 = vadd.f32 %v7538, %v8905
    %v8907 = vpop.f32.mrb[0].mxu0
    %8908 = vdwg.mxu0
    %v8910 = vsel %vm7545, %v7446, 0
    %v8913 = vsel %vm7545, %v7478, 0
    %8915 = vmatprep.subr.bf16.mxu0 0
    %8916 = vmatpush1.bf16.xpose.msra.mxu0 %v8913
    %8917 = vmatprep.subr.bf16.mxu0 0
    %8918 = vmatpush1.bf16.xpose.msra.mxu0 0
    %8919 = vmatprep.subr.bf16.mxu0 0
    %8920 = vmatpush1.bf16.xpose.msra.mxu0 0
    %8921 = vmatprep.subr.bf16.mxu0 0
    %8922 = vmatpush1.bf16.xpose.msra.mxu0 0
    %8923 = vmatprep.subr.bf16.mxu0 0
    %8924 = vmatpush1.bf16.xpose.msra.mxu0 0
    %8925 = vmatprep.subr.bf16.mxu0 0
    %8926 = vmatpush1.bf16.xpose.msra.mxu0 0
    %8927 = vmatprep.subr.bf16.mxu0 0
    %8928 = vmatpush1.bf16.xpose.msra.mxu0 0
    %8929 = vmatprep.subr.bf16.mxu0 0
    %8930 = vmatpush1.bf16.xpose.msra.mxu0 0
    %8931 = vmatprep.subr.bf16.mxu0 0
    %8932 = vmatpush1.bf16.xpose.msra.mxu0 0
    %8933 = vmatprep.subr.bf16.mxu0 0
    %8934 = vmatpush1.bf16.xpose.msra.mxu0 0
    %8935 = vmatprep.subr.bf16.mxu0 0
    %8936 = vmatpush1.bf16.xpose.msra.mxu0 0
    %8937 = vmatprep.subr.bf16.mxu0 0
    %8938 = vmatpush1.bf16.xpose.msra.mxu0 0
    %8939 = vmatprep.subr.bf16.mxu0 0
    %8940 = vmatpush1.bf16.xpose.msra.mxu0 0
    %8941 = vmatprep.subr.bf16.mxu0 0
    %8942 = vmatpush1.bf16.xpose.msra.mxu0 0
    %8943 = vmatprep.subr.bf16.mxu0 0
    %8944 = vmatpush1.bf16.xpose.msra.mxu0 0
    %8945 = vmatprep.subr.bf16.mxu0 0
    %8946 = vmatpush1.bf16.xpose.msra.mxu0 0
    %8947 = vmatprep.mubr.bf16.mxu0 0
    %8948 = vmatmul.mubr.bf16.gmra.mrb[0].mxu0 %v8910
    %v8949 = vpop.f32.mrb[0].mxu0
    %v8950 = vadd.f32 %v7539, %v8949
    %v8951 = vpop.f32.mrb[0].mxu0
    %v8952 = vpop.f32.mrb[0].mxu0
    %v8953 = vadd.f32 %v7540, %v8952
    %v8954 = vpop.f32.mrb[0].mxu0
    %8955 = vdwg.mxu0
    %v8957 = vsel %vm7545, %v7447, 0
    %v8960 = vsel %vm7545, %v7479, 0
    %8962 = vmatprep.subr.bf16.mxu0 0
    %8963 = vmatpush1.bf16.xpose.msra.mxu0 %v8960
    %8964 = vmatprep.subr.bf16.mxu0 0
    %8965 = vmatpush1.bf16.xpose.msra.mxu0 0
    %8966 = vmatprep.subr.bf16.mxu0 0
    %8967 = vmatpush1.bf16.xpose.msra.mxu0 0
    %8968 = vmatprep.subr.bf16.mxu0 0
    %8969 = vmatpush1.bf16.xpose.msra.mxu0 0
    %8970 = vmatprep.subr.bf16.mxu0 0
    %8971 = vmatpush1.bf16.xpose.msra.mxu0 0
    %8972 = vmatprep.subr.bf16.mxu0 0
    %8973 = vmatpush1.bf16.xpose.msra.mxu0 0
    %8974 = vmatprep.subr.bf16.mxu0 0
    %8975 = vmatpush1.bf16.xpose.msra.mxu0 0
    %8976 = vmatprep.subr.bf16.mxu0 0
    %8977 = vmatpush1.bf16.xpose.msra.mxu0 0
    %8978 = vmatprep.subr.bf16.mxu0 0
    %8979 = vmatpush1.bf16.xpose.msra.mxu0 0
    %8980 = vmatprep.subr.bf16.mxu0 0
    %8981 = vmatpush1.bf16.xpose.msra.mxu0 0
    %8982 = vmatprep.subr.bf16.mxu0 0
    %8983 = vmatpush1.bf16.xpose.msra.mxu0 0
    %8984 = vmatprep.subr.bf16.mxu0 0
    %8985 = vmatpush1.bf16.xpose.msra.mxu0 0
    %8986 = vmatprep.subr.bf16.mxu0 0
    %8987 = vmatpush1.bf16.xpose.msra.mxu0 0
    %8988 = vmatprep.subr.bf16.mxu0 0
    %8989 = vmatpush1.bf16.xpose.msra.mxu0 0
    %8990 = vmatprep.subr.bf16.mxu0 0
    %8991 = vmatpush1.bf16.xpose.msra.mxu0 0
    %8992 = vmatprep.subr.bf16.mxu0 0
    %8993 = vmatpush1.bf16.xpose.msra.mxu0 0
    %8994 = vmatprep.mubr.bf16.mxu0 0
    %8995 = vmatmul.mubr.bf16.gmra.mrb[0].mxu0 %v8957
    %v8996 = vpop.f32.mrb[0].mxu0
    %v8997 = vadd.f32 %v7541, %v8996
    %v8998 = vpop.f32.mrb[0].mxu0
    %v8999 = vpop.f32.mrb[0].mxu0
    %v9000 = vadd.f32 %v7542, %v8999
    %v9001 = vpop.f32.mrb[0].mxu0
    %9002 = vdwg.mxu0
    %v9004 = vsel %vm7545, %v7448, 0
    %v9007 = vsel %vm7545, %v7480, 0
    %9009 = vmatprep.subr.bf16.mxu0 0
    %9010 = vmatpush1.bf16.xpose.msra.mxu0 %v9007
    %9011 = vmatprep.subr.bf16.mxu0 0
    %9012 = vmatpush1.bf16.xpose.msra.mxu0 0
    %9013 = vmatprep.subr.bf16.mxu0 0
    %9014 = vmatpush1.bf16.xpose.msra.mxu0 0
    %9015 = vmatprep.subr.bf16.mxu0 0
    %9016 = vmatpush1.bf16.xpose.msra.mxu0 0
    %9017 = vmatprep.subr.bf16.mxu0 0
    %9018 = vmatpush1.bf16.xpose.msra.mxu0 0
    %9019 = vmatprep.subr.bf16.mxu0 0
    %9020 = vmatpush1.bf16.xpose.msra.mxu0 0
    %9021 = vmatprep.subr.bf16.mxu0 0
    %9022 = vmatpush1.bf16.xpose.msra.mxu0 0
    %9023 = vmatprep.subr.bf16.mxu0 0
    %9024 = vmatpush1.bf16.xpose.msra.mxu0 0
    %9025 = vmatprep.subr.bf16.mxu0 0
    %9026 = vmatpush1.bf16.xpose.msra.mxu0 0
    %9027 = vmatprep.subr.bf16.mxu0 0
    %9028 = vmatpush1.bf16.xpose.msra.mxu0 0
    %9029 = vmatprep.subr.bf16.mxu0 0
    %9030 = vmatpush1.bf16.xpose.msra.mxu0 0
    %9031 = vmatprep.subr.bf16.mxu0 0
    %9032 = vmatpush1.bf16.xpose.msra.mxu0 0
    %9033 = vmatprep.subr.bf16.mxu0 0
    %9034 = vmatpush1.bf16.xpose.msra.mxu0 0
    %9035 = vmatprep.subr.bf16.mxu0 0
    %9036 = vmatpush1.bf16.xpose.msra.mxu0 0
    %9037 = vmatprep.subr.bf16.mxu0 0
    %9038 = vmatpush1.bf16.xpose.msra.mxu0 0
    %9039 = vmatprep.subr.bf16.mxu0 0
    %9040 = vmatpush1.bf16.xpose.msra.mxu0 0
    %9041 = vmatprep.mubr.bf16.mxu0 0
    %9042 = vmatmul.mubr.bf16.gmra.mrb[0].mxu0 %v9004
    %v9043 = vpop.f32.mrb[0].mxu0
    %v9044 = vadd.f32 %v7543, %v9043
    %v9045 = vpop.f32.mrb[0].mxu0
    %v9046 = vpop.f32.mrb[0].mxu0
    %v9047 = vadd.f32 %v7544, %v9046
    %v9048 = vpop.f32.mrb[0].mxu0
    %9049 = vdwg.mxu0
    %vm9050 = vcmask 130048
    %v9051 = vsel %vm9050, %v7587, -inf
    %9052 = vmax.xlane.f32.xlu0 %v9051
    %v9053 = vpop.xlane.xlu0 %9052
    %v9054 = vsel %vm9050, %v7590, -inf
    %9055 = vmax.xlane.f32.xlu0 %v9054
    %v9056 = vpop.xlane.xlu0 %9055
    %v9057 = vsel %vm9050, %v7634, -inf
    %9058 = vmax.xlane.f32.xlu0 %v9057
    %v9059 = vpop.xlane.xlu0 %9058
    %v9060 = vsel %vm9050, %v7637, -inf
    %9061 = vmax.xlane.f32.xlu0 %v9060
    %v9062 = vpop.xlane.xlu0 %9061
    %v9063 = vsel %vm9050, %v7681, -inf
    %9064 = vmax.xlane.f32.xlu0 %v9063
    %v9065 = vpop.xlane.xlu0 %9064
    %v9066 = vsel %vm9050, %v7684, -inf
    %9067 = vmax.xlane.f32.xlu0 %v9066
    %v9068 = vpop.xlane.xlu0 %9067
    %v9069 = vsel %vm9050, %v7728, -inf
    %9070 = vmax.xlane.f32.xlu0 %v9069
    %v9071 = vpop.xlane.xlu0 %9070
    %v9072 = vsel %vm9050, %v7731, -inf
    %9073 = vmax.xlane.f32.xlu0 %v9072
    %v9074 = vpop.xlane.xlu0 %9073
    %v9075 = vsel %vm9050, %v7775, -inf
    %9076 = vmax.xlane.f32.xlu0 %v9075
    %v9077 = vpop.xlane.xlu0 %9076
    %v9078 = vsel %vm9050, %v7778, -inf
    %9079 = vmax.xlane.f32.xlu0 %v9078
    %v9080 = vpop.xlane.xlu0 %9079
    %v9081 = vsel %vm9050, %v7822, -inf
    %9082 = vmax.xlane.f32.xlu0 %v9081
    %v9083 = vpop.xlane.xlu0 %9082
    %v9084 = vsel %vm9050, %v7825, -inf
    %9085 = vmax.xlane.f32.xlu0 %v9084
    %v9086 = vpop.xlane.xlu0 %9085
    %v9087 = vsel %vm9050, %v7869, -inf
    %9088 = vmax.xlane.f32.xlu0 %v9087
    %v9089 = vpop.xlane.xlu0 %9088
    %v9090 = vsel %vm9050, %v7872, -inf
    %9091 = vmax.xlane.f32.xlu0 %v9090
    %v9092 = vpop.xlane.xlu0 %9091
    %v9093 = vsel %vm9050, %v7916, -inf
    %9094 = vmax.xlane.f32.xlu0 %v9093
    %v9095 = vpop.xlane.xlu0 %9094
    %v9096 = vsel %vm9050, %v7919, -inf
    %9097 = vmax.xlane.f32.xlu0 %v9096
    %v9098 = vpop.xlane.xlu0 %9097
    %v9099 = vsel %vm9050, %v7963, -inf
    %9100 = vmax.xlane.f32.xlu0 %v9099
    %v9101 = vpop.xlane.xlu0 %9100
    %v9102 = vsel %vm9050, %v7966, -inf
    %9103 = vmax.xlane.f32.xlu0 %v9102
    %v9104 = vpop.xlane.xlu0 %9103
    %v9105 = vsel %vm9050, %v8010, -inf
    %9106 = vmax.xlane.f32.xlu0 %v9105
    %v9107 = vpop.xlane.xlu0 %9106
    %v9108 = vsel %vm9050, %v8013, -inf
    %9109 = vmax.xlane.f32.xlu0 %v9108
    %v9110 = vpop.xlane.xlu0 %9109
    %v9111 = vsel %vm9050, %v8057, -inf
    %9112 = vmax.xlane.f32.xlu0 %v9111
    %v9113 = vpop.xlane.xlu0 %9112
    %v9114 = vsel %vm9050, %v8060, -inf
    %9115 = vmax.xlane.f32.xlu0 %v9114
    %v9116 = vpop.xlane.xlu0 %9115
    %v9117 = vsel %vm9050, %v8104, -inf
    %9118 = vmax.xlane.f32.xlu0 %v9117
    %v9119 = vpop.xlane.xlu0 %9118
    %v9120 = vsel %vm9050, %v8107, -inf
    %9121 = vmax.xlane.f32.xlu0 %v9120
    %v9122 = vpop.xlane.xlu0 %9121
    %v9123 = vsel %vm9050, %v8151, -inf
    %9124 = vmax.xlane.f32.xlu0 %v9123
    %v9125 = vpop.xlane.xlu0 %9124
    %v9126 = vsel %vm9050, %v8154, -inf
    %9127 = vmax.xlane.f32.xlu0 %v9126
    %v9128 = vpop.xlane.xlu0 %9127
    %v9129 = vsel %vm9050, %v8198, -inf
    %9130 = vmax.xlane.f32.xlu0 %v9129
    %v9131 = vpop.xlane.xlu0 %9130
    %v9132 = vsel %vm9050, %v8201, -inf
    %9133 = vmax.xlane.f32.xlu0 %v9132
    %v9134 = vpop.xlane.xlu0 %9133
    %v9135 = vsel %vm9050, %v8245, -inf
    %9136 = vmax.xlane.f32.xlu0 %v9135
    %v9137 = vpop.xlane.xlu0 %9136
    %v9138 = vsel %vm9050, %v8248, -inf
    %9139 = vmax.xlane.f32.xlu0 %v9138
    %v9140 = vpop.xlane.xlu0 %9139
    %v9141 = vsel %vm9050, %v8292, -inf
    %9142 = vmax.xlane.f32.xlu0 %v9141
    %v9143 = vpop.xlane.xlu0 %9142
    %v9144 = vsel %vm9050, %v8295, -inf
    %9145 = vmax.xlane.f32.xlu0 %v9144
    %v9146 = vpop.xlane.xlu0 %9145
    %v9147 = vsel %vm9050, %v8339, -inf
    %9148 = vmax.xlane.f32.xlu0 %v9147
    %v9149 = vpop.xlane.xlu0 %9148
    %v9150 = vsel %vm9050, %v8342, -inf
    %9151 = vmax.xlane.f32.xlu0 %v9150
    %v9152 = vpop.xlane.xlu0 %9151
    %v9153 = vsel %vm9050, %v8386, -inf
    %9154 = vmax.xlane.f32.xlu0 %v9153
    %v9155 = vpop.xlane.xlu0 %9154
    %v9156 = vsel %vm9050, %v8389, -inf
    %9157 = vmax.xlane.f32.xlu0 %v9156
    %v9158 = vpop.xlane.xlu0 %9157
    %v9159 = vsel %vm9050, %v8433, -inf
    %9160 = vmax.xlane.f32.xlu0 %v9159
    %v9161 = vpop.xlane.xlu0 %9160
    %v9162 = vsel %vm9050, %v8436, -inf
    %9163 = vmax.xlane.f32.xlu0 %v9162
    %v9164 = vpop.xlane.xlu0 %9163
    %v9165 = vsel %vm9050, %v8480, -inf
    %9166 = vmax.xlane.f32.xlu0 %v9165
    %v9167 = vpop.xlane.xlu0 %9166
    %v9168 = vsel %vm9050, %v8483, -inf
    %9169 = vmax.xlane.f32.xlu0 %v9168
    %v9170 = vpop.xlane.xlu0 %9169
    %v9171 = vsel %vm9050, %v8527, -inf
    %9172 = vmax.xlane.f32.xlu0 %v9171
    %v9173 = vpop.xlane.xlu0 %9172
    %v9174 = vsel %vm9050, %v8530, -inf
    %9175 = vmax.xlane.f32.xlu0 %v9174
    %v9176 = vpop.xlane.xlu0 %9175
    %v9177 = vsel %vm9050, %v8574, -inf
    %9178 = vmax.xlane.f32.xlu0 %v9177
    %v9179 = vpop.xlane.xlu0 %9178
    %v9180 = vsel %vm9050, %v8577, -inf
    %9181 = vmax.xlane.f32.xlu0 %v9180
    %v9182 = vpop.xlane.xlu0 %9181
    %v9183 = vsel %vm9050, %v8621, -inf
    %9184 = vmax.xlane.f32.xlu0 %v9183
    %v9185 = vpop.xlane.xlu0 %9184
    %v9186 = vsel %vm9050, %v8624, -inf
    %9187 = vmax.xlane.f32.xlu0 %v9186
    %v9188 = vpop.xlane.xlu0 %9187
    %v9189 = vsel %vm9050, %v8668, -inf
    %9190 = vmax.xlane.f32.xlu0 %v9189
    %v9191 = vpop.xlane.xlu0 %9190
    %v9192 = vsel %vm9050, %v8671, -inf
    %9193 = vmax.xlane.f32.xlu0 %v9192
    %v9194 = vpop.xlane.xlu0 %9193
    %v9195 = vsel %vm9050, %v8715, -inf
    %9196 = vmax.xlane.f32.xlu0 %v9195
    %v9197 = vpop.xlane.xlu0 %9196
    %v9198 = vsel %vm9050, %v8718, -inf
    %9199 = vmax.xlane.f32.xlu0 %v9198
    %v9200 = vpop.xlane.xlu0 %9199
    %v9201 = vsel %vm9050, %v8762, -inf
    %9202 = vmax.xlane.f32.xlu0 %v9201
    %v9203 = vpop.xlane.xlu0 %9202
    %v9204 = vsel %vm9050, %v8765, -inf
    %9205 = vmax.xlane.f32.xlu0 %v9204
    %v9206 = vpop.xlane.xlu0 %9205
    %v9207 = vsel %vm9050, %v8809, -inf
    %9208 = vmax.xlane.f32.xlu0 %v9207
    %v9209 = vpop.xlane.xlu0 %9208
    %v9210 = vsel %vm9050, %v8812, -inf
    %9211 = vmax.xlane.f32.xlu0 %v9210
    %v9212 = vpop.xlane.xlu0 %9211
    %v9213 = vsel %vm9050, %v8856, -inf
    %9214 = vmax.xlane.f32.xlu0 %v9213
    %v9215 = vpop.xlane.xlu0 %9214
    %v9216 = vsel %vm9050, %v8859, -inf
    %9217 = vmax.xlane.f32.xlu0 %v9216
    %v9218 = vpop.xlane.xlu0 %9217
    %v9219 = vsel %vm9050, %v8903, -inf
    %9220 = vmax.xlane.f32.xlu0 %v9219
    %v9221 = vpop.xlane.xlu0 %9220
    %v9222 = vsel %vm9050, %v8906, -inf
    %9223 = vmax.xlane.f32.xlu0 %v9222
    %v9224 = vpop.xlane.xlu0 %9223
    %v9225 = vsel %vm9050, %v8950, -inf
    %9226 = vmax.xlane.f32.xlu0 %v9225
    %v9227 = vpop.xlane.xlu0 %9226
    %v9228 = vsel %vm9050, %v8953, -inf
    %9229 = vmax.xlane.f32.xlu0 %v9228
    %v9230 = vpop.xlane.xlu0 %9229
    %v9231 = vsel %vm9050, %v8997, -inf
    %9232 = vmax.xlane.f32.xlu0 %v9231
    %v9233 = vpop.xlane.xlu0 %9232
    %v9234 = vsel %vm9050, %v9000, -inf
    %9235 = vmax.xlane.f32.xlu0 %v9234
    %v9236 = vpop.xlane.xlu0 %9235
    %v9237 = vsel %vm9050, %v9044, -inf
    %9238 = vmax.xlane.f32.xlu0 %v9237
    %v9239 = vpop.xlane.xlu0 %9238
    %v9240 = vsel %vm9050, %v9047, -inf
    %9241 = vmax.xlane.f32.xlu0 %v9240
    %v9242 = vpop.xlane.xlu0 %9241
    %v9243 = vsub.f32 %v7587, %v9053
    %v9244 = vsub.f32 %v7590, %v9056
    %v9245 = vsub.f32 %v7634, %v9059
    %v9246 = vsub.f32 %v7637, %v9062
    %v9247 = vsub.f32 %v7681, %v9065
    %v9248 = vsub.f32 %v7684, %v9068
    %v9249 = vsub.f32 %v7728, %v9071
    %v9250 = vsub.f32 %v7731, %v9074
    %v9251 = vsub.f32 %v7775, %v9077
    %v9252 = vsub.f32 %v7778, %v9080
    %v9253 = vsub.f32 %v7822, %v9083
    %v9254 = vsub.f32 %v7825, %v9086
    %v9255 = vsub.f32 %v7869, %v9089
    %v9256 = vsub.f32 %v7872, %v9092
    %v9257 = vsub.f32 %v7916, %v9095
    %v9258 = vsub.f32 %v7919, %v9098
    %v9259 = vsub.f32 %v7963, %v9101
    %v9260 = vsub.f32 %v7966, %v9104
    %v9261 = vsub.f32 %v8010, %v9107
    %v9262 = vsub.f32 %v8013, %v9110
    %v9263 = vsub.f32 %v8057, %v9113
    %v9264 = vsub.f32 %v8060, %v9116
    %v9265 = vsub.f32 %v8104, %v9119
    %v9266 = vsub.f32 %v8107, %v9122
    %v9267 = vsub.f32 %v8151, %v9125
    %v9268 = vsub.f32 %v8154, %v9128
    %v9269 = vsub.f32 %v8198, %v9131
    %v9270 = vsub.f32 %v8201, %v9134
    %v9271 = vsub.f32 %v8245, %v9137
    %v9272 = vsub.f32 %v8248, %v9140
    %v9273 = vsub.f32 %v8292, %v9143
    %v9274 = vsub.f32 %v8295, %v9146
    %v9275 = vsub.f32 %v8339, %v9149
    %v9276 = vsub.f32 %v8342, %v9152
    %v9277 = vsub.f32 %v8386, %v9155
    %v9278 = vsub.f32 %v8389, %v9158
    %v9279 = vsub.f32 %v8433, %v9161
    %v9280 = vsub.f32 %v8436, %v9164
    %v9281 = vsub.f32 %v8480, %v9167
    %v9282 = vsub.f32 %v8483, %v9170
    %v9283 = vsub.f32 %v8527, %v9173
    %v9284 = vsub.f32 %v8530, %v9176
    %v9285 = vsub.f32 %v8574, %v9179
    %v9286 = vsub.f32 %v8577, %v9182
    %v9287 = vsub.f32 %v8621, %v9185
    %v9288 = vsub.f32 %v8624, %v9188
    %v9289 = vsub.f32 %v8668, %v9191
    %v9290 = vsub.f32 %v8671, %v9194
    %v9291 = vsub.f32 %v8715, %v9197
    %v9292 = vsub.f32 %v8718, %v9200
    %v9293 = vsub.f32 %v8762, %v9203
    %v9294 = vsub.f32 %v8765, %v9206
    %v9295 = vsub.f32 %v8809, %v9209
    %v9296 = vsub.f32 %v8812, %v9212
    %v9297 = vsub.f32 %v8856, %v9215
    %v9298 = vsub.f32 %v8859, %v9218
    %v9299 = vsub.f32 %v8903, %v9221
    %v9300 = vsub.f32 %v8906, %v9224
    %v9301 = vsub.f32 %v8950, %v9227
    %v9302 = vsub.f32 %v8953, %v9230
    %v9303 = vsub.f32 %v8997, %v9233
    %v9304 = vsub.f32 %v9000, %v9236
    %v9305 = vsub.f32 %v9044, %v9239
    %v9306 = vsub.f32 %v9047, %v9242
    %v9307 = vmul.f32 %v9243, 1.442695
    %v9308 = vpow.pop %v9307
    %v9309 = vmul.f32 %v9244, 1.442695
    %v9310 = vpow.pop %v9309
    %v9311 = vmul.f32 %v9245, 1.442695
    %v9312 = vpow.pop %v9311
    %v9313 = vmul.f32 %v9246, 1.442695
    %v9314 = vpow.pop %v9313
    %v9315 = vmul.f32 %v9247, 1.442695
    %v9316 = vpow.pop %v9315
    %v9317 = vmul.f32 %v9248, 1.442695
    %v9318 = vpow.pop %v9317
    %v9319 = vmul.f32 %v9249, 1.442695
    %v9320 = vpow.pop %v9319
    %v9321 = vmul.f32 %v9250, 1.442695
    %v9322 = vpow.pop %v9321
    %v9323 = vmul.f32 %v9251, 1.442695
    %v9324 = vpow.pop %v9323
    %v9325 = vmul.f32 %v9252, 1.442695
    %v9326 = vpow.pop %v9325
    %v9327 = vmul.f32 %v9253, 1.442695
    %v9328 = vpow.pop %v9327
    %v9329 = vmul.f32 %v9254, 1.442695
    %v9330 = vpow.pop %v9329
    %v9331 = vmul.f32 %v9255, 1.442695
    %v9332 = vpow.pop %v9331
    %v9333 = vmul.f32 %v9256, 1.442695
    %v9334 = vpow.pop %v9333
    %v9335 = vmul.f32 %v9257, 1.442695
    %v9336 = vpow.pop %v9335
    %v9337 = vmul.f32 %v9258, 1.442695
    %v9338 = vpow.pop %v9337
    %v9339 = vmul.f32 %v9259, 1.442695
    %v9340 = vpow.pop %v9339
    %v9341 = vmul.f32 %v9260, 1.442695
    %v9342 = vpow.pop %v9341
    %v9343 = vmul.f32 %v9261, 1.442695
    %v9344 = vpow.pop %v9343
    %v9345 = vmul.f32 %v9262, 1.442695
    %v9346 = vpow.pop %v9345
    %v9347 = vmul.f32 %v9263, 1.442695
    %v9348 = vpow.pop %v9347
    %v9349 = vmul.f32 %v9264, 1.442695
    %v9350 = vpow.pop %v9349
    %v9351 = vmul.f32 %v9265, 1.442695
    %v9352 = vpow.pop %v9351
    %v9353 = vmul.f32 %v9266, 1.442695
    %v9354 = vpow.pop %v9353
    %v9355 = vmul.f32 %v9267, 1.442695
    %v9356 = vpow.pop %v9355
    %v9357 = vmul.f32 %v9268, 1.442695
    %v9358 = vpow.pop %v9357
    %v9359 = vmul.f32 %v9269, 1.442695
    %v9360 = vpow.pop %v9359
    %v9361 = vmul.f32 %v9270, 1.442695
    %v9362 = vpow.pop %v9361
    %v9363 = vmul.f32 %v9271, 1.442695
    %v9364 = vpow.pop %v9363
    %v9365 = vmul.f32 %v9272, 1.442695
    %v9366 = vpow.pop %v9365
    %v9367 = vmul.f32 %v9273, 1.442695
    %v9368 = vpow.pop %v9367
    %v9369 = vmul.f32 %v9274, 1.442695
    %v9370 = vpow.pop %v9369
    %v9371 = vmul.f32 %v9275, 1.442695
    %v9372 = vpow.pop %v9371
    %v9373 = vmul.f32 %v9276, 1.442695
    %v9374 = vpow.pop %v9373
    %v9375 = vmul.f32 %v9277, 1.442695
    %v9376 = vpow.pop %v9375
    %v9377 = vmul.f32 %v9278, 1.442695
    %v9378 = vpow.pop %v9377
    %v9379 = vmul.f32 %v9279, 1.442695
    %v9380 = vpow.pop %v9379
    %v9381 = vmul.f32 %v9280, 1.442695
    %v9382 = vpow.pop %v9381
    %v9383 = vmul.f32 %v9281, 1.442695
    %v9384 = vpow.pop %v9383
    %v9385 = vmul.f32 %v9282, 1.442695
    %v9386 = vpow.pop %v9385
    %v9387 = vmul.f32 %v9283, 1.442695
    %v9388 = vpow.pop %v9387
    %v9389 = vmul.f32 %v9284, 1.442695
    %v9390 = vpow.pop %v9389
    %v9391 = vmul.f32 %v9285, 1.442695
    %v9392 = vpow.pop %v9391
    %v9393 = vmul.f32 %v9286, 1.442695
    %v9394 = vpow.pop %v9393
    %v9395 = vmul.f32 %v9287, 1.442695
    %v9396 = vpow.pop %v9395
    %v9397 = vmul.f32 %v9288, 1.442695
    %v9398 = vpow.pop %v9397
    %v9399 = vmul.f32 %v9289, 1.442695
    %v9400 = vpow.pop %v9399
    %v9401 = vmul.f32 %v9290, 1.442695
    %v9402 = vpow.pop %v9401
    %v9403 = vmul.f32 %v9291, 1.442695
    %v9404 = vpow.pop %v9403
    %v9405 = vmul.f32 %v9292, 1.442695
    %v9406 = vpow.pop %v9405
    %v9407 = vmul.f32 %v9293, 1.442695
    %v9408 = vpow.pop %v9407
    %v9409 = vmul.f32 %v9294, 1.442695
    %v9410 = vpow.pop %v9409
    %v9411 = vmul.f32 %v9295, 1.442695
    %v9412 = vpow.pop %v9411
    %v9413 = vmul.f32 %v9296, 1.442695
    %v9414 = vpow.pop %v9413
    %v9415 = vmul.f32 %v9297, 1.442695
    %v9416 = vpow.pop %v9415
    %v9417 = vmul.f32 %v9298, 1.442695
    %v9418 = vpow.pop %v9417
    %v9419 = vmul.f32 %v9299, 1.442695
    %v9420 = vpow.pop %v9419
    %v9421 = vmul.f32 %v9300, 1.442695
    %v9422 = vpow.pop %v9421
    %v9423 = vmul.f32 %v9301, 1.442695
    %v9424 = vpow.pop %v9423
    %v9425 = vmul.f32 %v9302, 1.442695
    %v9426 = vpow.pop %v9425
    %v9427 = vmul.f32 %v9303, 1.442695
    %v9428 = vpow.pop %v9427
    %v9429 = vmul.f32 %v9304, 1.442695
    %v9430 = vpow.pop %v9429
    %v9431 = vmul.f32 %v9305, 1.442695
    %v9432 = vpow.pop %v9431
    %v9433 = vmul.f32 %v9306, 1.442695
    %v9434 = vpow.pop %v9433
    %v9435 = vsel %vm9050, %v9308, 0.0
    %9436 = vadd.xlane.f32.xlu0 %v9435
    %v9437 = vpop.xlane.xlu0 %9436
    %v9438 = vsel %vm9050, %v9310, 0.0
    %9439 = vadd.xlane.f32.xlu0 %v9438
    %v9440 = vpop.xlane.xlu0 %9439
    %v9441 = vsel %vm9050, %v9312, 0.0
    %9442 = vadd.xlane.f32.xlu0 %v9441
    %v9443 = vpop.xlane.xlu0 %9442
    %v9444 = vsel %vm9050, %v9314, 0.0
    %9445 = vadd.xlane.f32.xlu0 %v9444
    %v9446 = vpop.xlane.xlu0 %9445
    %v9447 = vsel %vm9050, %v9316, 0.0
    %9448 = vadd.xlane.f32.xlu0 %v9447
    %v9449 = vpop.xlane.xlu0 %9448
    %v9450 = vsel %vm9050, %v9318, 0.0
    %9451 = vadd.xlane.f32.xlu0 %v9450
    %v9452 = vpop.xlane.xlu0 %9451
    %v9453 = vsel %vm9050, %v9320, 0.0
    %9454 = vadd.xlane.f32.xlu0 %v9453
    %v9455 = vpop.xlane.xlu0 %9454
    %v9456 = vsel %vm9050, %v9322, 0.0
    %9457 = vadd.xlane.f32.xlu0 %v9456
    %v9458 = vpop.xlane.xlu0 %9457
    %v9459 = vsel %vm9050, %v9324, 0.0
    %9460 = vadd.xlane.f32.xlu0 %v9459
    %v9461 = vpop.xlane.xlu0 %9460
    %v9462 = vsel %vm9050, %v9326, 0.0
    %9463 = vadd.xlane.f32.xlu0 %v9462
    %v9464 = vpop.xlane.xlu0 %9463
    %v9465 = vsel %vm9050, %v9328, 0.0
    %9466 = vadd.xlane.f32.xlu0 %v9465
    %v9467 = vpop.xlane.xlu0 %9466
    %v9468 = vsel %vm9050, %v9330, 0.0
    %9469 = vadd.xlane.f32.xlu0 %v9468
    %v9470 = vpop.xlane.xlu0 %9469
    %v9471 = vsel %vm9050, %v9332, 0.0
    %9472 = vadd.xlane.f32.xlu0 %v9471
    %v9473 = vpop.xlane.xlu0 %9472
    %v9474 = vsel %vm9050, %v9334, 0.0
    %9475 = vadd.xlane.f32.xlu0 %v9474
    %v9476 = vpop.xlane.xlu0 %9475
    %v9477 = vsel %vm9050, %v9336, 0.0
    %9478 = vadd.xlane.f32.xlu0 %v9477
    %v9479 = vpop.xlane.xlu0 %9478
    %v9480 = vsel %vm9050, %v9338, 0.0
    %9481 = vadd.xlane.f32.xlu0 %v9480
    %v9482 = vpop.xlane.xlu0 %9481
    %v9483 = vsel %vm9050, %v9340, 0.0
    %9484 = vadd.xlane.f32.xlu0 %v9483
    %v9485 = vpop.xlane.xlu0 %9484
    %v9486 = vsel %vm9050, %v9342, 0.0
    %9487 = vadd.xlane.f32.xlu0 %v9486
    %v9488 = vpop.xlane.xlu0 %9487
    %v9489 = vsel %vm9050, %v9344, 0.0
    %9490 = vadd.xlane.f32.xlu0 %v9489
    %v9491 = vpop.xlane.xlu0 %9490
    %v9492 = vsel %vm9050, %v9346, 0.0
    %9493 = vadd.xlane.f32.xlu0 %v9492
    %v9494 = vpop.xlane.xlu0 %9493
    %v9495 = vsel %vm9050, %v9348, 0.0
    %9496 = vadd.xlane.f32.xlu0 %v9495
    %v9497 = vpop.xlane.xlu0 %9496
    %v9498 = vsel %vm9050, %v9350, 0.0
    %9499 = vadd.xlane.f32.xlu0 %v9498
    %v9500 = vpop.xlane.xlu0 %9499
    %v9501 = vsel %vm9050, %v9352, 0.0
    %9502 = vadd.xlane.f32.xlu0 %v9501
    %v9503 = vpop.xlane.xlu0 %9502
    %v9504 = vsel %vm9050, %v9354, 0.0
    %9505 = vadd.xlane.f32.xlu0 %v9504
    %v9506 = vpop.xlane.xlu0 %9505
    %v9507 = vsel %vm9050, %v9356, 0.0
    %9508 = vadd.xlane.f32.xlu0 %v9507
    %v9509 = vpop.xlane.xlu0 %9508
    %v9510 = vsel %vm9050, %v9358, 0.0
    %9511 = vadd.xlane.f32.xlu0 %v9510
    %v9512 = vpop.xlane.xlu0 %9511
    %v9513 = vsel %vm9050, %v9360, 0.0
    %9514 = vadd.xlane.f32.xlu0 %v9513
    %v9515 = vpop.xlane.xlu0 %9514
    %v9516 = vsel %vm9050, %v9362, 0.0
    %9517 = vadd.xlane.f32.xlu0 %v9516
    %v9518 = vpop.xlane.xlu0 %9517
    %v9519 = vsel %vm9050, %v9364, 0.0
    %9520 = vadd.xlane.f32.xlu0 %v9519
    %v9521 = vpop.xlane.xlu0 %9520
    %v9522 = vsel %vm9050, %v9366, 0.0
    %9523 = vadd.xlane.f32.xlu0 %v9522
    %v9524 = vpop.xlane.xlu0 %9523
    %v9525 = vsel %vm9050, %v9368, 0.0
    %9526 = vadd.xlane.f32.xlu0 %v9525
    %v9527 = vpop.xlane.xlu0 %9526
    %v9528 = vsel %vm9050, %v9370, 0.0
    %9529 = vadd.xlane.f32.xlu0 %v9528
    %v9530 = vpop.xlane.xlu0 %9529
    %v9531 = vsel %vm9050, %v9372, 0.0
    %9532 = vadd.xlane.f32.xlu0 %v9531
    %v9533 = vpop.xlane.xlu0 %9532
    %v9534 = vsel %vm9050, %v9374, 0.0
    %9535 = vadd.xlane.f32.xlu0 %v9534
    %v9536 = vpop.xlane.xlu0 %9535
    %v9537 = vsel %vm9050, %v9376, 0.0
    %9538 = vadd.xlane.f32.xlu0 %v9537
    %v9539 = vpop.xlane.xlu0 %9538
    %v9540 = vsel %vm9050, %v9378, 0.0
    %9541 = vadd.xlane.f32.xlu0 %v9540
    %v9542 = vpop.xlane.xlu0 %9541
    %v9543 = vsel %vm9050, %v9380, 0.0
    %9544 = vadd.xlane.f32.xlu0 %v9543
    %v9545 = vpop.xlane.xlu0 %9544
    %v9546 = vsel %vm9050, %v9382, 0.0
    %9547 = vadd.xlane.f32.xlu0 %v9546
    %v9548 = vpop.xlane.xlu0 %9547
    %v9549 = vsel %vm9050, %v9384, 0.0
    %9550 = vadd.xlane.f32.xlu0 %v9549
    %v9551 = vpop.xlane.xlu0 %9550
    %v9552 = vsel %vm9050, %v9386, 0.0
    %9553 = vadd.xlane.f32.xlu0 %v9552
    %v9554 = vpop.xlane.xlu0 %9553
    %v9555 = vsel %vm9050, %v9388, 0.0
    %9556 = vadd.xlane.f32.xlu0 %v9555
    %v9557 = vpop.xlane.xlu0 %9556
    %v9558 = vsel %vm9050, %v9390, 0.0
    %9559 = vadd.xlane.f32.xlu0 %v9558
    %v9560 = vpop.xlane.xlu0 %9559
    %v9561 = vsel %vm9050, %v9392, 0.0
    %9562 = vadd.xlane.f32.xlu0 %v9561
    %v9563 = vpop.xlane.xlu0 %9562
    %v9564 = vsel %vm9050, %v9394, 0.0
    %9565 = vadd.xlane.f32.xlu0 %v9564
    %v9566 = vpop.xlane.xlu0 %9565
    %v9567 = vsel %vm9050, %v9396, 0.0
    %9568 = vadd.xlane.f32.xlu0 %v9567
    %v9569 = vpop.xlane.xlu0 %9568
    %v9570 = vsel %vm9050, %v9398, 0.0
    %9571 = vadd.xlane.f32.xlu0 %v9570
    %v9572 = vpop.xlane.xlu0 %9571
    %v9573 = vsel %vm9050, %v9400, 0.0
    %9574 = vadd.xlane.f32.xlu0 %v9573
    %v9575 = vpop.xlane.xlu0 %9574
    %v9576 = vsel %vm9050, %v9402, 0.0
    %9577 = vadd.xlane.f32.xlu0 %v9576
    %v9578 = vpop.xlane.xlu0 %9577
    %v9579 = vsel %vm9050, %v9404, 0.0
    %9580 = vadd.xlane.f32.xlu0 %v9579
    %v9581 = vpop.xlane.xlu0 %9580
    %v9582 = vsel %vm9050, %v9406, 0.0
    %9583 = vadd.xlane.f32.xlu0 %v9582
    %v9584 = vpop.xlane.xlu0 %9583
    %v9585 = vsel %vm9050, %v9408, 0.0
    %9586 = vadd.xlane.f32.xlu0 %v9585
    %v9587 = vpop.xlane.xlu0 %9586
    %v9588 = vsel %vm9050, %v9410, 0.0
    %9589 = vadd.xlane.f32.xlu0 %v9588
    %v9590 = vpop.xlane.xlu0 %9589
    %v9591 = vsel %vm9050, %v9412, 0.0
    %9592 = vadd.xlane.f32.xlu0 %v9591
    %v9593 = vpop.xlane.xlu0 %9592
    %v9594 = vsel %vm9050, %v9414, 0.0
    %9595 = vadd.xlane.f32.xlu0 %v9594
    %v9596 = vpop.xlane.xlu0 %9595
    %v9597 = vsel %vm9050, %v9416, 0.0
    %9598 = vadd.xlane.f32.xlu0 %v9597
    %v9599 = vpop.xlane.xlu0 %9598
    %v9600 = vsel %vm9050, %v9418, 0.0
    %9601 = vadd.xlane.f32.xlu0 %v9600
    %v9602 = vpop.xlane.xlu0 %9601
    %v9603 = vsel %vm9050, %v9420, 0.0
    %9604 = vadd.xlane.f32.xlu0 %v9603
    %v9605 = vpop.xlane.xlu0 %9604
    %v9606 = vsel %vm9050, %v9422, 0.0
    %9607 = vadd.xlane.f32.xlu0 %v9606
    %v9608 = vpop.xlane.xlu0 %9607
    %v9609 = vsel %vm9050, %v9424, 0.0
    %9610 = vadd.xlane.f32.xlu0 %v9609
    %v9611 = vpop.xlane.xlu0 %9610
    %v9612 = vsel %vm9050, %v9426, 0.0
    %9613 = vadd.xlane.f32.xlu0 %v9612
    %v9614 = vpop.xlane.xlu0 %9613
    %v9615 = vsel %vm9050, %v9428, 0.0
    %9616 = vadd.xlane.f32.xlu0 %v9615
    %v9617 = vpop.xlane.xlu0 %9616
    %v9618 = vsel %vm9050, %v9430, 0.0
    %9619 = vadd.xlane.f32.xlu0 %v9618
    %v9620 = vpop.xlane.xlu0 %9619
    %v9621 = vsel %vm9050, %v9432, 0.0
    %9622 = vadd.xlane.f32.xlu0 %v9621
    %v9623 = vpop.xlane.xlu0 %9622
    %v9624 = vsel %vm9050, %v9434, 0.0
    %9625 = vadd.xlane.f32.xlu0 %v9624
    %v9626 = vpop.xlane.xlu0 %9625
    %v9627 = vrcp.pop %v9437
    %v9628 = vrcp.pop %v9440
    %v9629 = vrcp.pop %v9443
    %v9630 = vrcp.pop %v9446
    %v9631 = vrcp.pop %v9449
    %v9632 = vrcp.pop %v9452
    %v9633 = vrcp.pop %v9455
    %v9634 = vrcp.pop %v9458
    %v9635 = vrcp.pop %v9461
    %v9636 = vrcp.pop %v9464
    %v9637 = vrcp.pop %v9467
    %v9638 = vrcp.pop %v9470
    %v9639 = vrcp.pop %v9473
    %v9640 = vrcp.pop %v9476
    %v9641 = vrcp.pop %v9479
    %v9642 = vrcp.pop %v9482
    %v9643 = vrcp.pop %v9485
    %v9644 = vrcp.pop %v9488
    %v9645 = vrcp.pop %v9491
    %v9646 = vrcp.pop %v9494
    %v9647 = vrcp.pop %v9497
    %v9648 = vrcp.pop %v9500
    %v9649 = vrcp.pop %v9503
    %v9650 = vrcp.pop %v9506
    %v9651 = vrcp.pop %v9509
    %v9652 = vrcp.pop %v9512
    %v9653 = vrcp.pop %v9515
    %v9654 = vrcp.pop %v9518
    %v9655 = vrcp.pop %v9521
    %v9656 = vrcp.pop %v9524
    %v9657 = vrcp.pop %v9527
    %v9658 = vrcp.pop %v9530
    %v9659 = vrcp.pop %v9533
    %v9660 = vrcp.pop %v9536
    %v9661 = vrcp.pop %v9539
    %v9662 = vrcp.pop %v9542
    %v9663 = vrcp.pop %v9545
    %v9664 = vrcp.pop %v9548
    %v9665 = vrcp.pop %v9551
    %v9666 = vrcp.pop %v9554
    %v9667 = vrcp.pop %v9557
    %v9668 = vrcp.pop %v9560
    %v9669 = vrcp.pop %v9563
    %v9670 = vrcp.pop %v9566
    %v9671 = vrcp.pop %v9569
    %v9672 = vrcp.pop %v9572
    %v9673 = vrcp.pop %v9575
    %v9674 = vrcp.pop %v9578
    %v9675 = vrcp.pop %v9581
    %v9676 = vrcp.pop %v9584
    %v9677 = vrcp.pop %v9587
    %v9678 = vrcp.pop %v9590
    %v9679 = vrcp.pop %v9593
    %v9680 = vrcp.pop %v9596
    %v9681 = vrcp.pop %v9599
    %v9682 = vrcp.pop %v9602
    %v9683 = vrcp.pop %v9605
    %v9684 = vrcp.pop %v9608
    %v9685 = vrcp.pop %v9611
    %v9686 = vrcp.pop %v9614
    %v9687 = vrcp.pop %v9617
    %v9688 = vrcp.pop %v9620
    %v9689 = vrcp.pop %v9623
    %v9690 = vrcp.pop %v9626
    %v9691 = vmul.f32 %v9308, %v9627
    %v9692 = vmul.f32 %v9310, %v9628
    %v9693 = vmul.f32 %v9312, %v9629
    %v9694 = vmul.f32 %v9314, %v9630
    %v9695 = vmul.f32 %v9316, %v9631
    %v9696 = vmul.f32 %v9318, %v9632
    %v9697 = vmul.f32 %v9320, %v9633
    %v9698 = vmul.f32 %v9322, %v9634
    %v9699 = vmul.f32 %v9324, %v9635
    %v9700 = vmul.f32 %v9326, %v9636
    %v9701 = vmul.f32 %v9328, %v9637
    %v9702 = vmul.f32 %v9330, %v9638
    %v9703 = vmul.f32 %v9332, %v9639
    %v9704 = vmul.f32 %v9334, %v9640
    %v9705 = vmul.f32 %v9336, %v9641
    %v9706 = vmul.f32 %v9338, %v9642
    %v9707 = vmul.f32 %v9340, %v9643
    %v9708 = vmul.f32 %v9342, %v9644
    %v9709 = vmul.f32 %v9344, %v9645
    %v9710 = vmul.f32 %v9346, %v9646
    %v9711 = vmul.f32 %v9348, %v9647
    %v9712 = vmul.f32 %v9350, %v9648
    %v9713 = vmul.f32 %v9352, %v9649
    %v9714 = vmul.f32 %v9354, %v9650
    %v9715 = vmul.f32 %v9356, %v9651
    %v9716 = vmul.f32 %v9358, %v9652
    %v9717 = vmul.f32 %v9360, %v9653
    %v9718 = vmul.f32 %v9362, %v9654
    %v9719 = vmul.f32 %v9364, %v9655
    %v9720 = vmul.f32 %v9366, %v9656
    %v9721 = vmul.f32 %v9368, %v9657
    %v9722 = vmul.f32 %v9370, %v9658
    %v9723 = vmul.f32 %v9372, %v9659
    %v9724 = vmul.f32 %v9374, %v9660
    %v9725 = vmul.f32 %v9376, %v9661
    %v9726 = vmul.f32 %v9378, %v9662
    %v9727 = vmul.f32 %v9380, %v9663
    %v9728 = vmul.f32 %v9382, %v9664
    %v9729 = vmul.f32 %v9384, %v9665
    %v9730 = vmul.f32 %v9386, %v9666
    %v9731 = vmul.f32 %v9388, %v9667
    %v9732 = vmul.f32 %v9390, %v9668
    %v9733 = vmul.f32 %v9392, %v9669
    %v9734 = vmul.f32 %v9394, %v9670
    %v9735 = vmul.f32 %v9396, %v9671
    %v9736 = vmul.f32 %v9398, %v9672
    %v9737 = vmul.f32 %v9400, %v9673
    %v9738 = vmul.f32 %v9402, %v9674
    %v9739 = vmul.f32 %v9404, %v9675
    %v9740 = vmul.f32 %v9406, %v9676
    %v9741 = vmul.f32 %v9408, %v9677
    %v9742 = vmul.f32 %v9410, %v9678
    %v9743 = vmul.f32 %v9412, %v9679
    %v9744 = vmul.f32 %v9414, %v9680
    %v9745 = vmul.f32 %v9416, %v9681
    %v9746 = vmul.f32 %v9418, %v9682
    %v9747 = vmul.f32 %v9420, %v9683
    %v9748 = vmul.f32 %v9422, %v9684
    %v9749 = vmul.f32 %v9424, %v9685
    %v9750 = vmul.f32 %v9426, %v9686
    %v9751 = vmul.f32 %v9428, %v9687
    %v9752 = vmul.f32 %v9430, %v9688
    %v9753 = vmul.f32 %v9432, %v9689
    %v9754 = vmul.f32 %v9434, %v9690
    %v9755 = vpack.c.bf16 %v9692, %v9691
    %v9756 = vpack.c.bf16 %v9694, %v9693
    %v9757 = vpack.c.bf16 %v9696, %v9695
    %v9758 = vpack.c.bf16 %v9698, %v9697
    %v9759 = vpack.c.bf16 %v9700, %v9699
    %v9760 = vpack.c.bf16 %v9702, %v9701
    %v9761 = vpack.c.bf16 %v9704, %v9703
    %v9762 = vpack.c.bf16 %v9706, %v9705
    %v9763 = vpack.c.bf16 %v9708, %v9707
    %v9764 = vpack.c.bf16 %v9710, %v9709
    %v9765 = vpack.c.bf16 %v9712, %v9711
    %v9766 = vpack.c.bf16 %v9714, %v9713
    %v9767 = vpack.c.bf16 %v9716, %v9715
    %v9768 = vpack.c.bf16 %v9718, %v9717
    %v9769 = vpack.c.bf16 %v9720, %v9719
    %v9770 = vpack.c.bf16 %v9722, %v9721
    %v9771 = vpack.c.bf16 %v9724, %v9723
    %v9772 = vpack.c.bf16 %v9726, %v9725
    %v9773 = vpack.c.bf16 %v9728, %v9727
    %v9774 = vpack.c.bf16 %v9730, %v9729
    %v9775 = vpack.c.bf16 %v9732, %v9731
    %v9776 = vpack.c.bf16 %v9734, %v9733
    %v9777 = vpack.c.bf16 %v9736, %v9735
    %v9778 = vpack.c.bf16 %v9738, %v9737
    %v9779 = vpack.c.bf16 %v9740, %v9739
    %v9780 = vpack.c.bf16 %v9742, %v9741
    %v9781 = vpack.c.bf16 %v9744, %v9743
    %v9782 = vpack.c.bf16 %v9746, %v9745
    %v9783 = vpack.c.bf16 %v9748, %v9747
    %v9784 = vpack.c.bf16 %v9750, %v9749
    %v9785 = vpack.c.bf16 %v9752, %v9751
    %v9786 = vpack.c.bf16 %v9754, %v9753
    %v9787 = vpack.c.bf16 %v6461, %v6393
    %v9788 = vpack.c.bf16 %v6462, %v6394
    %v9789 = vpack.c.bf16 %v6463, %v6395
    %v9790 = vpack.c.bf16 %v6464, %v6396
    %v9791 = vpack.c.bf16 %v6597, %v6529
    %v9792 = vpack.c.bf16 %v6598, %v6530
    %v9793 = vpack.c.bf16 %v6599, %v6531
    %v9794 = vpack.c.bf16 %v6600, %v6532
    %v9795 = vpack.c.bf16 %v6733, %v6665
    %v9796 = vpack.c.bf16 %v6734, %v6666
    %v9797 = vpack.c.bf16 %v6735, %v6667
    %v9798 = vpack.c.bf16 %v6736, %v6668
    %v9799 = vpack.c.bf16 %v6869, %v6801
    %v9800 = vpack.c.bf16 %v6870, %v6802
    %v9801 = vpack.c.bf16 %v6871, %v6803
    %v9802 = vpack.c.bf16 %v6872, %v6804
    %v9803 = vpack.c.bf16 %v7005, %v6937
    %v9804 = vpack.c.bf16 %v7006, %v6938
    %v9805 = vpack.c.bf16 %v7007, %v6939
    %v9806 = vpack.c.bf16 %v7008, %v6940
    %v9807 = vpack.c.bf16 %v7141, %v7073
    %v9808 = vpack.c.bf16 %v7142, %v7074
    %v9809 = vpack.c.bf16 %v7143, %v7075
    %v9810 = vpack.c.bf16 %v7144, %v7076
    %v9811 = vpack.c.bf16 %v7277, %v7209
    %v9812 = vpack.c.bf16 %v7278, %v7210
    %v9813 = vpack.c.bf16 %v7279, %v7211
    %v9814 = vpack.c.bf16 %v7280, %v7212
    %v9815 = vpack.c.bf16 %v7413, %v7345
    %v9816 = vpack.c.bf16 %v7414, %v7346
    %v9817 = vpack.c.bf16 %v7415, %v7347
    %v9818 = vpack.c.bf16 %v7416, %v7348
    %v9820 = vsel %vm9050, %v9755, 0
    %9822 = vmatprep.subr.bf16.mxu0 0
    %9823 = vmatpush1.bf16.msra.mxu0 %v9787
    %9824 = vmatprep.subr.bf16.mxu0 0
    %9825 = vmatpush1.bf16.msra.mxu0 0
    %9826 = vmatprep.subr.bf16.mxu0 0
    %9827 = vmatpush1.bf16.msra.mxu0 0
    %9828 = vmatprep.subr.bf16.mxu0 0
    %9829 = vmatpush1.bf16.msra.mxu0 0
    %9830 = vmatprep.subr.bf16.mxu0 0
    %9831 = vmatpush1.bf16.msra.mxu0 0
    %9832 = vmatprep.subr.bf16.mxu0 0
    %9833 = vmatpush1.bf16.msra.mxu0 0
    %9834 = vmatprep.subr.bf16.mxu0 0
    %9835 = vmatpush1.bf16.msra.mxu0 0
    %9836 = vmatprep.subr.bf16.mxu0 0
    %9837 = vmatpush1.bf16.msra.mxu0 0
    %9838 = vmatprep.subr.bf16.mxu0 0
    %9839 = vmatpush1.bf16.msra.mxu0 0
    %9840 = vmatprep.subr.bf16.mxu0 0
    %9841 = vmatpush1.bf16.msra.mxu0 0
    %9842 = vmatprep.subr.bf16.mxu0 0
    %9843 = vmatpush1.bf16.msra.mxu0 0
    %9844 = vmatprep.subr.bf16.mxu0 0
    %9845 = vmatpush1.bf16.msra.mxu0 0
    %9846 = vmatprep.subr.bf16.mxu0 0
    %9847 = vmatpush1.bf16.msra.mxu0 0
    %9848 = vmatprep.subr.bf16.mxu0 0
    %9849 = vmatpush1.bf16.msra.mxu0 0
    %9850 = vmatprep.subr.bf16.mxu0 0
    %9851 = vmatpush1.bf16.msra.mxu0 0
    %9852 = vmatprep.subr.bf16.mxu0 0
    %9853 = vmatpush1.bf16.msra.mxu0 0
    %9854 = vmatprep.mubr.bf16.mxu0 0
    %9855 = vmatmul.mubr.bf16.gmra.mrb[0].mxu0 %v9820
    %v9856 = vpop.f32.mrb[0].mxu0
    %v9857 = vadd.f32 0.0, %v9856
    %v9858 = vpop.f32.mrb[0].mxu0
    %v9859 = vpop.f32.mrb[0].mxu0
    %v9860 = vadd.f32 0.0, %v9859
    %v9861 = vpop.f32.mrb[0].mxu0
    %9862 = vdwg.mxu0
    %v9864 = vsel %vm9050, %v9756, 0
    %9866 = vmatprep.subr.bf16.mxu0 0
    %9867 = vmatpush1.bf16.msra.mxu0 %v9788
    %9868 = vmatprep.subr.bf16.mxu0 0
    %9869 = vmatpush1.bf16.msra.mxu0 0
    %9870 = vmatprep.subr.bf16.mxu0 0
    %9871 = vmatpush1.bf16.msra.mxu0 0
    %9872 = vmatprep.subr.bf16.mxu0 0
    %9873 = vmatpush1.bf16.msra.mxu0 0
    %9874 = vmatprep.subr.bf16.mxu0 0
    %9875 = vmatpush1.bf16.msra.mxu0 0
    %9876 = vmatprep.subr.bf16.mxu0 0
    %9877 = vmatpush1.bf16.msra.mxu0 0
    %9878 = vmatprep.subr.bf16.mxu0 0
    %9879 = vmatpush1.bf16.msra.mxu0 0
    %9880 = vmatprep.subr.bf16.mxu0 0
    %9881 = vmatpush1.bf16.msra.mxu0 0
    %9882 = vmatprep.subr.bf16.mxu0 0
    %9883 = vmatpush1.bf16.msra.mxu0 0
    %9884 = vmatprep.subr.bf16.mxu0 0
    %9885 = vmatpush1.bf16.msra.mxu0 0
    %9886 = vmatprep.subr.bf16.mxu0 0
    %9887 = vmatpush1.bf16.msra.mxu0 0
    %9888 = vmatprep.subr.bf16.mxu0 0
    %9889 = vmatpush1.bf16.msra.mxu0 0
    %9890 = vmatprep.subr.bf16.mxu0 0
    %9891 = vmatpush1.bf16.msra.mxu0 0
    %9892 = vmatprep.subr.bf16.mxu0 0
    %9893 = vmatpush1.bf16.msra.mxu0 0
    %9894 = vmatprep.subr.bf16.mxu0 0
    %9895 = vmatpush1.bf16.msra.mxu0 0
    %9896 = vmatprep.subr.bf16.mxu0 0
    %9897 = vmatpush1.bf16.msra.mxu0 0
    %9898 = vmatprep.mubr.bf16.mxu0 0
    %9899 = vmatmul.mubr.bf16.gmra.mrb[0].mxu0 %v9864
    %v9900 = vpop.f32.mrb[0].mxu0
    %v9901 = vadd.f32 0.0, %v9900
    %v9902 = vpop.f32.mrb[0].mxu0
    %v9903 = vpop.f32.mrb[0].mxu0
    %v9904 = vadd.f32 0.0, %v9903
    %v9905 = vpop.f32.mrb[0].mxu0
    %9906 = vdwg.mxu0
    %v9908 = vsel %vm9050, %v9757, 0
    %9910 = vmatprep.subr.bf16.mxu0 0
    %9911 = vmatpush1.bf16.msra.mxu0 %v9789
    %9912 = vmatprep.subr.bf16.mxu0 0
    %9913 = vmatpush1.bf16.msra.mxu0 0
    %9914 = vmatprep.subr.bf16.mxu0 0
    %9915 = vmatpush1.bf16.msra.mxu0 0
    %9916 = vmatprep.subr.bf16.mxu0 0
    %9917 = vmatpush1.bf16.msra.mxu0 0
    %9918 = vmatprep.subr.bf16.mxu0 0
    %9919 = vmatpush1.bf16.msra.mxu0 0
    %9920 = vmatprep.subr.bf16.mxu0 0
    %9921 = vmatpush1.bf16.msra.mxu0 0
    %9922 = vmatprep.subr.bf16.mxu0 0
    %9923 = vmatpush1.bf16.msra.mxu0 0
    %9924 = vmatprep.subr.bf16.mxu0 0
    %9925 = vmatpush1.bf16.msra.mxu0 0
    %9926 = vmatprep.subr.bf16.mxu0 0
    %9927 = vmatpush1.bf16.msra.mxu0 0
    %9928 = vmatprep.subr.bf16.mxu0 0
    %9929 = vmatpush1.bf16.msra.mxu0 0
    %9930 = vmatprep.subr.bf16.mxu0 0
    %9931 = vmatpush1.bf16.msra.mxu0 0
    %9932 = vmatprep.subr.bf16.mxu0 0
    %9933 = vmatpush1.bf16.msra.mxu0 0
    %9934 = vmatprep.subr.bf16.mxu0 0
    %9935 = vmatpush1.bf16.msra.mxu0 0
    %9936 = vmatprep.subr.bf16.mxu0 0
    %9937 = vmatpush1.bf16.msra.mxu0 0
    %9938 = vmatprep.subr.bf16.mxu0 0
    %9939 = vmatpush1.bf16.msra.mxu0 0
    %9940 = vmatprep.subr.bf16.mxu0 0
    %9941 = vmatpush1.bf16.msra.mxu0 0
    %9942 = vmatprep.mubr.bf16.mxu0 0
    %9943 = vmatmul.mubr.bf16.gmra.mrb[0].mxu0 %v9908
    %v9944 = vpop.f32.mrb[0].mxu0
    %v9945 = vadd.f32 0.0, %v9944
    %v9946 = vpop.f32.mrb[0].mxu0
    %v9947 = vpop.f32.mrb[0].mxu0
    %v9948 = vadd.f32 0.0, %v9947
    %v9949 = vpop.f32.mrb[0].mxu0
    %9950 = vdwg.mxu0
    %v9952 = vsel %vm9050, %v9758, 0
    %9954 = vmatprep.subr.bf16.mxu0 0
    %9955 = vmatpush1.bf16.msra.mxu0 %v9790
    %9956 = vmatprep.subr.bf16.mxu0 0
    %9957 = vmatpush1.bf16.msra.mxu0 0
    %9958 = vmatprep.subr.bf16.mxu0 0
    %9959 = vmatpush1.bf16.msra.mxu0 0
    %9960 = vmatprep.subr.bf16.mxu0 0
    %9961 = vmatpush1.bf16.msra.mxu0 0
    %9962 = vmatprep.subr.bf16.mxu0 0
    %9963 = vmatpush1.bf16.msra.mxu0 0
    %9964 = vmatprep.subr.bf16.mxu0 0
    %9965 = vmatpush1.bf16.msra.mxu0 0
    %9966 = vmatprep.subr.bf16.mxu0 0
    %9967 = vmatpush1.bf16.msra.mxu0 0
    %9968 = vmatprep.subr.bf16.mxu0 0
    %9969 = vmatpush1.bf16.msra.mxu0 0
    %9970 = vmatprep.subr.bf16.mxu0 0
    %9971 = vmatpush1.bf16.msra.mxu0 0
    %9972 = vmatprep.subr.bf16.mxu0 0
    %9973 = vmatpush1.bf16.msra.mxu0 0
    %9974 = vmatprep.subr.bf16.mxu0 0
    %9975 = vmatpush1.bf16.msra.mxu0 0
    %9976 = vmatprep.subr.bf16.mxu0 0
    %9977 = vmatpush1.bf16.msra.mxu0 0
    %9978 = vmatprep.subr.bf16.mxu0 0
    %9979 = vmatpush1.bf16.msra.mxu0 0
    %9980 = vmatprep.subr.bf16.mxu0 0
    %9981 = vmatpush1.bf16.msra.mxu0 0
    %9982 = vmatprep.subr.bf16.mxu0 0
    %9983 = vmatpush1.bf16.msra.mxu0 0
    %9984 = vmatprep.subr.bf16.mxu0 0
    %9985 = vmatpush1.bf16.msra.mxu0 0
    %9986 = vmatprep.mubr.bf16.mxu0 0
    %9987 = vmatmul.mubr.bf16.gmra.mrb[0].mxu0 %v9952
    %v9988 = vpop.f32.mrb[0].mxu0
    %v9989 = vadd.f32 0.0, %v9988
    %v9990 = vpop.f32.mrb[0].mxu0
    %v9991 = vpop.f32.mrb[0].mxu0
    %v9992 = vadd.f32 0.0, %v9991
    %v9993 = vpop.f32.mrb[0].mxu0
    %9994 = vdwg.mxu0
    %v9996 = vsel %vm9050, %v9759, 0
    %9998 = vmatprep.subr.bf16.mxu0 0
    %9999 = vmatpush1.bf16.msra.mxu0 %v9791
    %10000 = vmatprep.subr.bf16.mxu0 0
    %10001 = vmatpush1.bf16.msra.mxu0 0
    %10002 = vmatprep.subr.bf16.mxu0 0
    %10003 = vmatpush1.bf16.msra.mxu0 0
    %10004 = vmatprep.subr.bf16.mxu0 0
    %10005 = vmatpush1.bf16.msra.mxu0 0
    %10006 = vmatprep.subr.bf16.mxu0 0
    %10007 = vmatpush1.bf16.msra.mxu0 0
    %10008 = vmatprep.subr.bf16.mxu0 0
    %10009 = vmatpush1.bf16.msra.mxu0 0
    %10010 = vmatprep.subr.bf16.mxu0 0
    %10011 = vmatpush1.bf16.msra.mxu0 0
    %10012 = vmatprep.subr.bf16.mxu0 0
    %10013 = vmatpush1.bf16.msra.mxu0 0
    %10014 = vmatprep.subr.bf16.mxu0 0
    %10015 = vmatpush1.bf16.msra.mxu0 0
    %10016 = vmatprep.subr.bf16.mxu0 0
    %10017 = vmatpush1.bf16.msra.mxu0 0
    %10018 = vmatprep.subr.bf16.mxu0 0
    %10019 = vmatpush1.bf16.msra.mxu0 0
    %10020 = vmatprep.subr.bf16.mxu0 0
    %10021 = vmatpush1.bf16.msra.mxu0 0
    %10022 = vmatprep.subr.bf16.mxu0 0
    %10023 = vmatpush1.bf16.msra.mxu0 0
    %10024 = vmatprep.subr.bf16.mxu0 0
    %10025 = vmatpush1.bf16.msra.mxu0 0
    %10026 = vmatprep.subr.bf16.mxu0 0
    %10027 = vmatpush1.bf16.msra.mxu0 0
    %10028 = vmatprep.subr.bf16.mxu0 0
    %10029 = vmatpush1.bf16.msra.mxu0 0
    %10030 = vmatprep.mubr.bf16.mxu0 0
    %10031 = vmatmul.mubr.bf16.gmra.mrb[0].mxu0 %v9996
    %v10032 = vpop.f32.mrb[0].mxu0
    %v10033 = vadd.f32 0.0, %v10032
    %v10034 = vpop.f32.mrb[0].mxu0
    %v10035 = vpop.f32.mrb[0].mxu0
    %v10036 = vadd.f32 0.0, %v10035
    %v10037 = vpop.f32.mrb[0].mxu0
    %10038 = vdwg.mxu0
    %v10040 = vsel %vm9050, %v9760, 0
    %10042 = vmatprep.subr.bf16.mxu0 0
    %10043 = vmatpush1.bf16.msra.mxu0 %v9792
    %10044 = vmatprep.subr.bf16.mxu0 0
    %10045 = vmatpush1.bf16.msra.mxu0 0
    %10046 = vmatprep.subr.bf16.mxu0 0
    %10047 = vmatpush1.bf16.msra.mxu0 0
    %10048 = vmatprep.subr.bf16.mxu0 0
    %10049 = vmatpush1.bf16.msra.mxu0 0
    %10050 = vmatprep.subr.bf16.mxu0 0
    %10051 = vmatpush1.bf16.msra.mxu0 0
    %10052 = vmatprep.subr.bf16.mxu0 0
    %10053 = vmatpush1.bf16.msra.mxu0 0
    %10054 = vmatprep.subr.bf16.mxu0 0
    %10055 = vmatpush1.bf16.msra.mxu0 0
    %10056 = vmatprep.subr.bf16.mxu0 0
    %10057 = vmatpush1.bf16.msra.mxu0 0
    %10058 = vmatprep.subr.bf16.mxu0 0
    %10059 = vmatpush1.bf16.msra.mxu0 0
    %10060 = vmatprep.subr.bf16.mxu0 0
    %10061 = vmatpush1.bf16.msra.mxu0 0
    %10062 = vmatprep.subr.bf16.mxu0 0
    %10063 = vmatpush1.bf16.msra.mxu0 0
    %10064 = vmatprep.subr.bf16.mxu0 0
    %10065 = vmatpush1.bf16.msra.mxu0 0
    %10066 = vmatprep.subr.bf16.mxu0 0
    %10067 = vmatpush1.bf16.msra.mxu0 0
    %10068 = vmatprep.subr.bf16.mxu0 0
    %10069 = vmatpush1.bf16.msra.mxu0 0
    %10070 = vmatprep.subr.bf16.mxu0 0
    %10071 = vmatpush1.bf16.msra.mxu0 0
    %10072 = vmatprep.subr.bf16.mxu0 0
    %10073 = vmatpush1.bf16.msra.mxu0 0
    %10074 = vmatprep.mubr.bf16.mxu0 0
    %10075 = vmatmul.mubr.bf16.gmra.mrb[0].mxu0 %v10040
    %v10076 = vpop.f32.mrb[0].mxu0
    %v10077 = vadd.f32 0.0, %v10076
    %v10078 = vpop.f32.mrb[0].mxu0
    %v10079 = vpop.f32.mrb[0].mxu0
    %v10080 = vadd.f32 0.0, %v10079
    %v10081 = vpop.f32.mrb[0].mxu0
    %10082 = vdwg.mxu0
    %v10084 = vsel %vm9050, %v9761, 0
    %10086 = vmatprep.subr.bf16.mxu0 0
    %10087 = vmatpush1.bf16.msra.mxu0 %v9793
    %10088 = vmatprep.subr.bf16.mxu0 0
    %10089 = vmatpush1.bf16.msra.mxu0 0
    %10090 = vmatprep.subr.bf16.mxu0 0
    %10091 = vmatpush1.bf16.msra.mxu0 0
    %10092 = vmatprep.subr.bf16.mxu0 0
    %10093 = vmatpush1.bf16.msra.mxu0 0
    %10094 = vmatprep.subr.bf16.mxu0 0
    %10095 = vmatpush1.bf16.msra.mxu0 0
    %10096 = vmatprep.subr.bf16.mxu0 0
    %10097 = vmatpush1.bf16.msra.mxu0 0
    %10098 = vmatprep.subr.bf16.mxu0 0
    %10099 = vmatpush1.bf16.msra.mxu0 0
    %10100 = vmatprep.subr.bf16.mxu0 0
    %10101 = vmatpush1.bf16.msra.mxu0 0
    %10102 = vmatprep.subr.bf16.mxu0 0
    %10103 = vmatpush1.bf16.msra.mxu0 0
    %10104 = vmatprep.subr.bf16.mxu0 0
    %10105 = vmatpush1.bf16.msra.mxu0 0
    %10106 = vmatprep.subr.bf16.mxu0 0
    %10107 = vmatpush1.bf16.msra.mxu0 0
    %10108 = vmatprep.subr.bf16.mxu0 0
    %10109 = vmatpush1.bf16.msra.mxu0 0
    %10110 = vmatprep.subr.bf16.mxu0 0
    %10111 = vmatpush1.bf16.msra.mxu0 0
    %10112 = vmatprep.subr.bf16.mxu0 0
    %10113 = vmatpush1.bf16.msra.mxu0 0
    %10114 = vmatprep.subr.bf16.mxu0 0
    %10115 = vmatpush1.bf16.msra.mxu0 0
    %10116 = vmatprep.subr.bf16.mxu0 0
    %10117 = vmatpush1.bf16.msra.mxu0 0
    %10118 = vmatprep.mubr.bf16.mxu0 0
    %10119 = vmatmul.mubr.bf16.gmra.mrb[0].mxu0 %v10084
    %v10120 = vpop.f32.mrb[0].mxu0
    %v10121 = vadd.f32 0.0, %v10120
    %v10122 = vpop.f32.mrb[0].mxu0
    %v10123 = vpop.f32.mrb[0].mxu0
    %v10124 = vadd.f32 0.0, %v10123
    %v10125 = vpop.f32.mrb[0].mxu0
    %10126 = vdwg.mxu0
    %v10128 = vsel %vm9050, %v9762, 0
    %10130 = vmatprep.subr.bf16.mxu0 0
    %10131 = vmatpush1.bf16.msra.mxu0 %v9794
    %10132 = vmatprep.subr.bf16.mxu0 0
    %10133 = vmatpush1.bf16.msra.mxu0 0
    %10134 = vmatprep.subr.bf16.mxu0 0
    %10135 = vmatpush1.bf16.msra.mxu0 0
    %10136 = vmatprep.subr.bf16.mxu0 0
    %10137 = vmatpush1.bf16.msra.mxu0 0
    %10138 = vmatprep.subr.bf16.mxu0 0
    %10139 = vmatpush1.bf16.msra.mxu0 0
    %10140 = vmatprep.subr.bf16.mxu0 0
    %10141 = vmatpush1.bf16.msra.mxu0 0
    %10142 = vmatprep.subr.bf16.mxu0 0
    %10143 = vmatpush1.bf16.msra.mxu0 0
    %10144 = vmatprep.subr.bf16.mxu0 0
    %10145 = vmatpush1.bf16.msra.mxu0 0
    %10146 = vmatprep.subr.bf16.mxu0 0
    %10147 = vmatpush1.bf16.msra.mxu0 0
    %10148 = vmatprep.subr.bf16.mxu0 0
    %10149 = vmatpush1.bf16.msra.mxu0 0
    %10150 = vmatprep.subr.bf16.mxu0 0
    %10151 = vmatpush1.bf16.msra.mxu0 0
    %10152 = vmatprep.subr.bf16.mxu0 0
    %10153 = vmatpush1.bf16.msra.mxu0 0
    %10154 = vmatprep.subr.bf16.mxu0 0
    %10155 = vmatpush1.bf16.msra.mxu0 0
    %10156 = vmatprep.subr.bf16.mxu0 0
    %10157 = vmatpush1.bf16.msra.mxu0 0
    %10158 = vmatprep.subr.bf16.mxu0 0
    %10159 = vmatpush1.bf16.msra.mxu0 0
    %10160 = vmatprep.subr.bf16.mxu0 0
    %10161 = vmatpush1.bf16.msra.mxu0 0
    %10162 = vmatprep.mubr.bf16.mxu0 0
    %10163 = vmatmul.mubr.bf16.gmra.mrb[0].mxu0 %v10128
    %v10164 = vpop.f32.mrb[0].mxu0
    %v10165 = vadd.f32 0.0, %v10164
    %v10166 = vpop.f32.mrb[0].mxu0
    %v10167 = vpop.f32.mrb[0].mxu0
    %v10168 = vadd.f32 0.0, %v10167
    %v10169 = vpop.f32.mrb[0].mxu0
    %10170 = vdwg.mxu0
    %v10172 = vsel %vm9050, %v9763, 0
    %10174 = vmatprep.subr.bf16.mxu0 0
    %10175 = vmatpush1.bf16.msra.mxu0 %v9795
    %10176 = vmatprep.subr.bf16.mxu0 0
    %10177 = vmatpush1.bf16.msra.mxu0 0
    %10178 = vmatprep.subr.bf16.mxu0 0
    %10179 = vmatpush1.bf16.msra.mxu0 0
    %10180 = vmatprep.subr.bf16.mxu0 0
    %10181 = vmatpush1.bf16.msra.mxu0 0
    %10182 = vmatprep.subr.bf16.mxu0 0
    %10183 = vmatpush1.bf16.msra.mxu0 0
    %10184 = vmatprep.subr.bf16.mxu0 0
    %10185 = vmatpush1.bf16.msra.mxu0 0
    %10186 = vmatprep.subr.bf16.mxu0 0
    %10187 = vmatpush1.bf16.msra.mxu0 0
    %10188 = vmatprep.subr.bf16.mxu0 0
    %10189 = vmatpush1.bf16.msra.mxu0 0
    %10190 = vmatprep.subr.bf16.mxu0 0
    %10191 = vmatpush1.bf16.msra.mxu0 0
    %10192 = vmatprep.subr.bf16.mxu0 0
    %10193 = vmatpush1.bf16.msra.mxu0 0
    %10194 = vmatprep.subr.bf16.mxu0 0
    %10195 = vmatpush1.bf16.msra.mxu0 0
    %10196 = vmatprep.subr.bf16.mxu0 0
    %10197 = vmatpush1.bf16.msra.mxu0 0
    %10198 = vmatprep.subr.bf16.mxu0 0
    %10199 = vmatpush1.bf16.msra.mxu0 0
    %10200 = vmatprep.subr.bf16.mxu0 0
    %10201 = vmatpush1.bf16.msra.mxu0 0
    %10202 = vmatprep.subr.bf16.mxu0 0
    %10203 = vmatpush1.bf16.msra.mxu0 0
    %10204 = vmatprep.subr.bf16.mxu0 0
    %10205 = vmatpush1.bf16.msra.mxu0 0
    %10206 = vmatprep.mubr.bf16.mxu0 0
    %10207 = vmatmul.mubr.bf16.gmra.mrb[0].mxu0 %v10172
    %v10208 = vpop.f32.mrb[0].mxu0
    %v10209 = vadd.f32 0.0, %v10208
    %v10210 = vpop.f32.mrb[0].mxu0
    %v10211 = vpop.f32.mrb[0].mxu0
    %v10212 = vadd.f32 0.0, %v10211
    %v10213 = vpop.f32.mrb[0].mxu0
    %10214 = vdwg.mxu0
    %v10216 = vsel %vm9050, %v9764, 0
    %10218 = vmatprep.subr.bf16.mxu0 0
    %10219 = vmatpush1.bf16.msra.mxu0 %v9796
    %10220 = vmatprep.subr.bf16.mxu0 0
    %10221 = vmatpush1.bf16.msra.mxu0 0
    %10222 = vmatprep.subr.bf16.mxu0 0
    %10223 = vmatpush1.bf16.msra.mxu0 0
    %10224 = vmatprep.subr.bf16.mxu0 0
    %10225 = vmatpush1.bf16.msra.mxu0 0
    %10226 = vmatprep.subr.bf16.mxu0 0
    %10227 = vmatpush1.bf16.msra.mxu0 0
    %10228 = vmatprep.subr.bf16.mxu0 0
    %10229 = vmatpush1.bf16.msra.mxu0 0
    %10230 = vmatprep.subr.bf16.mxu0 0
    %10231 = vmatpush1.bf16.msra.mxu0 0
    %10232 = vmatprep.subr.bf16.mxu0 0
    %10233 = vmatpush1.bf16.msra.mxu0 0
    %10234 = vmatprep.subr.bf16.mxu0 0
    %10235 = vmatpush1.bf16.msra.mxu0 0
    %10236 = vmatprep.subr.bf16.mxu0 0
    %10237 = vmatpush1.bf16.msra.mxu0 0
    %10238 = vmatprep.subr.bf16.mxu0 0
    %10239 = vmatpush1.bf16.msra.mxu0 0
    %10240 = vmatprep.subr.bf16.mxu0 0
    %10241 = vmatpush1.bf16.msra.mxu0 0
    %10242 = vmatprep.subr.bf16.mxu0 0
    %10243 = vmatpush1.bf16.msra.mxu0 0
    %10244 = vmatprep.subr.bf16.mxu0 0
    %10245 = vmatpush1.bf16.msra.mxu0 0
    %10246 = vmatprep.subr.bf16.mxu0 0
    %10247 = vmatpush1.bf16.msra.mxu0 0
    %10248 = vmatprep.subr.bf16.mxu0 0
    %10249 = vmatpush1.bf16.msra.mxu0 0
    %10250 = vmatprep.mubr.bf16.mxu0 0
    %10251 = vmatmul.mubr.bf16.gmra.mrb[0].mxu0 %v10216
    %v10252 = vpop.f32.mrb[0].mxu0
    %v10253 = vadd.f32 0.0, %v10252
    %v10254 = vpop.f32.mrb[0].mxu0
    %v10255 = vpop.f32.mrb[0].mxu0
    %v10256 = vadd.f32 0.0, %v10255
    %v10257 = vpop.f32.mrb[0].mxu0
    %10258 = vdwg.mxu0
    %v10260 = vsel %vm9050, %v9765, 0
    %10262 = vmatprep.subr.bf16.mxu0 0
    %10263 = vmatpush1.bf16.msra.mxu0 %v9797
    %10264 = vmatprep.subr.bf16.mxu0 0
    %10265 = vmatpush1.bf16.msra.mxu0 0
    %10266 = vmatprep.subr.bf16.mxu0 0
    %10267 = vmatpush1.bf16.msra.mxu0 0
    %10268 = vmatprep.subr.bf16.mxu0 0
    %10269 = vmatpush1.bf16.msra.mxu0 0
    %10270 = vmatprep.subr.bf16.mxu0 0
    %10271 = vmatpush1.bf16.msra.mxu0 0
    %10272 = vmatprep.subr.bf16.mxu0 0
    %10273 = vmatpush1.bf16.msra.mxu0 0
    %10274 = vmatprep.subr.bf16.mxu0 0
    %10275 = vmatpush1.bf16.msra.mxu0 0
    %10276 = vmatprep.subr.bf16.mxu0 0
    %10277 = vmatpush1.bf16.msra.mxu0 0
    %10278 = vmatprep.subr.bf16.mxu0 0
    %10279 = vmatpush1.bf16.msra.mxu0 0
    %10280 = vmatprep.subr.bf16.mxu0 0
    %10281 = vmatpush1.bf16.msra.mxu0 0
    %10282 = vmatprep.subr.bf16.mxu0 0
    %10283 = vmatpush1.bf16.msra.mxu0 0
    %10284 = vmatprep.subr.bf16.mxu0 0
    %10285 = vmatpush1.bf16.msra.mxu0 0
    %10286 = vmatprep.subr.bf16.mxu0 0
    %10287 = vmatpush1.bf16.msra.mxu0 0
    %10288 = vmatprep.subr.bf16.mxu0 0
    %10289 = vmatpush1.bf16.msra.mxu0 0
    %10290 = vmatprep.subr.bf16.mxu0 0
    %10291 = vmatpush1.bf16.msra.mxu0 0
    %10292 = vmatprep.subr.bf16.mxu0 0
    %10293 = vmatpush1.bf16.msra.mxu0 0
    %10294 = vmatprep.mubr.bf16.mxu0 0
    %10295 = vmatmul.mubr.bf16.gmra.mrb[0].mxu0 %v10260
    %v10296 = vpop.f32.mrb[0].mxu0
    %v10297 = vadd.f32 0.0, %v10296
    %v10298 = vpop.f32.mrb[0].mxu0
    %v10299 = vpop.f32.mrb[0].mxu0
    %v10300 = vadd.f32 0.0, %v10299
    %v10301 = vpop.f32.mrb[0].mxu0
    %10302 = vdwg.mxu0
    %v10304 = vsel %vm9050, %v9766, 0
    %10306 = vmatprep.subr.bf16.mxu0 0
    %10307 = vmatpush1.bf16.msra.mxu0 %v9798
    %10308 = vmatprep.subr.bf16.mxu0 0
    %10309 = vmatpush1.bf16.msra.mxu0 0
    %10310 = vmatprep.subr.bf16.mxu0 0
    %10311 = vmatpush1.bf16.msra.mxu0 0
    %10312 = vmatprep.subr.bf16.mxu0 0
    %10313 = vmatpush1.bf16.msra.mxu0 0
    %10314 = vmatprep.subr.bf16.mxu0 0
    %10315 = vmatpush1.bf16.msra.mxu0 0
    %10316 = vmatprep.subr.bf16.mxu0 0
    %10317 = vmatpush1.bf16.msra.mxu0 0
    %10318 = vmatprep.subr.bf16.mxu0 0
    %10319 = vmatpush1.bf16.msra.mxu0 0
    %10320 = vmatprep.subr.bf16.mxu0 0
    %10321 = vmatpush1.bf16.msra.mxu0 0
    %10322 = vmatprep.subr.bf16.mxu0 0
    %10323 = vmatpush1.bf16.msra.mxu0 0
    %10324 = vmatprep.subr.bf16.mxu0 0
    %10325 = vmatpush1.bf16.msra.mxu0 0
    %10326 = vmatprep.subr.bf16.mxu0 0
    %10327 = vmatpush1.bf16.msra.mxu0 0
    %10328 = vmatprep.subr.bf16.mxu0 0
    %10329 = vmatpush1.bf16.msra.mxu0 0
    %10330 = vmatprep.subr.bf16.mxu0 0
    %10331 = vmatpush1.bf16.msra.mxu0 0
    %10332 = vmatprep.subr.bf16.mxu0 0
    %10333 = vmatpush1.bf16.msra.mxu0 0
    %10334 = vmatprep.subr.bf16.mxu0 0
    %10335 = vmatpush1.bf16.msra.mxu0 0
    %10336 = vmatprep.subr.bf16.mxu0 0
    %10337 = vmatpush1.bf16.msra.mxu0 0
    %10338 = vmatprep.mubr.bf16.mxu0 0
    %10339 = vmatmul.mubr.bf16.gmra.mrb[0].mxu0 %v10304
    %v10340 = vpop.f32.mrb[0].mxu0
    %v10341 = vadd.f32 0.0, %v10340
    %v10342 = vpop.f32.mrb[0].mxu0
    %v10343 = vpop.f32.mrb[0].mxu0
    %v10344 = vadd.f32 0.0, %v10343
    %v10345 = vpop.f32.mrb[0].mxu0
    %10346 = vdwg.mxu0
    %v10348 = vsel %vm9050, %v9767, 0
    %10350 = vmatprep.subr.bf16.mxu0 0
    %10351 = vmatpush1.bf16.msra.mxu0 %v9799
    %10352 = vmatprep.subr.bf16.mxu0 0
    %10353 = vmatpush1.bf16.msra.mxu0 0
    %10354 = vmatprep.subr.bf16.mxu0 0
    %10355 = vmatpush1.bf16.msra.mxu0 0
    %10356 = vmatprep.subr.bf16.mxu0 0
    %10357 = vmatpush1.bf16.msra.mxu0 0
    %10358 = vmatprep.subr.bf16.mxu0 0
    %10359 = vmatpush1.bf16.msra.mxu0 0
    %10360 = vmatprep.subr.bf16.mxu0 0
    %10361 = vmatpush1.bf16.msra.mxu0 0
    %10362 = vmatprep.subr.bf16.mxu0 0
    %10363 = vmatpush1.bf16.msra.mxu0 0
    %10364 = vmatprep.subr.bf16.mxu0 0
    %10365 = vmatpush1.bf16.msra.mxu0 0
    %10366 = vmatprep.subr.bf16.mxu0 0
    %10367 = vmatpush1.bf16.msra.mxu0 0
    %10368 = vmatprep.subr.bf16.mxu0 0
    %10369 = vmatpush1.bf16.msra.mxu0 0
    %10370 = vmatprep.subr.bf16.mxu0 0
    %10371 = vmatpush1.bf16.msra.mxu0 0
    %10372 = vmatprep.subr.bf16.mxu0 0
    %10373 = vmatpush1.bf16.msra.mxu0 0
    %10374 = vmatprep.subr.bf16.mxu0 0
    %10375 = vmatpush1.bf16.msra.mxu0 0
    %10376 = vmatprep.subr.bf16.mxu0 0
    %10377 = vmatpush1.bf16.msra.mxu0 0
    %10378 = vmatprep.subr.bf16.mxu0 0
    %10379 = vmatpush1.bf16.msra.mxu0 0
    %10380 = vmatprep.subr.bf16.mxu0 0
    %10381 = vmatpush1.bf16.msra.mxu0 0
    %10382 = vmatprep.mubr.bf16.mxu0 0
    %10383 = vmatmul.mubr.bf16.gmra.mrb[0].mxu0 %v10348
    %v10384 = vpop.f32.mrb[0].mxu0
    %v10385 = vadd.f32 0.0, %v10384
    %v10386 = vpop.f32.mrb[0].mxu0
    %v10387 = vpop.f32.mrb[0].mxu0
    %v10388 = vadd.f32 0.0, %v10387
    %v10389 = vpop.f32.mrb[0].mxu0
    %10390 = vdwg.mxu0
    %v10392 = vsel %vm9050, %v9768, 0
    %10394 = vmatprep.subr.bf16.mxu0 0
    %10395 = vmatpush1.bf16.msra.mxu0 %v9800
    %10396 = vmatprep.subr.bf16.mxu0 0
    %10397 = vmatpush1.bf16.msra.mxu0 0
    %10398 = vmatprep.subr.bf16.mxu0 0
    %10399 = vmatpush1.bf16.msra.mxu0 0
    %10400 = vmatprep.subr.bf16.mxu0 0
    %10401 = vmatpush1.bf16.msra.mxu0 0
    %10402 = vmatprep.subr.bf16.mxu0 0
    %10403 = vmatpush1.bf16.msra.mxu0 0
    %10404 = vmatprep.subr.bf16.mxu0 0
    %10405 = vmatpush1.bf16.msra.mxu0 0
    %10406 = vmatprep.subr.bf16.mxu0 0
    %10407 = vmatpush1.bf16.msra.mxu0 0
    %10408 = vmatprep.subr.bf16.mxu0 0
    %10409 = vmatpush1.bf16.msra.mxu0 0
    %10410 = vmatprep.subr.bf16.mxu0 0
    %10411 = vmatpush1.bf16.msra.mxu0 0
    %10412 = vmatprep.subr.bf16.mxu0 0
    %10413 = vmatpush1.bf16.msra.mxu0 0
    %10414 = vmatprep.subr.bf16.mxu0 0
    %10415 = vmatpush1.bf16.msra.mxu0 0
    %10416 = vmatprep.subr.bf16.mxu0 0
    %10417 = vmatpush1.bf16.msra.mxu0 0
    %10418 = vmatprep.subr.bf16.mxu0 0
    %10419 = vmatpush1.bf16.msra.mxu0 0
    %10420 = vmatprep.subr.bf16.mxu0 0
    %10421 = vmatpush1.bf16.msra.mxu0 0
    %10422 = vmatprep.subr.bf16.mxu0 0
    %10423 = vmatpush1.bf16.msra.mxu0 0
    %10424 = vmatprep.subr.bf16.mxu0 0
    %10425 = vmatpush1.bf16.msra.mxu0 0
    %10426 = vmatprep.mubr.bf16.mxu0 0
    %10427 = vmatmul.mubr.bf16.gmra.mrb[0].mxu0 %v10392
    %v10428 = vpop.f32.mrb[0].mxu0
    %v10429 = vadd.f32 0.0, %v10428
    %v10430 = vpop.f32.mrb[0].mxu0
    %v10431 = vpop.f32.mrb[0].mxu0
    %v10432 = vadd.f32 0.0, %v10431
    %v10433 = vpop.f32.mrb[0].mxu0
    %10434 = vdwg.mxu0
    %v10436 = vsel %vm9050, %v9769, 0
    %10438 = vmatprep.subr.bf16.mxu0 0
    %10439 = vmatpush1.bf16.msra.mxu0 %v9801
    %10440 = vmatprep.subr.bf16.mxu0 0
    %10441 = vmatpush1.bf16.msra.mxu0 0
    %10442 = vmatprep.subr.bf16.mxu0 0
    %10443 = vmatpush1.bf16.msra.mxu0 0
    %10444 = vmatprep.subr.bf16.mxu0 0
    %10445 = vmatpush1.bf16.msra.mxu0 0
    %10446 = vmatprep.subr.bf16.mxu0 0
    %10447 = vmatpush1.bf16.msra.mxu0 0
    %10448 = vmatprep.subr.bf16.mxu0 0
    %10449 = vmatpush1.bf16.msra.mxu0 0
    %10450 = vmatprep.subr.bf16.mxu0 0
    %10451 = vmatpush1.bf16.msra.mxu0 0
    %10452 = vmatprep.subr.bf16.mxu0 0
    %10453 = vmatpush1.bf16.msra.mxu0 0
    %10454 = vmatprep.subr.bf16.mxu0 0
    %10455 = vmatpush1.bf16.msra.mxu0 0
    %10456 = vmatprep.subr.bf16.mxu0 0
    %10457 = vmatpush1.bf16.msra.mxu0 0
    %10458 = vmatprep.subr.bf16.mxu0 0
    %10459 = vmatpush1.bf16.msra.mxu0 0
    %10460 = vmatprep.subr.bf16.mxu0 0
    %10461 = vmatpush1.bf16.msra.mxu0 0
    %10462 = vmatprep.subr.bf16.mxu0 0
    %10463 = vmatpush1.bf16.msra.mxu0 0
    %10464 = vmatprep.subr.bf16.mxu0 0
    %10465 = vmatpush1.bf16.msra.mxu0 0
    %10466 = vmatprep.subr.bf16.mxu0 0
    %10467 = vmatpush1.bf16.msra.mxu0 0
    %10468 = vmatprep.subr.bf16.mxu0 0
    %10469 = vmatpush1.bf16.msra.mxu0 0
    %10470 = vmatprep.mubr.bf16.mxu0 0
    %10471 = vmatmul.mubr.bf16.gmra.mrb[0].mxu0 %v10436
    %v10472 = vpop.f32.mrb[0].mxu0
    %v10473 = vadd.f32 0.0, %v10472
    %v10474 = vpop.f32.mrb[0].mxu0
    %v10475 = vpop.f32.mrb[0].mxu0
    %v10476 = vadd.f32 0.0, %v10475
    %v10477 = vpop.f32.mrb[0].mxu0
    %10478 = vdwg.mxu0
    %v10480 = vsel %vm9050, %v9770, 0
    %10482 = vmatprep.subr.bf16.mxu0 0
    %10483 = vmatpush1.bf16.msra.mxu0 %v9802
    %10484 = vmatprep.subr.bf16.mxu0 0
    %10485 = vmatpush1.bf16.msra.mxu0 0
    %10486 = vmatprep.subr.bf16.mxu0 0
    %10487 = vmatpush1.bf16.msra.mxu0 0
    %10488 = vmatprep.subr.bf16.mxu0 0
    %10489 = vmatpush1.bf16.msra.mxu0 0
    %10490 = vmatprep.subr.bf16.mxu0 0
    %10491 = vmatpush1.bf16.msra.mxu0 0
    %10492 = vmatprep.subr.bf16.mxu0 0
    %10493 = vmatpush1.bf16.msra.mxu0 0
    %10494 = vmatprep.subr.bf16.mxu0 0
    %10495 = vmatpush1.bf16.msra.mxu0 0
    %10496 = vmatprep.subr.bf16.mxu0 0
    %10497 = vmatpush1.bf16.msra.mxu0 0
    %10498 = vmatprep.subr.bf16.mxu0 0
    %10499 = vmatpush1.bf16.msra.mxu0 0
    %10500 = vmatprep.subr.bf16.mxu0 0
    %10501 = vmatpush1.bf16.msra.mxu0 0
    %10502 = vmatprep.subr.bf16.mxu0 0
    %10503 = vmatpush1.bf16.msra.mxu0 0
    %10504 = vmatprep.subr.bf16.mxu0 0
    %10505 = vmatpush1.bf16.msra.mxu0 0
    %10506 = vmatprep.subr.bf16.mxu0 0
    %10507 = vmatpush1.bf16.msra.mxu0 0
    %10508 = vmatprep.subr.bf16.mxu0 0
    %10509 = vmatpush1.bf16.msra.mxu0 0
    %10510 = vmatprep.subr.bf16.mxu0 0
    %10511 = vmatpush1.bf16.msra.mxu0 0
    %10512 = vmatprep.subr.bf16.mxu0 0
    %10513 = vmatpush1.bf16.msra.mxu0 0
    %10514 = vmatprep.mubr.bf16.mxu0 0
    %10515 = vmatmul.mubr.bf16.gmra.mrb[0].mxu0 %v10480
    %v10516 = vpop.f32.mrb[0].mxu0
    %v10517 = vadd.f32 0.0, %v10516
    %v10518 = vpop.f32.mrb[0].mxu0
    %v10519 = vpop.f32.mrb[0].mxu0
    %v10520 = vadd.f32 0.0, %v10519
    %v10521 = vpop.f32.mrb[0].mxu0
    %10522 = vdwg.mxu0
    %v10524 = vsel %vm9050, %v9771, 0
    %10526 = vmatprep.subr.bf16.mxu0 0
    %10527 = vmatpush1.bf16.msra.mxu0 %v9803
    %10528 = vmatprep.subr.bf16.mxu0 0
    %10529 = vmatpush1.bf16.msra.mxu0 0
    %10530 = vmatprep.subr.bf16.mxu0 0
    %10531 = vmatpush1.bf16.msra.mxu0 0
    %10532 = vmatprep.subr.bf16.mxu0 0
    %10533 = vmatpush1.bf16.msra.mxu0 0
    %10534 = vmatprep.subr.bf16.mxu0 0
    %10535 = vmatpush1.bf16.msra.mxu0 0
    %10536 = vmatprep.subr.bf16.mxu0 0
    %10537 = vmatpush1.bf16.msra.mxu0 0
    %10538 = vmatprep.subr.bf16.mxu0 0
    %10539 = vmatpush1.bf16.msra.mxu0 0
    %10540 = vmatprep.subr.bf16.mxu0 0
    %10541 = vmatpush1.bf16.msra.mxu0 0
    %10542 = vmatprep.subr.bf16.mxu0 0
    %10543 = vmatpush1.bf16.msra.mxu0 0
    %10544 = vmatprep.subr.bf16.mxu0 0
    %10545 = vmatpush1.bf16.msra.mxu0 0
    %10546 = vmatprep.subr.bf16.mxu0 0
    %10547 = vmatpush1.bf16.msra.mxu0 0
    %10548 = vmatprep.subr.bf16.mxu0 0
    %10549 = vmatpush1.bf16.msra.mxu0 0
    %10550 = vmatprep.subr.bf16.mxu0 0
    %10551 = vmatpush1.bf16.msra.mxu0 0
    %10552 = vmatprep.subr.bf16.mxu0 0
    %10553 = vmatpush1.bf16.msra.mxu0 0
    %10554 = vmatprep.subr.bf16.mxu0 0
    %10555 = vmatpush1.bf16.msra.mxu0 0
    %10556 = vmatprep.subr.bf16.mxu0 0
    %10557 = vmatpush1.bf16.msra.mxu0 0
    %10558 = vmatprep.mubr.bf16.mxu0 0
    %10559 = vmatmul.mubr.bf16.gmra.mrb[0].mxu0 %v10524
    %v10560 = vpop.f32.mrb[0].mxu0
    %v10561 = vadd.f32 0.0, %v10560
    %v10562 = vpop.f32.mrb[0].mxu0
    %v10563 = vpop.f32.mrb[0].mxu0
    %v10564 = vadd.f32 0.0, %v10563
    %v10565 = vpop.f32.mrb[0].mxu0
    %10566 = vdwg.mxu0
    %v10568 = vsel %vm9050, %v9772, 0
    %10570 = vmatprep.subr.bf16.mxu0 0
    %10571 = vmatpush1.bf16.msra.mxu0 %v9804
    %10572 = vmatprep.subr.bf16.mxu0 0
    %10573 = vmatpush1.bf16.msra.mxu0 0
    %10574 = vmatprep.subr.bf16.mxu0 0
    %10575 = vmatpush1.bf16.msra.mxu0 0
    %10576 = vmatprep.subr.bf16.mxu0 0
    %10577 = vmatpush1.bf16.msra.mxu0 0
    %10578 = vmatprep.subr.bf16.mxu0 0
    %10579 = vmatpush1.bf16.msra.mxu0 0
    %10580 = vmatprep.subr.bf16.mxu0 0
    %10581 = vmatpush1.bf16.msra.mxu0 0
    %10582 = vmatprep.subr.bf16.mxu0 0
    %10583 = vmatpush1.bf16.msra.mxu0 0
    %10584 = vmatprep.subr.bf16.mxu0 0
    %10585 = vmatpush1.bf16.msra.mxu0 0
    %10586 = vmatprep.subr.bf16.mxu0 0
    %10587 = vmatpush1.bf16.msra.mxu0 0
    %10588 = vmatprep.subr.bf16.mxu0 0
    %10589 = vmatpush1.bf16.msra.mxu0 0
    %10590 = vmatprep.subr.bf16.mxu0 0
    %10591 = vmatpush1.bf16.msra.mxu0 0
    %10592 = vmatprep.subr.bf16.mxu0 0
    %10593 = vmatpush1.bf16.msra.mxu0 0
    %10594 = vmatprep.subr.bf16.mxu0 0
    %10595 = vmatpush1.bf16.msra.mxu0 0
    %10596 = vmatprep.subr.bf16.mxu0 0
    %10597 = vmatpush1.bf16.msra.mxu0 0
    %10598 = vmatprep.subr.bf16.mxu0 0
    %10599 = vmatpush1.bf16.msra.mxu0 0
    %10600 = vmatprep.subr.bf16.mxu0 0
    %10601 = vmatpush1.bf16.msra.mxu0 0
    %10602 = vmatprep.mubr.bf16.mxu0 0
    %10603 = vmatmul.mubr.bf16.gmra.mrb[0].mxu0 %v10568
    %v10604 = vpop.f32.mrb[0].mxu0
    %v10605 = vadd.f32 0.0, %v10604
    %v10606 = vpop.f32.mrb[0].mxu0
    %v10607 = vpop.f32.mrb[0].mxu0
    %v10608 = vadd.f32 0.0, %v10607
    %v10609 = vpop.f32.mrb[0].mxu0
    %10610 = vdwg.mxu0
    %v10612 = vsel %vm9050, %v9773, 0
    %10614 = vmatprep.subr.bf16.mxu0 0
    %10615 = vmatpush1.bf16.msra.mxu0 %v9805
    %10616 = vmatprep.subr.bf16.mxu0 0
    %10617 = vmatpush1.bf16.msra.mxu0 0
    %10618 = vmatprep.subr.bf16.mxu0 0
    %10619 = vmatpush1.bf16.msra.mxu0 0
    %10620 = vmatprep.subr.bf16.mxu0 0
    %10621 = vmatpush1.bf16.msra.mxu0 0
    %10622 = vmatprep.subr.bf16.mxu0 0
    %10623 = vmatpush1.bf16.msra.mxu0 0
    %10624 = vmatprep.subr.bf16.mxu0 0
    %10625 = vmatpush1.bf16.msra.mxu0 0
    %10626 = vmatprep.subr.bf16.mxu0 0
    %10627 = vmatpush1.bf16.msra.mxu0 0
    %10628 = vmatprep.subr.bf16.mxu0 0
    %10629 = vmatpush1.bf16.msra.mxu0 0
    %10630 = vmatprep.subr.bf16.mxu0 0
    %10631 = vmatpush1.bf16.msra.mxu0 0
    %10632 = vmatprep.subr.bf16.mxu0 0
    %10633 = vmatpush1.bf16.msra.mxu0 0
    %10634 = vmatprep.subr.bf16.mxu0 0
    %10635 = vmatpush1.bf16.msra.mxu0 0
    %10636 = vmatprep.subr.bf16.mxu0 0
    %10637 = vmatpush1.bf16.msra.mxu0 0
    %10638 = vmatprep.subr.bf16.mxu0 0
    %10639 = vmatpush1.bf16.msra.mxu0 0
    %10640 = vmatprep.subr.bf16.mxu0 0
    %10641 = vmatpush1.bf16.msra.mxu0 0
    %10642 = vmatprep.subr.bf16.mxu0 0
    %10643 = vmatpush1.bf16.msra.mxu0 0
    %10644 = vmatprep.subr.bf16.mxu0 0
    %10645 = vmatpush1.bf16.msra.mxu0 0
    %10646 = vmatprep.mubr.bf16.mxu0 0
    %10647 = vmatmul.mubr.bf16.gmra.mrb[0].mxu0 %v10612
    %v10648 = vpop.f32.mrb[0].mxu0
    %v10649 = vadd.f32 0.0, %v10648
    %v10650 = vpop.f32.mrb[0].mxu0
    %v10651 = vpop.f32.mrb[0].mxu0
    %v10652 = vadd.f32 0.0, %v10651
    %v10653 = vpop.f32.mrb[0].mxu0
    %10654 = vdwg.mxu0
    %v10656 = vsel %vm9050, %v9774, 0
    %10658 = vmatprep.subr.bf16.mxu0 0
    %10659 = vmatpush1.bf16.msra.mxu0 %v9806
    %10660 = vmatprep.subr.bf16.mxu0 0
    %10661 = vmatpush1.bf16.msra.mxu0 0
    %10662 = vmatprep.subr.bf16.mxu0 0
    %10663 = vmatpush1.bf16.msra.mxu0 0
    %10664 = vmatprep.subr.bf16.mxu0 0
    %10665 = vmatpush1.bf16.msra.mxu0 0
    %10666 = vmatprep.subr.bf16.mxu0 0
    %10667 = vmatpush1.bf16.msra.mxu0 0
    %10668 = vmatprep.subr.bf16.mxu0 0
    %10669 = vmatpush1.bf16.msra.mxu0 0
    %10670 = vmatprep.subr.bf16.mxu0 0
    %10671 = vmatpush1.bf16.msra.mxu0 0
    %10672 = vmatprep.subr.bf16.mxu0 0
    %10673 = vmatpush1.bf16.msra.mxu0 0
    %10674 = vmatprep.subr.bf16.mxu0 0
    %10675 = vmatpush1.bf16.msra.mxu0 0
    %10676 = vmatprep.subr.bf16.mxu0 0
    %10677 = vmatpush1.bf16.msra.mxu0 0
    %10678 = vmatprep.subr.bf16.mxu0 0
    %10679 = vmatpush1.bf16.msra.mxu0 0
    %10680 = vmatprep.subr.bf16.mxu0 0
    %10681 = vmatpush1.bf16.msra.mxu0 0
    %10682 = vmatprep.subr.bf16.mxu0 0
    %10683 = vmatpush1.bf16.msra.mxu0 0
    %10684 = vmatprep.subr.bf16.mxu0 0
    %10685 = vmatpush1.bf16.msra.mxu0 0
    %10686 = vmatprep.subr.bf16.mxu0 0
    %10687 = vmatpush1.bf16.msra.mxu0 0
    %10688 = vmatprep.subr.bf16.mxu0 0
    %10689 = vmatpush1.bf16.msra.mxu0 0
    %10690 = vmatprep.mubr.bf16.mxu0 0
    %10691 = vmatmul.mubr.bf16.gmra.mrb[0].mxu0 %v10656
    %v10692 = vpop.f32.mrb[0].mxu0
    %v10693 = vadd.f32 0.0, %v10692
    %v10694 = vpop.f32.mrb[0].mxu0
    %v10695 = vpop.f32.mrb[0].mxu0
    %v10696 = vadd.f32 0.0, %v10695
    %v10697 = vpop.f32.mrb[0].mxu0
    %10698 = vdwg.mxu0
    %v10700 = vsel %vm9050, %v9775, 0
    %10702 = vmatprep.subr.bf16.mxu0 0
    %10703 = vmatpush1.bf16.msra.mxu0 %v9807
    %10704 = vmatprep.subr.bf16.mxu0 0
    %10705 = vmatpush1.bf16.msra.mxu0 0
    %10706 = vmatprep.subr.bf16.mxu0 0
    %10707 = vmatpush1.bf16.msra.mxu0 0
    %10708 = vmatprep.subr.bf16.mxu0 0
    %10709 = vmatpush1.bf16.msra.mxu0 0
    %10710 = vmatprep.subr.bf16.mxu0 0
    %10711 = vmatpush1.bf16.msra.mxu0 0
    %10712 = vmatprep.subr.bf16.mxu0 0
    %10713 = vmatpush1.bf16.msra.mxu0 0
    %10714 = vmatprep.subr.bf16.mxu0 0
    %10715 = vmatpush1.bf16.msra.mxu0 0
    %10716 = vmatprep.subr.bf16.mxu0 0
    %10717 = vmatpush1.bf16.msra.mxu0 0
    %10718 = vmatprep.subr.bf16.mxu0 0
    %10719 = vmatpush1.bf16.msra.mxu0 0
    %10720 = vmatprep.subr.bf16.mxu0 0
    %10721 = vmatpush1.bf16.msra.mxu0 0
    %10722 = vmatprep.subr.bf16.mxu0 0
    %10723 = vmatpush1.bf16.msra.mxu0 0
    %10724 = vmatprep.subr.bf16.mxu0 0
    %10725 = vmatpush1.bf16.msra.mxu0 0
    %10726 = vmatprep.subr.bf16.mxu0 0
    %10727 = vmatpush1.bf16.msra.mxu0 0
    %10728 = vmatprep.subr.bf16.mxu0 0
    %10729 = vmatpush1.bf16.msra.mxu0 0
    %10730 = vmatprep.subr.bf16.mxu0 0
    %10731 = vmatpush1.bf16.msra.mxu0 0
    %10732 = vmatprep.subr.bf16.mxu0 0
    %10733 = vmatpush1.bf16.msra.mxu0 0
    %10734 = vmatprep.mubr.bf16.mxu0 0
    %10735 = vmatmul.mubr.bf16.gmra.mrb[0].mxu0 %v10700
    %v10736 = vpop.f32.mrb[0].mxu0
    %v10737 = vadd.f32 0.0, %v10736
    %v10738 = vpop.f32.mrb[0].mxu0
    %v10739 = vpop.f32.mrb[0].mxu0
    %v10740 = vadd.f32 0.0, %v10739
    %v10741 = vpop.f32.mrb[0].mxu0
    %10742 = vdwg.mxu0
    %v10744 = vsel %vm9050, %v9776, 0
    %10746 = vmatprep.subr.bf16.mxu0 0
    %10747 = vmatpush1.bf16.msra.mxu0 %v9808
    %10748 = vmatprep.subr.bf16.mxu0 0
    %10749 = vmatpush1.bf16.msra.mxu0 0
    %10750 = vmatprep.subr.bf16.mxu0 0
    %10751 = vmatpush1.bf16.msra.mxu0 0
    %10752 = vmatprep.subr.bf16.mxu0 0
    %10753 = vmatpush1.bf16.msra.mxu0 0
    %10754 = vmatprep.subr.bf16.mxu0 0
    %10755 = vmatpush1.bf16.msra.mxu0 0
    %10756 = vmatprep.subr.bf16.mxu0 0
    %10757 = vmatpush1.bf16.msra.mxu0 0
    %10758 = vmatprep.subr.bf16.mxu0 0
    %10759 = vmatpush1.bf16.msra.mxu0 0
    %10760 = vmatprep.subr.bf16.mxu0 0
    %10761 = vmatpush1.bf16.msra.mxu0 0
    %10762 = vmatprep.subr.bf16.mxu0 0
    %10763 = vmatpush1.bf16.msra.mxu0 0
    %10764 = vmatprep.subr.bf16.mxu0 0
    %10765 = vmatpush1.bf16.msra.mxu0 0
    %10766 = vmatprep.subr.bf16.mxu0 0
    %10767 = vmatpush1.bf16.msra.mxu0 0
    %10768 = vmatprep.subr.bf16.mxu0 0
    %10769 = vmatpush1.bf16.msra.mxu0 0
    %10770 = vmatprep.subr.bf16.mxu0 0
    %10771 = vmatpush1.bf16.msra.mxu0 0
    %10772 = vmatprep.subr.bf16.mxu0 0
    %10773 = vmatpush1.bf16.msra.mxu0 0
    %10774 = vmatprep.subr.bf16.mxu0 0
    %10775 = vmatpush1.bf16.msra.mxu0 0
    %10776 = vmatprep.subr.bf16.mxu0 0
    %10777 = vmatpush1.bf16.msra.mxu0 0
    %10778 = vmatprep.mubr.bf16.mxu0 0
    %10779 = vmatmul.mubr.bf16.gmra.mrb[0].mxu0 %v10744
    %v10780 = vpop.f32.mrb[0].mxu0
    %v10781 = vadd.f32 0.0, %v10780
    %v10782 = vpop.f32.mrb[0].mxu0
    %v10783 = vpop.f32.mrb[0].mxu0
    %v10784 = vadd.f32 0.0, %v10783
    %v10785 = vpop.f32.mrb[0].mxu0
    %10786 = vdwg.mxu0
    %v10788 = vsel %vm9050, %v9777, 0
    %10790 = vmatprep.subr.bf16.mxu0 0
    %10791 = vmatpush1.bf16.msra.mxu0 %v9809
    %10792 = vmatprep.subr.bf16.mxu0 0
    %10793 = vmatpush1.bf16.msra.mxu0 0
    %10794 = vmatprep.subr.bf16.mxu0 0
    %10795 = vmatpush1.bf16.msra.mxu0 0
    %10796 = vmatprep.subr.bf16.mxu0 0
    %10797 = vmatpush1.bf16.msra.mxu0 0
    %10798 = vmatprep.subr.bf16.mxu0 0
    %10799 = vmatpush1.bf16.msra.mxu0 0
    %10800 = vmatprep.subr.bf16.mxu0 0
    %10801 = vmatpush1.bf16.msra.mxu0 0
    %10802 = vmatprep.subr.bf16.mxu0 0
    %10803 = vmatpush1.bf16.msra.mxu0 0
    %10804 = vmatprep.subr.bf16.mxu0 0
    %10805 = vmatpush1.bf16.msra.mxu0 0
    %10806 = vmatprep.subr.bf16.mxu0 0
    %10807 = vmatpush1.bf16.msra.mxu0 0
    %10808 = vmatprep.subr.bf16.mxu0 0
    %10809 = vmatpush1.bf16.msra.mxu0 0
    %10810 = vmatprep.subr.bf16.mxu0 0
    %10811 = vmatpush1.bf16.msra.mxu0 0
    %10812 = vmatprep.subr.bf16.mxu0 0
    %10813 = vmatpush1.bf16.msra.mxu0 0
    %10814 = vmatprep.subr.bf16.mxu0 0
    %10815 = vmatpush1.bf16.msra.mxu0 0
    %10816 = vmatprep.subr.bf16.mxu0 0
    %10817 = vmatpush1.bf16.msra.mxu0 0
    %10818 = vmatprep.subr.bf16.mxu0 0
    %10819 = vmatpush1.bf16.msra.mxu0 0
    %10820 = vmatprep.subr.bf16.mxu0 0
    %10821 = vmatpush1.bf16.msra.mxu0 0
    %10822 = vmatprep.mubr.bf16.mxu0 0
    %10823 = vmatmul.mubr.bf16.gmra.mrb[0].mxu0 %v10788
    %v10824 = vpop.f32.mrb[0].mxu0
    %v10825 = vadd.f32 0.0, %v10824
    %v10826 = vpop.f32.mrb[0].mxu0
    %v10827 = vpop.f32.mrb[0].mxu0
    %v10828 = vadd.f32 0.0, %v10827
    %v10829 = vpop.f32.mrb[0].mxu0
    %10830 = vdwg.mxu0
    %v10832 = vsel %vm9050, %v9778, 0
    %10834 = vmatprep.subr.bf16.mxu0 0
    %10835 = vmatpush1.bf16.msra.mxu0 %v9810
    %10836 = vmatprep.subr.bf16.mxu0 0
    %10837 = vmatpush1.bf16.msra.mxu0 0
    %10838 = vmatprep.subr.bf16.mxu0 0
    %10839 = vmatpush1.bf16.msra.mxu0 0
    %10840 = vmatprep.subr.bf16.mxu0 0
    %10841 = vmatpush1.bf16.msra.mxu0 0
    %10842 = vmatprep.subr.bf16.mxu0 0
    %10843 = vmatpush1.bf16.msra.mxu0 0
    %10844 = vmatprep.subr.bf16.mxu0 0
    %10845 = vmatpush1.bf16.msra.mxu0 0
    %10846 = vmatprep.subr.bf16.mxu0 0
    %10847 = vmatpush1.bf16.msra.mxu0 0
    %10848 = vmatprep.subr.bf16.mxu0 0
    %10849 = vmatpush1.bf16.msra.mxu0 0
    %10850 = vmatprep.subr.bf16.mxu0 0
    %10851 = vmatpush1.bf16.msra.mxu0 0
    %10852 = vmatprep.subr.bf16.mxu0 0
    %10853 = vmatpush1.bf16.msra.mxu0 0
    %10854 = vmatprep.subr.bf16.mxu0 0
    %10855 = vmatpush1.bf16.msra.mxu0 0
    %10856 = vmatprep.subr.bf16.mxu0 0
    %10857 = vmatpush1.bf16.msra.mxu0 0
    %10858 = vmatprep.subr.bf16.mxu0 0
    %10859 = vmatpush1.bf16.msra.mxu0 0
    %10860 = vmatprep.subr.bf16.mxu0 0
    %10861 = vmatpush1.bf16.msra.mxu0 0
    %10862 = vmatprep.subr.bf16.mxu0 0
    %10863 = vmatpush1.bf16.msra.mxu0 0
    %10864 = vmatprep.subr.bf16.mxu0 0
    %10865 = vmatpush1.bf16.msra.mxu0 0
    %10866 = vmatprep.mubr.bf16.mxu0 0
    %10867 = vmatmul.mubr.bf16.gmra.mrb[0].mxu0 %v10832
    %v10868 = vpop.f32.mrb[0].mxu0
    %v10869 = vadd.f32 0.0, %v10868
    %v10870 = vpop.f32.mrb[0].mxu0
    %v10871 = vpop.f32.mrb[0].mxu0
    %v10872 = vadd.f32 0.0, %v10871
    %v10873 = vpop.f32.mrb[0].mxu0
    %10874 = vdwg.mxu0
    %v10876 = vsel %vm9050, %v9779, 0
    %10878 = vmatprep.subr.bf16.mxu0 0
    %10879 = vmatpush1.bf16.msra.mxu0 %v9811
    %10880 = vmatprep.subr.bf16.mxu0 0
    %10881 = vmatpush1.bf16.msra.mxu0 0
    %10882 = vmatprep.subr.bf16.mxu0 0
    %10883 = vmatpush1.bf16.msra.mxu0 0
    %10884 = vmatprep.subr.bf16.mxu0 0
    %10885 = vmatpush1.bf16.msra.mxu0 0
    %10886 = vmatprep.subr.bf16.mxu0 0
    %10887 = vmatpush1.bf16.msra.mxu0 0
    %10888 = vmatprep.subr.bf16.mxu0 0
    %10889 = vmatpush1.bf16.msra.mxu0 0
    %10890 = vmatprep.subr.bf16.mxu0 0
    %10891 = vmatpush1.bf16.msra.mxu0 0
    %10892 = vmatprep.subr.bf16.mxu0 0
    %10893 = vmatpush1.bf16.msra.mxu0 0
    %10894 = vmatprep.subr.bf16.mxu0 0
    %10895 = vmatpush1.bf16.msra.mxu0 0
    %10896 = vmatprep.subr.bf16.mxu0 0
    %10897 = vmatpush1.bf16.msra.mxu0 0
    %10898 = vmatprep.subr.bf16.mxu0 0
    %10899 = vmatpush1.bf16.msra.mxu0 0
    %10900 = vmatprep.subr.bf16.mxu0 0
    %10901 = vmatpush1.bf16.msra.mxu0 0
    %10902 = vmatprep.subr.bf16.mxu0 0
    %10903 = vmatpush1.bf16.msra.mxu0 0
    %10904 = vmatprep.subr.bf16.mxu0 0
    %10905 = vmatpush1.bf16.msra.mxu0 0
    %10906 = vmatprep.subr.bf16.mxu0 0
    %10907 = vmatpush1.bf16.msra.mxu0 0
    %10908 = vmatprep.subr.bf16.mxu0 0
    %10909 = vmatpush1.bf16.msra.mxu0 0
    %10910 = vmatprep.mubr.bf16.mxu0 0
    %10911 = vmatmul.mubr.bf16.gmra.mrb[0].mxu0 %v10876
    %v10912 = vpop.f32.mrb[0].mxu0
    %v10913 = vadd.f32 0.0, %v10912
    %v10914 = vpop.f32.mrb[0].mxu0
    %v10915 = vpop.f32.mrb[0].mxu0
    %v10916 = vadd.f32 0.0, %v10915
    %v10917 = vpop.f32.mrb[0].mxu0
    %10918 = vdwg.mxu0
    %v10920 = vsel %vm9050, %v9780, 0
    %10922 = vmatprep.subr.bf16.mxu0 0
    %10923 = vmatpush1.bf16.msra.mxu0 %v9812
    %10924 = vmatprep.subr.bf16.mxu0 0
    %10925 = vmatpush1.bf16.msra.mxu0 0
    %10926 = vmatprep.subr.bf16.mxu0 0
    %10927 = vmatpush1.bf16.msra.mxu0 0
    %10928 = vmatprep.subr.bf16.mxu0 0
    %10929 = vmatpush1.bf16.msra.mxu0 0
    %10930 = vmatprep.subr.bf16.mxu0 0
    %10931 = vmatpush1.bf16.msra.mxu0 0
    %10932 = vmatprep.subr.bf16.mxu0 0
    %10933 = vmatpush1.bf16.msra.mxu0 0
    %10934 = vmatprep.subr.bf16.mxu0 0
    %10935 = vmatpush1.bf16.msra.mxu0 0
    %10936 = vmatprep.subr.bf16.mxu0 0
    %10937 = vmatpush1.bf16.msra.mxu0 0
    %10938 = vmatprep.subr.bf16.mxu0 0
    %10939 = vmatpush1.bf16.msra.mxu0 0
    %10940 = vmatprep.subr.bf16.mxu0 0
    %10941 = vmatpush1.bf16.msra.mxu0 0
    %10942 = vmatprep.subr.bf16.mxu0 0
    %10943 = vmatpush1.bf16.msra.mxu0 0
    %10944 = vmatprep.subr.bf16.mxu0 0
    %10945 = vmatpush1.bf16.msra.mxu0 0
    %10946 = vmatprep.subr.bf16.mxu0 0
    %10947 = vmatpush1.bf16.msra.mxu0 0
    %10948 = vmatprep.subr.bf16.mxu0 0
    %10949 = vmatpush1.bf16.msra.mxu0 0
    %10950 = vmatprep.subr.bf16.mxu0 0
    %10951 = vmatpush1.bf16.msra.mxu0 0
    %10952 = vmatprep.subr.bf16.mxu0 0
    %10953 = vmatpush1.bf16.msra.mxu0 0
    %10954 = vmatprep.mubr.bf16.mxu0 0
    %10955 = vmatmul.mubr.bf16.gmra.mrb[0].mxu0 %v10920
    %v10956 = vpop.f32.mrb[0].mxu0
    %v10957 = vadd.f32 0.0, %v10956
    %v10958 = vpop.f32.mrb[0].mxu0
    %v10959 = vpop.f32.mrb[0].mxu0
    %v10960 = vadd.f32 0.0, %v10959
    %v10961 = vpop.f32.mrb[0].mxu0
    %10962 = vdwg.mxu0
    %v10964 = vsel %vm9050, %v9781, 0
    %10966 = vmatprep.subr.bf16.mxu0 0
    %10967 = vmatpush1.bf16.msra.mxu0 %v9813
    %10968 = vmatprep.subr.bf16.mxu0 0
    %10969 = vmatpush1.bf16.msra.mxu0 0
    %10970 = vmatprep.subr.bf16.mxu0 0
    %10971 = vmatpush1.bf16.msra.mxu0 0
    %10972 = vmatprep.subr.bf16.mxu0 0
    %10973 = vmatpush1.bf16.msra.mxu0 0
    %10974 = vmatprep.subr.bf16.mxu0 0
    %10975 = vmatpush1.bf16.msra.mxu0 0
    %10976 = vmatprep.subr.bf16.mxu0 0
    %10977 = vmatpush1.bf16.msra.mxu0 0
    %10978 = vmatprep.subr.bf16.mxu0 0
    %10979 = vmatpush1.bf16.msra.mxu0 0
    %10980 = vmatprep.subr.bf16.mxu0 0
    %10981 = vmatpush1.bf16.msra.mxu0 0
    %10982 = vmatprep.subr.bf16.mxu0 0
    %10983 = vmatpush1.bf16.msra.mxu0 0
    %10984 = vmatprep.subr.bf16.mxu0 0
    %10985 = vmatpush1.bf16.msra.mxu0 0
    %10986 = vmatprep.subr.bf16.mxu0 0
    %10987 = vmatpush1.bf16.msra.mxu0 0
    %10988 = vmatprep.subr.bf16.mxu0 0
    %10989 = vmatpush1.bf16.msra.mxu0 0
    %10990 = vmatprep.subr.bf16.mxu0 0
    %10991 = vmatpush1.bf16.msra.mxu0 0
    %10992 = vmatprep.subr.bf16.mxu0 0
    %10993 = vmatpush1.bf16.msra.mxu0 0
    %10994 = vmatprep.subr.bf16.mxu0 0
    %10995 = vmatpush1.bf16.msra.mxu0 0
    %10996 = vmatprep.subr.bf16.mxu0 0
    %10997 = vmatpush1.bf16.msra.mxu0 0
    %10998 = vmatprep.mubr.bf16.mxu0 0
    %10999 = vmatmul.mubr.bf16.gmra.mrb[0].mxu0 %v10964
    %v11000 = vpop.f32.mrb[0].mxu0
    %v11001 = vadd.f32 0.0, %v11000
    %v11002 = vpop.f32.mrb[0].mxu0
    %v11003 = vpop.f32.mrb[0].mxu0
    %v11004 = vadd.f32 0.0, %v11003
    %v11005 = vpop.f32.mrb[0].mxu0
    %11006 = vdwg.mxu0
    %v11008 = vsel %vm9050, %v9782, 0
    %11010 = vmatprep.subr.bf16.mxu0 0
    %11011 = vmatpush1.bf16.msra.mxu0 %v9814
    %11012 = vmatprep.subr.bf16.mxu0 0
    %11013 = vmatpush1.bf16.msra.mxu0 0
    %11014 = vmatprep.subr.bf16.mxu0 0
    %11015 = vmatpush1.bf16.msra.mxu0 0
    %11016 = vmatprep.subr.bf16.mxu0 0
    %11017 = vmatpush1.bf16.msra.mxu0 0
    %11018 = vmatprep.subr.bf16.mxu0 0
    %11019 = vmatpush1.bf16.msra.mxu0 0
    %11020 = vmatprep.subr.bf16.mxu0 0
    %11021 = vmatpush1.bf16.msra.mxu0 0
    %11022 = vmatprep.subr.bf16.mxu0 0
    %11023 = vmatpush1.bf16.msra.mxu0 0
    %11024 = vmatprep.subr.bf16.mxu0 0
    %11025 = vmatpush1.bf16.msra.mxu0 0
    %11026 = vmatprep.subr.bf16.mxu0 0
    %11027 = vmatpush1.bf16.msra.mxu0 0
    %11028 = vmatprep.subr.bf16.mxu0 0
    %11029 = vmatpush1.bf16.msra.mxu0 0
    %11030 = vmatprep.subr.bf16.mxu0 0
    %11031 = vmatpush1.bf16.msra.mxu0 0
    %11032 = vmatprep.subr.bf16.mxu0 0
    %11033 = vmatpush1.bf16.msra.mxu0 0
    %11034 = vmatprep.subr.bf16.mxu0 0
    %11035 = vmatpush1.bf16.msra.mxu0 0
    %11036 = vmatprep.subr.bf16.mxu0 0
    %11037 = vmatpush1.bf16.msra.mxu0 0
    %11038 = vmatprep.subr.bf16.mxu0 0
    %11039 = vmatpush1.bf16.msra.mxu0 0
    %11040 = vmatprep.subr.bf16.mxu0 0
    %11041 = vmatpush1.bf16.msra.mxu0 0
    %11042 = vmatprep.mubr.bf16.mxu0 0
    %11043 = vmatmul.mubr.bf16.gmra.mrb[0].mxu0 %v11008
    %v11044 = vpop.f32.mrb[0].mxu0
    %v11045 = vadd.f32 0.0, %v11044
    %v11046 = vpop.f32.mrb[0].mxu0
    %v11047 = vpop.f32.mrb[0].mxu0
    %v11048 = vadd.f32 0.0, %v11047
    %v11049 = vpop.f32.mrb[0].mxu0
    %11050 = vdwg.mxu0
    %v11052 = vsel %vm9050, %v9783, 0
    %11054 = vmatprep.subr.bf16.mxu0 0
    %11055 = vmatpush1.bf16.msra.mxu0 %v9815
    %11056 = vmatprep.subr.bf16.mxu0 0
    %11057 = vmatpush1.bf16.msra.mxu0 0
    %11058 = vmatprep.subr.bf16.mxu0 0
    %11059 = vmatpush1.bf16.msra.mxu0 0
    %11060 = vmatprep.subr.bf16.mxu0 0
    %11061 = vmatpush1.bf16.msra.mxu0 0
    %11062 = vmatprep.subr.bf16.mxu0 0
    %11063 = vmatpush1.bf16.msra.mxu0 0
    %11064 = vmatprep.subr.bf16.mxu0 0
    %11065 = vmatpush1.bf16.msra.mxu0 0
    %11066 = vmatprep.subr.bf16.mxu0 0
    %11067 = vmatpush1.bf16.msra.mxu0 0
    %11068 = vmatprep.subr.bf16.mxu0 0
    %11069 = vmatpush1.bf16.msra.mxu0 0
    %11070 = vmatprep.subr.bf16.mxu0 0
    %11071 = vmatpush1.bf16.msra.mxu0 0
    %11072 = vmatprep.subr.bf16.mxu0 0
    %11073 = vmatpush1.bf16.msra.mxu0 0
    %11074 = vmatprep.subr.bf16.mxu0 0
    %11075 = vmatpush1.bf16.msra.mxu0 0
    %11076 = vmatprep.subr.bf16.mxu0 0
    %11077 = vmatpush1.bf16.msra.mxu0 0
    %11078 = vmatprep.subr.bf16.mxu0 0
    %11079 = vmatpush1.bf16.msra.mxu0 0
    %11080 = vmatprep.subr.bf16.mxu0 0
    %11081 = vmatpush1.bf16.msra.mxu0 0
    %11082 = vmatprep.subr.bf16.mxu0 0
    %11083 = vmatpush1.bf16.msra.mxu0 0
    %11084 = vmatprep.subr.bf16.mxu0 0
    %11085 = vmatpush1.bf16.msra.mxu0 0
    %11086 = vmatprep.mubr.bf16.mxu0 0
    %11087 = vmatmul.mubr.bf16.gmra.mrb[0].mxu0 %v11052
    %v11088 = vpop.f32.mrb[0].mxu0
    %v11089 = vadd.f32 0.0, %v11088
    %v11090 = vpop.f32.mrb[0].mxu0
    %v11091 = vpop.f32.mrb[0].mxu0
    %v11092 = vadd.f32 0.0, %v11091
    %v11093 = vpop.f32.mrb[0].mxu0
    %11094 = vdwg.mxu0
    %v11096 = vsel %vm9050, %v9784, 0
    %11098 = vmatprep.subr.bf16.mxu0 0
    %11099 = vmatpush1.bf16.msra.mxu0 %v9816
    %11100 = vmatprep.subr.bf16.mxu0 0
    %11101 = vmatpush1.bf16.msra.mxu0 0
    %11102 = vmatprep.subr.bf16.mxu0 0
    %11103 = vmatpush1.bf16.msra.mxu0 0
    %11104 = vmatprep.subr.bf16.mxu0 0
    %11105 = vmatpush1.bf16.msra.mxu0 0
    %11106 = vmatprep.subr.bf16.mxu0 0
    %11107 = vmatpush1.bf16.msra.mxu0 0
    %11108 = vmatprep.subr.bf16.mxu0 0
    %11109 = vmatpush1.bf16.msra.mxu0 0
    %11110 = vmatprep.subr.bf16.mxu0 0
    %11111 = vmatpush1.bf16.msra.mxu0 0
    %11112 = vmatprep.subr.bf16.mxu0 0
    %11113 = vmatpush1.bf16.msra.mxu0 0
    %11114 = vmatprep.subr.bf16.mxu0 0
    %11115 = vmatpush1.bf16.msra.mxu0 0
    %11116 = vmatprep.subr.bf16.mxu0 0
    %11117 = vmatpush1.bf16.msra.mxu0 0
    %11118 = vmatprep.subr.bf16.mxu0 0
    %11119 = vmatpush1.bf16.msra.mxu0 0
    %11120 = vmatprep.subr.bf16.mxu0 0
    %11121 = vmatpush1.bf16.msra.mxu0 0
    %11122 = vmatprep.subr.bf16.mxu0 0
    %11123 = vmatpush1.bf16.msra.mxu0 0
    %11124 = vmatprep.subr.bf16.mxu0 0
    %11125 = vmatpush1.bf16.msra.mxu0 0
    %11126 = vmatprep.subr.bf16.mxu0 0
    %11127 = vmatpush1.bf16.msra.mxu0 0
    %11128 = vmatprep.subr.bf16.mxu0 0
    %11129 = vmatpush1.bf16.msra.mxu0 0
    %11130 = vmatprep.mubr.bf16.mxu0 0
    %11131 = vmatmul.mubr.bf16.gmra.mrb[0].mxu0 %v11096
    %v11132 = vpop.f32.mrb[0].mxu0
    %v11133 = vadd.f32 0.0, %v11132
    %v11134 = vpop.f32.mrb[0].mxu0
    %v11135 = vpop.f32.mrb[0].mxu0
    %v11136 = vadd.f32 0.0, %v11135
    %v11137 = vpop.f32.mrb[0].mxu0
    %11138 = vdwg.mxu0
    %v11140 = vsel %vm9050, %v9785, 0
    %11142 = vmatprep.subr.bf16.mxu0 0
    %11143 = vmatpush1.bf16.msra.mxu0 %v9817
    %11144 = vmatprep.subr.bf16.mxu0 0
    %11145 = vmatpush1.bf16.msra.mxu0 0
    %11146 = vmatprep.subr.bf16.mxu0 0
    %11147 = vmatpush1.bf16.msra.mxu0 0
    %11148 = vmatprep.subr.bf16.mxu0 0
    %11149 = vmatpush1.bf16.msra.mxu0 0
    %11150 = vmatprep.subr.bf16.mxu0 0
    %11151 = vmatpush1.bf16.msra.mxu0 0
    %11152 = vmatprep.subr.bf16.mxu0 0
    %11153 = vmatpush1.bf16.msra.mxu0 0
    %11154 = vmatprep.subr.bf16.mxu0 0
    %11155 = vmatpush1.bf16.msra.mxu0 0
    %11156 = vmatprep.subr.bf16.mxu0 0
    %11157 = vmatpush1.bf16.msra.mxu0 0
    %11158 = vmatprep.subr.bf16.mxu0 0
    %11159 = vmatpush1.bf16.msra.mxu0 0
    %11160 = vmatprep.subr.bf16.mxu0 0
    %11161 = vmatpush1.bf16.msra.mxu0 0
    %11162 = vmatprep.subr.bf16.mxu0 0
    %11163 = vmatpush1.bf16.msra.mxu0 0
    %11164 = vmatprep.subr.bf16.mxu0 0
    %11165 = vmatpush1.bf16.msra.mxu0 0
    %11166 = vmatprep.subr.bf16.mxu0 0
    %11167 = vmatpush1.bf16.msra.mxu0 0
    %11168 = vmatprep.subr.bf16.mxu0 0
    %11169 = vmatpush1.bf16.msra.mxu0 0
    %11170 = vmatprep.subr.bf16.mxu0 0
    %11171 = vmatpush1.bf16.msra.mxu0 0
    %11172 = vmatprep.subr.bf16.mxu0 0
    %11173 = vmatpush1.bf16.msra.mxu0 0
    %11174 = vmatprep.mubr.bf16.mxu0 0
    %11175 = vmatmul.mubr.bf16.gmra.mrb[0].mxu0 %v11140
    %v11176 = vpop.f32.mrb[0].mxu0
    %v11177 = vadd.f32 0.0, %v11176
    %v11178 = vpop.f32.mrb[0].mxu0
    %v11179 = vpop.f32.mrb[0].mxu0
    %v11180 = vadd.f32 0.0, %v11179
    %v11181 = vpop.f32.mrb[0].mxu0
    %11182 = vdwg.mxu0
    %v11184 = vsel %vm9050, %v9786, 0
    %11186 = vmatprep.subr.bf16.mxu0 0
    %11187 = vmatpush1.bf16.msra.mxu0 %v9818
    %11188 = vmatprep.subr.bf16.mxu0 0
    %11189 = vmatpush1.bf16.msra.mxu0 0
    %11190 = vmatprep.subr.bf16.mxu0 0
    %11191 = vmatpush1.bf16.msra.mxu0 0
    %11192 = vmatprep.subr.bf16.mxu0 0
    %11193 = vmatpush1.bf16.msra.mxu0 0
    %11194 = vmatprep.subr.bf16.mxu0 0
    %11195 = vmatpush1.bf16.msra.mxu0 0
    %11196 = vmatprep.subr.bf16.mxu0 0
    %11197 = vmatpush1.bf16.msra.mxu0 0
    %11198 = vmatprep.subr.bf16.mxu0 0
    %11199 = vmatpush1.bf16.msra.mxu0 0
    %11200 = vmatprep.subr.bf16.mxu0 0
    %11201 = vmatpush1.bf16.msra.mxu0 0
    %11202 = vmatprep.subr.bf16.mxu0 0
    %11203 = vmatpush1.bf16.msra.mxu0 0
    %11204 = vmatprep.subr.bf16.mxu0 0
    %11205 = vmatpush1.bf16.msra.mxu0 0
    %11206 = vmatprep.subr.bf16.mxu0 0
    %11207 = vmatpush1.bf16.msra.mxu0 0
    %11208 = vmatprep.subr.bf16.mxu0 0
    %11209 = vmatpush1.bf16.msra.mxu0 0
    %11210 = vmatprep.subr.bf16.mxu0 0
    %11211 = vmatpush1.bf16.msra.mxu0 0
    %11212 = vmatprep.subr.bf16.mxu0 0
    %11213 = vmatpush1.bf16.msra.mxu0 0
    %11214 = vmatprep.subr.bf16.mxu0 0
    %11215 = vmatpush1.bf16.msra.mxu0 0
    %11216 = vmatprep.subr.bf16.mxu0 0
    %11217 = vmatpush1.bf16.msra.mxu0 0
    %11218 = vmatprep.mubr.bf16.mxu0 0
    %11219 = vmatmul.mubr.bf16.gmra.mrb[0].mxu0 %v11184
    %v11220 = vpop.f32.mrb[0].mxu0
    %v11221 = vadd.f32 0.0, %v11220
    %v11222 = vpop.f32.mrb[0].mxu0
    %v11223 = vpop.f32.mrb[0].mxu0
    %v11224 = vadd.f32 0.0, %v11223
    %v11225 = vpop.f32.mrb[0].mxu0
    %11226 = vdwg.mxu0
    %v11227 = vsel %vm127, %v9857, 0.0
    %v11228 = vsel %vm127, %v9901, 0.0
    %v11229 = vadd.f32 %v11227, %v11228
    %v11230 = vsel %vm127, %v9945, 0.0
    %v11231 = vadd.f32 %v11229, %v11230
    %v11232 = vsel %vm127, %v9989, 0.0
    %v11233 = vadd.f32 %v11231, %v11232
    %v11234 = vsel %vm127, %v9860, 0.0
    %v11235 = vsel %vm127, %v9904, 0.0
    %v11236 = vadd.f32 %v11234, %v11235
    %v11237 = vsel %vm127, %v9948, 0.0
    %v11238 = vadd.f32 %v11236, %v11237
    %v11239 = vsel %vm127, %v9992, 0.0
    %v11240 = vadd.f32 %v11238, %v11239
    %v11241 = vsel %vm127, %v10033, 0.0
    %v11242 = vsel %vm127, %v10077, 0.0
    %v11243 = vadd.f32 %v11241, %v11242
    %v11244 = vsel %vm127, %v10121, 0.0
    %v11245 = vadd.f32 %v11243, %v11244
    %v11246 = vsel %vm127, %v10165, 0.0
    %v11247 = vadd.f32 %v11245, %v11246
    %v11248 = vsel %vm127, %v10036, 0.0
    %v11249 = vsel %vm127, %v10080, 0.0
    %v11250 = vadd.f32 %v11248, %v11249
    %v11251 = vsel %vm127, %v10124, 0.0
    %v11252 = vadd.f32 %v11250, %v11251
    %v11253 = vsel %vm127, %v10168, 0.0
    %v11254 = vadd.f32 %v11252, %v11253
    %v11255 = vsel %vm127, %v10209, 0.0
    %v11256 = vsel %vm127, %v10253, 0.0
    %v11257 = vadd.f32 %v11255, %v11256
    %v11258 = vsel %vm127, %v10297, 0.0
    %v11259 = vadd.f32 %v11257, %v11258
    %v11260 = vsel %vm127, %v10341, 0.0
    %v11261 = vadd.f32 %v11259, %v11260
    %v11262 = vsel %vm127, %v10212, 0.0
    %v11263 = vsel %vm127, %v10256, 0.0
    %v11264 = vadd.f32 %v11262, %v11263
    %v11265 = vsel %vm127, %v10300, 0.0
    %v11266 = vadd.f32 %v11264, %v11265
    %v11267 = vsel %vm127, %v10344, 0.0
    %v11268 = vadd.f32 %v11266, %v11267
    %v11269 = vsel %vm127, %v10385, 0.0
    %v11270 = vsel %vm127, %v10429, 0.0
    %v11271 = vadd.f32 %v11269, %v11270
    %v11272 = vsel %vm127, %v10473, 0.0
    %v11273 = vadd.f32 %v11271, %v11272
    %v11274 = vsel %vm127, %v10517, 0.0
    %v11275 = vadd.f32 %v11273, %v11274
    %v11276 = vsel %vm127, %v10388, 0.0
    %v11277 = vsel %vm127, %v10432, 0.0
    %v11278 = vadd.f32 %v11276, %v11277
    %v11279 = vsel %vm127, %v10476, 0.0
    %v11280 = vadd.f32 %v11278, %v11279
    %v11281 = vsel %vm127, %v10520, 0.0
    %v11282 = vadd.f32 %v11280, %v11281
    %v11283 = vsel %vm127, %v10561, 0.0
    %v11284 = vsel %vm127, %v10605, 0.0
    %v11285 = vadd.f32 %v11283, %v11284
    %v11286 = vsel %vm127, %v10649, 0.0
    %v11287 = vadd.f32 %v11285, %v11286
    %v11288 = vsel %vm127, %v10693, 0.0
    %v11289 = vadd.f32 %v11287, %v11288
    %v11290 = vsel %vm127, %v10564, 0.0
    %v11291 = vsel %vm127, %v10608, 0.0
    %v11292 = vadd.f32 %v11290, %v11291
    %v11293 = vsel %vm127, %v10652, 0.0
    %v11294 = vadd.f32 %v11292, %v11293
    %v11295 = vsel %vm127, %v10696, 0.0
    %v11296 = vadd.f32 %v11294, %v11295
    %v11297 = vsel %vm127, %v10737, 0.0
    %v11298 = vsel %vm127, %v10781, 0.0
    %v11299 = vadd.f32 %v11297, %v11298
    %v11300 = vsel %vm127, %v10825, 0.0
    %v11301 = vadd.f32 %v11299, %v11300
    %v11302 = vsel %vm127, %v10869, 0.0
    %v11303 = vadd.f32 %v11301, %v11302
    %v11304 = vsel %vm127, %v10740, 0.0
    %v11305 = vsel %vm127, %v10784, 0.0
    %v11306 = vadd.f32 %v11304, %v11305
    %v11307 = vsel %vm127, %v10828, 0.0
    %v11308 = vadd.f32 %v11306, %v11307
    %v11309 = vsel %vm127, %v10872, 0.0
    %v11310 = vadd.f32 %v11308, %v11309
    %v11311 = vsel %vm127, %v10913, 0.0
    %v11312 = vsel %vm127, %v10957, 0.0
    %v11313 = vadd.f32 %v11311, %v11312
    %v11314 = vsel %vm127, %v11001, 0.0
    %v11315 = vadd.f32 %v11313, %v11314
    %v11316 = vsel %vm127, %v11045, 0.0
    %v11317 = vadd.f32 %v11315, %v11316
    %v11318 = vsel %vm127, %v10916, 0.0
    %v11319 = vsel %vm127, %v10960, 0.0
    %v11320 = vadd.f32 %v11318, %v11319
    %v11321 = vsel %vm127, %v11004, 0.0
    %v11322 = vadd.f32 %v11320, %v11321
    %v11323 = vsel %vm127, %v11048, 0.0
    %v11324 = vadd.f32 %v11322, %v11323
    %v11325 = vsel %vm127, %v11089, 0.0
    %v11326 = vsel %vm127, %v11133, 0.0
    %v11327 = vadd.f32 %v11325, %v11326
    %v11328 = vsel %vm127, %v11177, 0.0
    %v11329 = vadd.f32 %v11327, %v11328
    %v11330 = vsel %vm127, %v11221, 0.0
    %v11331 = vadd.f32 %v11329, %v11330
    %v11332 = vsel %vm127, %v11092, 0.0
    %v11333 = vsel %vm127, %v11136, 0.0
    %v11334 = vadd.f32 %v11332, %v11333
    %v11335 = vsel %vm127, %v11180, 0.0
    %v11336 = vadd.f32 %v11334, %v11335
    %v11337 = vsel %vm127, %v11224, 0.0
    %v11338 = vadd.f32 %v11336, %v11337
    %v11339 = vld [vmem:[%s3] sm:$0x1]
    %v11341 = vlaneseq
    %v11342 = vshrl.u32 %v11341, 7
    %v11343 = vsub.s32 0, %v11342
    %v11344 = vrot.slane %v11339, %v11343
    %v11346 = vadd.f32 %v11233, %v11344
    %v11347 = vadd.f32 %v11240, %v11344
    %v11348 = vadd.f32 %v11247, %v11344
    %v11349 = vadd.f32 %v11254, %v11344
    %v11350 = vadd.f32 %v11261, %v11344
    %v11351 = vadd.f32 %v11268, %v11344
    %v11352 = vadd.f32 %v11275, %v11344
    %v11353 = vadd.f32 %v11282, %v11344
    %v11354 = vadd.f32 %v11289, %v11344
    %v11355 = vadd.f32 %v11296, %v11344
    %v11356 = vadd.f32 %v11303, %v11344
    %v11357 = vadd.f32 %v11310, %v11344
    %v11358 = vadd.f32 %v11317, %v11344
    %v11359 = vadd.f32 %v11324, %v11344
    %v11360 = vadd.f32 %v11331, %v11344
    %v11361 = vadd.f32 %v11338, %v11344
    %v11362 = vpack.c.bf16 %v11347, %v11346
    %v11363 = vpack.c.bf16 %v11349, %v11348
    %v11364 = vpack.c.bf16 %v11351, %v11350
    %v11365 = vpack.c.bf16 %v11353, %v11352
    %v11366 = vpack.c.bf16 %v11355, %v11354
    %v11367 = vpack.c.bf16 %v11357, %v11356
    %v11368 = vpack.c.bf16 %v11359, %v11358
    %v11369 = vpack.c.bf16 %v11361, %v11360
    %v11378 = vunpack.c.l.b16 %v11362
    %v11379 = vunpack.c.h.b16 %v11362
    %v11380 = vunpack.c.l.b16 %v11363
    %v11381 = vunpack.c.h.b16 %v11363
    %v11382 = vunpack.c.l.b16 %v11364
    %v11383 = vunpack.c.h.b16 %v11364
    %v11384 = vunpack.c.l.b16 %v11365
    %v11385 = vunpack.c.h.b16 %v11365
    %v11386 = vunpack.c.l.b16 %v11366
    %v11387 = vunpack.c.h.b16 %v11366
    %v11388 = vunpack.c.l.b16 %v11367
    %v11389 = vunpack.c.h.b16 %v11367
    %v11390 = vunpack.c.l.b16 %v11368
    %v11391 = vunpack.c.h.b16 %v11368
    %v11392 = vunpack.c.l.b16 %v11369
    %v11393 = vunpack.c.h.b16 %v11369
    %v11394 = vpack.c.b16 %v11378, %v11378
    %v11395 = vpack.c.b16 %v11379, %v11379
    %v11396 = vpack.c.b16 %v11380, %v11380
    %v11397 = vpack.c.b16 %v11381, %v11381
    %v11398 = vpack.c.b16 %v11382, %v11382
    %v11399 = vpack.c.b16 %v11383, %v11383
    %v11400 = vpack.c.b16 %v11384, %v11384
    %v11401 = vpack.c.b16 %v11385, %v11385
    %v11402 = vpack.c.b16 %v11386, %v11386
    %v11403 = vpack.c.b16 %v11387, %v11387
    %v11404 = vpack.c.b16 %v11388, %v11388
    %v11405 = vpack.c.b16 %v11389, %v11389
    %v11406 = vpack.c.b16 %v11390, %v11390
    %v11407 = vpack.c.b16 %v11391, %v11391
    %v11408 = vpack.c.b16 %v11392, %v11392
    %v11409 = vpack.c.b16 %v11393, %v11393
    %vm11426 = vcmask 257024
    %11427 = vst.msk [vmem:[%s5] sm:$0xf] %vm11426, %v11394
    %11428 = vst.msk [vmem:[%s5 + $0x4] sm:$0xf] %vm11426, %v11395
    %11429 = vst.msk [vmem:[%s5 + $0x8] sm:$0xf] %vm11426, %v11396
    %11430 = vst.msk [vmem:[%s5 + $0xc] sm:$0xf] %vm11426, %v11397
    %11431 = vst.msk [vmem:[%s5 + $0x10] sm:$0xf] %vm11426, %v11398
    %11432 = vst.msk [vmem:[%s5 + $0x14] sm:$0xf] %vm11426, %v11399
    %11433 = vst.msk [vmem:[%s5 + $0x18] sm:$0xf] %vm11426, %v11400
    %11434 = vst.msk [vmem:[%s5 + $0x1c] sm:$0xf] %vm11426, %v11401
    %11435 = vst.msk [vmem:[%s5 + $0x20] sm:$0xf] %vm11426, %v11402
    %11436 = vst.msk [vmem:[%s5 + $0x24] sm:$0xf] %vm11426, %v11403
    %11437 = vst.msk [vmem:[%s5 + $0x28] sm:$0xf] %vm11426, %v11404
    %11438 = vst.msk [vmem:[%s5 + $0x2c] sm:$0xf] %vm11426, %v11405
    %11439 = vst.msk [vmem:[%s5 + $0x30] sm:$0xf] %vm11426, %v11406
    %11440 = vst.msk [vmem:[%s5 + $0x34] sm:$0xf] %vm11426, %v11407
    %11441 = vst.msk [vmem:[%s5 + $0x38] sm:$0xf] %vm11426, %v11408
    %11442 = vst.msk [vmem:[%s5 + $0x3c] sm:$0xf] %vm11426, %v11409
    // Predicated region
    $region26: #{tpu_custom_call.1} parent=1 // pred_check
      _
    $region27: #{tpu_custom_call.1} parent=1 // pred_check_branch
      %11444 = sbr.rel (0) target = $region29
    $region28: #{tpu_custom_call.1} parent=1 // pred_region
      _
    $region29: #{tpu_custom_call.1} parent=1 // pred_fallthru
      _
    // Predicated region
    $region30: #{tpu_custom_call.1} parent=1 // pred_check
      _
    $region31: #{tpu_custom_call.1} parent=1 // pred_check_branch
      %11446 = sbr.rel (0) target = $region33
    $region32: #{tpu_custom_call.1} parent=1 // pred_region
      _
    $region33: #{tpu_custom_call.1} parent=1 // pred_fallthru
      _
    %11447 = vsyncpa [#allocation3], 1

</llo_original>
